<compile_context>
chip_gen: v7x
topology: tpu7x:2x2x1
jax: 0.10.0
libtpu: 0.0.40
codegen_flags: <defaults>
</compile_context>

<pallas_src>
import functools

import jax
import jax.numpy as jnp
import numpy as np
from jax.experimental import pallas as pl
from jax.experimental.pallas import tpu as pltpu


def _largest_tile(n, cap):
    """Largest divisor of n that is <= cap and (multiple of 8 or == n)."""
    cap = min(n, cap)
    for d in range(cap, 0, -1):
        if n % d == 0 and (d % 8 == 0 or d == n):
            return d
    return n


# ----------------------------------------------------------------------------
# Kernel 1: x-path pre-activations for the whole sequence (tiled matmul + bias)
# ----------------------------------------------------------------------------
def _xconv_kernel(p_ref, w_ref, b_ref, o_ref):
    # p_ref: (RT, K)   w_ref: (K, 4*HID)   b_ref: (1, 4*HID)   o_ref: (RT, 4*HID)
    o_ref[...] = jax.lax.dot_general(
        p_ref[...], w_ref[...], (((1,), (0,)), ((), ())),
        preferred_element_type=jnp.float32) + b_ref[...]


def _xconv_pre(patches, w_mat, b_row, row_cap=1024):
    rows, K = patches.shape
    O = w_mat.shape[1]
    RT = _largest_tile(rows, row_cap)
    return pl.pallas_call(
        _xconv_kernel,
        out_shape=jax.ShapeDtypeStruct((rows, O), jnp.float32),
        grid_spec=pltpu.PrefetchScalarGridSpec(
            num_scalar_prefetch=0,
            grid=(rows // RT,),
            in_specs=[pl.BlockSpec((RT, K), lambda i: (i, 0)),
                      pl.BlockSpec((K, O), lambda i: (0, 0)),
                      pl.BlockSpec((1, O), lambda i: (0, 0))],
            out_specs=pl.BlockSpec((RT, O), lambda i: (i, 0))),
        compiler_params=pltpu.CompilerParams(
            dimension_semantics=("parallel",)),
    )(patches, w_mat, b_row)


# ----------------------------------------------------------------------------
# Kernel 2: fused recurrence over T. h (padded, with halo) and c stay in VMEM
# scratch for the whole sequence; per-step work = one K=KH*KW*HID contraction
# plus the gate math.
# ----------------------------------------------------------------------------
def _make_recurrent_kernel(B, H, W, HID, KH, KW):
    ph, pw = KH // 2, KW // 2
    BHW = B * H * W

    def kernel(xpre_ref, wh_ref, hseq_ref, clast_ref, hpad_ref, c_ref):
        # xpre_ref : (1, BHW, 4*HID)   x-path pre-activation (+bias) for step t
        # wh_ref   : (KH*KW*HID, 4*HID)
        # hseq_ref : (1, BHW, HID)     h output for step t
        # clast_ref: (BHW, HID)        final cell state (written at last step)
        # hpad_ref : (B, H+2ph, W+2pw, HID) VMEM scratch, zero halo, persists over T
        # c_ref    : (BHW, HID)        VMEM scratch, persists over T
        t = pl.program_id(0)

        @pl.when(t == 0)
        def _init():
            hpad_ref[...] = jnp.zeros_like(hpad_ref)
            c_ref[...] = jnp.zeros_like(c_ref)

        # In-VMEM im2col of h (halo already zero-padded) -> single contraction.
        cols = []
        for kh in range(KH):
            for kw in range(KW):
                cols.append(hpad_ref[:, kh:kh + H, kw:kw + W, :])
        patch = jnp.concatenate(cols, axis=-1)               # (B, H, W, KH*KW*HID)
        patch = patch.reshape(BHW, KH * KW * HID)

        acc = xpre_ref[0] + jax.lax.dot_general(
            patch, wh_ref[...], (((1,), (0,)), ((), ())),
            preferred_element_type=jnp.float32)              # (BHW, 4*HID)

        i_g = jax.nn.sigmoid(acc[:, 0 * HID:1 * HID])
        f_g = jax.nn.sigmoid(acc[:, 1 * HID:2 * HID])
        o_g = jax.nn.sigmoid(acc[:, 2 * HID:3 * HID])
        g_g = jnp.tanh(acc[:, 3 * HID:4 * HID])

        c_new = f_g * c_ref[...] + i_g * g_g
        h_new = o_g * jnp.tanh(c_new)

        c_ref[...] = c_new
        hpad_ref[:, ph:ph + H, pw:pw + W, :] = h_new.reshape(B, H, W, HID)
        hseq_ref[0] = h_new

        @pl.when(t == pl.num_programs(0) - 1)
        def _finalize():
            clast_ref[...] = c_new

    return kernel


def _recurrent_scan(xpre, wh_mat, B, H, W, HID, KH, KW):
    T = xpre.shape[0]
    BHW = B * H * W
    ph, pw = KH // 2, KW // 2
    kernel = _make_recurrent_kernel(B, H, W, HID, KH, KW)
    h_seq, c_last = pl.pallas_call(
        kernel,
        out_shape=(jax.ShapeDtypeStruct((T, BHW, HID), jnp.float32),
                   jax.ShapeDtypeStruct((BHW, HID), jnp.float32)),
        grid_spec=pltpu.PrefetchScalarGridSpec(
            num_scalar_prefetch=0,
            grid=(T,),
            in_specs=[pl.BlockSpec((1, BHW, 4 * HID), lambda t: (t, 0, 0)),
                      pl.BlockSpec((KH * KW * HID, 4 * HID), lambda t: (0, 0))],
            out_specs=[pl.BlockSpec((1, BHW, HID), lambda t: (t, 0, 0)),
                       pl.BlockSpec((BHW, HID), lambda t: (0, 0))],
            scratch_shapes=[
                pltpu.VMEM((B, H + 2 * ph, W + 2 * pw, HID), jnp.float32),
                pltpu.VMEM((BHW, HID), jnp.float32)]),
        compiler_params=pltpu.CompilerParams(
            dimension_semantics=("arbitrary",)),
    )(xpre, wh_mat)
    return h_seq, c_last


# ----------------------------------------------------------------------------
# Wrapper-side im2col (done ONCE per layer for the whole sequence, not per step)
# ----------------------------------------------------------------------------
def _im2col(x, KH, KW):
    # x: (N, H, W, C) -> (N*H*W, KH*KW*C), zero-padded "same" conv patches.
    ph, pw = KH // 2, KW // 2
    N, H, W, C = x.shape
    xp = jnp.pad(x, ((0, 0), (ph, ph), (pw, pw), (0, 0)))
    cols = [xp[:, kh:kh + H, kw:kw + W, :] for kh in range(KH) for kw in range(KW)]
    patch = jnp.concatenate(cols, axis=-1)                   # (N, H, W, KH*KW*C)
    return patch.reshape(N * H * W, KH * KW * C)


# ----------------------------------------------------------------------------
# ConvLSTM forward (matches the PyTorch module with batch_first=True, bias=True,
# return_all_layers=False, hidden_state=None).
# ----------------------------------------------------------------------------
def convlstm_forward(x_seq_nchw, params, hidden_dim, kernel_size, num_layers,
                     return_all_layers=False):
    # x_seq_nchw: (B, T, Cin, H, W)  -- PyTorch layout (batch_first=True)
    B, T, _, H, W = x_seq_nchw.shape
    KH, KW = kernel_size
    HID = hidden_dim
    cur = jnp.transpose(x_seq_nchw, (1, 0, 3, 4, 2)).astype(jnp.float32)  # (T,B,H,W,C)

    layer_outputs, last_states = [], []
    for layer_idx in range(num_layers):
        w, b = params[layer_idx]            # (4*HID, Cin_l+HID, KH, KW), (4*HID,)
        Cin_l = w.shape[1] - HID
        wx = jnp.transpose(w[:, :Cin_l], (2, 3, 1, 0)).reshape(KH * KW * Cin_l, 4 * HID)
        wh = jnp.transpose(w[:, Cin_l:], (2, 3, 1, 0)).reshape(KH * KW * HID, 4 * HID)
        b_row = b.reshape(1, 4 * HID).astype(jnp.float32)

        # x-path: one big matmul over all T timesteps (non-recurrent, parallel).
        patches = _im2col(cur.reshape(T * B, H, W, Cin_l), KH, KW)
        xpre = _xconv_pre(patches.astype(jnp.float32), wx.astype(jnp.float32), b_row)
        xpre = xpre.reshape(T, B * H * W, 4 * HID)

        # recurrent path: single fused pallas_call over the time grid.
        h_seq_flat, c_last_flat = _recurrent_scan(
            xpre, wh.astype(jnp.float32), B, H, W, HID, KH, KW)
        h_seq = h_seq_flat.reshape(T, B, H, W, HID)

        cur = h_seq
        layer_outputs.append(h_seq)
        last_states.append((h_seq[-1], c_last_flat.reshape(B, H, W, HID)))

    if not return_all_layers:
        layer_outputs = layer_outputs[-1:]
        last_states = last_states[-1:]

    # back to PyTorch NCHW conventions
    layer_outputs = [jnp.transpose(o, (1, 0, 4, 2, 3)) for o in layer_outputs]
    last_states = [(jnp.transpose(hh, (0, 3, 1, 2)), jnp.transpose(cc, (0, 3, 1, 2)))
                   for (hh, cc) in last_states]
    return layer_outputs, last_states


# ----------------------------------------------------------------------------
# Pure-JAX reference (for correctness check only)
# ----------------------------------------------------------------------------
def ref_forward(x_seq_nchw, params, hidden_dim, kernel_size, num_layers):
    B, T, Cin, Hh, Ww = x_seq_nchw.shape
    x_seq = jnp.transpose(x_seq_nchw, (0, 1, 3, 4, 2)).astype(jnp.float32)
    cur = [x_seq[:, t] for t in range(T)]
    h = c = None
    for layer_idx in range(num_layers):
        w, b = params[layer_idx]
        w_hwio = jnp.transpose(w, (2, 3, 1, 0))
        h = jnp.zeros((B, Hh, Ww, hidden_dim), jnp.float32)
        c = jnp.zeros((B, Hh, Ww, hidden_dim), jnp.float32)
        outs = []
        for t in range(T):
            comb = jnp.concatenate([cur[t], h], axis=-1)
            conv = jax.lax.conv_general_dilated(
                comb, w_hwio, window_strides=(1, 1), padding='SAME',
                dimension_numbers=('NHWC', 'HWIO', 'NHWC')) + b
            i_g = jax.nn.sigmoid(conv[..., 0 * hidden_dim:1 * hidden_dim])
            f_g = jax.nn.sigmoid(conv[..., 1 * hidden_dim:2 * hidden_dim])
            o_g = jax.nn.sigmoid(conv[..., 2 * hidden_dim:3 * hidden_dim])
            g_g = jnp.tanh(conv[..., 3 * hidden_dim:4 * hidden_dim])
            c = f_g * c + i_g * g_g
            h = o_g * jnp.tanh(c)
            outs.append(h)
        cur = outs
    out = jnp.transpose(jnp.stack(cur, axis=1), (0, 1, 4, 2, 3))   # (B,T,HID,H,W)
    h_last = jnp.transpose(h, (0, 3, 1, 2))
    c_last = jnp.transpose(c, (0, 3, 1, 2))
    return out, h_last, c_last


# ----------------------------------------------------------------------------
if __name__ == "__main__":
    # Module config (deterministic synthetic parameters).
    input_dim = 4
    hidden_dim = 32
    kernel_size = (3, 3)
    num_layers = 2
    B, T, Hh, Ww = 2, 8, 16, 16

    key = jax.random.PRNGKey(0)
    params = []
    for i in range(num_layers):
        cur_in = input_dim if i == 0 else hidden_dim
        key, k1, k2 = jax.random.split(key, 3)
        w = 0.1 * jax.random.normal(
            k1, (4 * hidden_dim, cur_in + hidden_dim, kernel_size[0], kernel_size[1]),
            jnp.float32)
        b = 0.1 * jax.random.normal(k2, (4 * hidden_dim,), jnp.float32)
        params.append((w, b))

    key, kx = jax.random.split(key)
    x = jax.random.normal(kx, (B, T, input_dim, Hh, Ww), jnp.float32)

    fwd = jax.jit(functools.partial(
        convlstm_forward, hidden_dim=hidden_dim, kernel_size=kernel_size,
        num_layers=num_layers, return_all_layers=False))

    layer_out_list, last_state_list = fwd(x, params)
    out = jax.block_until_ready(layer_out_list[0])
    h_last = jax.block_until_ready(last_state_list[0][0])
    c_last = jax.block_until_ready(last_state_list[0][1])

    # Validate against a pure-JAX reference.
    ref_out, ref_h, ref_c = ref_forward(x, params, hidden_dim, kernel_size, num_layers)
    ref_out = jax.block_until_ready(ref_out)
    np.testing.assert_allclose(np.asarray(out), np.asarray(ref_out), rtol=1e-4, atol=1e-4)
    np.testing.assert_allclose(np.asarray(h_last), np.asarray(ref_h), rtol=1e-4, atol=1e-4)
    np.testing.assert_allclose(np.asarray(c_last), np.asarray(ref_c), rtol=1e-4, atol=1e-4)

    print("KERNEL_OK")
</pallas_src>

<mosaic_0001>
module attributes {stable_mosaic.version = 11 : i64} {
  func.func @_xconv_kernel(%arg0: i32, %arg1: memref<1024x36xf32, #tpu.memory_space<vmem>>, %arg2: memref<36x128xf32, #tpu.memory_space<vmem>>, %arg3: memref<1x128xf32, #tpu.memory_space<vmem>>, %arg4: memref<1024x128xf32, #tpu.memory_space<vmem>>) attributes {dimension_semantics = [#tpu.dimension_semantics<parallel>], iteration_bounds = array<i64: 4>, scalar_prefetch = 0 : i64, scratch_operands = 0 : i64, tpu.core_type = #tpu.core_type<tc>, window_params = [{transform_indices = @transform_0, window_bounds = array<i64: 1024, 36>}, {pipeline_mode = #tpu.pipeline_mode<synchronous>, transform_indices = @transform_1, window_bounds = array<i64: 36, 128>}, {pipeline_mode = #tpu.pipeline_mode<synchronous>, transform_indices = @transform_2, window_bounds = array<i64: 1, 128>}, {transform_indices = @transform_3, window_bounds = array<i64: 1024, 128>}]} {
    %c0 = arith.constant 0 : index
    %c0_0 = arith.constant 0 : index
    %0 = vector.load %arg1[%c0, %c0_0] : memref<1024x36xf32, #tpu.memory_space<vmem>>, vector<1024x36xf32>
    %c0_1 = arith.constant 0 : index
    %c0_2 = arith.constant 0 : index
    %1 = vector.load %arg2[%c0_1, %c0_2] : memref<36x128xf32, #tpu.memory_space<vmem>>, vector<36x128xf32>
    %cst = arith.constant dense<0.000000e+00> : vector<1024x128xf32>
    %2 = tpu.matmul %0, %1, %cst {dimension_numbers = #tpu.dot_dimension_numbers<[1], [0], [0], [1], [0, 0, 1, 1], [], []>} : vector<1024x36xf32>, vector<36x128xf32>, vector<1024x128xf32> -> vector<1024x128xf32>
    %c0_3 = arith.constant 0 : index
    %c0_4 = arith.constant 0 : index
    %3 = vector.load %arg3[%c0_3, %c0_4] : memref<1x128xf32, #tpu.memory_space<vmem>>, vector<1x128xf32>
    %4 = vector.broadcast %3 : vector<1x128xf32> to vector<1024x128xf32>
    %5 = arith.addf %2, %4 : vector<1024x128xf32>
    %c0_5 = arith.constant 0 : index
    %c0_6 = arith.constant 0 : index
    %6 = vector.load %arg4[%c0_5, %c0_6] : memref<1024x128xf32, #tpu.memory_space<vmem>>, vector<1024x128xf32>
    tpu.vector_store %arg4[%c0_5, %c0_6], %5 {strides = array<i32>} : memref<1024x128xf32, #tpu.memory_space<vmem>>, vector<1024x128xf32>,
    return
  }
  func.func @transform_0(%arg0: i32) -> (i32, i32) {
    %c0_i32 = arith.constant 0 : i32
    %c0_i32_0 = arith.constant 0 : i32
    return %arg0, %c0_i32 : i32, i32
  }
  func.func @transform_1(%arg0: i32) -> (i32, i32) {
    %c0_i32 = arith.constant 0 : i32
    %c0_i32_0 = arith.constant 0 : i32
    %c0_i32_1 = arith.constant 0 : i32
    return %c0_i32, %c0_i32_0 : i32, i32
  }
  func.func @transform_2(%arg0: i32) -> (i32, i32) {
    %c0_i32 = arith.constant 0 : i32
    %c0_i32_0 = arith.constant 0 : i32
    %c0_i32_1 = arith.constant 0 : i32
    return %c0_i32, %c0_i32_0 : i32, i32
  }
  func.func @transform_3(%arg0: i32) -> (i32, i32) {
    %c0_i32 = arith.constant 0 : i32
    %c0_i32_0 = arith.constant 0 : i32
    return %arg0, %c0_i32 : i32, i32
  }
}

module attributes {stable_mosaic.version = 11 : i64} {
  func.func @kernel(%arg0: i32, %arg1: memref<1x512x128xf32, #tpu.memory_space<vmem>>, %arg2: memref<288x128xf32, #tpu.memory_space<vmem>>, %arg3: memref<1x512x32xf32, #tpu.memory_space<vmem>>, %arg4: memref<512x32xf32, #tpu.memory_space<vmem>>, %arg5: memref<2x18x18x32xf32, #tpu.memory_space<vmem>>, %arg6: memref<512x32xf32, #tpu.memory_space<vmem>>) attributes {dimension_semantics = [#tpu.dimension_semantics<arbitrary>], iteration_bounds = array<i64: 8>, scalar_prefetch = 0 : i64, scratch_operands = 2 : i64, tpu.core_type = #tpu.core_type<tc>, window_params = [{transform_indices = @transform_0, window_bounds = array<i64: 1, 512, 128>}, {pipeline_mode = #tpu.pipeline_mode<synchronous>, transform_indices = @transform_1, window_bounds = array<i64: 288, 128>}, {transform_indices = @transform_2, window_bounds = array<i64: 1, 512, 32>}, {pipeline_mode = #tpu.pipeline_mode<synchronous>, transform_indices = @transform_3, window_bounds = array<i64: 512, 32>}]} {
    %c0_i32 = arith.constant 0 : i32
    %0 = arith.cmpi eq, %arg0, %c0_i32 : i32
    %1 = arith.extui %0 : i1 to i32
    %c0_i32_0 = arith.constant 0 : i32
    %2 = arith.cmpi ne, %1, %c0_i32_0 : i32
    scf.if %2 {
      %cst_54 = arith.constant 0.000000e+00 : f32
      %54 = vector.broadcast %cst_54 : f32 to vector<2x18x18x32xf32>
      %c0_55 = arith.constant 0 : index
      %c0_56 = arith.constant 0 : index
      %c0_57 = arith.constant 0 : index
      %c0_58 = arith.constant 0 : index
      %55 = vector.load %arg5[%c0_55, %c0_56, %c0_57, %c0_58] : memref<2x18x18x32xf32, #tpu.memory_space<vmem>>, vector<2x18x18x32xf32>
      tpu.vector_store %arg5[%c0_55, %c0_56, %c0_57, %c0_58], %54 {strides = array<i32>} : memref<2x18x18x32xf32, #tpu.memory_space<vmem>>, vector<2x18x18x32xf32>,
      %cst_59 = arith.constant 0.000000e+00 : f32
      %56 = vector.broadcast %cst_59 : f32 to vector<512x32xf32>
      %c0_60 = arith.constant 0 : index
      %c0_61 = arith.constant 0 : index
      %57 = vector.load %arg6[%c0_60, %c0_61] : memref<512x32xf32, #tpu.memory_space<vmem>>, vector<512x32xf32>
      tpu.vector_store %arg6[%c0_60, %c0_61], %56 {strides = array<i32>} : memref<512x32xf32, #tpu.memory_space<vmem>>, vector<512x32xf32>,
    } else {
    }
    %c0 = arith.constant 0 : index
    %c0_1 = arith.constant 0 : index
    %c0_2 = arith.constant 0 : index
    %c0_3 = arith.constant 0 : index
    %3 = vector.load %arg5[%c0, %c0_1, %c0_2, %c0_3] : memref<2x18x18x32xf32, #tpu.memory_space<vmem>>, vector<2x16x16x32xf32>
    %c0_4 = arith.constant 0 : index
    %c0_5 = arith.constant 0 : index
    %c1 = arith.constant 1 : index
    %c0_6 = arith.constant 0 : index
    %4 = vector.load %arg5[%c0_4, %c0_5, %c1, %c0_6] : memref<2x18x18x32xf32, #tpu.memory_space<vmem>>, vector<2x16x16x32xf32>
    %c0_7 = arith.constant 0 : index
    %c0_8 = arith.constant 0 : index
    %c2 = arith.constant 2 : index
    %c0_9 = arith.constant 0 : index
    %5 = vector.load %arg5[%c0_7, %c0_8, %c2, %c0_9] : memref<2x18x18x32xf32, #tpu.memory_space<vmem>>, vector<2x16x16x32xf32>
    %c0_10 = arith.constant 0 : index
    %c1_11 = arith.constant 1 : index
    %c0_12 = arith.constant 0 : index
    %c0_13 = arith.constant 0 : index
    %6 = vector.load %arg5[%c0_10, %c1_11, %c0_12, %c0_13] : memref<2x18x18x32xf32, #tpu.memory_space<vmem>>, vector<2x16x16x32xf32>
    %c0_14 = arith.constant 0 : index
    %c1_15 = arith.constant 1 : index
    %c1_16 = arith.constant 1 : index
    %c0_17 = arith.constant 0 : index
    %7 = vector.load %arg5[%c0_14, %c1_15, %c1_16, %c0_17] : memref<2x18x18x32xf32, #tpu.memory_space<vmem>>, vector<2x16x16x32xf32>
    %c0_18 = arith.constant 0 : index
    %c1_19 = arith.constant 1 : index
    %c2_20 = arith.constant 2 : index
    %c0_21 = arith.constant 0 : index
    %8 = vector.load %arg5[%c0_18, %c1_19, %c2_20, %c0_21] : memref<2x18x18x32xf32, #tpu.memory_space<vmem>>, vector<2x16x16x32xf32>
    %c0_22 = arith.constant 0 : index
    %c2_23 = arith.constant 2 : index
    %c0_24 = arith.constant 0 : index
    %c0_25 = arith.constant 0 : index
    %9 = vector.load %arg5[%c0_22, %c2_23, %c0_24, %c0_25] : memref<2x18x18x32xf32, #tpu.memory_space<vmem>>, vector<2x16x16x32xf32>
    %c0_26 = arith.constant 0 : index
    %c2_27 = arith.constant 2 : index
    %c1_28 = arith.constant 1 : index
    %c0_29 = arith.constant 0 : index
    %10 = vector.load %arg5[%c0_26, %c2_27, %c1_28, %c0_29] : memref<2x18x18x32xf32, #tpu.memory_space<vmem>>, vector<2x16x16x32xf32>
    %c0_30 = arith.constant 0 : index
    %c2_31 = arith.constant 2 : index
    %c2_32 = arith.constant 2 : index
    %c0_33 = arith.constant 0 : index
    %11 = vector.load %arg5[%c0_30, %c2_31, %c2_32, %c0_33] : memref<2x18x18x32xf32, #tpu.memory_space<vmem>>, vector<2x16x16x32xf32>
    %12 = tpu.concatenate %3, %4, %5, %6, %7, %8, %9, %10, %11 in 3 : vector<2x16x16x32xf32>, vector<2x16x16x32xf32>, vector<2x16x16x32xf32>, vector<2x16x16x32xf32>, vector<2x16x16x32xf32>, vector<2x16x16x32xf32>, vector<2x16x16x32xf32>, vector<2x16x16x32xf32>, vector<2x16x16x32xf32> -> vector<2x16x16x288xf32>
    %13 = vector.shape_cast %12 : vector<2x16x16x288xf32> to vector<512x288xf32>
    %c0_34 = arith.constant 0 : index
    %c0_35 = arith.constant 0 : index
    %c0_36 = arith.constant 0 : index
    %14 = vector.load %arg1[%c0_34, %c0_35, %c0_36] : memref<1x512x128xf32, #tpu.memory_space<vmem>>, vector<1x512x128xf32>
    %15 = vector.shape_cast %14 : vector<1x512x128xf32> to vector<512x128xf32>
    %c0_37 = arith.constant 0 : index
    %c0_38 = arith.constant 0 : index
    %16 = vector.load %arg2[%c0_37, %c0_38] : memref<288x128xf32, #tpu.memory_space<vmem>>, vector<288x128xf32>
    %cst = arith.constant dense<0.000000e+00> : vector<512x128xf32>
    %17 = tpu.matmul %13, %16, %cst {dimension_numbers = #tpu.dot_dimension_numbers<[1], [0], [0], [1], [0, 0, 1, 1], [], []>} : vector<512x288xf32>, vector<288x128xf32>, vector<512x128xf32> -> vector<512x128xf32>
    %18 = arith.addf %15, %17 : vector<512x128xf32>
    %19 = vector.extract_strided_slice %18 {offsets = [0, 0], sizes = [512, 32], strides = [1, 1]} : vector<512x128xf32> to vector<512x32xf32>
    %20 = arith.negf %19 : vector<512x32xf32>
    %21 = math.exp %20 : vector<512x32xf32>
    %cst_39 = arith.constant 1.000000e+00 : f32
    %22 = vector.broadcast %cst_39 : f32 to vector<512x32xf32>
    %23 = arith.addf %22, %21 : vector<512x32xf32>
    %24 = arith.divf %22, %23 : vector<512x32xf32>
    %25 = vector.extract_strided_slice %18 {offsets = [0, 32], sizes = [512, 32], strides = [1, 1]} : vector<512x128xf32> to vector<512x32xf32>
    %26 = arith.negf %25 : vector<512x32xf32>
    %27 = math.exp %26 : vector<512x32xf32>
    %cst_40 = arith.constant 1.000000e+00 : f32
    %28 = vector.broadcast %cst_40 : f32 to vector<512x32xf32>
    %29 = arith.addf %28, %27 : vector<512x32xf32>
    %30 = arith.divf %28, %29 : vector<512x32xf32>
    %31 = vector.extract_strided_slice %18 {offsets = [0, 64], sizes = [512, 32], strides = [1, 1]} : vector<512x128xf32> to vector<512x32xf32>
    %32 = arith.negf %31 : vector<512x32xf32>
    %33 = math.exp %32 : vector<512x32xf32>
    %cst_41 = arith.constant 1.000000e+00 : f32
    %34 = vector.broadcast %cst_41 : f32 to vector<512x32xf32>
    %35 = arith.addf %34, %33 : vector<512x32xf32>
    %36 = arith.divf %34, %35 : vector<512x32xf32>
    %37 = vector.extract_strided_slice %18 {offsets = [0, 96], sizes = [512, 32], strides = [1, 1]} : vector<512x128xf32> to vector<512x32xf32>
    %38 = math.tanh %37 : vector<512x32xf32>
    %c0_42 = arith.constant 0 : index
    %c0_43 = arith.constant 0 : index
    %39 = vector.load %arg6[%c0_42, %c0_43] : memref<512x32xf32, #tpu.memory_space<vmem>>, vector<512x32xf32>
    %40 = arith.mulf %30, %39 : vector<512x32xf32>
    %41 = arith.mulf %24, %38 : vector<512x32xf32>
    %42 = arith.addf %40, %41 : vector<512x32xf32>
    %43 = math.tanh %42 : vector<512x32xf32>
    %44 = arith.mulf %36, %43 : vector<512x32xf32>
    %c0_44 = arith.constant 0 : index
    %c0_45 = arith.constant 0 : index
    %45 = vector.load %arg6[%c0_44, %c0_45] : memref<512x32xf32, #tpu.memory_space<vmem>>, vector<512x32xf32>
    tpu.vector_store %arg6[%c0_44, %c0_45], %42 {strides = array<i32>} : memref<512x32xf32, #tpu.memory_space<vmem>>, vector<512x32xf32>,
    %46 = vector.shape_cast %44 : vector<512x32xf32> to vector<2x16x16x32xf32>
    %c0_46 = arith.constant 0 : index
    %c1_47 = arith.constant 1 : index
    %c1_48 = arith.constant 1 : index
    %c0_49 = arith.constant 0 : index
    %47 = vector.load %arg5[%c0_46, %c1_47, %c1_48, %c0_49] : memref<2x18x18x32xf32, #tpu.memory_space<vmem>>, vector<2x16x16x32xf32>
    tpu.vector_store %arg5[%c0_46, %c1_47, %c1_48, %c0_49], %46 {strides = array<i32>} : memref<2x18x18x32xf32, #tpu.memory_space<vmem>>, vector<2x16x16x32xf32>,
    %c0_50 = arith.constant 0 : index
    %c0_51 = arith.constant 0 : index
    %c0_52 = arith.constant 0 : index
    %48 = vector.load %arg3[%c0_50, %c0_51, %c0_52] : memref<1x512x32xf32, #tpu.memory_space<vmem>>, vector<1x512x32xf32>
    %49 = vector.shape_cast %48 : vector<1x512x32xf32> to vector<512x32xf32>
    %50 = vector.shape_cast %44 : vector<512x32xf32> to vector<1x512x32xf32>
    tpu.vector_store %arg3[%c0_50, %c0_51, %c0_52], %50 {strides = array<i32>} : memref<1x512x32xf32, #tpu.memory_space<vmem>>, vector<1x512x32xf32>,
    %c7_i32 = arith.constant 7 : i32
    %51 = arith.cmpi eq, %arg0, %c7_i32 : i32
    %52 = arith.extui %51 : i1 to i32
    %c0_i32_53 = arith.constant 0 : i32
    %53 = arith.cmpi ne, %52, %c0_i32_53 : i32
    scf.if %53 {
      %c0_54 = arith.constant 0 : index
      %c0_55 = arith.constant 0 : index
      %54 = vector.load %arg4[%c0_54, %c0_55] : memref<512x32xf32, #tpu.memory_space<vmem>>, vector<512x32xf32>
      tpu.vector_store %arg4[%c0_54, %c0_55], %42 {strides = array<i32>} : memref<512x32xf32, #tpu.memory_space<vmem>>, vector<512x32xf32>,
    } else {
    }
    return
  }
  func.func @transform_0(%arg0: i32) -> (i32, i32, i32) {
    %c0_i32 = arith.constant 0 : i32
    %c0_i32_0 = arith.constant 0 : i32
    %c0_i32_1 = arith.constant 0 : i32
    return %arg0, %c0_i32, %c0_i32_0 : i32, i32, i32
  }
  func.func @transform_1(%arg0: i32) -> (i32, i32) {
    %c0_i32 = arith.constant 0 : i32
    %c0_i32_0 = arith.constant 0 : i32
    %c0_i32_1 = arith.constant 0 : i32
    return %c0_i32, %c0_i32_0 : i32, i32
  }
  func.func @transform_2(%arg0: i32) -> (i32, i32, i32) {
    %c0_i32 = arith.constant 0 : i32
    %c0_i32_0 = arith.constant 0 : i32
    %c0_i32_1 = arith.constant 0 : i32
    return %arg0, %c0_i32, %c0_i32_0 : i32, i32, i32
  }
  func.func @transform_3(%arg0: i32) -> (i32, i32) {
    %c0_i32 = arith.constant 0 : i32
    %c0_i32_0 = arith.constant 0 : i32
    %c0_i32_1 = arith.constant 0 : i32
    return %c0_i32, %c0_i32_0 : i32, i32
  }
}

module attributes {stable_mosaic.version = 11 : i64} {
  func.func @_xconv_kernel(%arg0: i32, %arg1: memref<1024x288xf32, #tpu.memory_space<vmem>>, %arg2: memref<288x128xf32, #tpu.memory_space<vmem>>, %arg3: memref<1x128xf32, #tpu.memory_space<vmem>>, %arg4: memref<1024x128xf32, #tpu.memory_space<vmem>>) attributes {dimension_semantics = [#tpu.dimension_semantics<parallel>], iteration_bounds = array<i64: 4>, scalar_prefetch = 0 : i64, scratch_operands = 0 : i64, tpu.core_type = #tpu.core_type<tc>, window_params = [{transform_indices = @transform_0, window_bounds = array<i64: 1024, 288>}, {pipeline_mode = #tpu.pipeline_mode<synchronous>, transform_indices = @transform_1, window_bounds = array<i64: 288, 128>}, {pipeline_mode = #tpu.pipeline_mode<synchronous>, transform_indices = @transform_2, window_bounds = array<i64: 1, 128>}, {transform_indices = @transform_3, window_bounds = array<i64: 1024, 128>}]} {
    %c0 = arith.constant 0 : index
    %c0_0 = arith.constant 0 : index
    %0 = vector.load %arg1[%c0, %c0_0] : memref<1024x288xf32, #tpu.memory_space<vmem>>, vector<1024x288xf32>
    %c0_1 = arith.constant 0 : index
    %c0_2 = arith.constant 0 : index
    %1 = vector.load %arg2[%c0_1, %c0_2] : memref<288x128xf32, #tpu.memory_space<vmem>>, vector<288x128xf32>
    %cst = arith.constant dense<0.000000e+00> : vector<1024x128xf32>
    %2 = tpu.matmul %0, %1, %cst {dimension_numbers = #tpu.dot_dimension_numbers<[1], [0], [0], [1], [0, 0, 1, 1], [], []>} : vector<1024x288xf32>, vector<288x128xf32>, vector<1024x128xf32> -> vector<1024x128xf32>
    %c0_3 = arith.constant 0 : index
    %c0_4 = arith.constant 0 : index
    %3 = vector.load %arg3[%c0_3, %c0_4] : memref<1x128xf32, #tpu.memory_space<vmem>>, vector<1x128xf32>
    %4 = vector.broadcast %3 : vector<1x128xf32> to vector<1024x128xf32>
    %5 = arith.addf %2, %4 : vector<1024x128xf32>
    %c0_5 = arith.constant 0 : index
    %c0_6 = arith.constant 0 : index
    %6 = vector.load %arg4[%c0_5, %c0_6] : memref<1024x128xf32, #tpu.memory_space<vmem>>, vector<1024x128xf32>
    tpu.vector_store %arg4[%c0_5, %c0_6], %5 {strides = array<i32>} : memref<1024x128xf32, #tpu.memory_space<vmem>>, vector<1024x128xf32>,
    return
  }
  func.func @transform_0(%arg0: i32) -> (i32, i32) {
    %c0_i32 = arith.constant 0 : i32
    %c0_i32_0 = arith.constant 0 : i32
    return %arg0, %c0_i32 : i32, i32
  }
  func.func @transform_1(%arg0: i32) -> (i32, i32) {
    %c0_i32 = arith.constant 0 : i32
    %c0_i32_0 = arith.constant 0 : i32
    %c0_i32_1 = arith.constant 0 : i32
    return %c0_i32, %c0_i32_0 : i32, i32
  }
  func.func @transform_2(%arg0: i32) -> (i32, i32) {
    %c0_i32 = arith.constant 0 : i32
    %c0_i32_0 = arith.constant 0 : i32
    %c0_i32_1 = arith.constant 0 : i32
    return %c0_i32, %c0_i32_0 : i32, i32
  }
  func.func @transform_3(%arg0: i32) -> (i32, i32) {
    %c0_i32 = arith.constant 0 : i32
    %c0_i32_0 = arith.constant 0 : i32
    return %arg0, %c0_i32 : i32, i32
  }
}

</mosaic_0001>

<llo_original>
// kernel: convlstm_forward.4
$region0: #{convlstm_forward.4}
  #allocation0 [shape = 'u32[]', space=smem, size = 0x4, offset = 0x4, fixed_abs, tag = 'smem constant byte address 0x4 - core index']
  #allocation1 [shape = 'u32[144,128]{1,0:T(1,128)}', space=vmem, size = 0x12000, scoped, tag = 'internal scratch']
  %s0 = inlined_call_operand.vmem [shape: f32[4096,36], index: 0, kind: input, shape index: {}]
  %s1 = inlined_call_operand.vmem [shape: f32[36,128], index: 1, kind: input, shape index: {}]
  %s2 = inlined_call_operand.vmem [shape: f32[1,128], index: 2, kind: input, shape index: {}]
  %s3 = inlined_call_operand.vmem [shape: f32[4096,128], index: 3, kind: output, shape index: {}]
  %s4 = sld [smem:[#allocation0]]
  $region45: #{convlstm_forward.4} parent=0
    _
  %s6 = ssub.s32 1, %s4
  %s7 = scalar_select 0, %s6, %s4
  loop: start=0, step=1, limit=6
  $region2: #{convlstm_forward.4} parent=0 // loop_pre_header
    _
  $region3: #{convlstm_forward.4} parent=0 // loop_header
    %s9 = sphi 0, %s13
    %p10 = scmp.ge.s32.totalorder %s9, 6
    %s19 = sphi 0, %s21
    %s22 = sphi 0, %s19
    %s23 = sphi 0, %s22
    %s39 = sphi 0, %s23
    %s43 = sphi 0, %s43
    %s45 = sphi 0, %s43
    %s46 = sphi 0, %s45
    %s60 = sphi 0, %s46
    %s64 = sphi 0, %s64
    %s66 = sphi 0, %s64
    %s67 = sphi 0, %s66
    %s81 = sphi 0, %s67
    %s87 = sphi 0, %s89
    %s90 = sphi 0, %s87
    %s91 = sphi 0, %s90
    %s107 = sphi 0, %s91
  $region4: #{convlstm_forward.4} parent=0 // loop_header_branch
    %12 = sbr.rel (%p10) target = $region8
  $region5: #{convlstm_forward.4} parent=0 // loop_body
    %s14 = ssub.s32 %s9, 1
    %s15 = ssub.s32 %s9, 2
    %s16 = sadd.s32 %s9, 1
    %s17 = ssub.s32 %s9, %s16
    %p18 = scmp.eq.s32.totalorder %s17, 0
    %s20 = sadd.s32 %s19, 1
    %s21 = scalar_select %p18, %s19, %s20
    %p24 = pneg %p18
    %p25 = scmp.eq.s32.totalorder %s9, 3
    %p26 = por %p24, %p25
    %p27 = scmp.ne.s32.totalorder %s19, %s22
    %p28 = scmp.eq.s32.totalorder %s9, 0
    %p29 = por %p27, %p28
    %p30 = scmp.ne.s32.totalorder %s19, %s22
    %p31 = scmp.eq.s32.totalorder %s14, 3
    %p32 = por %p30, %p31
    %p33 = scmp.ne.s32.totalorder %s22, %s23
    %p34 = scmp.eq.s32.totalorder %s14, 0
    %p35 = por %p33, %p34
    %p36 = scmp.ne.s32.totalorder %s22, %s23
    %p37 = scmp.eq.s32.totalorder %s15, 3
    %p38 = por %p36, %p37
    %p40 = scmp.ne.s32.totalorder %s23, %s39
    %p41 = scmp.eq.s32.totalorder %s15, 0
    %p42 = por %p40, %p41
    %s44 = sadd.s32 %s43, 1
    %p47 = scmp.eq.s32.totalorder %s9, 3
    %p48 = scmp.ne.s32.totalorder %s43, %s45
    %p49 = scmp.eq.s32.totalorder %s9, 0
    %p50 = por %p48, %p49
    %p51 = scmp.ne.s32.totalorder %s43, %s45
    %p52 = scmp.eq.s32.totalorder %s14, 3
    %p53 = por %p51, %p52
    %p54 = scmp.ne.s32.totalorder %s45, %s46
    %p55 = scmp.eq.s32.totalorder %s14, 0
    %p56 = por %p54, %p55
    %p57 = scmp.ne.s32.totalorder %s45, %s46
    %p58 = scmp.eq.s32.totalorder %s15, 3
    %p59 = por %p57, %p58
    %p61 = scmp.ne.s32.totalorder %s46, %s60
    %p62 = scmp.eq.s32.totalorder %s15, 0
    %p63 = por %p61, %p62
    %s65 = sadd.s32 %s64, 1
    %p68 = scmp.eq.s32.totalorder %s9, 3
    %p69 = scmp.ne.s32.totalorder %s64, %s66
    %p70 = scmp.eq.s32.totalorder %s9, 0
    %p71 = por %p69, %p70
    %p72 = scmp.ne.s32.totalorder %s64, %s66
    %p73 = scmp.eq.s32.totalorder %s14, 3
    %p74 = por %p72, %p73
    %p75 = scmp.ne.s32.totalorder %s66, %s67
    %p76 = scmp.eq.s32.totalorder %s14, 0
    %p77 = por %p75, %p76
    %p78 = scmp.ne.s32.totalorder %s66, %s67
    %p79 = scmp.eq.s32.totalorder %s15, 3
    %p80 = por %p78, %p79
    %p82 = scmp.ne.s32.totalorder %s67, %s81
    %p83 = scmp.eq.s32.totalorder %s15, 0
    %p84 = por %p82, %p83
    %s85 = ssub.s32 %s9, %s16
    %p86 = scmp.eq.s32.totalorder %s85, 0
    %s88 = sadd.s32 %s87, 1
    %s89 = scalar_select %p86, %s87, %s88
    %p92 = pneg %p86
    %p93 = scmp.eq.s32.totalorder %s9, 3
    %p94 = por %p92, %p93
    %p95 = scmp.ne.s32.totalorder %s87, %s90
    %p96 = scmp.eq.s32.totalorder %s9, 0
    %p97 = por %p95, %p96
    %p98 = scmp.ne.s32.totalorder %s87, %s90
    %p99 = scmp.eq.s32.totalorder %s14, 3
    %p100 = por %p98, %p99
    %p101 = scmp.ne.s32.totalorder %s90, %s91
    %p102 = scmp.eq.s32.totalorder %s14, 0
    %p103 = por %p101, %p102
    %p104 = scmp.ne.s32.totalorder %s90, %s91
    %p105 = scmp.eq.s32.totalorder %s15, 3
    %p106 = por %p104, %p105
    %p108 = scmp.ne.s32.totalorder %s91, %s107
    %p109 = scmp.eq.s32.totalorder %s15, 0
    %p110 = por %p108, %p109
    %p111 = scmp.le.s32.totalorder 1, %s9
    %p112 = scmp.lt.s32.totalorder %s9, 5
    %p113 = pnand %p111, %p112
    %p114 = pneg %p113
    // Predicated region
    $region9: #{convlstm_forward.4} parent=5 // pred_check
      _
    $region10: #{convlstm_forward.4} parent=5 // pred_check_branch
      %116 = sbr.rel (%p113) target = $region12
    $region11: #{convlstm_forward.4} parent=5 // pred_region
      %s117 = ssub.s32 %s9, 1
      // Predicated region
      $region13: #{convlstm_forward.4} parent=11 // pred_check
        %p118 = pneg %p56
      $region14: #{convlstm_forward.4} parent=11 // pred_check_branch
        %120 = sbr.rel (%p118) target = $region16
      $region15: #{convlstm_forward.4} parent=11 // pred_region
        _
      $region16: #{convlstm_forward.4} parent=11 // pred_fallthru
        _
      // Predicated region
      $region17: #{convlstm_forward.4} parent=11 // pred_check
        %p121 = pneg %p77
      $region18: #{convlstm_forward.4} parent=11 // pred_check_branch
        %123 = sbr.rel (%p121) target = $region20
      $region19: #{convlstm_forward.4} parent=11 // pred_region
        _
      $region20: #{convlstm_forward.4} parent=11 // pred_fallthru
        _
    $region12: #{convlstm_forward.4} parent=5 // pred_fallthru
      _
    %p124 = scmp.lt.s32.totalorder %s9, 4
    // Predicated region
    $region21: #{convlstm_forward.4} parent=5 // pred_check
      %p125 = pneg %p124
    $region22: #{convlstm_forward.4} parent=5 // pred_check_branch
      %127 = sbr.rel (%p125) target = $region24
    $region23: #{convlstm_forward.4} parent=5 // pred_region
      // Predicated region
      $region25: #{convlstm_forward.4} parent=23 // pred_check
        %p128 = pneg %p29
      $region26: #{convlstm_forward.4} parent=23 // pred_check_branch
        %130 = sbr.rel (%p128) target = $region28
      $region27: #{convlstm_forward.4} parent=23 // pred_region
        %s131 = smul.u32 128, %s9
        %p132 = scmp.lt.s32.totalorder %s131, 511
        %s133 = scalar_select %p132, %s131, 511
        %s134 = smul.addr %s133, 8
        %s135 = scalar_lea.vmem %s0, %s134
        %s136 = smul.u32 128, %s9
      $region28: #{convlstm_forward.4} parent=23 // pred_fallthru
        _
    $region24: #{convlstm_forward.4} parent=5 // pred_fallthru
      _
    %p137 = scmp.le.s32.totalorder 1, %s9
    %p138 = scmp.lt.s32.totalorder %s9, 5
    %p139 = pnand %p137, %p138
    %p140 = pneg %p139
    // Predicated region
    $region29: #{convlstm_forward.4} parent=5 // pred_check
      _
    $region30: #{convlstm_forward.4} parent=5 // pred_check_branch
      %142 = sbr.rel (%p139) target = $region32
    $region31: #{convlstm_forward.4} parent=5 // pred_region
      %s143 = ssub.s32 %s9, 1
      %s144 = smul.u32 128, %s14
      %p145 = scmp.lt.s32.totalorder %s144, 511
      %s146 = scalar_select %p145, %s144, 511
      %s147 = smul.addr %s146, 8
      %s148 = scalar_lea.vmem %s0, %s147
      %p149 = pneg %p35
      %p150 = pneg %p32
      %p151 = pneg %p56
      %p152 = pneg %p53
      %p153 = pneg %p77
      %p154 = pneg %p74
      %p155 = pneg %p103
      %p156 = pneg %p100
      %s157 = smul.u32 128, %s14
      %p158 = scmp.lt.s32.totalorder %s157, 511
      %s159 = scalar_select %p158, %s157, 511
      %s160 = smul.addr %s159, 8
      %s161 = scalar_lea.vmem %s3, %s160
      %s162 = smul.u32 128, %s14
      %p163 = scmp.lt.s32.totalorder %s162, 511
      %s164 = scalar_select %p163, %s162, 511
      %s165 = smul.addr %s164, 8
      %s166 = scalar_lea.vmem %s0, %s165
      %s167 = smul.u32 128, %s14
      %s168 = smul.u32 128, %s14
      %p169 = scmp.lt.s32.totalorder %s168, 511
      %s170 = scalar_select %p169, %s168, 511
      %s171 = smul.addr %s170, 8
      %s172 = scalar_lea.vmem %s3, %s171
      %s173 = smul.u32 128, %s14
      %v174 = vld [vmem:[%s166] sm:$0xff]
      %v175 = vld [vmem:[%s166 + $0x8] sm:$0xff]
      %v176 = vld [vmem:[%s166 + $0x10] sm:$0xff]
      %v177 = vld [vmem:[%s166 + $0x18] sm:$0xff]
      %v178 = vld [vmem:[%s166 + $0x20] sm:$0xff]
      %v179 = vld [vmem:[%s166 + $0x28] sm:$0xff]
      %v180 = vld [vmem:[%s166 + $0x30] sm:$0xff]
      %v181 = vld [vmem:[%s166 + $0x38] sm:$0xff]
      %v182 = vld [vmem:[%s166 + $0x40] sm:$0xff]
      %v183 = vld [vmem:[%s166 + $0x48] sm:$0xff]
      %v184 = vld [vmem:[%s166 + $0x50] sm:$0xff]
      %v185 = vld [vmem:[%s166 + $0x58] sm:$0xff]
      %v186 = vld [vmem:[%s166 + $0x60] sm:$0xff]
      %v187 = vld [vmem:[%s166 + $0x68] sm:$0xff]
      %v188 = vld [vmem:[%s166 + $0x70] sm:$0xff]
      %v189 = vld [vmem:[%s166 + $0x78] sm:$0xff]
      %v190 = vld [vmem:[%s166 + $0x80] sm:$0xff]
      %v191 = vld [vmem:[%s166 + $0x88] sm:$0xff]
      %v192 = vld [vmem:[%s166 + $0x90] sm:$0xff]
      %v193 = vld [vmem:[%s166 + $0x98] sm:$0xff]
      %v194 = vld [vmem:[%s166 + $0xa0] sm:$0xff]
      %v195 = vld [vmem:[%s166 + $0xa8] sm:$0xff]
      %v196 = vld [vmem:[%s166 + $0xb0] sm:$0xff]
      %v197 = vld [vmem:[%s166 + $0xb8] sm:$0xff]
      %v198 = vld [vmem:[%s166 + $0xc0] sm:$0xff]
      %v199 = vld [vmem:[%s166 + $0xc8] sm:$0xff]
      %v200 = vld [vmem:[%s166 + $0xd0] sm:$0xff]
      %v201 = vld [vmem:[%s166 + $0xd8] sm:$0xff]
      %v202 = vld [vmem:[%s166 + $0xe0] sm:$0xff]
      %v203 = vld [vmem:[%s166 + $0xe8] sm:$0xff]
      %v204 = vld [vmem:[%s166 + $0xf0] sm:$0xff]
      %v205 = vld [vmem:[%s166 + $0xf8] sm:$0xff]
      %v206 = vld [vmem:[%s166 + $0x100] sm:$0xff]
      %v207 = vld [vmem:[%s166 + $0x108] sm:$0xff]
      %v208 = vld [vmem:[%s166 + $0x110] sm:$0xff]
      %v209 = vld [vmem:[%s166 + $0x118] sm:$0xff]
      %v210 = vld [vmem:[%s166 + $0x120] sm:$0xff]
      %v211 = vld [vmem:[%s166 + $0x128] sm:$0xff]
      %v212 = vld [vmem:[%s166 + $0x130] sm:$0xff]
      %v213 = vld [vmem:[%s166 + $0x138] sm:$0xff]
      %v214 = vld [vmem:[%s166 + $0x140] sm:$0xff]
      %v215 = vld [vmem:[%s166 + $0x148] sm:$0xff]
      %v216 = vld [vmem:[%s166 + $0x150] sm:$0xff]
      %v217 = vld [vmem:[%s166 + $0x158] sm:$0xff]
      %v218 = vld [vmem:[%s166 + $0x160] sm:$0xff]
      %v219 = vld [vmem:[%s166 + $0x168] sm:$0xff]
      %v220 = vld [vmem:[%s166 + $0x170] sm:$0xff]
      %v221 = vld [vmem:[%s166 + $0x178] sm:$0xff]
      %v222 = vld [vmem:[%s166 + $0x180] sm:$0xff]
      %v223 = vld [vmem:[%s166 + $0x188] sm:$0xff]
      %v224 = vld [vmem:[%s166 + $0x190] sm:$0xff]
      %v225 = vld [vmem:[%s166 + $0x198] sm:$0xff]
      %v226 = vld [vmem:[%s166 + $0x1a0] sm:$0xff]
      %v227 = vld [vmem:[%s166 + $0x1a8] sm:$0xff]
      %v228 = vld [vmem:[%s166 + $0x1b0] sm:$0xff]
      %v229 = vld [vmem:[%s166 + $0x1b8] sm:$0xff]
      %v230 = vld [vmem:[%s166 + $0x1c0] sm:$0xff]
      %v231 = vld [vmem:[%s166 + $0x1c8] sm:$0xff]
      %v232 = vld [vmem:[%s166 + $0x1d0] sm:$0xff]
      %v233 = vld [vmem:[%s166 + $0x1d8] sm:$0xff]
      %v234 = vld [vmem:[%s166 + $0x1e0] sm:$0xff]
      %v235 = vld [vmem:[%s166 + $0x1e8] sm:$0xff]
      %v236 = vld [vmem:[%s166 + $0x1f0] sm:$0xff]
      %v237 = vld [vmem:[%s166 + $0x1f8] sm:$0xff]
      %v238 = vld [vmem:[%s166 + $0x200] sm:$0xff]
      %v239 = vld [vmem:[%s166 + $0x208] sm:$0xff]
      %v240 = vld [vmem:[%s166 + $0x210] sm:$0xff]
      %v241 = vld [vmem:[%s166 + $0x218] sm:$0xff]
      %v242 = vld [vmem:[%s166 + $0x220] sm:$0xff]
      %v243 = vld [vmem:[%s166 + $0x228] sm:$0xff]
      %v244 = vld [vmem:[%s166 + $0x230] sm:$0xff]
      %v245 = vld [vmem:[%s166 + $0x238] sm:$0xff]
      %v246 = vld [vmem:[%s166 + $0x240] sm:$0xff]
      %v247 = vld [vmem:[%s166 + $0x248] sm:$0xff]
      %v248 = vld [vmem:[%s166 + $0x250] sm:$0xff]
      %v249 = vld [vmem:[%s166 + $0x258] sm:$0xff]
      %v250 = vld [vmem:[%s166 + $0x260] sm:$0xff]
      %v251 = vld [vmem:[%s166 + $0x268] sm:$0xff]
      %v252 = vld [vmem:[%s166 + $0x270] sm:$0xff]
      %v253 = vld [vmem:[%s166 + $0x278] sm:$0xff]
      %v254 = vld [vmem:[%s166 + $0x280] sm:$0xff]
      %v255 = vld [vmem:[%s166 + $0x288] sm:$0xff]
      %v256 = vld [vmem:[%s166 + $0x290] sm:$0xff]
      %v257 = vld [vmem:[%s166 + $0x298] sm:$0xff]
      %v258 = vld [vmem:[%s166 + $0x2a0] sm:$0xff]
      %v259 = vld [vmem:[%s166 + $0x2a8] sm:$0xff]
      %v260 = vld [vmem:[%s166 + $0x2b0] sm:$0xff]
      %v261 = vld [vmem:[%s166 + $0x2b8] sm:$0xff]
      %v262 = vld [vmem:[%s166 + $0x2c0] sm:$0xff]
      %v263 = vld [vmem:[%s166 + $0x2c8] sm:$0xff]
      %v264 = vld [vmem:[%s166 + $0x2d0] sm:$0xff]
      %v265 = vld [vmem:[%s166 + $0x2d8] sm:$0xff]
      %v266 = vld [vmem:[%s166 + $0x2e0] sm:$0xff]
      %v267 = vld [vmem:[%s166 + $0x2e8] sm:$0xff]
      %v268 = vld [vmem:[%s166 + $0x2f0] sm:$0xff]
      %v269 = vld [vmem:[%s166 + $0x2f8] sm:$0xff]
      %v270 = vld [vmem:[%s166 + $0x300] sm:$0xff]
      %v271 = vld [vmem:[%s166 + $0x308] sm:$0xff]
      %v272 = vld [vmem:[%s166 + $0x310] sm:$0xff]
      %v273 = vld [vmem:[%s166 + $0x318] sm:$0xff]
      %v274 = vld [vmem:[%s166 + $0x320] sm:$0xff]
      %v275 = vld [vmem:[%s166 + $0x328] sm:$0xff]
      %v276 = vld [vmem:[%s166 + $0x330] sm:$0xff]
      %v277 = vld [vmem:[%s166 + $0x338] sm:$0xff]
      %v278 = vld [vmem:[%s166 + $0x340] sm:$0xff]
      %v279 = vld [vmem:[%s166 + $0x348] sm:$0xff]
      %v280 = vld [vmem:[%s166 + $0x350] sm:$0xff]
      %v281 = vld [vmem:[%s166 + $0x358] sm:$0xff]
      %v282 = vld [vmem:[%s166 + $0x360] sm:$0xff]
      %v283 = vld [vmem:[%s166 + $0x368] sm:$0xff]
      %v284 = vld [vmem:[%s166 + $0x370] sm:$0xff]
      %v285 = vld [vmem:[%s166 + $0x378] sm:$0xff]
      %v286 = vld [vmem:[%s166 + $0x380] sm:$0xff]
      %v287 = vld [vmem:[%s166 + $0x388] sm:$0xff]
      %v288 = vld [vmem:[%s166 + $0x390] sm:$0xff]
      %v289 = vld [vmem:[%s166 + $0x398] sm:$0xff]
      %v290 = vld [vmem:[%s166 + $0x3a0] sm:$0xff]
      %v291 = vld [vmem:[%s166 + $0x3a8] sm:$0xff]
      %v292 = vld [vmem:[%s166 + $0x3b0] sm:$0xff]
      %v293 = vld [vmem:[%s166 + $0x3b8] sm:$0xff]
      %v294 = vld [vmem:[%s166 + $0x3c0] sm:$0xff]
      %v295 = vld [vmem:[%s166 + $0x3c8] sm:$0xff]
      %v296 = vld [vmem:[%s166 + $0x3d0] sm:$0xff]
      %v297 = vld [vmem:[%s166 + $0x3d8] sm:$0xff]
      %v298 = vld [vmem:[%s166 + $0x3e0] sm:$0xff]
      %v299 = vld [vmem:[%s166 + $0x3e8] sm:$0xff]
      %v300 = vld [vmem:[%s166 + $0x3f0] sm:$0xff]
      %v301 = vld [vmem:[%s166 + $0x3f8] sm:$0xff]
      %v302 = vld [vmem:[%s1] sm:$0xff]
      %v303 = vld [vmem:[%s1 + $0x8] sm:$0xff]
      %v304 = vld [vmem:[%s1 + $0x10] sm:$0xff]
      %v305 = vld [vmem:[%s1 + $0x18] sm:$0xff]
      %v306 = vld [vmem:[%s1 + $0x20] sm:$0xf]
      %v307 = vld [vmem:[%s2] sm:$0x1]
      %v309 = vlaneseq
      %v310 = vshrl.u32 %v309, 7
      %v311 = vsub.s32 0, %v310
      %v312 = vrot.slane %v307, %v311
      %vm314 = vcmask 293888
      %v316 = vsel %vm314, %v174, 0
      %v319 = vsel %vm314, %v175, 0
      %v322 = vsel %vm314, %v176, 0
      %v325 = vsel %vm314, %v177, 0
      %v328 = vsel %vm314, %v178, 0
      %v331 = vsel %vm314, %v179, 0
      %v334 = vsel %vm314, %v180, 0
      %v337 = vsel %vm314, %v181, 0
      %v340 = vsel %vm314, %v182, 0
      %v343 = vsel %vm314, %v183, 0
      %v346 = vsel %vm314, %v184, 0
      %v349 = vsel %vm314, %v185, 0
      %v352 = vsel %vm314, %v186, 0
      %v355 = vsel %vm314, %v187, 0
      %v358 = vsel %vm314, %v188, 0
      %v361 = vsel %vm314, %v189, 0
      %v364 = vsel %vm314, %v190, 0
      %v367 = vsel %vm314, %v191, 0
      %v370 = vsel %vm314, %v192, 0
      %v373 = vsel %vm314, %v193, 0
      %v376 = vsel %vm314, %v194, 0
      %v379 = vsel %vm314, %v195, 0
      %v382 = vsel %vm314, %v196, 0
      %v385 = vsel %vm314, %v197, 0
      %v388 = vsel %vm314, %v198, 0
      %v391 = vsel %vm314, %v199, 0
      %v394 = vsel %vm314, %v200, 0
      %v397 = vsel %vm314, %v201, 0
      %v400 = vsel %vm314, %v202, 0
      %v403 = vsel %vm314, %v203, 0
      %v406 = vsel %vm314, %v204, 0
      %v409 = vsel %vm314, %v205, 0
      %v412 = vsel %vm314, %v206, 0
      %v415 = vsel %vm314, %v207, 0
      %v418 = vsel %vm314, %v208, 0
      %v421 = vsel %vm314, %v209, 0
      %v424 = vsel %vm314, %v210, 0
      %v427 = vsel %vm314, %v211, 0
      %v430 = vsel %vm314, %v212, 0
      %v433 = vsel %vm314, %v213, 0
      %v436 = vsel %vm314, %v214, 0
      %v439 = vsel %vm314, %v215, 0
      %v442 = vsel %vm314, %v216, 0
      %v445 = vsel %vm314, %v217, 0
      %v448 = vsel %vm314, %v218, 0
      %v451 = vsel %vm314, %v219, 0
      %v454 = vsel %vm314, %v220, 0
      %v457 = vsel %vm314, %v221, 0
      %v460 = vsel %vm314, %v222, 0
      %v463 = vsel %vm314, %v223, 0
      %v466 = vsel %vm314, %v224, 0
      %v469 = vsel %vm314, %v225, 0
      %v472 = vsel %vm314, %v226, 0
      %v475 = vsel %vm314, %v227, 0
      %v478 = vsel %vm314, %v228, 0
      %v481 = vsel %vm314, %v229, 0
      %v484 = vsel %vm314, %v230, 0
      %v487 = vsel %vm314, %v231, 0
      %v490 = vsel %vm314, %v232, 0
      %v493 = vsel %vm314, %v233, 0
      %v496 = vsel %vm314, %v234, 0
      %v499 = vsel %vm314, %v235, 0
      %v502 = vsel %vm314, %v236, 0
      %v505 = vsel %vm314, %v237, 0
      %v508 = vsel %vm314, %v238, 0
      %v511 = vsel %vm314, %v239, 0
      %v514 = vsel %vm314, %v240, 0
      %v517 = vsel %vm314, %v241, 0
      %v520 = vsel %vm314, %v242, 0
      %v523 = vsel %vm314, %v243, 0
      %v526 = vsel %vm314, %v244, 0
      %v529 = vsel %vm314, %v245, 0
      %v532 = vsel %vm314, %v246, 0
      %v535 = vsel %vm314, %v247, 0
      %v538 = vsel %vm314, %v248, 0
      %v541 = vsel %vm314, %v249, 0
      %v544 = vsel %vm314, %v250, 0
      %v547 = vsel %vm314, %v251, 0
      %v550 = vsel %vm314, %v252, 0
      %v553 = vsel %vm314, %v253, 0
      %v556 = vsel %vm314, %v254, 0
      %v559 = vsel %vm314, %v255, 0
      %v562 = vsel %vm314, %v256, 0
      %v565 = vsel %vm314, %v257, 0
      %v568 = vsel %vm314, %v258, 0
      %v571 = vsel %vm314, %v259, 0
      %v574 = vsel %vm314, %v260, 0
      %v577 = vsel %vm314, %v261, 0
      %v580 = vsel %vm314, %v262, 0
      %v583 = vsel %vm314, %v263, 0
      %v586 = vsel %vm314, %v264, 0
      %v589 = vsel %vm314, %v265, 0
      %v592 = vsel %vm314, %v266, 0
      %v595 = vsel %vm314, %v267, 0
      %v598 = vsel %vm314, %v268, 0
      %v601 = vsel %vm314, %v269, 0
      %v604 = vsel %vm314, %v270, 0
      %v607 = vsel %vm314, %v271, 0
      %v610 = vsel %vm314, %v272, 0
      %v613 = vsel %vm314, %v273, 0
      %v616 = vsel %vm314, %v274, 0
      %v619 = vsel %vm314, %v275, 0
      %v622 = vsel %vm314, %v276, 0
      %v625 = vsel %vm314, %v277, 0
      %v628 = vsel %vm314, %v278, 0
      %v631 = vsel %vm314, %v279, 0
      %v634 = vsel %vm314, %v280, 0
      %v637 = vsel %vm314, %v281, 0
      %v640 = vsel %vm314, %v282, 0
      %v643 = vsel %vm314, %v283, 0
      %v646 = vsel %vm314, %v284, 0
      %v649 = vsel %vm314, %v285, 0
      %v652 = vsel %vm314, %v286, 0
      %v655 = vsel %vm314, %v287, 0
      %v658 = vsel %vm314, %v288, 0
      %v661 = vsel %vm314, %v289, 0
      %v664 = vsel %vm314, %v290, 0
      %v667 = vsel %vm314, %v291, 0
      %v670 = vsel %vm314, %v292, 0
      %v673 = vsel %vm314, %v293, 0
      %v676 = vsel %vm314, %v294, 0
      %v679 = vsel %vm314, %v295, 0
      %v682 = vsel %vm314, %v296, 0
      %v685 = vsel %vm314, %v297, 0
      %v688 = vsel %vm314, %v298, 0
      %v691 = vsel %vm314, %v299, 0
      %v694 = vsel %vm314, %v300, 0
      %v697 = vsel %vm314, %v301, 0
      %vm699 = vcmask 1043456
      %v701 = vsel %vm699, %v306, 0
      %703 = vmatprep.subr.mxu0 0.0
      %704 = vmatpush1.msra.mxu0 %v302
      %705 = vmatprep.subr.mxu0 0.0
      %706 = vmatpush1.msra.mxu0 %v303
      %707 = vmatprep.subr.mxu0 0.0
      %708 = vmatpush1.msra.mxu0 %v304
      %709 = vmatprep.subr.mxu0 0.0
      %710 = vmatpush1.msra.mxu0 %v305
      %711 = vmatprep.subr.mxu0 0.0
      %712 = vmatpush1.msra.mxu0 %v701
      %713 = vmatprep.subr.mxu0 0.0
      %714 = vmatpush1.msra.mxu0 0.0
      %715 = vmatprep.subr.mxu0 0.0
      %716 = vmatpush1.msra.mxu0 0.0
      %717 = vmatprep.subr.mxu0 0.0
      %718 = vmatpush1.msra.mxu0 0.0
      %719 = vmatprep.subr.mxu0 0.0
      %720 = vmatpush1.msra.mxu0 0.0
      %721 = vmatprep.subr.mxu0 0.0
      %722 = vmatpush1.msra.mxu0 0.0
      %723 = vmatprep.subr.mxu0 0.0
      %724 = vmatpush1.msra.mxu0 0.0
      %725 = vmatprep.subr.mxu0 0.0
      %726 = vmatpush1.msra.mxu0 0.0
      %727 = vmatprep.subr.mxu0 0.0
      %728 = vmatpush1.msra.mxu0 0.0
      %729 = vmatprep.subr.mxu0 0.0
      %730 = vmatpush1.msra.mxu0 0.0
      %731 = vmatprep.subr.mxu0 0.0
      %732 = vmatpush1.msra.mxu0 0.0
      %733 = vmatprep.subr.mxu0 0.0
      %734 = vmatpush1.msra.mxu0 0.0
      %735 = vmatprep.subr.mxu0 0.0
      %736 = vmatpush1.msra.mxu0 0.0
      %737 = vmatprep.subr.mxu0 0.0
      %738 = vmatpush1.msra.mxu0 0.0
      %739 = vmatprep.subr.mxu0 0.0
      %740 = vmatpush1.msra.mxu0 0.0
      %741 = vmatprep.subr.mxu0 0.0
      %742 = vmatpush1.msra.mxu0 0.0
      %743 = vmatprep.subr.mxu0 0.0
      %744 = vmatpush1.msra.mxu0 0.0
      %745 = vmatprep.subr.mxu0 0.0
      %746 = vmatpush1.msra.mxu0 0.0
      %747 = vmatprep.subr.mxu0 0.0
      %748 = vmatpush1.msra.mxu0 0.0
      %749 = vmatprep.subr.mxu0 0.0
      %750 = vmatpush1.msra.mxu0 0.0
      %751 = vmatprep.subr.mxu0 0.0
      %752 = vmatpush1.msra.mxu0 0.0
      %753 = vmatprep.subr.mxu0 0.0
      %754 = vmatpush1.msra.mxu0 0.0
      %755 = vmatprep.subr.mxu0 0.0
      %756 = vmatpush1.msra.mxu0 0.0
      %757 = vmatprep.subr.mxu0 0.0
      %758 = vmatpush1.msra.mxu0 0.0
      %759 = vmatprep.subr.mxu0 0.0
      %760 = vmatpush1.msra.mxu0 0.0
      %761 = vmatprep.subr.mxu0 0.0
      %762 = vmatpush1.msra.mxu0 0.0
      %763 = vmatprep.subr.mxu0 0.0
      %764 = vmatpush1.msra.mxu0 0.0
      %765 = vmatprep.subr.mxu0 0.0
      %766 = vmatpush1.msra.mxu0 0.0
      %767 = vmatprep.mubr.f32.mxu0 0.0
      %768 = vmatmul.mubr.f32.gmra.mrb[0].mxu0 %v316
      %v769 = vpop.f32.mrb[0].mxu0
      %v770 = vadd.f32 %v312, %v769
      %v771 = vpop.f32.mrb[0].mxu0
      %772 = vmatprep.mubr.f32.mxu0 0.0
      %773 = vmatmul.mubr.f32.gmra.mrb[0].mxu0 %v319
      %v774 = vpop.f32.mrb[0].mxu0
      %v775 = vadd.f32 %v312, %v774
      %v776 = vpop.f32.mrb[0].mxu0
      %777 = vmatprep.mubr.f32.mxu0 0.0
      %778 = vmatmul.mubr.f32.gmra.mrb[0].mxu0 %v322
      %v779 = vpop.f32.mrb[0].mxu0
      %v780 = vadd.f32 %v312, %v779
      %v781 = vpop.f32.mrb[0].mxu0
      %782 = vmatprep.mubr.f32.mxu0 0.0
      %783 = vmatmul.mubr.f32.gmra.mrb[0].mxu0 %v325
      %v784 = vpop.f32.mrb[0].mxu0
      %v785 = vadd.f32 %v312, %v784
      %v786 = vpop.f32.mrb[0].mxu0
      %787 = vmatprep.mubr.f32.mxu0 0.0
      %788 = vmatmul.mubr.f32.gmra.mrb[0].mxu0 %v328
      %v789 = vpop.f32.mrb[0].mxu0
      %v790 = vadd.f32 %v312, %v789
      %v791 = vpop.f32.mrb[0].mxu0
      %792 = vmatprep.mubr.f32.mxu0 0.0
      %793 = vmatmul.mubr.f32.gmra.mrb[0].mxu0 %v331
      %v794 = vpop.f32.mrb[0].mxu0
      %v795 = vadd.f32 %v312, %v794
      %v796 = vpop.f32.mrb[0].mxu0
      %797 = vmatprep.mubr.f32.mxu0 0.0
      %798 = vmatmul.mubr.f32.gmra.mrb[0].mxu0 %v334
      %v799 = vpop.f32.mrb[0].mxu0
      %v800 = vadd.f32 %v312, %v799
      %v801 = vpop.f32.mrb[0].mxu0
      %802 = vmatprep.mubr.f32.mxu0 0.0
      %803 = vmatmul.mubr.f32.gmra.mrb[0].mxu0 %v337
      %v804 = vpop.f32.mrb[0].mxu0
      %v805 = vadd.f32 %v312, %v804
      %v806 = vpop.f32.mrb[0].mxu0
      %807 = vmatprep.mubr.f32.mxu0 0.0
      %808 = vmatmul.mubr.f32.gmra.mrb[0].mxu0 %v340
      %v809 = vpop.f32.mrb[0].mxu0
      %v810 = vadd.f32 %v312, %v809
      %v811 = vpop.f32.mrb[0].mxu0
      %812 = vmatprep.mubr.f32.mxu0 0.0
      %813 = vmatmul.mubr.f32.gmra.mrb[0].mxu0 %v343
      %v814 = vpop.f32.mrb[0].mxu0
      %v815 = vadd.f32 %v312, %v814
      %v816 = vpop.f32.mrb[0].mxu0
      %817 = vmatprep.mubr.f32.mxu0 0.0
      %818 = vmatmul.mubr.f32.gmra.mrb[0].mxu0 %v346
      %v819 = vpop.f32.mrb[0].mxu0
      %v820 = vadd.f32 %v312, %v819
      %v821 = vpop.f32.mrb[0].mxu0
      %822 = vmatprep.mubr.f32.mxu0 0.0
      %823 = vmatmul.mubr.f32.gmra.mrb[0].mxu0 %v349
      %v824 = vpop.f32.mrb[0].mxu0
      %v825 = vadd.f32 %v312, %v824
      %v826 = vpop.f32.mrb[0].mxu0
      %827 = vmatprep.mubr.f32.mxu0 0.0
      %828 = vmatmul.mubr.f32.gmra.mrb[0].mxu0 %v352
      %v829 = vpop.f32.mrb[0].mxu0
      %v830 = vadd.f32 %v312, %v829
      %v831 = vpop.f32.mrb[0].mxu0
      %832 = vmatprep.mubr.f32.mxu0 0.0
      %833 = vmatmul.mubr.f32.gmra.mrb[0].mxu0 %v355
      %v834 = vpop.f32.mrb[0].mxu0
      %v835 = vadd.f32 %v312, %v834
      %v836 = vpop.f32.mrb[0].mxu0
      %837 = vmatprep.mubr.f32.mxu0 0.0
      %838 = vmatmul.mubr.f32.gmra.mrb[0].mxu0 %v358
      %v839 = vpop.f32.mrb[0].mxu0
      %v840 = vadd.f32 %v312, %v839
      %v841 = vpop.f32.mrb[0].mxu0
      %842 = vmatprep.mubr.f32.mxu0 0.0
      %843 = vmatmul.mubr.f32.gmra.mrb[0].mxu0 %v361
      %v844 = vpop.f32.mrb[0].mxu0
      %v845 = vadd.f32 %v312, %v844
      %v846 = vpop.f32.mrb[0].mxu0
      %847 = vmatprep.mubr.f32.mxu0 0.0
      %848 = vmatmul.mubr.f32.gmra.mrb[0].mxu0 %v364
      %v849 = vpop.f32.mrb[0].mxu0
      %v850 = vadd.f32 %v312, %v849
      %v851 = vpop.f32.mrb[0].mxu0
      %852 = vmatprep.mubr.f32.mxu0 0.0
      %853 = vmatmul.mubr.f32.gmra.mrb[0].mxu0 %v367
      %v854 = vpop.f32.mrb[0].mxu0
      %v855 = vadd.f32 %v312, %v854
      %v856 = vpop.f32.mrb[0].mxu0
      %857 = vmatprep.mubr.f32.mxu0 0.0
      %858 = vmatmul.mubr.f32.gmra.mrb[0].mxu0 %v370
      %v859 = vpop.f32.mrb[0].mxu0
      %v860 = vadd.f32 %v312, %v859
      %v861 = vpop.f32.mrb[0].mxu0
      %862 = vmatprep.mubr.f32.mxu0 0.0
      %863 = vmatmul.mubr.f32.gmra.mrb[0].mxu0 %v373
      %v864 = vpop.f32.mrb[0].mxu0
      %v865 = vadd.f32 %v312, %v864
      %v866 = vpop.f32.mrb[0].mxu0
      %867 = vmatprep.mubr.f32.mxu0 0.0
      %868 = vmatmul.mubr.f32.gmra.mrb[0].mxu0 %v376
      %v869 = vpop.f32.mrb[0].mxu0
      %v870 = vadd.f32 %v312, %v869
      %v871 = vpop.f32.mrb[0].mxu0
      %872 = vmatprep.mubr.f32.mxu0 0.0
      %873 = vmatmul.mubr.f32.gmra.mrb[0].mxu0 %v379
      %v874 = vpop.f32.mrb[0].mxu0
      %v875 = vadd.f32 %v312, %v874
      %v876 = vpop.f32.mrb[0].mxu0
      %877 = vmatprep.mubr.f32.mxu0 0.0
      %878 = vmatmul.mubr.f32.gmra.mrb[0].mxu0 %v382
      %v879 = vpop.f32.mrb[0].mxu0
      %v880 = vadd.f32 %v312, %v879
      %v881 = vpop.f32.mrb[0].mxu0
      %882 = vmatprep.mubr.f32.mxu0 0.0
      %883 = vmatmul.mubr.f32.gmra.mrb[0].mxu0 %v385
      %v884 = vpop.f32.mrb[0].mxu0
      %v885 = vadd.f32 %v312, %v884
      %v886 = vpop.f32.mrb[0].mxu0
      %887 = vmatprep.mubr.f32.mxu0 0.0
      %888 = vmatmul.mubr.f32.gmra.mrb[0].mxu0 %v388
      %v889 = vpop.f32.mrb[0].mxu0
      %v890 = vadd.f32 %v312, %v889
      %v891 = vpop.f32.mrb[0].mxu0
      %892 = vmatprep.mubr.f32.mxu0 0.0
      %893 = vmatmul.mubr.f32.gmra.mrb[0].mxu0 %v391
      %v894 = vpop.f32.mrb[0].mxu0
      %v895 = vadd.f32 %v312, %v894
      %v896 = vpop.f32.mrb[0].mxu0
      %897 = vmatprep.mubr.f32.mxu0 0.0
      %898 = vmatmul.mubr.f32.gmra.mrb[0].mxu0 %v394
      %v899 = vpop.f32.mrb[0].mxu0
      %v900 = vadd.f32 %v312, %v899
      %v901 = vpop.f32.mrb[0].mxu0
      %902 = vmatprep.mubr.f32.mxu0 0.0
      %903 = vmatmul.mubr.f32.gmra.mrb[0].mxu0 %v397
      %v904 = vpop.f32.mrb[0].mxu0
      %v905 = vadd.f32 %v312, %v904
      %v906 = vpop.f32.mrb[0].mxu0
      %907 = vmatprep.mubr.f32.mxu0 0.0
      %908 = vmatmul.mubr.f32.gmra.mrb[0].mxu0 %v400
      %v909 = vpop.f32.mrb[0].mxu0
      %v910 = vadd.f32 %v312, %v909
      %v911 = vpop.f32.mrb[0].mxu0
      %912 = vmatprep.mubr.f32.mxu0 0.0
      %913 = vmatmul.mubr.f32.gmra.mrb[0].mxu0 %v403
      %v914 = vpop.f32.mrb[0].mxu0
      %v915 = vadd.f32 %v312, %v914
      %v916 = vpop.f32.mrb[0].mxu0
      %917 = vmatprep.mubr.f32.mxu0 0.0
      %918 = vmatmul.mubr.f32.gmra.mrb[0].mxu0 %v406
      %v919 = vpop.f32.mrb[0].mxu0
      %v920 = vadd.f32 %v312, %v919
      %v921 = vpop.f32.mrb[0].mxu0
      %922 = vmatprep.mubr.f32.mxu0 0.0
      %923 = vmatmul.mubr.f32.gmra.mrb[0].mxu0 %v409
      %v924 = vpop.f32.mrb[0].mxu0
      %v925 = vadd.f32 %v312, %v924
      %v926 = vpop.f32.mrb[0].mxu0
      %927 = vmatprep.mubr.f32.mxu0 0.0
      %928 = vmatmul.mubr.f32.gmra.mrb[0].mxu0 %v412
      %v929 = vpop.f32.mrb[0].mxu0
      %v930 = vadd.f32 %v312, %v929
      %v931 = vpop.f32.mrb[0].mxu0
      %932 = vmatprep.mubr.f32.mxu0 0.0
      %933 = vmatmul.mubr.f32.gmra.mrb[0].mxu0 %v415
      %v934 = vpop.f32.mrb[0].mxu0
      %v935 = vadd.f32 %v312, %v934
      %v936 = vpop.f32.mrb[0].mxu0
      %937 = vmatprep.mubr.f32.mxu0 0.0
      %938 = vmatmul.mubr.f32.gmra.mrb[0].mxu0 %v418
      %v939 = vpop.f32.mrb[0].mxu0
      %v940 = vadd.f32 %v312, %v939
      %v941 = vpop.f32.mrb[0].mxu0
      %942 = vmatprep.mubr.f32.mxu0 0.0
      %943 = vmatmul.mubr.f32.gmra.mrb[0].mxu0 %v421
      %v944 = vpop.f32.mrb[0].mxu0
      %v945 = vadd.f32 %v312, %v944
      %v946 = vpop.f32.mrb[0].mxu0
      %947 = vmatprep.mubr.f32.mxu0 0.0
      %948 = vmatmul.mubr.f32.gmra.mrb[0].mxu0 %v424
      %v949 = vpop.f32.mrb[0].mxu0
      %v950 = vadd.f32 %v312, %v949
      %v951 = vpop.f32.mrb[0].mxu0
      %952 = vmatprep.mubr.f32.mxu0 0.0
      %953 = vmatmul.mubr.f32.gmra.mrb[0].mxu0 %v427
      %v954 = vpop.f32.mrb[0].mxu0
      %v955 = vadd.f32 %v312, %v954
      %v956 = vpop.f32.mrb[0].mxu0
      %957 = vmatprep.mubr.f32.mxu0 0.0
      %958 = vmatmul.mubr.f32.gmra.mrb[0].mxu0 %v430
      %v959 = vpop.f32.mrb[0].mxu0
      %v960 = vadd.f32 %v312, %v959
      %v961 = vpop.f32.mrb[0].mxu0
      %962 = vmatprep.mubr.f32.mxu0 0.0
      %963 = vmatmul.mubr.f32.gmra.mrb[0].mxu0 %v433
      %v964 = vpop.f32.mrb[0].mxu0
      %v965 = vadd.f32 %v312, %v964
      %v966 = vpop.f32.mrb[0].mxu0
      %967 = vmatprep.mubr.f32.mxu0 0.0
      %968 = vmatmul.mubr.f32.gmra.mrb[0].mxu0 %v436
      %v969 = vpop.f32.mrb[0].mxu0
      %v970 = vadd.f32 %v312, %v969
      %v971 = vpop.f32.mrb[0].mxu0
      %972 = vmatprep.mubr.f32.mxu0 0.0
      %973 = vmatmul.mubr.f32.gmra.mrb[0].mxu0 %v439
      %v974 = vpop.f32.mrb[0].mxu0
      %v975 = vadd.f32 %v312, %v974
      %v976 = vpop.f32.mrb[0].mxu0
      %977 = vmatprep.mubr.f32.mxu0 0.0
      %978 = vmatmul.mubr.f32.gmra.mrb[0].mxu0 %v442
      %v979 = vpop.f32.mrb[0].mxu0
      %v980 = vadd.f32 %v312, %v979
      %v981 = vpop.f32.mrb[0].mxu0
      %982 = vmatprep.mubr.f32.mxu0 0.0
      %983 = vmatmul.mubr.f32.gmra.mrb[0].mxu0 %v445
      %v984 = vpop.f32.mrb[0].mxu0
      %v985 = vadd.f32 %v312, %v984
      %v986 = vpop.f32.mrb[0].mxu0
      %987 = vmatprep.mubr.f32.mxu0 0.0
      %988 = vmatmul.mubr.f32.gmra.mrb[0].mxu0 %v448
      %v989 = vpop.f32.mrb[0].mxu0
      %v990 = vadd.f32 %v312, %v989
      %v991 = vpop.f32.mrb[0].mxu0
      %992 = vmatprep.mubr.f32.mxu0 0.0
      %993 = vmatmul.mubr.f32.gmra.mrb[0].mxu0 %v451
      %v994 = vpop.f32.mrb[0].mxu0
      %v995 = vadd.f32 %v312, %v994
      %v996 = vpop.f32.mrb[0].mxu0
      %997 = vmatprep.mubr.f32.mxu0 0.0
      %998 = vmatmul.mubr.f32.gmra.mrb[0].mxu0 %v454
      %v999 = vpop.f32.mrb[0].mxu0
      %v1000 = vadd.f32 %v312, %v999
      %v1001 = vpop.f32.mrb[0].mxu0
      %1002 = vmatprep.mubr.f32.mxu0 0.0
      %1003 = vmatmul.mubr.f32.gmra.mrb[0].mxu0 %v457
      %v1004 = vpop.f32.mrb[0].mxu0
      %v1005 = vadd.f32 %v312, %v1004
      %v1006 = vpop.f32.mrb[0].mxu0
      %1007 = vmatprep.mubr.f32.mxu0 0.0
      %1008 = vmatmul.mubr.f32.gmra.mrb[0].mxu0 %v460
      %v1009 = vpop.f32.mrb[0].mxu0
      %v1010 = vadd.f32 %v312, %v1009
      %v1011 = vpop.f32.mrb[0].mxu0
      %1012 = vmatprep.mubr.f32.mxu0 0.0
      %1013 = vmatmul.mubr.f32.gmra.mrb[0].mxu0 %v463
      %v1014 = vpop.f32.mrb[0].mxu0
      %v1015 = vadd.f32 %v312, %v1014
      %v1016 = vpop.f32.mrb[0].mxu0
      %1017 = vmatprep.mubr.f32.mxu0 0.0
      %1018 = vmatmul.mubr.f32.gmra.mrb[0].mxu0 %v466
      %v1019 = vpop.f32.mrb[0].mxu0
      %v1020 = vadd.f32 %v312, %v1019
      %v1021 = vpop.f32.mrb[0].mxu0
      %1022 = vmatprep.mubr.f32.mxu0 0.0
      %1023 = vmatmul.mubr.f32.gmra.mrb[0].mxu0 %v469
      %v1024 = vpop.f32.mrb[0].mxu0
      %v1025 = vadd.f32 %v312, %v1024
      %v1026 = vpop.f32.mrb[0].mxu0
      %1027 = vmatprep.mubr.f32.mxu0 0.0
      %1028 = vmatmul.mubr.f32.gmra.mrb[0].mxu0 %v472
      %v1029 = vpop.f32.mrb[0].mxu0
      %v1030 = vadd.f32 %v312, %v1029
      %v1031 = vpop.f32.mrb[0].mxu0
      %1032 = vmatprep.mubr.f32.mxu0 0.0
      %1033 = vmatmul.mubr.f32.gmra.mrb[0].mxu0 %v475
      %v1034 = vpop.f32.mrb[0].mxu0
      %v1035 = vadd.f32 %v312, %v1034
      %v1036 = vpop.f32.mrb[0].mxu0
      %1037 = vmatprep.mubr.f32.mxu0 0.0
      %1038 = vmatmul.mubr.f32.gmra.mrb[0].mxu0 %v478
      %v1039 = vpop.f32.mrb[0].mxu0
      %v1040 = vadd.f32 %v312, %v1039
      %v1041 = vpop.f32.mrb[0].mxu0
      %1042 = vmatprep.mubr.f32.mxu0 0.0
      %1043 = vmatmul.mubr.f32.gmra.mrb[0].mxu0 %v481
      %v1044 = vpop.f32.mrb[0].mxu0
      %v1045 = vadd.f32 %v312, %v1044
      %v1046 = vpop.f32.mrb[0].mxu0
      %1047 = vmatprep.mubr.f32.mxu0 0.0
      %1048 = vmatmul.mubr.f32.gmra.mrb[0].mxu0 %v484
      %v1049 = vpop.f32.mrb[0].mxu0
      %v1050 = vadd.f32 %v312, %v1049
      %v1051 = vpop.f32.mrb[0].mxu0
      %1052 = vmatprep.mubr.f32.mxu0 0.0
      %1053 = vmatmul.mubr.f32.gmra.mrb[0].mxu0 %v487
      %v1054 = vpop.f32.mrb[0].mxu0
      %v1055 = vadd.f32 %v312, %v1054
      %v1056 = vpop.f32.mrb[0].mxu0
      %1057 = vmatprep.mubr.f32.mxu0 0.0
      %1058 = vmatmul.mubr.f32.gmra.mrb[0].mxu0 %v490
      %v1059 = vpop.f32.mrb[0].mxu0
      %v1060 = vadd.f32 %v312, %v1059
      %v1061 = vpop.f32.mrb[0].mxu0
      %1062 = vmatprep.mubr.f32.mxu0 0.0
      %1063 = vmatmul.mubr.f32.gmra.mrb[0].mxu0 %v493
      %v1064 = vpop.f32.mrb[0].mxu0
      %v1065 = vadd.f32 %v312, %v1064
      %v1066 = vpop.f32.mrb[0].mxu0
      %1067 = vmatprep.mubr.f32.mxu0 0.0
      %1068 = vmatmul.mubr.f32.gmra.mrb[0].mxu0 %v496
      %v1069 = vpop.f32.mrb[0].mxu0
      %v1070 = vadd.f32 %v312, %v1069
      %v1071 = vpop.f32.mrb[0].mxu0
      %1072 = vmatprep.mubr.f32.mxu0 0.0
      %1073 = vmatmul.mubr.f32.gmra.mrb[0].mxu0 %v499
      %v1074 = vpop.f32.mrb[0].mxu0
      %v1075 = vadd.f32 %v312, %v1074
      %v1076 = vpop.f32.mrb[0].mxu0
      %1077 = vmatprep.mubr.f32.mxu0 0.0
      %1078 = vmatmul.mubr.f32.gmra.mrb[0].mxu0 %v502
      %v1079 = vpop.f32.mrb[0].mxu0
      %v1080 = vadd.f32 %v312, %v1079
      %v1081 = vpop.f32.mrb[0].mxu0
      %1082 = vmatprep.mubr.f32.mxu0 0.0
      %1083 = vmatmul.mubr.f32.gmra.mrb[0].mxu0 %v505
      %v1084 = vpop.f32.mrb[0].mxu0
      %v1085 = vadd.f32 %v312, %v1084
      %v1086 = vpop.f32.mrb[0].mxu0
      %1087 = vmatprep.mubr.f32.mxu0 0.0
      %1088 = vmatmul.mubr.f32.gmra.mrb[0].mxu0 %v508
      %v1089 = vpop.f32.mrb[0].mxu0
      %v1090 = vadd.f32 %v312, %v1089
      %v1091 = vpop.f32.mrb[0].mxu0
      %1092 = vmatprep.mubr.f32.mxu0 0.0
      %1093 = vmatmul.mubr.f32.gmra.mrb[0].mxu0 %v511
      %v1094 = vpop.f32.mrb[0].mxu0
      %v1095 = vadd.f32 %v312, %v1094
      %v1096 = vpop.f32.mrb[0].mxu0
      %1097 = vmatprep.mubr.f32.mxu0 0.0
      %1098 = vmatmul.mubr.f32.gmra.mrb[0].mxu0 %v514
      %v1099 = vpop.f32.mrb[0].mxu0
      %v1100 = vadd.f32 %v312, %v1099
      %v1101 = vpop.f32.mrb[0].mxu0
      %1102 = vmatprep.mubr.f32.mxu0 0.0
      %1103 = vmatmul.mubr.f32.gmra.mrb[0].mxu0 %v517
      %v1104 = vpop.f32.mrb[0].mxu0
      %v1105 = vadd.f32 %v312, %v1104
      %v1106 = vpop.f32.mrb[0].mxu0
      %1107 = vmatprep.mubr.f32.mxu0 0.0
      %1108 = vmatmul.mubr.f32.gmra.mrb[0].mxu0 %v520
      %v1109 = vpop.f32.mrb[0].mxu0
      %v1110 = vadd.f32 %v312, %v1109
      %v1111 = vpop.f32.mrb[0].mxu0
      %1112 = vmatprep.mubr.f32.mxu0 0.0
      %1113 = vmatmul.mubr.f32.gmra.mrb[0].mxu0 %v523
      %v1114 = vpop.f32.mrb[0].mxu0
      %v1115 = vadd.f32 %v312, %v1114
      %v1116 = vpop.f32.mrb[0].mxu0
      %1117 = vmatprep.mubr.f32.mxu0 0.0
      %1118 = vmatmul.mubr.f32.gmra.mrb[0].mxu0 %v526
      %v1119 = vpop.f32.mrb[0].mxu0
      %v1120 = vadd.f32 %v312, %v1119
      %v1121 = vpop.f32.mrb[0].mxu0
      %1122 = vmatprep.mubr.f32.mxu0 0.0
      %1123 = vmatmul.mubr.f32.gmra.mrb[0].mxu0 %v529
      %v1124 = vpop.f32.mrb[0].mxu0
      %v1125 = vadd.f32 %v312, %v1124
      %v1126 = vpop.f32.mrb[0].mxu0
      %1127 = vmatprep.mubr.f32.mxu0 0.0
      %1128 = vmatmul.mubr.f32.gmra.mrb[0].mxu0 %v532
      %v1129 = vpop.f32.mrb[0].mxu0
      %v1130 = vadd.f32 %v312, %v1129
      %v1131 = vpop.f32.mrb[0].mxu0
      %1132 = vmatprep.mubr.f32.mxu0 0.0
      %1133 = vmatmul.mubr.f32.gmra.mrb[0].mxu0 %v535
      %v1134 = vpop.f32.mrb[0].mxu0
      %v1135 = vadd.f32 %v312, %v1134
      %v1136 = vpop.f32.mrb[0].mxu0
      %1137 = vmatprep.mubr.f32.mxu0 0.0
      %1138 = vmatmul.mubr.f32.gmra.mrb[0].mxu0 %v538
      %v1139 = vpop.f32.mrb[0].mxu0
      %v1140 = vadd.f32 %v312, %v1139
      %v1141 = vpop.f32.mrb[0].mxu0
      %1142 = vmatprep.mubr.f32.mxu0 0.0
      %1143 = vmatmul.mubr.f32.gmra.mrb[0].mxu0 %v541
      %v1144 = vpop.f32.mrb[0].mxu0
      %v1145 = vadd.f32 %v312, %v1144
      %v1146 = vpop.f32.mrb[0].mxu0
      %1147 = vmatprep.mubr.f32.mxu0 0.0
      %1148 = vmatmul.mubr.f32.gmra.mrb[0].mxu0 %v544
      %v1149 = vpop.f32.mrb[0].mxu0
      %v1150 = vadd.f32 %v312, %v1149
      %v1151 = vpop.f32.mrb[0].mxu0
      %1152 = vmatprep.mubr.f32.mxu0 0.0
      %1153 = vmatmul.mubr.f32.gmra.mrb[0].mxu0 %v547
      %v1154 = vpop.f32.mrb[0].mxu0
      %v1155 = vadd.f32 %v312, %v1154
      %v1156 = vpop.f32.mrb[0].mxu0
      %1157 = vmatprep.mubr.f32.mxu0 0.0
      %1158 = vmatmul.mubr.f32.gmra.mrb[0].mxu0 %v550
      %v1159 = vpop.f32.mrb[0].mxu0
      %v1160 = vadd.f32 %v312, %v1159
      %v1161 = vpop.f32.mrb[0].mxu0
      %1162 = vmatprep.mubr.f32.mxu0 0.0
      %1163 = vmatmul.mubr.f32.gmra.mrb[0].mxu0 %v553
      %v1164 = vpop.f32.mrb[0].mxu0
      %v1165 = vadd.f32 %v312, %v1164
      %v1166 = vpop.f32.mrb[0].mxu0
      %1167 = vmatprep.mubr.f32.mxu0 0.0
      %1168 = vmatmul.mubr.f32.gmra.mrb[0].mxu0 %v556
      %v1169 = vpop.f32.mrb[0].mxu0
      %v1170 = vadd.f32 %v312, %v1169
      %v1171 = vpop.f32.mrb[0].mxu0
      %1172 = vmatprep.mubr.f32.mxu0 0.0
      %1173 = vmatmul.mubr.f32.gmra.mrb[0].mxu0 %v559
      %v1174 = vpop.f32.mrb[0].mxu0
      %v1175 = vadd.f32 %v312, %v1174
      %v1176 = vpop.f32.mrb[0].mxu0
      %1177 = vmatprep.mubr.f32.mxu0 0.0
      %1178 = vmatmul.mubr.f32.gmra.mrb[0].mxu0 %v562
      %v1179 = vpop.f32.mrb[0].mxu0
      %v1180 = vadd.f32 %v312, %v1179
      %v1181 = vpop.f32.mrb[0].mxu0
      %1182 = vmatprep.mubr.f32.mxu0 0.0
      %1183 = vmatmul.mubr.f32.gmra.mrb[0].mxu0 %v565
      %v1184 = vpop.f32.mrb[0].mxu0
      %v1185 = vadd.f32 %v312, %v1184
      %v1186 = vpop.f32.mrb[0].mxu0
      %1187 = vmatprep.mubr.f32.mxu0 0.0
      %1188 = vmatmul.mubr.f32.gmra.mrb[0].mxu0 %v568
      %v1189 = vpop.f32.mrb[0].mxu0
      %v1190 = vadd.f32 %v312, %v1189
      %v1191 = vpop.f32.mrb[0].mxu0
      %1192 = vmatprep.mubr.f32.mxu0 0.0
      %1193 = vmatmul.mubr.f32.gmra.mrb[0].mxu0 %v571
      %v1194 = vpop.f32.mrb[0].mxu0
      %v1195 = vadd.f32 %v312, %v1194
      %v1196 = vpop.f32.mrb[0].mxu0
      %1197 = vmatprep.mubr.f32.mxu0 0.0
      %1198 = vmatmul.mubr.f32.gmra.mrb[0].mxu0 %v574
      %v1199 = vpop.f32.mrb[0].mxu0
      %v1200 = vadd.f32 %v312, %v1199
      %v1201 = vpop.f32.mrb[0].mxu0
      %1202 = vmatprep.mubr.f32.mxu0 0.0
      %1203 = vmatmul.mubr.f32.gmra.mrb[0].mxu0 %v577
      %v1204 = vpop.f32.mrb[0].mxu0
      %v1205 = vadd.f32 %v312, %v1204
      %v1206 = vpop.f32.mrb[0].mxu0
      %1207 = vmatprep.mubr.f32.mxu0 0.0
      %1208 = vmatmul.mubr.f32.gmra.mrb[0].mxu0 %v580
      %v1209 = vpop.f32.mrb[0].mxu0
      %v1210 = vadd.f32 %v312, %v1209
      %v1211 = vpop.f32.mrb[0].mxu0
      %1212 = vmatprep.mubr.f32.mxu0 0.0
      %1213 = vmatmul.mubr.f32.gmra.mrb[0].mxu0 %v583
      %v1214 = vpop.f32.mrb[0].mxu0
      %v1215 = vadd.f32 %v312, %v1214
      %v1216 = vpop.f32.mrb[0].mxu0
      %1217 = vmatprep.mubr.f32.mxu0 0.0
      %1218 = vmatmul.mubr.f32.gmra.mrb[0].mxu0 %v586
      %v1219 = vpop.f32.mrb[0].mxu0
      %v1220 = vadd.f32 %v312, %v1219
      %v1221 = vpop.f32.mrb[0].mxu0
      %1222 = vmatprep.mubr.f32.mxu0 0.0
      %1223 = vmatmul.mubr.f32.gmra.mrb[0].mxu0 %v589
      %v1224 = vpop.f32.mrb[0].mxu0
      %v1225 = vadd.f32 %v312, %v1224
      %v1226 = vpop.f32.mrb[0].mxu0
      %1227 = vmatprep.mubr.f32.mxu0 0.0
      %1228 = vmatmul.mubr.f32.gmra.mrb[0].mxu0 %v592
      %v1229 = vpop.f32.mrb[0].mxu0
      %v1230 = vadd.f32 %v312, %v1229
      %v1231 = vpop.f32.mrb[0].mxu0
      %1232 = vmatprep.mubr.f32.mxu0 0.0
      %1233 = vmatmul.mubr.f32.gmra.mrb[0].mxu0 %v595
      %v1234 = vpop.f32.mrb[0].mxu0
      %v1235 = vadd.f32 %v312, %v1234
      %v1236 = vpop.f32.mrb[0].mxu0
      %1237 = vmatprep.mubr.f32.mxu0 0.0
      %1238 = vmatmul.mubr.f32.gmra.mrb[0].mxu0 %v598
      %v1239 = vpop.f32.mrb[0].mxu0
      %v1240 = vadd.f32 %v312, %v1239
      %v1241 = vpop.f32.mrb[0].mxu0
      %1242 = vmatprep.mubr.f32.mxu0 0.0
      %1243 = vmatmul.mubr.f32.gmra.mrb[0].mxu0 %v601
      %v1244 = vpop.f32.mrb[0].mxu0
      %v1245 = vadd.f32 %v312, %v1244
      %v1246 = vpop.f32.mrb[0].mxu0
      %1247 = vmatprep.mubr.f32.mxu0 0.0
      %1248 = vmatmul.mubr.f32.gmra.mrb[0].mxu0 %v604
      %v1249 = vpop.f32.mrb[0].mxu0
      %v1250 = vadd.f32 %v312, %v1249
      %v1251 = vpop.f32.mrb[0].mxu0
      %1252 = vmatprep.mubr.f32.mxu0 0.0
      %1253 = vmatmul.mubr.f32.gmra.mrb[0].mxu0 %v607
      %v1254 = vpop.f32.mrb[0].mxu0
      %v1255 = vadd.f32 %v312, %v1254
      %v1256 = vpop.f32.mrb[0].mxu0
      %1257 = vmatprep.mubr.f32.mxu0 0.0
      %1258 = vmatmul.mubr.f32.gmra.mrb[0].mxu0 %v610
      %v1259 = vpop.f32.mrb[0].mxu0
      %v1260 = vadd.f32 %v312, %v1259
      %v1261 = vpop.f32.mrb[0].mxu0
      %1262 = vmatprep.mubr.f32.mxu0 0.0
      %1263 = vmatmul.mubr.f32.gmra.mrb[0].mxu0 %v613
      %v1264 = vpop.f32.mrb[0].mxu0
      %v1265 = vadd.f32 %v312, %v1264
      %v1266 = vpop.f32.mrb[0].mxu0
      %1267 = vmatprep.mubr.f32.mxu0 0.0
      %1268 = vmatmul.mubr.f32.gmra.mrb[0].mxu0 %v616
      %v1269 = vpop.f32.mrb[0].mxu0
      %v1270 = vadd.f32 %v312, %v1269
      %v1271 = vpop.f32.mrb[0].mxu0
      %1272 = vmatprep.mubr.f32.mxu0 0.0
      %1273 = vmatmul.mubr.f32.gmra.mrb[0].mxu0 %v619
      %v1274 = vpop.f32.mrb[0].mxu0
      %v1275 = vadd.f32 %v312, %v1274
      %v1276 = vpop.f32.mrb[0].mxu0
      %1277 = vmatprep.mubr.f32.mxu0 0.0
      %1278 = vmatmul.mubr.f32.gmra.mrb[0].mxu0 %v622
      %v1279 = vpop.f32.mrb[0].mxu0
      %v1280 = vadd.f32 %v312, %v1279
      %v1281 = vpop.f32.mrb[0].mxu0
      %1282 = vmatprep.mubr.f32.mxu0 0.0
      %1283 = vmatmul.mubr.f32.gmra.mrb[0].mxu0 %v625
      %v1284 = vpop.f32.mrb[0].mxu0
      %v1285 = vadd.f32 %v312, %v1284
      %v1286 = vpop.f32.mrb[0].mxu0
      %1287 = vmatprep.mubr.f32.mxu0 0.0
      %1288 = vmatmul.mubr.f32.gmra.mrb[0].mxu0 %v628
      %v1289 = vpop.f32.mrb[0].mxu0
      %v1290 = vadd.f32 %v312, %v1289
      %v1291 = vpop.f32.mrb[0].mxu0
      %1292 = vmatprep.mubr.f32.mxu0 0.0
      %1293 = vmatmul.mubr.f32.gmra.mrb[0].mxu0 %v631
      %v1294 = vpop.f32.mrb[0].mxu0
      %v1295 = vadd.f32 %v312, %v1294
      %v1296 = vpop.f32.mrb[0].mxu0
      %1297 = vmatprep.mubr.f32.mxu0 0.0
      %1298 = vmatmul.mubr.f32.gmra.mrb[0].mxu0 %v634
      %v1299 = vpop.f32.mrb[0].mxu0
      %v1300 = vadd.f32 %v312, %v1299
      %v1301 = vpop.f32.mrb[0].mxu0
      %1302 = vmatprep.mubr.f32.mxu0 0.0
      %1303 = vmatmul.mubr.f32.gmra.mrb[0].mxu0 %v637
      %v1304 = vpop.f32.mrb[0].mxu0
      %v1305 = vadd.f32 %v312, %v1304
      %v1306 = vpop.f32.mrb[0].mxu0
      %1307 = vmatprep.mubr.f32.mxu0 0.0
      %1308 = vmatmul.mubr.f32.gmra.mrb[0].mxu0 %v640
      %v1309 = vpop.f32.mrb[0].mxu0
      %v1310 = vadd.f32 %v312, %v1309
      %v1311 = vpop.f32.mrb[0].mxu0
      %1312 = vmatprep.mubr.f32.mxu0 0.0
      %1313 = vmatmul.mubr.f32.gmra.mrb[0].mxu0 %v643
      %v1314 = vpop.f32.mrb[0].mxu0
      %v1315 = vadd.f32 %v312, %v1314
      %v1316 = vpop.f32.mrb[0].mxu0
      %1317 = vmatprep.mubr.f32.mxu0 0.0
      %1318 = vmatmul.mubr.f32.gmra.mrb[0].mxu0 %v646
      %v1319 = vpop.f32.mrb[0].mxu0
      %v1320 = vadd.f32 %v312, %v1319
      %v1321 = vpop.f32.mrb[0].mxu0
      %1322 = vmatprep.mubr.f32.mxu0 0.0
      %1323 = vmatmul.mubr.f32.gmra.mrb[0].mxu0 %v649
      %v1324 = vpop.f32.mrb[0].mxu0
      %v1325 = vadd.f32 %v312, %v1324
      %v1326 = vpop.f32.mrb[0].mxu0
      %1327 = vmatprep.mubr.f32.mxu0 0.0
      %1328 = vmatmul.mubr.f32.gmra.mrb[0].mxu0 %v652
      %v1329 = vpop.f32.mrb[0].mxu0
      %v1330 = vadd.f32 %v312, %v1329
      %v1331 = vpop.f32.mrb[0].mxu0
      %1332 = vmatprep.mubr.f32.mxu0 0.0
      %1333 = vmatmul.mubr.f32.gmra.mrb[0].mxu0 %v655
      %v1334 = vpop.f32.mrb[0].mxu0
      %v1335 = vadd.f32 %v312, %v1334
      %v1336 = vpop.f32.mrb[0].mxu0
      %1337 = vmatprep.mubr.f32.mxu0 0.0
      %1338 = vmatmul.mubr.f32.gmra.mrb[0].mxu0 %v658
      %v1339 = vpop.f32.mrb[0].mxu0
      %v1340 = vadd.f32 %v312, %v1339
      %v1341 = vpop.f32.mrb[0].mxu0
      %1342 = vmatprep.mubr.f32.mxu0 0.0
      %1343 = vmatmul.mubr.f32.gmra.mrb[0].mxu0 %v661
      %v1344 = vpop.f32.mrb[0].mxu0
      %v1345 = vadd.f32 %v312, %v1344
      %v1346 = vpop.f32.mrb[0].mxu0
      %1347 = vmatprep.mubr.f32.mxu0 0.0
      %1348 = vmatmul.mubr.f32.gmra.mrb[0].mxu0 %v664
      %v1349 = vpop.f32.mrb[0].mxu0
      %v1350 = vadd.f32 %v312, %v1349
      %v1351 = vpop.f32.mrb[0].mxu0
      %1352 = vmatprep.mubr.f32.mxu0 0.0
      %1353 = vmatmul.mubr.f32.gmra.mrb[0].mxu0 %v667
      %v1354 = vpop.f32.mrb[0].mxu0
      %v1355 = vadd.f32 %v312, %v1354
      %v1356 = vpop.f32.mrb[0].mxu0
      %1357 = vmatprep.mubr.f32.mxu0 0.0
      %1358 = vmatmul.mubr.f32.gmra.mrb[0].mxu0 %v670
      %v1359 = vpop.f32.mrb[0].mxu0
      %v1360 = vadd.f32 %v312, %v1359
      %v1361 = vpop.f32.mrb[0].mxu0
      %1362 = vmatprep.mubr.f32.mxu0 0.0
      %1363 = vmatmul.mubr.f32.gmra.mrb[0].mxu0 %v673
      %v1364 = vpop.f32.mrb[0].mxu0
      %v1365 = vadd.f32 %v312, %v1364
      %v1366 = vpop.f32.mrb[0].mxu0
      %1367 = vmatprep.mubr.f32.mxu0 0.0
      %1368 = vmatmul.mubr.f32.gmra.mrb[0].mxu0 %v676
      %v1369 = vpop.f32.mrb[0].mxu0
      %v1370 = vadd.f32 %v312, %v1369
      %v1371 = vpop.f32.mrb[0].mxu0
      %1372 = vmatprep.mubr.f32.mxu0 0.0
      %1373 = vmatmul.mubr.f32.gmra.mrb[0].mxu0 %v679
      %v1374 = vpop.f32.mrb[0].mxu0
      %v1375 = vadd.f32 %v312, %v1374
      %v1376 = vpop.f32.mrb[0].mxu0
      %1377 = vmatprep.mubr.f32.mxu0 0.0
      %1378 = vmatmul.mubr.f32.gmra.mrb[0].mxu0 %v682
      %v1379 = vpop.f32.mrb[0].mxu0
      %v1380 = vadd.f32 %v312, %v1379
      %v1381 = vpop.f32.mrb[0].mxu0
      %1382 = vmatprep.mubr.f32.mxu0 0.0
      %1383 = vmatmul.mubr.f32.gmra.mrb[0].mxu0 %v685
      %v1384 = vpop.f32.mrb[0].mxu0
      %v1385 = vadd.f32 %v312, %v1384
      %v1386 = vpop.f32.mrb[0].mxu0
      %1387 = vmatprep.mubr.f32.mxu0 0.0
      %1388 = vmatmul.mubr.f32.gmra.mrb[0].mxu0 %v688
      %v1389 = vpop.f32.mrb[0].mxu0
      %v1390 = vadd.f32 %v312, %v1389
      %v1391 = vpop.f32.mrb[0].mxu0
      %1392 = vmatprep.mubr.f32.mxu0 0.0
      %1393 = vmatmul.mubr.f32.gmra.mrb[0].mxu0 %v691
      %v1394 = vpop.f32.mrb[0].mxu0
      %v1395 = vadd.f32 %v312, %v1394
      %v1396 = vpop.f32.mrb[0].mxu0
      %1397 = vmatprep.mubr.f32.mxu0 0.0
      %1398 = vmatmul.mubr.f32.gmra.mrb[0].mxu0 %v694
      %v1399 = vpop.f32.mrb[0].mxu0
      %v1400 = vadd.f32 %v312, %v1399
      %v1401 = vpop.f32.mrb[0].mxu0
      %1402 = vmatprep.mubr.f32.mxu0 0.0
      %1403 = vmatmul.mubr.f32.gmra.mrb[0].mxu0 %v697
      %v1404 = vpop.f32.mrb[0].mxu0
      %v1405 = vadd.f32 %v312, %v1404
      %v1406 = vpop.f32.mrb[0].mxu0
      %1407 = vdwg.mxu0
      %1408 = vst [vmem:[%s172] sm:$0xff] %v770
      %1409 = vst [vmem:[%s172 + $0x8] sm:$0xff] %v775
      %1410 = vst [vmem:[%s172 + $0x10] sm:$0xff] %v780
      %1411 = vst [vmem:[%s172 + $0x18] sm:$0xff] %v785
      %1412 = vst [vmem:[%s172 + $0x20] sm:$0xff] %v790
      %1413 = vst [vmem:[%s172 + $0x28] sm:$0xff] %v795
      %1414 = vst [vmem:[%s172 + $0x30] sm:$0xff] %v800
      %1415 = vst [vmem:[%s172 + $0x38] sm:$0xff] %v805
      %1416 = vst [vmem:[%s172 + $0x40] sm:$0xff] %v810
      %1417 = vst [vmem:[%s172 + $0x48] sm:$0xff] %v815
      %1418 = vst [vmem:[%s172 + $0x50] sm:$0xff] %v820
      %1419 = vst [vmem:[%s172 + $0x58] sm:$0xff] %v825
      %1420 = vst [vmem:[%s172 + $0x60] sm:$0xff] %v830
      %1421 = vst [vmem:[%s172 + $0x68] sm:$0xff] %v835
      %1422 = vst [vmem:[%s172 + $0x70] sm:$0xff] %v840
      %1423 = vst [vmem:[%s172 + $0x78] sm:$0xff] %v845
      %1424 = vst [vmem:[%s172 + $0x80] sm:$0xff] %v850
      %1425 = vst [vmem:[%s172 + $0x88] sm:$0xff] %v855
      %1426 = vst [vmem:[%s172 + $0x90] sm:$0xff] %v860
      %1427 = vst [vmem:[%s172 + $0x98] sm:$0xff] %v865
      %1428 = vst [vmem:[%s172 + $0xa0] sm:$0xff] %v870
      %1429 = vst [vmem:[%s172 + $0xa8] sm:$0xff] %v875
      %1430 = vst [vmem:[%s172 + $0xb0] sm:$0xff] %v880
      %1431 = vst [vmem:[%s172 + $0xb8] sm:$0xff] %v885
      %1432 = vst [vmem:[%s172 + $0xc0] sm:$0xff] %v890
      %1433 = vst [vmem:[%s172 + $0xc8] sm:$0xff] %v895
      %1434 = vst [vmem:[%s172 + $0xd0] sm:$0xff] %v900
      %1435 = vst [vmem:[%s172 + $0xd8] sm:$0xff] %v905
      %1436 = vst [vmem:[%s172 + $0xe0] sm:$0xff] %v910
      %1437 = vst [vmem:[%s172 + $0xe8] sm:$0xff] %v915
      %1438 = vst [vmem:[%s172 + $0xf0] sm:$0xff] %v920
      %1439 = vst [vmem:[%s172 + $0xf8] sm:$0xff] %v925
      %1440 = vst [vmem:[%s172 + $0x100] sm:$0xff] %v930
      %1441 = vst [vmem:[%s172 + $0x108] sm:$0xff] %v935
      %1442 = vst [vmem:[%s172 + $0x110] sm:$0xff] %v940
      %1443 = vst [vmem:[%s172 + $0x118] sm:$0xff] %v945
      %1444 = vst [vmem:[%s172 + $0x120] sm:$0xff] %v950
      %1445 = vst [vmem:[%s172 + $0x128] sm:$0xff] %v955
      %1446 = vst [vmem:[%s172 + $0x130] sm:$0xff] %v960
      %1447 = vst [vmem:[%s172 + $0x138] sm:$0xff] %v965
      %1448 = vst [vmem:[%s172 + $0x140] sm:$0xff] %v970
      %1449 = vst [vmem:[%s172 + $0x148] sm:$0xff] %v975
      %1450 = vst [vmem:[%s172 + $0x150] sm:$0xff] %v980
      %1451 = vst [vmem:[%s172 + $0x158] sm:$0xff] %v985
      %1452 = vst [vmem:[%s172 + $0x160] sm:$0xff] %v990
      %1453 = vst [vmem:[%s172 + $0x168] sm:$0xff] %v995
      %1454 = vst [vmem:[%s172 + $0x170] sm:$0xff] %v1000
      %1455 = vst [vmem:[%s172 + $0x178] sm:$0xff] %v1005
      %1456 = vst [vmem:[%s172 + $0x180] sm:$0xff] %v1010
      %1457 = vst [vmem:[%s172 + $0x188] sm:$0xff] %v1015
      %1458 = vst [vmem:[%s172 + $0x190] sm:$0xff] %v1020
      %1459 = vst [vmem:[%s172 + $0x198] sm:$0xff] %v1025
      %1460 = vst [vmem:[%s172 + $0x1a0] sm:$0xff] %v1030
      %1461 = vst [vmem:[%s172 + $0x1a8] sm:$0xff] %v1035
      %1462 = vst [vmem:[%s172 + $0x1b0] sm:$0xff] %v1040
      %1463 = vst [vmem:[%s172 + $0x1b8] sm:$0xff] %v1045
      %1464 = vst [vmem:[%s172 + $0x1c0] sm:$0xff] %v1050
      %1465 = vst [vmem:[%s172 + $0x1c8] sm:$0xff] %v1055
      %1466 = vst [vmem:[%s172 + $0x1d0] sm:$0xff] %v1060
      %1467 = vst [vmem:[%s172 + $0x1d8] sm:$0xff] %v1065
      %1468 = vst [vmem:[%s172 + $0x1e0] sm:$0xff] %v1070
      %1469 = vst [vmem:[%s172 + $0x1e8] sm:$0xff] %v1075
      %1470 = vst [vmem:[%s172 + $0x1f0] sm:$0xff] %v1080
      %1471 = vst [vmem:[%s172 + $0x1f8] sm:$0xff] %v1085
      %1472 = vst [vmem:[%s172 + $0x200] sm:$0xff] %v1090
      %1473 = vst [vmem:[%s172 + $0x208] sm:$0xff] %v1095
      %1474 = vst [vmem:[%s172 + $0x210] sm:$0xff] %v1100
      %1475 = vst [vmem:[%s172 + $0x218] sm:$0xff] %v1105
      %1476 = vst [vmem:[%s172 + $0x220] sm:$0xff] %v1110
      %1477 = vst [vmem:[%s172 + $0x228] sm:$0xff] %v1115
      %1478 = vst [vmem:[%s172 + $0x230] sm:$0xff] %v1120
      %1479 = vst [vmem:[%s172 + $0x238] sm:$0xff] %v1125
      %1480 = vst [vmem:[%s172 + $0x240] sm:$0xff] %v1130
      %1481 = vst [vmem:[%s172 + $0x248] sm:$0xff] %v1135
      %1482 = vst [vmem:[%s172 + $0x250] sm:$0xff] %v1140
      %1483 = vst [vmem:[%s172 + $0x258] sm:$0xff] %v1145
      %1484 = vst [vmem:[%s172 + $0x260] sm:$0xff] %v1150
      %1485 = vst [vmem:[%s172 + $0x268] sm:$0xff] %v1155
      %1486 = vst [vmem:[%s172 + $0x270] sm:$0xff] %v1160
      %1487 = vst [vmem:[%s172 + $0x278] sm:$0xff] %v1165
      %1488 = vst [vmem:[%s172 + $0x280] sm:$0xff] %v1170
      %1489 = vst [vmem:[%s172 + $0x288] sm:$0xff] %v1175
      %1490 = vst [vmem:[%s172 + $0x290] sm:$0xff] %v1180
      %1491 = vst [vmem:[%s172 + $0x298] sm:$0xff] %v1185
      %1492 = vst [vmem:[%s172 + $0x2a0] sm:$0xff] %v1190
      %1493 = vst [vmem:[%s172 + $0x2a8] sm:$0xff] %v1195
      %1494 = vst [vmem:[%s172 + $0x2b0] sm:$0xff] %v1200
      %1495 = vst [vmem:[%s172 + $0x2b8] sm:$0xff] %v1205
      %1496 = vst [vmem:[%s172 + $0x2c0] sm:$0xff] %v1210
      %1497 = vst [vmem:[%s172 + $0x2c8] sm:$0xff] %v1215
      %1498 = vst [vmem:[%s172 + $0x2d0] sm:$0xff] %v1220
      %1499 = vst [vmem:[%s172 + $0x2d8] sm:$0xff] %v1225
      %1500 = vst [vmem:[%s172 + $0x2e0] sm:$0xff] %v1230
      %1501 = vst [vmem:[%s172 + $0x2e8] sm:$0xff] %v1235
      %1502 = vst [vmem:[%s172 + $0x2f0] sm:$0xff] %v1240
      %1503 = vst [vmem:[%s172 + $0x2f8] sm:$0xff] %v1245
      %1504 = vst [vmem:[%s172 + $0x300] sm:$0xff] %v1250
      %1505 = vst [vmem:[%s172 + $0x308] sm:$0xff] %v1255
      %1506 = vst [vmem:[%s172 + $0x310] sm:$0xff] %v1260
      %1507 = vst [vmem:[%s172 + $0x318] sm:$0xff] %v1265
      %1508 = vst [vmem:[%s172 + $0x320] sm:$0xff] %v1270
      %1509 = vst [vmem:[%s172 + $0x328] sm:$0xff] %v1275
      %1510 = vst [vmem:[%s172 + $0x330] sm:$0xff] %v1280
      %1511 = vst [vmem:[%s172 + $0x338] sm:$0xff] %v1285
      %1512 = vst [vmem:[%s172 + $0x340] sm:$0xff] %v1290
      %1513 = vst [vmem:[%s172 + $0x348] sm:$0xff] %v1295
      %1514 = vst [vmem:[%s172 + $0x350] sm:$0xff] %v1300
      %1515 = vst [vmem:[%s172 + $0x358] sm:$0xff] %v1305
      %1516 = vst [vmem:[%s172 + $0x360] sm:$0xff] %v1310
      %1517 = vst [vmem:[%s172 + $0x368] sm:$0xff] %v1315
      %1518 = vst [vmem:[%s172 + $0x370] sm:$0xff] %v1320
      %1519 = vst [vmem:[%s172 + $0x378] sm:$0xff] %v1325
      %1520 = vst [vmem:[%s172 + $0x380] sm:$0xff] %v1330
      %1521 = vst [vmem:[%s172 + $0x388] sm:$0xff] %v1335
      %1522 = vst [vmem:[%s172 + $0x390] sm:$0xff] %v1340
      %1523 = vst [vmem:[%s172 + $0x398] sm:$0xff] %v1345
      %1524 = vst [vmem:[%s172 + $0x3a0] sm:$0xff] %v1350
      %1525 = vst [vmem:[%s172 + $0x3a8] sm:$0xff] %v1355
      %1526 = vst [vmem:[%s172 + $0x3b0] sm:$0xff] %v1360
      %1527 = vst [vmem:[%s172 + $0x3b8] sm:$0xff] %v1365
      %1528 = vst [vmem:[%s172 + $0x3c0] sm:$0xff] %v1370
      %1529 = vst [vmem:[%s172 + $0x3c8] sm:$0xff] %v1375
      %1530 = vst [vmem:[%s172 + $0x3d0] sm:$0xff] %v1380
      %1531 = vst [vmem:[%s172 + $0x3d8] sm:$0xff] %v1385
      %1532 = vst [vmem:[%s172 + $0x3e0] sm:$0xff] %v1390
      %1533 = vst [vmem:[%s172 + $0x3e8] sm:$0xff] %v1395
      %1534 = vst [vmem:[%s172 + $0x3f0] sm:$0xff] %v1400
      %1535 = vst [vmem:[%s172 + $0x3f8] sm:$0xff] %v1405
      %s1536 = smul.u32 128, %s14
      %p1537 = scmp.lt.s32.totalorder %s1536, 511
      %s1538 = scalar_select %p1537, %s1536, 511
      %s1539 = smul.addr %s1538, 8
      %s1540 = scalar_lea.vmem %s3, %s1539
      // Predicated region
      $region33: #{convlstm_forward.4} parent=31 // pred_check
        %p1541 = pneg %p100
      $region34: #{convlstm_forward.4} parent=31 // pred_check_branch
        %1543 = sbr.rel (%p1541) target = $region36
      $region35: #{convlstm_forward.4} parent=31 // pred_region
        %s1544 = smul.u32 128, %s14
      $region36: #{convlstm_forward.4} parent=31 // pred_fallthru
        _
    $region32: #{convlstm_forward.4} parent=5 // pred_fallthru
      _
    %p1545 = scmp.le.s32.totalorder 2, %s9
    // Predicated region
    $region37: #{convlstm_forward.4} parent=5 // pred_check
      %p1546 = pneg %p1545
    $region38: #{convlstm_forward.4} parent=5 // pred_check_branch
      %1548 = sbr.rel (%p1546) target = $region40
    $region39: #{convlstm_forward.4} parent=5 // pred_region
      %s1549 = ssub.s32 %s9, 2
      // Predicated region
      $region41: #{convlstm_forward.4} parent=39 // pred_check
        %p1550 = pneg %p106
      $region42: #{convlstm_forward.4} parent=39 // pred_check_branch
        %1552 = sbr.rel (%p1550) target = $region44
      $region43: #{convlstm_forward.4} parent=39 // pred_region
        %s1553 = smul.u32 128, %s15
        %p1554 = scmp.lt.s32.totalorder %s1553, 511
        %s1555 = scalar_select %p1554, %s1553, 511
        %s1556 = smul.addr %s1555, 8
        %s1557 = scalar_lea.vmem %s3, %s1556
      $region44: #{convlstm_forward.4} parent=39 // pred_fallthru
        _
    $region40: #{convlstm_forward.4} parent=5 // pred_fallthru
      _
  $region6: #{convlstm_forward.4} parent=0 // loop_footer
    %s13 = sadd.s32 1, %s9
  $region7: #{convlstm_forward.4} parent=0 // loop_footer_branch
    %8 = sbr.rel target = $region3
  $region8: #{convlstm_forward.4} parent=0 // loop_exit
    _

// kernel: convlstm_forward.6
$region0: #{convlstm_forward.6}
  #allocation0 [shape = 'u32[]', space=smem, size = 0x4, offset = 0x4, fixed_abs, tag = 'smem constant byte address 0x4 - core index']
  #allocation1 [shape = 'u32[144,128]{1,0:T(1,128)}', space=vmem, size = 0x12000, scoped, tag = 'internal scratch']
  %s0 = inlined_call_operand.vmem [shape: f32[4096,288], index: 0, kind: input, shape index: {}]
  %s1 = inlined_call_operand.vmem [shape: f32[288,128], index: 1, kind: input, shape index: {}]
  %s2 = inlined_call_operand.vmem [shape: f32[1,128], index: 2, kind: input, shape index: {}]
  %s3 = inlined_call_operand.vmem [shape: f32[4096,128], index: 3, kind: output, shape index: {}]
  %s4 = sld [smem:[#allocation0]]
  $region45: #{convlstm_forward.6} parent=0
    _
  %s6 = ssub.s32 1, %s4
  %s7 = scalar_select 0, %s6, %s4
  loop: start=0, step=1, limit=6
  $region2: #{convlstm_forward.6} parent=0 // loop_pre_header
    _
  $region3: #{convlstm_forward.6} parent=0 // loop_header
    %s9 = sphi 0, %s13
    %p10 = scmp.ge.s32.totalorder %s9, 6
    %s19 = sphi 0, %s21
    %s22 = sphi 0, %s19
    %s23 = sphi 0, %s22
    %s39 = sphi 0, %s23
    %s43 = sphi 0, %s43
    %s45 = sphi 0, %s43
    %s46 = sphi 0, %s45
    %s60 = sphi 0, %s46
    %s64 = sphi 0, %s64
    %s66 = sphi 0, %s64
    %s67 = sphi 0, %s66
    %s81 = sphi 0, %s67
    %s87 = sphi 0, %s89
    %s90 = sphi 0, %s87
    %s91 = sphi 0, %s90
    %s107 = sphi 0, %s91
  $region4: #{convlstm_forward.6} parent=0 // loop_header_branch
    %12 = sbr.rel (%p10) target = $region8
  $region5: #{convlstm_forward.6} parent=0 // loop_body
    %s14 = ssub.s32 %s9, 1
    %s15 = ssub.s32 %s9, 2
    %s16 = sadd.s32 %s9, 1
    %s17 = ssub.s32 %s9, %s16
    %p18 = scmp.eq.s32.totalorder %s17, 0
    %s20 = sadd.s32 %s19, 1
    %s21 = scalar_select %p18, %s19, %s20
    %p24 = pneg %p18
    %p25 = scmp.eq.s32.totalorder %s9, 3
    %p26 = por %p24, %p25
    %p27 = scmp.ne.s32.totalorder %s19, %s22
    %p28 = scmp.eq.s32.totalorder %s9, 0
    %p29 = por %p27, %p28
    %p30 = scmp.ne.s32.totalorder %s19, %s22
    %p31 = scmp.eq.s32.totalorder %s14, 3
    %p32 = por %p30, %p31
    %p33 = scmp.ne.s32.totalorder %s22, %s23
    %p34 = scmp.eq.s32.totalorder %s14, 0
    %p35 = por %p33, %p34
    %p36 = scmp.ne.s32.totalorder %s22, %s23
    %p37 = scmp.eq.s32.totalorder %s15, 3
    %p38 = por %p36, %p37
    %p40 = scmp.ne.s32.totalorder %s23, %s39
    %p41 = scmp.eq.s32.totalorder %s15, 0
    %p42 = por %p40, %p41
    %s44 = sadd.s32 %s43, 1
    %p47 = scmp.eq.s32.totalorder %s9, 3
    %p48 = scmp.ne.s32.totalorder %s43, %s45
    %p49 = scmp.eq.s32.totalorder %s9, 0
    %p50 = por %p48, %p49
    %p51 = scmp.ne.s32.totalorder %s43, %s45
    %p52 = scmp.eq.s32.totalorder %s14, 3
    %p53 = por %p51, %p52
    %p54 = scmp.ne.s32.totalorder %s45, %s46
    %p55 = scmp.eq.s32.totalorder %s14, 0
    %p56 = por %p54, %p55
    %p57 = scmp.ne.s32.totalorder %s45, %s46
    %p58 = scmp.eq.s32.totalorder %s15, 3
    %p59 = por %p57, %p58
    %p61 = scmp.ne.s32.totalorder %s46, %s60
    %p62 = scmp.eq.s32.totalorder %s15, 0
    %p63 = por %p61, %p62
    %s65 = sadd.s32 %s64, 1
    %p68 = scmp.eq.s32.totalorder %s9, 3
    %p69 = scmp.ne.s32.totalorder %s64, %s66
    %p70 = scmp.eq.s32.totalorder %s9, 0
    %p71 = por %p69, %p70
    %p72 = scmp.ne.s32.totalorder %s64, %s66
    %p73 = scmp.eq.s32.totalorder %s14, 3
    %p74 = por %p72, %p73
    %p75 = scmp.ne.s32.totalorder %s66, %s67
    %p76 = scmp.eq.s32.totalorder %s14, 0
    %p77 = por %p75, %p76
    %p78 = scmp.ne.s32.totalorder %s66, %s67
    %p79 = scmp.eq.s32.totalorder %s15, 3
    %p80 = por %p78, %p79
    %p82 = scmp.ne.s32.totalorder %s67, %s81
    %p83 = scmp.eq.s32.totalorder %s15, 0
    %p84 = por %p82, %p83
    %s85 = ssub.s32 %s9, %s16
    %p86 = scmp.eq.s32.totalorder %s85, 0
    %s88 = sadd.s32 %s87, 1
    %s89 = scalar_select %p86, %s87, %s88
    %p92 = pneg %p86
    %p93 = scmp.eq.s32.totalorder %s9, 3
    %p94 = por %p92, %p93
    %p95 = scmp.ne.s32.totalorder %s87, %s90
    %p96 = scmp.eq.s32.totalorder %s9, 0
    %p97 = por %p95, %p96
    %p98 = scmp.ne.s32.totalorder %s87, %s90
    %p99 = scmp.eq.s32.totalorder %s14, 3
    %p100 = por %p98, %p99
    %p101 = scmp.ne.s32.totalorder %s90, %s91
    %p102 = scmp.eq.s32.totalorder %s14, 0
    %p103 = por %p101, %p102
    %p104 = scmp.ne.s32.totalorder %s90, %s91
    %p105 = scmp.eq.s32.totalorder %s15, 3
    %p106 = por %p104, %p105
    %p108 = scmp.ne.s32.totalorder %s91, %s107
    %p109 = scmp.eq.s32.totalorder %s15, 0
    %p110 = por %p108, %p109
    %p111 = scmp.le.s32.totalorder 1, %s9
    %p112 = scmp.lt.s32.totalorder %s9, 5
    %p113 = pnand %p111, %p112
    %p114 = pneg %p113
    // Predicated region
    $region9: #{convlstm_forward.6} parent=5 // pred_check
      _
    $region10: #{convlstm_forward.6} parent=5 // pred_check_branch
      %116 = sbr.rel (%p113) target = $region12
    $region11: #{convlstm_forward.6} parent=5 // pred_region
      %s117 = ssub.s32 %s9, 1
      // Predicated region
      $region13: #{convlstm_forward.6} parent=11 // pred_check
        %p118 = pneg %p56
      $region14: #{convlstm_forward.6} parent=11 // pred_check_branch
        %120 = sbr.rel (%p118) target = $region16
      $region15: #{convlstm_forward.6} parent=11 // pred_region
        _
      $region16: #{convlstm_forward.6} parent=11 // pred_fallthru
        _
      // Predicated region
      $region17: #{convlstm_forward.6} parent=11 // pred_check
        %p121 = pneg %p77
      $region18: #{convlstm_forward.6} parent=11 // pred_check_branch
        %123 = sbr.rel (%p121) target = $region20
      $region19: #{convlstm_forward.6} parent=11 // pred_region
        _
      $region20: #{convlstm_forward.6} parent=11 // pred_fallthru
        _
    $region12: #{convlstm_forward.6} parent=5 // pred_fallthru
      _
    %p124 = scmp.lt.s32.totalorder %s9, 4
    // Predicated region
    $region21: #{convlstm_forward.6} parent=5 // pred_check
      %p125 = pneg %p124
    $region22: #{convlstm_forward.6} parent=5 // pred_check_branch
      %127 = sbr.rel (%p125) target = $region24
    $region23: #{convlstm_forward.6} parent=5 // pred_region
      // Predicated region
      $region25: #{convlstm_forward.6} parent=23 // pred_check
        %p128 = pneg %p29
      $region26: #{convlstm_forward.6} parent=23 // pred_check_branch
        %130 = sbr.rel (%p128) target = $region28
      $region27: #{convlstm_forward.6} parent=23 // pred_region
        %s131 = smul.u32 128, %s9
        %p132 = scmp.lt.s32.totalorder %s131, 511
        %s133 = scalar_select %p132, %s131, 511
        %s134 = smul.addr %s133, 3
        %s135 = smul.addr %s134, 8
        %s136 = scalar_lea.vmem %s0, %s135
        %s137 = smul.u32 128, %s9
      $region28: #{convlstm_forward.6} parent=23 // pred_fallthru
        _
    $region24: #{convlstm_forward.6} parent=5 // pred_fallthru
      _
    %p138 = scmp.le.s32.totalorder 1, %s9
    %p139 = scmp.lt.s32.totalorder %s9, 5
    %p140 = pnand %p138, %p139
    %p141 = pneg %p140
    // Predicated region
    $region29: #{convlstm_forward.6} parent=5 // pred_check
      _
    $region30: #{convlstm_forward.6} parent=5 // pred_check_branch
      %143 = sbr.rel (%p140) target = $region32
    $region31: #{convlstm_forward.6} parent=5 // pred_region
      %s144 = ssub.s32 %s9, 1
      %s145 = smul.u32 128, %s14
      %p146 = scmp.lt.s32.totalorder %s145, 511
      %s147 = scalar_select %p146, %s145, 511
      %s148 = smul.addr %s147, 3
      %s149 = smul.addr %s148, 8
      %s150 = scalar_lea.vmem %s0, %s149
      %p151 = pneg %p35
      %p152 = pneg %p32
      %p153 = pneg %p56
      %p154 = pneg %p53
      %p155 = pneg %p77
      %p156 = pneg %p74
      %p157 = pneg %p103
      %p158 = pneg %p100
      %s159 = smul.u32 128, %s14
      %p160 = scmp.lt.s32.totalorder %s159, 511
      %s161 = scalar_select %p160, %s159, 511
      %s162 = smul.addr %s161, 8
      %s163 = scalar_lea.vmem %s3, %s162
      %s164 = smul.u32 128, %s14
      %p165 = scmp.lt.s32.totalorder %s164, 511
      %s166 = scalar_select %p165, %s164, 511
      %s167 = smul.addr %s166, 3
      %s168 = smul.addr %s167, 8
      %s169 = scalar_lea.vmem %s0, %s168
      %s170 = smul.u32 128, %s14
      %s171 = smul.u32 128, %s14
      %p172 = scmp.lt.s32.totalorder %s171, 511
      %s173 = scalar_select %p172, %s171, 511
      %s174 = smul.addr %s173, 8
      %s175 = scalar_lea.vmem %s3, %s174
      %s176 = smul.u32 128, %s14
      %v177 = vld [vmem:[%s169] sm:$0xff]
      %v178 = vld [vmem:[%s169 + $0x8] sm:$0xff]
      %v179 = vld [vmem:[%s169 + $0x10] sm:$0xff]
      %v180 = vld [vmem:[%s169 + $0x18] sm:$0xff]
      %v181 = vld [vmem:[%s169 + $0x20] sm:$0xff]
      %v182 = vld [vmem:[%s169 + $0x28] sm:$0xff]
      %v183 = vld [vmem:[%s169 + $0x30] sm:$0xff]
      %v184 = vld [vmem:[%s169 + $0x38] sm:$0xff]
      %v185 = vld [vmem:[%s169 + $0x40] sm:$0xff]
      %v186 = vld [vmem:[%s169 + $0x48] sm:$0xff]
      %v187 = vld [vmem:[%s169 + $0x50] sm:$0xff]
      %v188 = vld [vmem:[%s169 + $0x58] sm:$0xff]
      %v189 = vld [vmem:[%s169 + $0x60] sm:$0xff]
      %v190 = vld [vmem:[%s169 + $0x68] sm:$0xff]
      %v191 = vld [vmem:[%s169 + $0x70] sm:$0xff]
      %v192 = vld [vmem:[%s169 + $0x78] sm:$0xff]
      %v193 = vld [vmem:[%s169 + $0x80] sm:$0xff]
      %v194 = vld [vmem:[%s169 + $0x88] sm:$0xff]
      %v195 = vld [vmem:[%s169 + $0x90] sm:$0xff]
      %v196 = vld [vmem:[%s169 + $0x98] sm:$0xff]
      %v197 = vld [vmem:[%s169 + $0xa0] sm:$0xff]
      %v198 = vld [vmem:[%s169 + $0xa8] sm:$0xff]
      %v199 = vld [vmem:[%s169 + $0xb0] sm:$0xff]
      %v200 = vld [vmem:[%s169 + $0xb8] sm:$0xff]
      %v201 = vld [vmem:[%s169 + $0xc0] sm:$0xff]
      %v202 = vld [vmem:[%s169 + $0xc8] sm:$0xff]
      %v203 = vld [vmem:[%s169 + $0xd0] sm:$0xff]
      %v204 = vld [vmem:[%s169 + $0xd8] sm:$0xff]
      %v205 = vld [vmem:[%s169 + $0xe0] sm:$0xff]
      %v206 = vld [vmem:[%s169 + $0xe8] sm:$0xff]
      %v207 = vld [vmem:[%s169 + $0xf0] sm:$0xff]
      %v208 = vld [vmem:[%s169 + $0xf8] sm:$0xff]
      %v209 = vld [vmem:[%s169 + $0x100] sm:$0xff]
      %v210 = vld [vmem:[%s169 + $0x108] sm:$0xff]
      %v211 = vld [vmem:[%s169 + $0x110] sm:$0xff]
      %v212 = vld [vmem:[%s169 + $0x118] sm:$0xff]
      %v213 = vld [vmem:[%s169 + $0x120] sm:$0xff]
      %v214 = vld [vmem:[%s169 + $0x128] sm:$0xff]
      %v215 = vld [vmem:[%s169 + $0x130] sm:$0xff]
      %v216 = vld [vmem:[%s169 + $0x138] sm:$0xff]
      %v217 = vld [vmem:[%s169 + $0x140] sm:$0xff]
      %v218 = vld [vmem:[%s169 + $0x148] sm:$0xff]
      %v219 = vld [vmem:[%s169 + $0x150] sm:$0xff]
      %v220 = vld [vmem:[%s169 + $0x158] sm:$0xff]
      %v221 = vld [vmem:[%s169 + $0x160] sm:$0xff]
      %v222 = vld [vmem:[%s169 + $0x168] sm:$0xff]
      %v223 = vld [vmem:[%s169 + $0x170] sm:$0xff]
      %v224 = vld [vmem:[%s169 + $0x178] sm:$0xff]
      %v225 = vld [vmem:[%s169 + $0x180] sm:$0xff]
      %v226 = vld [vmem:[%s169 + $0x188] sm:$0xff]
      %v227 = vld [vmem:[%s169 + $0x190] sm:$0xff]
      %v228 = vld [vmem:[%s169 + $0x198] sm:$0xff]
      %v229 = vld [vmem:[%s169 + $0x1a0] sm:$0xff]
      %v230 = vld [vmem:[%s169 + $0x1a8] sm:$0xff]
      %v231 = vld [vmem:[%s169 + $0x1b0] sm:$0xff]
      %v232 = vld [vmem:[%s169 + $0x1b8] sm:$0xff]
      %v233 = vld [vmem:[%s169 + $0x1c0] sm:$0xff]
      %v234 = vld [vmem:[%s169 + $0x1c8] sm:$0xff]
      %v235 = vld [vmem:[%s169 + $0x1d0] sm:$0xff]
      %v236 = vld [vmem:[%s169 + $0x1d8] sm:$0xff]
      %v237 = vld [vmem:[%s169 + $0x1e0] sm:$0xff]
      %v238 = vld [vmem:[%s169 + $0x1e8] sm:$0xff]
      %v239 = vld [vmem:[%s169 + $0x1f0] sm:$0xff]
      %v240 = vld [vmem:[%s169 + $0x1f8] sm:$0xff]
      %v241 = vld [vmem:[%s169 + $0x200] sm:$0xff]
      %v242 = vld [vmem:[%s169 + $0x208] sm:$0xff]
      %v243 = vld [vmem:[%s169 + $0x210] sm:$0xff]
      %v244 = vld [vmem:[%s169 + $0x218] sm:$0xff]
      %v245 = vld [vmem:[%s169 + $0x220] sm:$0xff]
      %v246 = vld [vmem:[%s169 + $0x228] sm:$0xff]
      %v247 = vld [vmem:[%s169 + $0x230] sm:$0xff]
      %v248 = vld [vmem:[%s169 + $0x238] sm:$0xff]
      %v249 = vld [vmem:[%s169 + $0x240] sm:$0xff]
      %v250 = vld [vmem:[%s169 + $0x248] sm:$0xff]
      %v251 = vld [vmem:[%s169 + $0x250] sm:$0xff]
      %v252 = vld [vmem:[%s169 + $0x258] sm:$0xff]
      %v253 = vld [vmem:[%s169 + $0x260] sm:$0xff]
      %v254 = vld [vmem:[%s169 + $0x268] sm:$0xff]
      %v255 = vld [vmem:[%s169 + $0x270] sm:$0xff]
      %v256 = vld [vmem:[%s169 + $0x278] sm:$0xff]
      %v257 = vld [vmem:[%s169 + $0x280] sm:$0xff]
      %v258 = vld [vmem:[%s169 + $0x288] sm:$0xff]
      %v259 = vld [vmem:[%s169 + $0x290] sm:$0xff]
      %v260 = vld [vmem:[%s169 + $0x298] sm:$0xff]
      %v261 = vld [vmem:[%s169 + $0x2a0] sm:$0xff]
      %v262 = vld [vmem:[%s169 + $0x2a8] sm:$0xff]
      %v263 = vld [vmem:[%s169 + $0x2b0] sm:$0xff]
      %v264 = vld [vmem:[%s169 + $0x2b8] sm:$0xff]
      %v265 = vld [vmem:[%s169 + $0x2c0] sm:$0xff]
      %v266 = vld [vmem:[%s169 + $0x2c8] sm:$0xff]
      %v267 = vld [vmem:[%s169 + $0x2d0] sm:$0xff]
      %v268 = vld [vmem:[%s169 + $0x2d8] sm:$0xff]
      %v269 = vld [vmem:[%s169 + $0x2e0] sm:$0xff]
      %v270 = vld [vmem:[%s169 + $0x2e8] sm:$0xff]
      %v271 = vld [vmem:[%s169 + $0x2f0] sm:$0xff]
      %v272 = vld [vmem:[%s169 + $0x2f8] sm:$0xff]
      %v273 = vld [vmem:[%s169 + $0x300] sm:$0xff]
      %v274 = vld [vmem:[%s169 + $0x308] sm:$0xff]
      %v275 = vld [vmem:[%s169 + $0x310] sm:$0xff]
      %v276 = vld [vmem:[%s169 + $0x318] sm:$0xff]
      %v277 = vld [vmem:[%s169 + $0x320] sm:$0xff]
      %v278 = vld [vmem:[%s169 + $0x328] sm:$0xff]
      %v279 = vld [vmem:[%s169 + $0x330] sm:$0xff]
      %v280 = vld [vmem:[%s169 + $0x338] sm:$0xff]
      %v281 = vld [vmem:[%s169 + $0x340] sm:$0xff]
      %v282 = vld [vmem:[%s169 + $0x348] sm:$0xff]
      %v283 = vld [vmem:[%s169 + $0x350] sm:$0xff]
      %v284 = vld [vmem:[%s169 + $0x358] sm:$0xff]
      %v285 = vld [vmem:[%s169 + $0x360] sm:$0xff]
      %v286 = vld [vmem:[%s169 + $0x368] sm:$0xff]
      %v287 = vld [vmem:[%s169 + $0x370] sm:$0xff]
      %v288 = vld [vmem:[%s169 + $0x378] sm:$0xff]
      %v289 = vld [vmem:[%s169 + $0x380] sm:$0xff]
      %v290 = vld [vmem:[%s169 + $0x388] sm:$0xff]
      %v291 = vld [vmem:[%s169 + $0x390] sm:$0xff]
      %v292 = vld [vmem:[%s169 + $0x398] sm:$0xff]
      %v293 = vld [vmem:[%s169 + $0x3a0] sm:$0xff]
      %v294 = vld [vmem:[%s169 + $0x3a8] sm:$0xff]
      %v295 = vld [vmem:[%s169 + $0x3b0] sm:$0xff]
      %v296 = vld [vmem:[%s169 + $0x3b8] sm:$0xff]
      %v297 = vld [vmem:[%s169 + $0x3c0] sm:$0xff]
      %v298 = vld [vmem:[%s169 + $0x3c8] sm:$0xff]
      %v299 = vld [vmem:[%s169 + $0x3d0] sm:$0xff]
      %v300 = vld [vmem:[%s169 + $0x3d8] sm:$0xff]
      %v301 = vld [vmem:[%s169 + $0x3e0] sm:$0xff]
      %v302 = vld [vmem:[%s169 + $0x3e8] sm:$0xff]
      %v303 = vld [vmem:[%s169 + $0x3f0] sm:$0xff]
      %v304 = vld [vmem:[%s169 + $0x3f8] sm:$0xff]
      %v305 = vld [vmem:[%s169 + $0x400] sm:$0xff]
      %v306 = vld [vmem:[%s169 + $0x408] sm:$0xff]
      %v307 = vld [vmem:[%s169 + $0x410] sm:$0xff]
      %v308 = vld [vmem:[%s169 + $0x418] sm:$0xff]
      %v309 = vld [vmem:[%s169 + $0x420] sm:$0xff]
      %v310 = vld [vmem:[%s169 + $0x428] sm:$0xff]
      %v311 = vld [vmem:[%s169 + $0x430] sm:$0xff]
      %v312 = vld [vmem:[%s169 + $0x438] sm:$0xff]
      %v313 = vld [vmem:[%s169 + $0x440] sm:$0xff]
      %v314 = vld [vmem:[%s169 + $0x448] sm:$0xff]
      %v315 = vld [vmem:[%s169 + $0x450] sm:$0xff]
      %v316 = vld [vmem:[%s169 + $0x458] sm:$0xff]
      %v317 = vld [vmem:[%s169 + $0x460] sm:$0xff]
      %v318 = vld [vmem:[%s169 + $0x468] sm:$0xff]
      %v319 = vld [vmem:[%s169 + $0x470] sm:$0xff]
      %v320 = vld [vmem:[%s169 + $0x478] sm:$0xff]
      %v321 = vld [vmem:[%s169 + $0x480] sm:$0xff]
      %v322 = vld [vmem:[%s169 + $0x488] sm:$0xff]
      %v323 = vld [vmem:[%s169 + $0x490] sm:$0xff]
      %v324 = vld [vmem:[%s169 + $0x498] sm:$0xff]
      %v325 = vld [vmem:[%s169 + $0x4a0] sm:$0xff]
      %v326 = vld [vmem:[%s169 + $0x4a8] sm:$0xff]
      %v327 = vld [vmem:[%s169 + $0x4b0] sm:$0xff]
      %v328 = vld [vmem:[%s169 + $0x4b8] sm:$0xff]
      %v329 = vld [vmem:[%s169 + $0x4c0] sm:$0xff]
      %v330 = vld [vmem:[%s169 + $0x4c8] sm:$0xff]
      %v331 = vld [vmem:[%s169 + $0x4d0] sm:$0xff]
      %v332 = vld [vmem:[%s169 + $0x4d8] sm:$0xff]
      %v333 = vld [vmem:[%s169 + $0x4e0] sm:$0xff]
      %v334 = vld [vmem:[%s169 + $0x4e8] sm:$0xff]
      %v335 = vld [vmem:[%s169 + $0x4f0] sm:$0xff]
      %v336 = vld [vmem:[%s169 + $0x4f8] sm:$0xff]
      %v337 = vld [vmem:[%s169 + $0x500] sm:$0xff]
      %v338 = vld [vmem:[%s169 + $0x508] sm:$0xff]
      %v339 = vld [vmem:[%s169 + $0x510] sm:$0xff]
      %v340 = vld [vmem:[%s169 + $0x518] sm:$0xff]
      %v341 = vld [vmem:[%s169 + $0x520] sm:$0xff]
      %v342 = vld [vmem:[%s169 + $0x528] sm:$0xff]
      %v343 = vld [vmem:[%s169 + $0x530] sm:$0xff]
      %v344 = vld [vmem:[%s169 + $0x538] sm:$0xff]
      %v345 = vld [vmem:[%s169 + $0x540] sm:$0xff]
      %v346 = vld [vmem:[%s169 + $0x548] sm:$0xff]
      %v347 = vld [vmem:[%s169 + $0x550] sm:$0xff]
      %v348 = vld [vmem:[%s169 + $0x558] sm:$0xff]
      %v349 = vld [vmem:[%s169 + $0x560] sm:$0xff]
      %v350 = vld [vmem:[%s169 + $0x568] sm:$0xff]
      %v351 = vld [vmem:[%s169 + $0x570] sm:$0xff]
      %v352 = vld [vmem:[%s169 + $0x578] sm:$0xff]
      %v353 = vld [vmem:[%s169 + $0x580] sm:$0xff]
      %v354 = vld [vmem:[%s169 + $0x588] sm:$0xff]
      %v355 = vld [vmem:[%s169 + $0x590] sm:$0xff]
      %v356 = vld [vmem:[%s169 + $0x598] sm:$0xff]
      %v357 = vld [vmem:[%s169 + $0x5a0] sm:$0xff]
      %v358 = vld [vmem:[%s169 + $0x5a8] sm:$0xff]
      %v359 = vld [vmem:[%s169 + $0x5b0] sm:$0xff]
      %v360 = vld [vmem:[%s169 + $0x5b8] sm:$0xff]
      %v361 = vld [vmem:[%s169 + $0x5c0] sm:$0xff]
      %v362 = vld [vmem:[%s169 + $0x5c8] sm:$0xff]
      %v363 = vld [vmem:[%s169 + $0x5d0] sm:$0xff]
      %v364 = vld [vmem:[%s169 + $0x5d8] sm:$0xff]
      %v365 = vld [vmem:[%s169 + $0x5e0] sm:$0xff]
      %v366 = vld [vmem:[%s169 + $0x5e8] sm:$0xff]
      %v367 = vld [vmem:[%s169 + $0x5f0] sm:$0xff]
      %v368 = vld [vmem:[%s169 + $0x5f8] sm:$0xff]
      %v369 = vld [vmem:[%s169 + $0x600] sm:$0xff]
      %v370 = vld [vmem:[%s169 + $0x608] sm:$0xff]
      %v371 = vld [vmem:[%s169 + $0x610] sm:$0xff]
      %v372 = vld [vmem:[%s169 + $0x618] sm:$0xff]
      %v373 = vld [vmem:[%s169 + $0x620] sm:$0xff]
      %v374 = vld [vmem:[%s169 + $0x628] sm:$0xff]
      %v375 = vld [vmem:[%s169 + $0x630] sm:$0xff]
      %v376 = vld [vmem:[%s169 + $0x638] sm:$0xff]
      %v377 = vld [vmem:[%s169 + $0x640] sm:$0xff]
      %v378 = vld [vmem:[%s169 + $0x648] sm:$0xff]
      %v379 = vld [vmem:[%s169 + $0x650] sm:$0xff]
      %v380 = vld [vmem:[%s169 + $0x658] sm:$0xff]
      %v381 = vld [vmem:[%s169 + $0x660] sm:$0xff]
      %v382 = vld [vmem:[%s169 + $0x668] sm:$0xff]
      %v383 = vld [vmem:[%s169 + $0x670] sm:$0xff]
      %v384 = vld [vmem:[%s169 + $0x678] sm:$0xff]
      %v385 = vld [vmem:[%s169 + $0x680] sm:$0xff]
      %v386 = vld [vmem:[%s169 + $0x688] sm:$0xff]
      %v387 = vld [vmem:[%s169 + $0x690] sm:$0xff]
      %v388 = vld [vmem:[%s169 + $0x698] sm:$0xff]
      %v389 = vld [vmem:[%s169 + $0x6a0] sm:$0xff]
      %v390 = vld [vmem:[%s169 + $0x6a8] sm:$0xff]
      %v391 = vld [vmem:[%s169 + $0x6b0] sm:$0xff]
      %v392 = vld [vmem:[%s169 + $0x6b8] sm:$0xff]
      %v393 = vld [vmem:[%s169 + $0x6c0] sm:$0xff]
      %v394 = vld [vmem:[%s169 + $0x6c8] sm:$0xff]
      %v395 = vld [vmem:[%s169 + $0x6d0] sm:$0xff]
      %v396 = vld [vmem:[%s169 + $0x6d8] sm:$0xff]
      %v397 = vld [vmem:[%s169 + $0x6e0] sm:$0xff]
      %v398 = vld [vmem:[%s169 + $0x6e8] sm:$0xff]
      %v399 = vld [vmem:[%s169 + $0x6f0] sm:$0xff]
      %v400 = vld [vmem:[%s169 + $0x6f8] sm:$0xff]
      %v401 = vld [vmem:[%s169 + $0x700] sm:$0xff]
      %v402 = vld [vmem:[%s169 + $0x708] sm:$0xff]
      %v403 = vld [vmem:[%s169 + $0x710] sm:$0xff]
      %v404 = vld [vmem:[%s169 + $0x718] sm:$0xff]
      %v405 = vld [vmem:[%s169 + $0x720] sm:$0xff]
      %v406 = vld [vmem:[%s169 + $0x728] sm:$0xff]
      %v407 = vld [vmem:[%s169 + $0x730] sm:$0xff]
      %v408 = vld [vmem:[%s169 + $0x738] sm:$0xff]
      %v409 = vld [vmem:[%s169 + $0x740] sm:$0xff]
      %v410 = vld [vmem:[%s169 + $0x748] sm:$0xff]
      %v411 = vld [vmem:[%s169 + $0x750] sm:$0xff]
      %v412 = vld [vmem:[%s169 + $0x758] sm:$0xff]
      %v413 = vld [vmem:[%s169 + $0x760] sm:$0xff]
      %v414 = vld [vmem:[%s169 + $0x768] sm:$0xff]
      %v415 = vld [vmem:[%s169 + $0x770] sm:$0xff]
      %v416 = vld [vmem:[%s169 + $0x778] sm:$0xff]
      %v417 = vld [vmem:[%s169 + $0x780] sm:$0xff]
      %v418 = vld [vmem:[%s169 + $0x788] sm:$0xff]
      %v419 = vld [vmem:[%s169 + $0x790] sm:$0xff]
      %v420 = vld [vmem:[%s169 + $0x798] sm:$0xff]
      %v421 = vld [vmem:[%s169 + $0x7a0] sm:$0xff]
      %v422 = vld [vmem:[%s169 + $0x7a8] sm:$0xff]
      %v423 = vld [vmem:[%s169 + $0x7b0] sm:$0xff]
      %v424 = vld [vmem:[%s169 + $0x7b8] sm:$0xff]
      %v425 = vld [vmem:[%s169 + $0x7c0] sm:$0xff]
      %v426 = vld [vmem:[%s169 + $0x7c8] sm:$0xff]
      %v427 = vld [vmem:[%s169 + $0x7d0] sm:$0xff]
      %v428 = vld [vmem:[%s169 + $0x7d8] sm:$0xff]
      %v429 = vld [vmem:[%s169 + $0x7e0] sm:$0xff]
      %v430 = vld [vmem:[%s169 + $0x7e8] sm:$0xff]
      %v431 = vld [vmem:[%s169 + $0x7f0] sm:$0xff]
      %v432 = vld [vmem:[%s169 + $0x7f8] sm:$0xff]
      %v433 = vld [vmem:[%s169 + $0x800] sm:$0xff]
      %v434 = vld [vmem:[%s169 + $0x808] sm:$0xff]
      %v435 = vld [vmem:[%s169 + $0x810] sm:$0xff]
      %v436 = vld [vmem:[%s169 + $0x818] sm:$0xff]
      %v437 = vld [vmem:[%s169 + $0x820] sm:$0xff]
      %v438 = vld [vmem:[%s169 + $0x828] sm:$0xff]
      %v439 = vld [vmem:[%s169 + $0x830] sm:$0xff]
      %v440 = vld [vmem:[%s169 + $0x838] sm:$0xff]
      %v441 = vld [vmem:[%s169 + $0x840] sm:$0xff]
      %v442 = vld [vmem:[%s169 + $0x848] sm:$0xff]
      %v443 = vld [vmem:[%s169 + $0x850] sm:$0xff]
      %v444 = vld [vmem:[%s169 + $0x858] sm:$0xff]
      %v445 = vld [vmem:[%s169 + $0x860] sm:$0xff]
      %v446 = vld [vmem:[%s169 + $0x868] sm:$0xff]
      %v447 = vld [vmem:[%s169 + $0x870] sm:$0xff]
      %v448 = vld [vmem:[%s169 + $0x878] sm:$0xff]
      %v449 = vld [vmem:[%s169 + $0x880] sm:$0xff]
      %v450 = vld [vmem:[%s169 + $0x888] sm:$0xff]
      %v451 = vld [vmem:[%s169 + $0x890] sm:$0xff]
      %v452 = vld [vmem:[%s169 + $0x898] sm:$0xff]
      %v453 = vld [vmem:[%s169 + $0x8a0] sm:$0xff]
      %v454 = vld [vmem:[%s169 + $0x8a8] sm:$0xff]
      %v455 = vld [vmem:[%s169 + $0x8b0] sm:$0xff]
      %v456 = vld [vmem:[%s169 + $0x8b8] sm:$0xff]
      %v457 = vld [vmem:[%s169 + $0x8c0] sm:$0xff]
      %v458 = vld [vmem:[%s169 + $0x8c8] sm:$0xff]
      %v459 = vld [vmem:[%s169 + $0x8d0] sm:$0xff]
      %v460 = vld [vmem:[%s169 + $0x8d8] sm:$0xff]
      %v461 = vld [vmem:[%s169 + $0x8e0] sm:$0xff]
      %v462 = vld [vmem:[%s169 + $0x8e8] sm:$0xff]
      %v463 = vld [vmem:[%s169 + $0x8f0] sm:$0xff]
      %v464 = vld [vmem:[%s169 + $0x8f8] sm:$0xff]
      %v465 = vld [vmem:[%s169 + $0x900] sm:$0xff]
      %v466 = vld [vmem:[%s169 + $0x908] sm:$0xff]
      %v467 = vld [vmem:[%s169 + $0x910] sm:$0xff]
      %v468 = vld [vmem:[%s169 + $0x918] sm:$0xff]
      %v469 = vld [vmem:[%s169 + $0x920] sm:$0xff]
      %v470 = vld [vmem:[%s169 + $0x928] sm:$0xff]
      %v471 = vld [vmem:[%s169 + $0x930] sm:$0xff]
      %v472 = vld [vmem:[%s169 + $0x938] sm:$0xff]
      %v473 = vld [vmem:[%s169 + $0x940] sm:$0xff]
      %v474 = vld [vmem:[%s169 + $0x948] sm:$0xff]
      %v475 = vld [vmem:[%s169 + $0x950] sm:$0xff]
      %v476 = vld [vmem:[%s169 + $0x958] sm:$0xff]
      %v477 = vld [vmem:[%s169 + $0x960] sm:$0xff]
      %v478 = vld [vmem:[%s169 + $0x968] sm:$0xff]
      %v479 = vld [vmem:[%s169 + $0x970] sm:$0xff]
      %v480 = vld [vmem:[%s169 + $0x978] sm:$0xff]
      %v481 = vld [vmem:[%s169 + $0x980] sm:$0xff]
      %v482 = vld [vmem:[%s169 + $0x988] sm:$0xff]
      %v483 = vld [vmem:[%s169 + $0x990] sm:$0xff]
      %v484 = vld [vmem:[%s169 + $0x998] sm:$0xff]
      %v485 = vld [vmem:[%s169 + $0x9a0] sm:$0xff]
      %v486 = vld [vmem:[%s169 + $0x9a8] sm:$0xff]
      %v487 = vld [vmem:[%s169 + $0x9b0] sm:$0xff]
      %v488 = vld [vmem:[%s169 + $0x9b8] sm:$0xff]
      %v489 = vld [vmem:[%s169 + $0x9c0] sm:$0xff]
      %v490 = vld [vmem:[%s169 + $0x9c8] sm:$0xff]
      %v491 = vld [vmem:[%s169 + $0x9d0] sm:$0xff]
      %v492 = vld [vmem:[%s169 + $0x9d8] sm:$0xff]
      %v493 = vld [vmem:[%s169 + $0x9e0] sm:$0xff]
      %v494 = vld [vmem:[%s169 + $0x9e8] sm:$0xff]
      %v495 = vld [vmem:[%s169 + $0x9f0] sm:$0xff]
      %v496 = vld [vmem:[%s169 + $0x9f8] sm:$0xff]
      %v497 = vld [vmem:[%s169 + $0xa00] sm:$0xff]
      %v498 = vld [vmem:[%s169 + $0xa08] sm:$0xff]
      %v499 = vld [vmem:[%s169 + $0xa10] sm:$0xff]
      %v500 = vld [vmem:[%s169 + $0xa18] sm:$0xff]
      %v501 = vld [vmem:[%s169 + $0xa20] sm:$0xff]
      %v502 = vld [vmem:[%s169 + $0xa28] sm:$0xff]
      %v503 = vld [vmem:[%s169 + $0xa30] sm:$0xff]
      %v504 = vld [vmem:[%s169 + $0xa38] sm:$0xff]
      %v505 = vld [vmem:[%s169 + $0xa40] sm:$0xff]
      %v506 = vld [vmem:[%s169 + $0xa48] sm:$0xff]
      %v507 = vld [vmem:[%s169 + $0xa50] sm:$0xff]
      %v508 = vld [vmem:[%s169 + $0xa58] sm:$0xff]
      %v509 = vld [vmem:[%s169 + $0xa60] sm:$0xff]
      %v510 = vld [vmem:[%s169 + $0xa68] sm:$0xff]
      %v511 = vld [vmem:[%s169 + $0xa70] sm:$0xff]
      %v512 = vld [vmem:[%s169 + $0xa78] sm:$0xff]
      %v513 = vld [vmem:[%s169 + $0xa80] sm:$0xff]
      %v514 = vld [vmem:[%s169 + $0xa88] sm:$0xff]
      %v515 = vld [vmem:[%s169 + $0xa90] sm:$0xff]
      %v516 = vld [vmem:[%s169 + $0xa98] sm:$0xff]
      %v517 = vld [vmem:[%s169 + $0xaa0] sm:$0xff]
      %v518 = vld [vmem:[%s169 + $0xaa8] sm:$0xff]
      %v519 = vld [vmem:[%s169 + $0xab0] sm:$0xff]
      %v520 = vld [vmem:[%s169 + $0xab8] sm:$0xff]
      %v521 = vld [vmem:[%s169 + $0xac0] sm:$0xff]
      %v522 = vld [vmem:[%s169 + $0xac8] sm:$0xff]
      %v523 = vld [vmem:[%s169 + $0xad0] sm:$0xff]
      %v524 = vld [vmem:[%s169 + $0xad8] sm:$0xff]
      %v525 = vld [vmem:[%s169 + $0xae0] sm:$0xff]
      %v526 = vld [vmem:[%s169 + $0xae8] sm:$0xff]
      %v527 = vld [vmem:[%s169 + $0xaf0] sm:$0xff]
      %v528 = vld [vmem:[%s169 + $0xaf8] sm:$0xff]
      %v529 = vld [vmem:[%s169 + $0xb00] sm:$0xff]
      %v530 = vld [vmem:[%s169 + $0xb08] sm:$0xff]
      %v531 = vld [vmem:[%s169 + $0xb10] sm:$0xff]
      %v532 = vld [vmem:[%s169 + $0xb18] sm:$0xff]
      %v533 = vld [vmem:[%s169 + $0xb20] sm:$0xff]
      %v534 = vld [vmem:[%s169 + $0xb28] sm:$0xff]
      %v535 = vld [vmem:[%s169 + $0xb30] sm:$0xff]
      %v536 = vld [vmem:[%s169 + $0xb38] sm:$0xff]
      %v537 = vld [vmem:[%s169 + $0xb40] sm:$0xff]
      %v538 = vld [vmem:[%s169 + $0xb48] sm:$0xff]
      %v539 = vld [vmem:[%s169 + $0xb50] sm:$0xff]
      %v540 = vld [vmem:[%s169 + $0xb58] sm:$0xff]
      %v541 = vld [vmem:[%s169 + $0xb60] sm:$0xff]
      %v542 = vld [vmem:[%s169 + $0xb68] sm:$0xff]
      %v543 = vld [vmem:[%s169 + $0xb70] sm:$0xff]
      %v544 = vld [vmem:[%s169 + $0xb78] sm:$0xff]
      %v545 = vld [vmem:[%s169 + $0xb80] sm:$0xff]
      %v546 = vld [vmem:[%s169 + $0xb88] sm:$0xff]
      %v547 = vld [vmem:[%s169 + $0xb90] sm:$0xff]
      %v548 = vld [vmem:[%s169 + $0xb98] sm:$0xff]
      %v549 = vld [vmem:[%s169 + $0xba0] sm:$0xff]
      %v550 = vld [vmem:[%s169 + $0xba8] sm:$0xff]
      %v551 = vld [vmem:[%s169 + $0xbb0] sm:$0xff]
      %v552 = vld [vmem:[%s169 + $0xbb8] sm:$0xff]
      %v553 = vld [vmem:[%s169 + $0xbc0] sm:$0xff]
      %v554 = vld [vmem:[%s169 + $0xbc8] sm:$0xff]
      %v555 = vld [vmem:[%s169 + $0xbd0] sm:$0xff]
      %v556 = vld [vmem:[%s169 + $0xbd8] sm:$0xff]
      %v557 = vld [vmem:[%s169 + $0xbe0] sm:$0xff]
      %v558 = vld [vmem:[%s169 + $0xbe8] sm:$0xff]
      %v559 = vld [vmem:[%s169 + $0xbf0] sm:$0xff]
      %v560 = vld [vmem:[%s169 + $0xbf8] sm:$0xff]
      %v561 = vld [vmem:[%s1] sm:$0xff]
      %v562 = vld [vmem:[%s1 + $0x8] sm:$0xff]
      %v563 = vld [vmem:[%s1 + $0x10] sm:$0xff]
      %v564 = vld [vmem:[%s1 + $0x18] sm:$0xff]
      %v565 = vld [vmem:[%s1 + $0x20] sm:$0xff]
      %v566 = vld [vmem:[%s1 + $0x28] sm:$0xff]
      %v567 = vld [vmem:[%s1 + $0x30] sm:$0xff]
      %v568 = vld [vmem:[%s1 + $0x38] sm:$0xff]
      %v569 = vld [vmem:[%s1 + $0x40] sm:$0xff]
      %v570 = vld [vmem:[%s1 + $0x48] sm:$0xff]
      %v571 = vld [vmem:[%s1 + $0x50] sm:$0xff]
      %v572 = vld [vmem:[%s1 + $0x58] sm:$0xff]
      %v573 = vld [vmem:[%s1 + $0x60] sm:$0xff]
      %v574 = vld [vmem:[%s1 + $0x68] sm:$0xff]
      %v575 = vld [vmem:[%s1 + $0x70] sm:$0xff]
      %v576 = vld [vmem:[%s1 + $0x78] sm:$0xff]
      %v577 = vld [vmem:[%s1 + $0x80] sm:$0xff]
      %v578 = vld [vmem:[%s1 + $0x88] sm:$0xff]
      %v579 = vld [vmem:[%s1 + $0x90] sm:$0xff]
      %v580 = vld [vmem:[%s1 + $0x98] sm:$0xff]
      %v581 = vld [vmem:[%s1 + $0xa0] sm:$0xff]
      %v582 = vld [vmem:[%s1 + $0xa8] sm:$0xff]
      %v583 = vld [vmem:[%s1 + $0xb0] sm:$0xff]
      %v584 = vld [vmem:[%s1 + $0xb8] sm:$0xff]
      %v585 = vld [vmem:[%s1 + $0xc0] sm:$0xff]
      %v586 = vld [vmem:[%s1 + $0xc8] sm:$0xff]
      %v587 = vld [vmem:[%s1 + $0xd0] sm:$0xff]
      %v588 = vld [vmem:[%s1 + $0xd8] sm:$0xff]
      %v589 = vld [vmem:[%s1 + $0xe0] sm:$0xff]
      %v590 = vld [vmem:[%s1 + $0xe8] sm:$0xff]
      %v591 = vld [vmem:[%s1 + $0xf0] sm:$0xff]
      %v592 = vld [vmem:[%s1 + $0xf8] sm:$0xff]
      %v593 = vld [vmem:[%s1 + $0x100] sm:$0xff]
      %v594 = vld [vmem:[%s1 + $0x108] sm:$0xff]
      %v595 = vld [vmem:[%s1 + $0x110] sm:$0xff]
      %v596 = vld [vmem:[%s1 + $0x118] sm:$0xff]
      %v597 = vld [vmem:[%s2] sm:$0x1]
      %v599 = vlaneseq
      %v600 = vshrl.u32 %v599, 7
      %v601 = vsub.s32 0, %v600
      %v602 = vrot.slane %v597, %v601
      %vm604 = vcmask 261120
      %v606 = vsel %vm604, %v179, 0
      %v609 = vsel %vm604, %v182, 0
      %v612 = vsel %vm604, %v185, 0
      %v615 = vsel %vm604, %v188, 0
      %v618 = vsel %vm604, %v191, 0
      %v621 = vsel %vm604, %v194, 0
      %v624 = vsel %vm604, %v197, 0
      %v627 = vsel %vm604, %v200, 0
      %v630 = vsel %vm604, %v203, 0
      %v633 = vsel %vm604, %v206, 0
      %v636 = vsel %vm604, %v209, 0
      %v639 = vsel %vm604, %v212, 0
      %v642 = vsel %vm604, %v215, 0
      %v645 = vsel %vm604, %v218, 0
      %v648 = vsel %vm604, %v221, 0
      %v651 = vsel %vm604, %v224, 0
      %v654 = vsel %vm604, %v227, 0
      %v657 = vsel %vm604, %v230, 0
      %v660 = vsel %vm604, %v233, 0
      %v663 = vsel %vm604, %v236, 0
      %v666 = vsel %vm604, %v239, 0
      %v669 = vsel %vm604, %v242, 0
      %v672 = vsel %vm604, %v245, 0
      %v675 = vsel %vm604, %v248, 0
      %v678 = vsel %vm604, %v251, 0
      %v681 = vsel %vm604, %v254, 0
      %v684 = vsel %vm604, %v257, 0
      %v687 = vsel %vm604, %v260, 0
      %v690 = vsel %vm604, %v263, 0
      %v693 = vsel %vm604, %v266, 0
      %v696 = vsel %vm604, %v269, 0
      %v699 = vsel %vm604, %v272, 0
      %v702 = vsel %vm604, %v275, 0
      %v705 = vsel %vm604, %v278, 0
      %v708 = vsel %vm604, %v281, 0
      %v711 = vsel %vm604, %v284, 0
      %v714 = vsel %vm604, %v287, 0
      %v717 = vsel %vm604, %v290, 0
      %v720 = vsel %vm604, %v293, 0
      %v723 = vsel %vm604, %v296, 0
      %v726 = vsel %vm604, %v299, 0
      %v729 = vsel %vm604, %v302, 0
      %v732 = vsel %vm604, %v305, 0
      %v735 = vsel %vm604, %v308, 0
      %v738 = vsel %vm604, %v311, 0
      %v741 = vsel %vm604, %v314, 0
      %v744 = vsel %vm604, %v317, 0
      %v747 = vsel %vm604, %v320, 0
      %v750 = vsel %vm604, %v323, 0
      %v753 = vsel %vm604, %v326, 0
      %v756 = vsel %vm604, %v329, 0
      %v759 = vsel %vm604, %v332, 0
      %v762 = vsel %vm604, %v335, 0
      %v765 = vsel %vm604, %v338, 0
      %v768 = vsel %vm604, %v341, 0
      %v771 = vsel %vm604, %v344, 0
      %v774 = vsel %vm604, %v347, 0
      %v777 = vsel %vm604, %v350, 0
      %v780 = vsel %vm604, %v353, 0
      %v783 = vsel %vm604, %v356, 0
      %v786 = vsel %vm604, %v359, 0
      %v789 = vsel %vm604, %v362, 0
      %v792 = vsel %vm604, %v365, 0
      %v795 = vsel %vm604, %v368, 0
      %v798 = vsel %vm604, %v371, 0
      %v801 = vsel %vm604, %v374, 0
      %v804 = vsel %vm604, %v377, 0
      %v807 = vsel %vm604, %v380, 0
      %v810 = vsel %vm604, %v383, 0
      %v813 = vsel %vm604, %v386, 0
      %v816 = vsel %vm604, %v389, 0
      %v819 = vsel %vm604, %v392, 0
      %v822 = vsel %vm604, %v395, 0
      %v825 = vsel %vm604, %v398, 0
      %v828 = vsel %vm604, %v401, 0
      %v831 = vsel %vm604, %v404, 0
      %v834 = vsel %vm604, %v407, 0
      %v837 = vsel %vm604, %v410, 0
      %v840 = vsel %vm604, %v413, 0
      %v843 = vsel %vm604, %v416, 0
      %v846 = vsel %vm604, %v419, 0
      %v849 = vsel %vm604, %v422, 0
      %v852 = vsel %vm604, %v425, 0
      %v855 = vsel %vm604, %v428, 0
      %v858 = vsel %vm604, %v431, 0
      %v861 = vsel %vm604, %v434, 0
      %v864 = vsel %vm604, %v437, 0
      %v867 = vsel %vm604, %v440, 0
      %v870 = vsel %vm604, %v443, 0
      %v873 = vsel %vm604, %v446, 0
      %v876 = vsel %vm604, %v449, 0
      %v879 = vsel %vm604, %v452, 0
      %v882 = vsel %vm604, %v455, 0
      %v885 = vsel %vm604, %v458, 0
      %v888 = vsel %vm604, %v461, 0
      %v891 = vsel %vm604, %v464, 0
      %v894 = vsel %vm604, %v467, 0
      %v897 = vsel %vm604, %v470, 0
      %v900 = vsel %vm604, %v473, 0
      %v903 = vsel %vm604, %v476, 0
      %v906 = vsel %vm604, %v479, 0
      %v909 = vsel %vm604, %v482, 0
      %v912 = vsel %vm604, %v485, 0
      %v915 = vsel %vm604, %v488, 0
      %v918 = vsel %vm604, %v491, 0
      %v921 = vsel %vm604, %v494, 0
      %v924 = vsel %vm604, %v497, 0
      %v927 = vsel %vm604, %v500, 0
      %v930 = vsel %vm604, %v503, 0
      %v933 = vsel %vm604, %v506, 0
      %v936 = vsel %vm604, %v509, 0
      %v939 = vsel %vm604, %v512, 0
      %v942 = vsel %vm604, %v515, 0
      %v945 = vsel %vm604, %v518, 0
      %v948 = vsel %vm604, %v521, 0
      %v951 = vsel %vm604, %v524, 0
      %v954 = vsel %vm604, %v527, 0
      %v957 = vsel %vm604, %v530, 0
      %v960 = vsel %vm604, %v533, 0
      %v963 = vsel %vm604, %v536, 0
      %v966 = vsel %vm604, %v539, 0
      %v969 = vsel %vm604, %v542, 0
      %v972 = vsel %vm604, %v545, 0
      %v975 = vsel %vm604, %v548, 0
      %v978 = vsel %vm604, %v551, 0
      %v981 = vsel %vm604, %v554, 0
      %v984 = vsel %vm604, %v557, 0
      %v987 = vsel %vm604, %v560, 0
      %989 = vmatprep.subr.mxu0 0.0
      %990 = vmatpush1.msra.mxu0 %v561
      %991 = vmatprep.subr.mxu0 0.0
      %992 = vmatpush1.msra.mxu0 %v562
      %993 = vmatprep.subr.mxu0 0.0
      %994 = vmatpush1.msra.mxu0 %v563
      %995 = vmatprep.subr.mxu0 0.0
      %996 = vmatpush1.msra.mxu0 %v564
      %997 = vmatprep.subr.mxu0 0.0
      %998 = vmatpush1.msra.mxu0 %v565
      %999 = vmatprep.subr.mxu0 0.0
      %1000 = vmatpush1.msra.mxu0 %v566
      %1001 = vmatprep.subr.mxu0 0.0
      %1002 = vmatpush1.msra.mxu0 %v567
      %1003 = vmatprep.subr.mxu0 0.0
      %1004 = vmatpush1.msra.mxu0 %v568
      %1005 = vmatprep.subr.mxu0 0.0
      %1006 = vmatpush1.msra.mxu0 %v569
      %1007 = vmatprep.subr.mxu0 0.0
      %1008 = vmatpush1.msra.mxu0 %v570
      %1009 = vmatprep.subr.mxu0 0.0
      %1010 = vmatpush1.msra.mxu0 %v571
      %1011 = vmatprep.subr.mxu0 0.0
      %1012 = vmatpush1.msra.mxu0 %v572
      %1013 = vmatprep.subr.mxu0 0.0
      %1014 = vmatpush1.msra.mxu0 %v573
      %1015 = vmatprep.subr.mxu0 0.0
      %1016 = vmatpush1.msra.mxu0 %v574
      %1017 = vmatprep.subr.mxu0 0.0
      %1018 = vmatpush1.msra.mxu0 %v575
      %1019 = vmatprep.subr.mxu0 0.0
      %1020 = vmatpush1.msra.mxu0 %v576
      %1021 = vmatprep.subr.mxu0 0.0
      %1022 = vmatpush1.msra.mxu0 %v577
      %1023 = vmatprep.subr.mxu0 0.0
      %1024 = vmatpush1.msra.mxu0 %v578
      %1025 = vmatprep.subr.mxu0 0.0
      %1026 = vmatpush1.msra.mxu0 %v579
      %1027 = vmatprep.subr.mxu0 0.0
      %1028 = vmatpush1.msra.mxu0 %v580
      %1029 = vmatprep.subr.mxu0 0.0
      %1030 = vmatpush1.msra.mxu0 %v581
      %1031 = vmatprep.subr.mxu0 0.0
      %1032 = vmatpush1.msra.mxu0 %v582
      %1033 = vmatprep.subr.mxu0 0.0
      %1034 = vmatpush1.msra.mxu0 %v583
      %1035 = vmatprep.subr.mxu0 0.0
      %1036 = vmatpush1.msra.mxu0 %v584
      %1037 = vmatprep.subr.mxu0 0.0
      %1038 = vmatpush1.msra.mxu0 %v585
      %1039 = vmatprep.subr.mxu0 0.0
      %1040 = vmatpush1.msra.mxu0 %v586
      %1041 = vmatprep.subr.mxu0 0.0
      %1042 = vmatpush1.msra.mxu0 %v587
      %1043 = vmatprep.subr.mxu0 0.0
      %1044 = vmatpush1.msra.mxu0 %v588
      %1045 = vmatprep.subr.mxu0 0.0
      %1046 = vmatpush1.msra.mxu0 %v589
      %1047 = vmatprep.subr.mxu0 0.0
      %1048 = vmatpush1.msra.mxu0 %v590
      %1049 = vmatprep.subr.mxu0 0.0
      %1050 = vmatpush1.msra.mxu0 %v591
      %1051 = vmatprep.subr.mxu0 0.0
      %1052 = vmatpush1.msra.mxu0 %v592
      %1053 = vmatprep.mubr.f32.mxu0 %v178
      %1054 = vmatmul.mubr.f32.gmra.mrb[0].mxu0 %v177
      %v1055 = vpop.f32.mrb[0].mxu0
      %v1056 = vadd.f32 %v602, %v1055
      %v1057 = vpop.f32.mrb[0].mxu0
      %1058 = vmatprep.mubr.f32.mxu0 %v181
      %1059 = vmatmul.mubr.f32.gmra.mrb[0].mxu0 %v180
      %v1060 = vpop.f32.mrb[0].mxu0
      %v1061 = vadd.f32 %v602, %v1060
      %v1062 = vpop.f32.mrb[0].mxu0
      %1063 = vmatprep.mubr.f32.mxu0 %v184
      %1064 = vmatmul.mubr.f32.gmra.mrb[0].mxu0 %v183
      %v1065 = vpop.f32.mrb[0].mxu0
      %v1066 = vadd.f32 %v602, %v1065
      %v1067 = vpop.f32.mrb[0].mxu0
      %1068 = vmatprep.mubr.f32.mxu0 %v187
      %1069 = vmatmul.mubr.f32.gmra.mrb[0].mxu0 %v186
      %v1070 = vpop.f32.mrb[0].mxu0
      %v1071 = vadd.f32 %v602, %v1070
      %v1072 = vpop.f32.mrb[0].mxu0
      %1073 = vmatprep.mubr.f32.mxu0 %v190
      %1074 = vmatmul.mubr.f32.gmra.mrb[0].mxu0 %v189
      %v1075 = vpop.f32.mrb[0].mxu0
      %v1076 = vadd.f32 %v602, %v1075
      %v1077 = vpop.f32.mrb[0].mxu0
      %1078 = vmatprep.mubr.f32.mxu0 %v193
      %1079 = vmatmul.mubr.f32.gmra.mrb[0].mxu0 %v192
      %v1080 = vpop.f32.mrb[0].mxu0
      %v1081 = vadd.f32 %v602, %v1080
      %v1082 = vpop.f32.mrb[0].mxu0
      %1083 = vmatprep.mubr.f32.mxu0 %v196
      %1084 = vmatmul.mubr.f32.gmra.mrb[0].mxu0 %v195
      %v1085 = vpop.f32.mrb[0].mxu0
      %v1086 = vadd.f32 %v602, %v1085
      %v1087 = vpop.f32.mrb[0].mxu0
      %1088 = vmatprep.mubr.f32.mxu0 %v199
      %1089 = vmatmul.mubr.f32.gmra.mrb[0].mxu0 %v198
      %v1090 = vpop.f32.mrb[0].mxu0
      %v1091 = vadd.f32 %v602, %v1090
      %v1092 = vpop.f32.mrb[0].mxu0
      %1093 = vmatprep.mubr.f32.mxu0 %v202
      %1094 = vmatmul.mubr.f32.gmra.mrb[0].mxu0 %v201
      %v1095 = vpop.f32.mrb[0].mxu0
      %v1096 = vadd.f32 %v602, %v1095
      %v1097 = vpop.f32.mrb[0].mxu0
      %1098 = vmatprep.mubr.f32.mxu0 %v205
      %1099 = vmatmul.mubr.f32.gmra.mrb[0].mxu0 %v204
      %v1100 = vpop.f32.mrb[0].mxu0
      %v1101 = vadd.f32 %v602, %v1100
      %v1102 = vpop.f32.mrb[0].mxu0
      %1103 = vmatprep.mubr.f32.mxu0 %v208
      %1104 = vmatmul.mubr.f32.gmra.mrb[0].mxu0 %v207
      %v1105 = vpop.f32.mrb[0].mxu0
      %v1106 = vadd.f32 %v602, %v1105
      %v1107 = vpop.f32.mrb[0].mxu0
      %1108 = vmatprep.mubr.f32.mxu0 %v211
      %1109 = vmatmul.mubr.f32.gmra.mrb[0].mxu0 %v210
      %v1110 = vpop.f32.mrb[0].mxu0
      %v1111 = vadd.f32 %v602, %v1110
      %v1112 = vpop.f32.mrb[0].mxu0
      %1113 = vmatprep.mubr.f32.mxu0 %v214
      %1114 = vmatmul.mubr.f32.gmra.mrb[0].mxu0 %v213
      %v1115 = vpop.f32.mrb[0].mxu0
      %v1116 = vadd.f32 %v602, %v1115
      %v1117 = vpop.f32.mrb[0].mxu0
      %1118 = vmatprep.mubr.f32.mxu0 %v217
      %1119 = vmatmul.mubr.f32.gmra.mrb[0].mxu0 %v216
      %v1120 = vpop.f32.mrb[0].mxu0
      %v1121 = vadd.f32 %v602, %v1120
      %v1122 = vpop.f32.mrb[0].mxu0
      %1123 = vmatprep.mubr.f32.mxu0 %v220
      %1124 = vmatmul.mubr.f32.gmra.mrb[0].mxu0 %v219
      %v1125 = vpop.f32.mrb[0].mxu0
      %v1126 = vadd.f32 %v602, %v1125
      %v1127 = vpop.f32.mrb[0].mxu0
      %1128 = vmatprep.mubr.f32.mxu0 %v223
      %1129 = vmatmul.mubr.f32.gmra.mrb[0].mxu0 %v222
      %v1130 = vpop.f32.mrb[0].mxu0
      %v1131 = vadd.f32 %v602, %v1130
      %v1132 = vpop.f32.mrb[0].mxu0
      %1133 = vmatprep.mubr.f32.mxu0 %v226
      %1134 = vmatmul.mubr.f32.gmra.mrb[0].mxu0 %v225
      %v1135 = vpop.f32.mrb[0].mxu0
      %v1136 = vadd.f32 %v602, %v1135
      %v1137 = vpop.f32.mrb[0].mxu0
      %1138 = vmatprep.mubr.f32.mxu0 %v229
      %1139 = vmatmul.mubr.f32.gmra.mrb[0].mxu0 %v228
      %v1140 = vpop.f32.mrb[0].mxu0
      %v1141 = vadd.f32 %v602, %v1140
      %v1142 = vpop.f32.mrb[0].mxu0
      %1143 = vmatprep.mubr.f32.mxu0 %v232
      %1144 = vmatmul.mubr.f32.gmra.mrb[0].mxu0 %v231
      %v1145 = vpop.f32.mrb[0].mxu0
      %v1146 = vadd.f32 %v602, %v1145
      %v1147 = vpop.f32.mrb[0].mxu0
      %1148 = vmatprep.mubr.f32.mxu0 %v235
      %1149 = vmatmul.mubr.f32.gmra.mrb[0].mxu0 %v234
      %v1150 = vpop.f32.mrb[0].mxu0
      %v1151 = vadd.f32 %v602, %v1150
      %v1152 = vpop.f32.mrb[0].mxu0
      %1153 = vmatprep.mubr.f32.mxu0 %v238
      %1154 = vmatmul.mubr.f32.gmra.mrb[0].mxu0 %v237
      %v1155 = vpop.f32.mrb[0].mxu0
      %v1156 = vadd.f32 %v602, %v1155
      %v1157 = vpop.f32.mrb[0].mxu0
      %1158 = vmatprep.mubr.f32.mxu0 %v241
      %1159 = vmatmul.mubr.f32.gmra.mrb[0].mxu0 %v240
      %v1160 = vpop.f32.mrb[0].mxu0
      %v1161 = vadd.f32 %v602, %v1160
      %v1162 = vpop.f32.mrb[0].mxu0
      %1163 = vmatprep.mubr.f32.mxu0 %v244
      %1164 = vmatmul.mubr.f32.gmra.mrb[0].mxu0 %v243
      %v1165 = vpop.f32.mrb[0].mxu0
      %v1166 = vadd.f32 %v602, %v1165
      %v1167 = vpop.f32.mrb[0].mxu0
      %1168 = vmatprep.mubr.f32.mxu0 %v247
      %1169 = vmatmul.mubr.f32.gmra.mrb[0].mxu0 %v246
      %v1170 = vpop.f32.mrb[0].mxu0
      %v1171 = vadd.f32 %v602, %v1170
      %v1172 = vpop.f32.mrb[0].mxu0
      %1173 = vmatprep.mubr.f32.mxu0 %v250
      %1174 = vmatmul.mubr.f32.gmra.mrb[0].mxu0 %v249
      %v1175 = vpop.f32.mrb[0].mxu0
      %v1176 = vadd.f32 %v602, %v1175
      %v1177 = vpop.f32.mrb[0].mxu0
      %1178 = vmatprep.mubr.f32.mxu0 %v253
      %1179 = vmatmul.mubr.f32.gmra.mrb[0].mxu0 %v252
      %v1180 = vpop.f32.mrb[0].mxu0
      %v1181 = vadd.f32 %v602, %v1180
      %v1182 = vpop.f32.mrb[0].mxu0
      %1183 = vmatprep.mubr.f32.mxu0 %v256
      %1184 = vmatmul.mubr.f32.gmra.mrb[0].mxu0 %v255
      %v1185 = vpop.f32.mrb[0].mxu0
      %v1186 = vadd.f32 %v602, %v1185
      %v1187 = vpop.f32.mrb[0].mxu0
      %1188 = vmatprep.mubr.f32.mxu0 %v259
      %1189 = vmatmul.mubr.f32.gmra.mrb[0].mxu0 %v258
      %v1190 = vpop.f32.mrb[0].mxu0
      %v1191 = vadd.f32 %v602, %v1190
      %v1192 = vpop.f32.mrb[0].mxu0
      %1193 = vmatprep.mubr.f32.mxu0 %v262
      %1194 = vmatmul.mubr.f32.gmra.mrb[0].mxu0 %v261
      %v1195 = vpop.f32.mrb[0].mxu0
      %v1196 = vadd.f32 %v602, %v1195
      %v1197 = vpop.f32.mrb[0].mxu0
      %1198 = vmatprep.mubr.f32.mxu0 %v265
      %1199 = vmatmul.mubr.f32.gmra.mrb[0].mxu0 %v264
      %v1200 = vpop.f32.mrb[0].mxu0
      %v1201 = vadd.f32 %v602, %v1200
      %v1202 = vpop.f32.mrb[0].mxu0
      %1203 = vmatprep.mubr.f32.mxu0 %v268
      %1204 = vmatmul.mubr.f32.gmra.mrb[0].mxu0 %v267
      %v1205 = vpop.f32.mrb[0].mxu0
      %v1206 = vadd.f32 %v602, %v1205
      %v1207 = vpop.f32.mrb[0].mxu0
      %1208 = vmatprep.mubr.f32.mxu0 %v271
      %1209 = vmatmul.mubr.f32.gmra.mrb[0].mxu0 %v270
      %v1210 = vpop.f32.mrb[0].mxu0
      %v1211 = vadd.f32 %v602, %v1210
      %v1212 = vpop.f32.mrb[0].mxu0
      %1213 = vmatprep.mubr.f32.mxu0 %v274
      %1214 = vmatmul.mubr.f32.gmra.mrb[0].mxu0 %v273
      %v1215 = vpop.f32.mrb[0].mxu0
      %v1216 = vadd.f32 %v602, %v1215
      %v1217 = vpop.f32.mrb[0].mxu0
      %1218 = vmatprep.mubr.f32.mxu0 %v277
      %1219 = vmatmul.mubr.f32.gmra.mrb[0].mxu0 %v276
      %v1220 = vpop.f32.mrb[0].mxu0
      %v1221 = vadd.f32 %v602, %v1220
      %v1222 = vpop.f32.mrb[0].mxu0
      %1223 = vmatprep.mubr.f32.mxu0 %v280
      %1224 = vmatmul.mubr.f32.gmra.mrb[0].mxu0 %v279
      %v1225 = vpop.f32.mrb[0].mxu0
      %v1226 = vadd.f32 %v602, %v1225
      %v1227 = vpop.f32.mrb[0].mxu0
      %1228 = vmatprep.mubr.f32.mxu0 %v283
      %1229 = vmatmul.mubr.f32.gmra.mrb[0].mxu0 %v282
      %v1230 = vpop.f32.mrb[0].mxu0
      %v1231 = vadd.f32 %v602, %v1230
      %v1232 = vpop.f32.mrb[0].mxu0
      %1233 = vmatprep.mubr.f32.mxu0 %v286
      %1234 = vmatmul.mubr.f32.gmra.mrb[0].mxu0 %v285
      %v1235 = vpop.f32.mrb[0].mxu0
      %v1236 = vadd.f32 %v602, %v1235
      %v1237 = vpop.f32.mrb[0].mxu0
      %1238 = vmatprep.mubr.f32.mxu0 %v289
      %1239 = vmatmul.mubr.f32.gmra.mrb[0].mxu0 %v288
      %v1240 = vpop.f32.mrb[0].mxu0
      %v1241 = vadd.f32 %v602, %v1240
      %v1242 = vpop.f32.mrb[0].mxu0
      %1243 = vmatprep.mubr.f32.mxu0 %v292
      %1244 = vmatmul.mubr.f32.gmra.mrb[0].mxu0 %v291
      %v1245 = vpop.f32.mrb[0].mxu0
      %v1246 = vadd.f32 %v602, %v1245
      %v1247 = vpop.f32.mrb[0].mxu0
      %1248 = vmatprep.mubr.f32.mxu0 %v295
      %1249 = vmatmul.mubr.f32.gmra.mrb[0].mxu0 %v294
      %v1250 = vpop.f32.mrb[0].mxu0
      %v1251 = vadd.f32 %v602, %v1250
      %v1252 = vpop.f32.mrb[0].mxu0
      %1253 = vmatprep.mubr.f32.mxu0 %v298
      %1254 = vmatmul.mubr.f32.gmra.mrb[0].mxu0 %v297
      %v1255 = vpop.f32.mrb[0].mxu0
      %v1256 = vadd.f32 %v602, %v1255
      %v1257 = vpop.f32.mrb[0].mxu0
      %1258 = vmatprep.mubr.f32.mxu0 %v301
      %1259 = vmatmul.mubr.f32.gmra.mrb[0].mxu0 %v300
      %v1260 = vpop.f32.mrb[0].mxu0
      %v1261 = vadd.f32 %v602, %v1260
      %v1262 = vpop.f32.mrb[0].mxu0
      %1263 = vmatprep.mubr.f32.mxu0 %v304
      %1264 = vmatmul.mubr.f32.gmra.mrb[0].mxu0 %v303
      %v1265 = vpop.f32.mrb[0].mxu0
      %v1266 = vadd.f32 %v602, %v1265
      %v1267 = vpop.f32.mrb[0].mxu0
      %1268 = vmatprep.mubr.f32.mxu0 %v307
      %1269 = vmatmul.mubr.f32.gmra.mrb[0].mxu0 %v306
      %v1270 = vpop.f32.mrb[0].mxu0
      %v1271 = vadd.f32 %v602, %v1270
      %v1272 = vpop.f32.mrb[0].mxu0
      %1273 = vmatprep.mubr.f32.mxu0 %v310
      %1274 = vmatmul.mubr.f32.gmra.mrb[0].mxu0 %v309
      %v1275 = vpop.f32.mrb[0].mxu0
      %v1276 = vadd.f32 %v602, %v1275
      %v1277 = vpop.f32.mrb[0].mxu0
      %1278 = vmatprep.mubr.f32.mxu0 %v313
      %1279 = vmatmul.mubr.f32.gmra.mrb[0].mxu0 %v312
      %v1280 = vpop.f32.mrb[0].mxu0
      %v1281 = vadd.f32 %v602, %v1280
      %v1282 = vpop.f32.mrb[0].mxu0
      %1283 = vmatprep.mubr.f32.mxu0 %v316
      %1284 = vmatmul.mubr.f32.gmra.mrb[0].mxu0 %v315
      %v1285 = vpop.f32.mrb[0].mxu0
      %v1286 = vadd.f32 %v602, %v1285
      %v1287 = vpop.f32.mrb[0].mxu0
      %1288 = vmatprep.mubr.f32.mxu0 %v319
      %1289 = vmatmul.mubr.f32.gmra.mrb[0].mxu0 %v318
      %v1290 = vpop.f32.mrb[0].mxu0
      %v1291 = vadd.f32 %v602, %v1290
      %v1292 = vpop.f32.mrb[0].mxu0
      %1293 = vmatprep.mubr.f32.mxu0 %v322
      %1294 = vmatmul.mubr.f32.gmra.mrb[0].mxu0 %v321
      %v1295 = vpop.f32.mrb[0].mxu0
      %v1296 = vadd.f32 %v602, %v1295
      %v1297 = vpop.f32.mrb[0].mxu0
      %1298 = vmatprep.mubr.f32.mxu0 %v325
      %1299 = vmatmul.mubr.f32.gmra.mrb[0].mxu0 %v324
      %v1300 = vpop.f32.mrb[0].mxu0
      %v1301 = vadd.f32 %v602, %v1300
      %v1302 = vpop.f32.mrb[0].mxu0
      %1303 = vmatprep.mubr.f32.mxu0 %v328
      %1304 = vmatmul.mubr.f32.gmra.mrb[0].mxu0 %v327
      %v1305 = vpop.f32.mrb[0].mxu0
      %v1306 = vadd.f32 %v602, %v1305
      %v1307 = vpop.f32.mrb[0].mxu0
      %1308 = vmatprep.mubr.f32.mxu0 %v331
      %1309 = vmatmul.mubr.f32.gmra.mrb[0].mxu0 %v330
      %v1310 = vpop.f32.mrb[0].mxu0
      %v1311 = vadd.f32 %v602, %v1310
      %v1312 = vpop.f32.mrb[0].mxu0
      %1313 = vmatprep.mubr.f32.mxu0 %v334
      %1314 = vmatmul.mubr.f32.gmra.mrb[0].mxu0 %v333
      %v1315 = vpop.f32.mrb[0].mxu0
      %v1316 = vadd.f32 %v602, %v1315
      %v1317 = vpop.f32.mrb[0].mxu0
      %1318 = vmatprep.mubr.f32.mxu0 %v337
      %1319 = vmatmul.mubr.f32.gmra.mrb[0].mxu0 %v336
      %v1320 = vpop.f32.mrb[0].mxu0
      %v1321 = vadd.f32 %v602, %v1320
      %v1322 = vpop.f32.mrb[0].mxu0
      %1323 = vmatprep.mubr.f32.mxu0 %v340
      %1324 = vmatmul.mubr.f32.gmra.mrb[0].mxu0 %v339
      %v1325 = vpop.f32.mrb[0].mxu0
      %v1326 = vadd.f32 %v602, %v1325
      %v1327 = vpop.f32.mrb[0].mxu0
      %1328 = vmatprep.mubr.f32.mxu0 %v343
      %1329 = vmatmul.mubr.f32.gmra.mrb[0].mxu0 %v342
      %v1330 = vpop.f32.mrb[0].mxu0
      %v1331 = vadd.f32 %v602, %v1330
      %v1332 = vpop.f32.mrb[0].mxu0
      %1333 = vmatprep.mubr.f32.mxu0 %v346
      %1334 = vmatmul.mubr.f32.gmra.mrb[0].mxu0 %v345
      %v1335 = vpop.f32.mrb[0].mxu0
      %v1336 = vadd.f32 %v602, %v1335
      %v1337 = vpop.f32.mrb[0].mxu0
      %1338 = vmatprep.mubr.f32.mxu0 %v349
      %1339 = vmatmul.mubr.f32.gmra.mrb[0].mxu0 %v348
      %v1340 = vpop.f32.mrb[0].mxu0
      %v1341 = vadd.f32 %v602, %v1340
      %v1342 = vpop.f32.mrb[0].mxu0
      %1343 = vmatprep.mubr.f32.mxu0 %v352
      %1344 = vmatmul.mubr.f32.gmra.mrb[0].mxu0 %v351
      %v1345 = vpop.f32.mrb[0].mxu0
      %v1346 = vadd.f32 %v602, %v1345
      %v1347 = vpop.f32.mrb[0].mxu0
      %1348 = vmatprep.mubr.f32.mxu0 %v355
      %1349 = vmatmul.mubr.f32.gmra.mrb[0].mxu0 %v354
      %v1350 = vpop.f32.mrb[0].mxu0
      %v1351 = vadd.f32 %v602, %v1350
      %v1352 = vpop.f32.mrb[0].mxu0
      %1353 = vmatprep.mubr.f32.mxu0 %v358
      %1354 = vmatmul.mubr.f32.gmra.mrb[0].mxu0 %v357
      %v1355 = vpop.f32.mrb[0].mxu0
      %v1356 = vadd.f32 %v602, %v1355
      %v1357 = vpop.f32.mrb[0].mxu0
      %1358 = vmatprep.mubr.f32.mxu0 %v361
      %1359 = vmatmul.mubr.f32.gmra.mrb[0].mxu0 %v360
      %v1360 = vpop.f32.mrb[0].mxu0
      %v1361 = vadd.f32 %v602, %v1360
      %v1362 = vpop.f32.mrb[0].mxu0
      %1363 = vmatprep.mubr.f32.mxu0 %v364
      %1364 = vmatmul.mubr.f32.gmra.mrb[0].mxu0 %v363
      %v1365 = vpop.f32.mrb[0].mxu0
      %v1366 = vadd.f32 %v602, %v1365
      %v1367 = vpop.f32.mrb[0].mxu0
      %1368 = vmatprep.mubr.f32.mxu0 %v367
      %1369 = vmatmul.mubr.f32.gmra.mrb[0].mxu0 %v366
      %v1370 = vpop.f32.mrb[0].mxu0
      %v1371 = vadd.f32 %v602, %v1370
      %v1372 = vpop.f32.mrb[0].mxu0
      %1373 = vmatprep.mubr.f32.mxu0 %v370
      %1374 = vmatmul.mubr.f32.gmra.mrb[0].mxu0 %v369
      %v1375 = vpop.f32.mrb[0].mxu0
      %v1376 = vadd.f32 %v602, %v1375
      %v1377 = vpop.f32.mrb[0].mxu0
      %1378 = vmatprep.mubr.f32.mxu0 %v373
      %1379 = vmatmul.mubr.f32.gmra.mrb[0].mxu0 %v372
      %v1380 = vpop.f32.mrb[0].mxu0
      %v1381 = vadd.f32 %v602, %v1380
      %v1382 = vpop.f32.mrb[0].mxu0
      %1383 = vmatprep.mubr.f32.mxu0 %v376
      %1384 = vmatmul.mubr.f32.gmra.mrb[0].mxu0 %v375
      %v1385 = vpop.f32.mrb[0].mxu0
      %v1386 = vadd.f32 %v602, %v1385
      %v1387 = vpop.f32.mrb[0].mxu0
      %1388 = vmatprep.mubr.f32.mxu0 %v379
      %1389 = vmatmul.mubr.f32.gmra.mrb[0].mxu0 %v378
      %v1390 = vpop.f32.mrb[0].mxu0
      %v1391 = vadd.f32 %v602, %v1390
      %v1392 = vpop.f32.mrb[0].mxu0
      %1393 = vmatprep.mubr.f32.mxu0 %v382
      %1394 = vmatmul.mubr.f32.gmra.mrb[0].mxu0 %v381
      %v1395 = vpop.f32.mrb[0].mxu0
      %v1396 = vadd.f32 %v602, %v1395
      %v1397 = vpop.f32.mrb[0].mxu0
      %1398 = vmatprep.mubr.f32.mxu0 %v385
      %1399 = vmatmul.mubr.f32.gmra.mrb[0].mxu0 %v384
      %v1400 = vpop.f32.mrb[0].mxu0
      %v1401 = vadd.f32 %v602, %v1400
      %v1402 = vpop.f32.mrb[0].mxu0
      %1403 = vmatprep.mubr.f32.mxu0 %v388
      %1404 = vmatmul.mubr.f32.gmra.mrb[0].mxu0 %v387
      %v1405 = vpop.f32.mrb[0].mxu0
      %v1406 = vadd.f32 %v602, %v1405
      %v1407 = vpop.f32.mrb[0].mxu0
      %1408 = vmatprep.mubr.f32.mxu0 %v391
      %1409 = vmatmul.mubr.f32.gmra.mrb[0].mxu0 %v390
      %v1410 = vpop.f32.mrb[0].mxu0
      %v1411 = vadd.f32 %v602, %v1410
      %v1412 = vpop.f32.mrb[0].mxu0
      %1413 = vmatprep.mubr.f32.mxu0 %v394
      %1414 = vmatmul.mubr.f32.gmra.mrb[0].mxu0 %v393
      %v1415 = vpop.f32.mrb[0].mxu0
      %v1416 = vadd.f32 %v602, %v1415
      %v1417 = vpop.f32.mrb[0].mxu0
      %1418 = vmatprep.mubr.f32.mxu0 %v397
      %1419 = vmatmul.mubr.f32.gmra.mrb[0].mxu0 %v396
      %v1420 = vpop.f32.mrb[0].mxu0
      %v1421 = vadd.f32 %v602, %v1420
      %v1422 = vpop.f32.mrb[0].mxu0
      %1423 = vmatprep.mubr.f32.mxu0 %v400
      %1424 = vmatmul.mubr.f32.gmra.mrb[0].mxu0 %v399
      %v1425 = vpop.f32.mrb[0].mxu0
      %v1426 = vadd.f32 %v602, %v1425
      %v1427 = vpop.f32.mrb[0].mxu0
      %1428 = vmatprep.mubr.f32.mxu0 %v403
      %1429 = vmatmul.mubr.f32.gmra.mrb[0].mxu0 %v402
      %v1430 = vpop.f32.mrb[0].mxu0
      %v1431 = vadd.f32 %v602, %v1430
      %v1432 = vpop.f32.mrb[0].mxu0
      %1433 = vmatprep.mubr.f32.mxu0 %v406
      %1434 = vmatmul.mubr.f32.gmra.mrb[0].mxu0 %v405
      %v1435 = vpop.f32.mrb[0].mxu0
      %v1436 = vadd.f32 %v602, %v1435
      %v1437 = vpop.f32.mrb[0].mxu0
      %1438 = vmatprep.mubr.f32.mxu0 %v409
      %1439 = vmatmul.mubr.f32.gmra.mrb[0].mxu0 %v408
      %v1440 = vpop.f32.mrb[0].mxu0
      %v1441 = vadd.f32 %v602, %v1440
      %v1442 = vpop.f32.mrb[0].mxu0
      %1443 = vmatprep.mubr.f32.mxu0 %v412
      %1444 = vmatmul.mubr.f32.gmra.mrb[0].mxu0 %v411
      %v1445 = vpop.f32.mrb[0].mxu0
      %v1446 = vadd.f32 %v602, %v1445
      %v1447 = vpop.f32.mrb[0].mxu0
      %1448 = vmatprep.mubr.f32.mxu0 %v415
      %1449 = vmatmul.mubr.f32.gmra.mrb[0].mxu0 %v414
      %v1450 = vpop.f32.mrb[0].mxu0
      %v1451 = vadd.f32 %v602, %v1450
      %v1452 = vpop.f32.mrb[0].mxu0
      %1453 = vmatprep.mubr.f32.mxu0 %v418
      %1454 = vmatmul.mubr.f32.gmra.mrb[0].mxu0 %v417
      %v1455 = vpop.f32.mrb[0].mxu0
      %v1456 = vadd.f32 %v602, %v1455
      %v1457 = vpop.f32.mrb[0].mxu0
      %1458 = vmatprep.mubr.f32.mxu0 %v421
      %1459 = vmatmul.mubr.f32.gmra.mrb[0].mxu0 %v420
      %v1460 = vpop.f32.mrb[0].mxu0
      %v1461 = vadd.f32 %v602, %v1460
      %v1462 = vpop.f32.mrb[0].mxu0
      %1463 = vmatprep.mubr.f32.mxu0 %v424
      %1464 = vmatmul.mubr.f32.gmra.mrb[0].mxu0 %v423
      %v1465 = vpop.f32.mrb[0].mxu0
      %v1466 = vadd.f32 %v602, %v1465
      %v1467 = vpop.f32.mrb[0].mxu0
      %1468 = vmatprep.mubr.f32.mxu0 %v427
      %1469 = vmatmul.mubr.f32.gmra.mrb[0].mxu0 %v426
      %v1470 = vpop.f32.mrb[0].mxu0
      %v1471 = vadd.f32 %v602, %v1470
      %v1472 = vpop.f32.mrb[0].mxu0
      %1473 = vmatprep.mubr.f32.mxu0 %v430
      %1474 = vmatmul.mubr.f32.gmra.mrb[0].mxu0 %v429
      %v1475 = vpop.f32.mrb[0].mxu0
      %v1476 = vadd.f32 %v602, %v1475
      %v1477 = vpop.f32.mrb[0].mxu0
      %1478 = vmatprep.mubr.f32.mxu0 %v433
      %1479 = vmatmul.mubr.f32.gmra.mrb[0].mxu0 %v432
      %v1480 = vpop.f32.mrb[0].mxu0
      %v1481 = vadd.f32 %v602, %v1480
      %v1482 = vpop.f32.mrb[0].mxu0
      %1483 = vmatprep.mubr.f32.mxu0 %v436
      %1484 = vmatmul.mubr.f32.gmra.mrb[0].mxu0 %v435
      %v1485 = vpop.f32.mrb[0].mxu0
      %v1486 = vadd.f32 %v602, %v1485
      %v1487 = vpop.f32.mrb[0].mxu0
      %1488 = vmatprep.mubr.f32.mxu0 %v439
      %1489 = vmatmul.mubr.f32.gmra.mrb[0].mxu0 %v438
      %v1490 = vpop.f32.mrb[0].mxu0
      %v1491 = vadd.f32 %v602, %v1490
      %v1492 = vpop.f32.mrb[0].mxu0
      %1493 = vmatprep.mubr.f32.mxu0 %v442
      %1494 = vmatmul.mubr.f32.gmra.mrb[0].mxu0 %v441
      %v1495 = vpop.f32.mrb[0].mxu0
      %v1496 = vadd.f32 %v602, %v1495
      %v1497 = vpop.f32.mrb[0].mxu0
      %1498 = vmatprep.mubr.f32.mxu0 %v445
      %1499 = vmatmul.mubr.f32.gmra.mrb[0].mxu0 %v444
      %v1500 = vpop.f32.mrb[0].mxu0
      %v1501 = vadd.f32 %v602, %v1500
      %v1502 = vpop.f32.mrb[0].mxu0
      %1503 = vmatprep.mubr.f32.mxu0 %v448
      %1504 = vmatmul.mubr.f32.gmra.mrb[0].mxu0 %v447
      %v1505 = vpop.f32.mrb[0].mxu0
      %v1506 = vadd.f32 %v602, %v1505
      %v1507 = vpop.f32.mrb[0].mxu0
      %1508 = vmatprep.mubr.f32.mxu0 %v451
      %1509 = vmatmul.mubr.f32.gmra.mrb[0].mxu0 %v450
      %v1510 = vpop.f32.mrb[0].mxu0
      %v1511 = vadd.f32 %v602, %v1510
      %v1512 = vpop.f32.mrb[0].mxu0
      %1513 = vmatprep.mubr.f32.mxu0 %v454
      %1514 = vmatmul.mubr.f32.gmra.mrb[0].mxu0 %v453
      %v1515 = vpop.f32.mrb[0].mxu0
      %v1516 = vadd.f32 %v602, %v1515
      %v1517 = vpop.f32.mrb[0].mxu0
      %1518 = vmatprep.mubr.f32.mxu0 %v457
      %1519 = vmatmul.mubr.f32.gmra.mrb[0].mxu0 %v456
      %v1520 = vpop.f32.mrb[0].mxu0
      %v1521 = vadd.f32 %v602, %v1520
      %v1522 = vpop.f32.mrb[0].mxu0
      %1523 = vmatprep.mubr.f32.mxu0 %v460
      %1524 = vmatmul.mubr.f32.gmra.mrb[0].mxu0 %v459
      %v1525 = vpop.f32.mrb[0].mxu0
      %v1526 = vadd.f32 %v602, %v1525
      %v1527 = vpop.f32.mrb[0].mxu0
      %1528 = vmatprep.mubr.f32.mxu0 %v463
      %1529 = vmatmul.mubr.f32.gmra.mrb[0].mxu0 %v462
      %v1530 = vpop.f32.mrb[0].mxu0
      %v1531 = vadd.f32 %v602, %v1530
      %v1532 = vpop.f32.mrb[0].mxu0
      %1533 = vmatprep.mubr.f32.mxu0 %v466
      %1534 = vmatmul.mubr.f32.gmra.mrb[0].mxu0 %v465
      %v1535 = vpop.f32.mrb[0].mxu0
      %v1536 = vadd.f32 %v602, %v1535
      %v1537 = vpop.f32.mrb[0].mxu0
      %1538 = vmatprep.mubr.f32.mxu0 %v469
      %1539 = vmatmul.mubr.f32.gmra.mrb[0].mxu0 %v468
      %v1540 = vpop.f32.mrb[0].mxu0
      %v1541 = vadd.f32 %v602, %v1540
      %v1542 = vpop.f32.mrb[0].mxu0
      %1543 = vmatprep.mubr.f32.mxu0 %v472
      %1544 = vmatmul.mubr.f32.gmra.mrb[0].mxu0 %v471
      %v1545 = vpop.f32.mrb[0].mxu0
      %v1546 = vadd.f32 %v602, %v1545
      %v1547 = vpop.f32.mrb[0].mxu0
      %1548 = vmatprep.mubr.f32.mxu0 %v475
      %1549 = vmatmul.mubr.f32.gmra.mrb[0].mxu0 %v474
      %v1550 = vpop.f32.mrb[0].mxu0
      %v1551 = vadd.f32 %v602, %v1550
      %v1552 = vpop.f32.mrb[0].mxu0
      %1553 = vmatprep.mubr.f32.mxu0 %v478
      %1554 = vmatmul.mubr.f32.gmra.mrb[0].mxu0 %v477
      %v1555 = vpop.f32.mrb[0].mxu0
      %v1556 = vadd.f32 %v602, %v1555
      %v1557 = vpop.f32.mrb[0].mxu0
      %1558 = vmatprep.mubr.f32.mxu0 %v481
      %1559 = vmatmul.mubr.f32.gmra.mrb[0].mxu0 %v480
      %v1560 = vpop.f32.mrb[0].mxu0
      %v1561 = vadd.f32 %v602, %v1560
      %v1562 = vpop.f32.mrb[0].mxu0
      %1563 = vmatprep.mubr.f32.mxu0 %v484
      %1564 = vmatmul.mubr.f32.gmra.mrb[0].mxu0 %v483
      %v1565 = vpop.f32.mrb[0].mxu0
      %v1566 = vadd.f32 %v602, %v1565
      %v1567 = vpop.f32.mrb[0].mxu0
      %1568 = vmatprep.mubr.f32.mxu0 %v487
      %1569 = vmatmul.mubr.f32.gmra.mrb[0].mxu0 %v486
      %v1570 = vpop.f32.mrb[0].mxu0
      %v1571 = vadd.f32 %v602, %v1570
      %v1572 = vpop.f32.mrb[0].mxu0
      %1573 = vmatprep.mubr.f32.mxu0 %v490
      %1574 = vmatmul.mubr.f32.gmra.mrb[0].mxu0 %v489
      %v1575 = vpop.f32.mrb[0].mxu0
      %v1576 = vadd.f32 %v602, %v1575
      %v1577 = vpop.f32.mrb[0].mxu0
      %1578 = vmatprep.mubr.f32.mxu0 %v493
      %1579 = vmatmul.mubr.f32.gmra.mrb[0].mxu0 %v492
      %v1580 = vpop.f32.mrb[0].mxu0
      %v1581 = vadd.f32 %v602, %v1580
      %v1582 = vpop.f32.mrb[0].mxu0
      %1583 = vmatprep.mubr.f32.mxu0 %v496
      %1584 = vmatmul.mubr.f32.gmra.mrb[0].mxu0 %v495
      %v1585 = vpop.f32.mrb[0].mxu0
      %v1586 = vadd.f32 %v602, %v1585
      %v1587 = vpop.f32.mrb[0].mxu0
      %1588 = vmatprep.mubr.f32.mxu0 %v499
      %1589 = vmatmul.mubr.f32.gmra.mrb[0].mxu0 %v498
      %v1590 = vpop.f32.mrb[0].mxu0
      %v1591 = vadd.f32 %v602, %v1590
      %v1592 = vpop.f32.mrb[0].mxu0
      %1593 = vmatprep.mubr.f32.mxu0 %v502
      %1594 = vmatmul.mubr.f32.gmra.mrb[0].mxu0 %v501
      %v1595 = vpop.f32.mrb[0].mxu0
      %v1596 = vadd.f32 %v602, %v1595
      %v1597 = vpop.f32.mrb[0].mxu0
      %1598 = vmatprep.mubr.f32.mxu0 %v505
      %1599 = vmatmul.mubr.f32.gmra.mrb[0].mxu0 %v504
      %v1600 = vpop.f32.mrb[0].mxu0
      %v1601 = vadd.f32 %v602, %v1600
      %v1602 = vpop.f32.mrb[0].mxu0
      %1603 = vmatprep.mubr.f32.mxu0 %v508
      %1604 = vmatmul.mubr.f32.gmra.mrb[0].mxu0 %v507
      %v1605 = vpop.f32.mrb[0].mxu0
      %v1606 = vadd.f32 %v602, %v1605
      %v1607 = vpop.f32.mrb[0].mxu0
      %1608 = vmatprep.mubr.f32.mxu0 %v511
      %1609 = vmatmul.mubr.f32.gmra.mrb[0].mxu0 %v510
      %v1610 = vpop.f32.mrb[0].mxu0
      %v1611 = vadd.f32 %v602, %v1610
      %v1612 = vpop.f32.mrb[0].mxu0
      %1613 = vmatprep.mubr.f32.mxu0 %v514
      %1614 = vmatmul.mubr.f32.gmra.mrb[0].mxu0 %v513
      %v1615 = vpop.f32.mrb[0].mxu0
      %v1616 = vadd.f32 %v602, %v1615
      %v1617 = vpop.f32.mrb[0].mxu0
      %1618 = vmatprep.mubr.f32.mxu0 %v517
      %1619 = vmatmul.mubr.f32.gmra.mrb[0].mxu0 %v516
      %v1620 = vpop.f32.mrb[0].mxu0
      %v1621 = vadd.f32 %v602, %v1620
      %v1622 = vpop.f32.mrb[0].mxu0
      %1623 = vmatprep.mubr.f32.mxu0 %v520
      %1624 = vmatmul.mubr.f32.gmra.mrb[0].mxu0 %v519
      %v1625 = vpop.f32.mrb[0].mxu0
      %v1626 = vadd.f32 %v602, %v1625
      %v1627 = vpop.f32.mrb[0].mxu0
      %1628 = vmatprep.mubr.f32.mxu0 %v523
      %1629 = vmatmul.mubr.f32.gmra.mrb[0].mxu0 %v522
      %v1630 = vpop.f32.mrb[0].mxu0
      %v1631 = vadd.f32 %v602, %v1630
      %v1632 = vpop.f32.mrb[0].mxu0
      %1633 = vmatprep.mubr.f32.mxu0 %v526
      %1634 = vmatmul.mubr.f32.gmra.mrb[0].mxu0 %v525
      %v1635 = vpop.f32.mrb[0].mxu0
      %v1636 = vadd.f32 %v602, %v1635
      %v1637 = vpop.f32.mrb[0].mxu0
      %1638 = vmatprep.mubr.f32.mxu0 %v529
      %1639 = vmatmul.mubr.f32.gmra.mrb[0].mxu0 %v528
      %v1640 = vpop.f32.mrb[0].mxu0
      %v1641 = vadd.f32 %v602, %v1640
      %v1642 = vpop.f32.mrb[0].mxu0
      %1643 = vmatprep.mubr.f32.mxu0 %v532
      %1644 = vmatmul.mubr.f32.gmra.mrb[0].mxu0 %v531
      %v1645 = vpop.f32.mrb[0].mxu0
      %v1646 = vadd.f32 %v602, %v1645
      %v1647 = vpop.f32.mrb[0].mxu0
      %1648 = vmatprep.mubr.f32.mxu0 %v535
      %1649 = vmatmul.mubr.f32.gmra.mrb[0].mxu0 %v534
      %v1650 = vpop.f32.mrb[0].mxu0
      %v1651 = vadd.f32 %v602, %v1650
      %v1652 = vpop.f32.mrb[0].mxu0
      %1653 = vmatprep.mubr.f32.mxu0 %v538
      %1654 = vmatmul.mubr.f32.gmra.mrb[0].mxu0 %v537
      %v1655 = vpop.f32.mrb[0].mxu0
      %v1656 = vadd.f32 %v602, %v1655
      %v1657 = vpop.f32.mrb[0].mxu0
      %1658 = vmatprep.mubr.f32.mxu0 %v541
      %1659 = vmatmul.mubr.f32.gmra.mrb[0].mxu0 %v540
      %v1660 = vpop.f32.mrb[0].mxu0
      %v1661 = vadd.f32 %v602, %v1660
      %v1662 = vpop.f32.mrb[0].mxu0
      %1663 = vmatprep.mubr.f32.mxu0 %v544
      %1664 = vmatmul.mubr.f32.gmra.mrb[0].mxu0 %v543
      %v1665 = vpop.f32.mrb[0].mxu0
      %v1666 = vadd.f32 %v602, %v1665
      %v1667 = vpop.f32.mrb[0].mxu0
      %1668 = vmatprep.mubr.f32.mxu0 %v547
      %1669 = vmatmul.mubr.f32.gmra.mrb[0].mxu0 %v546
      %v1670 = vpop.f32.mrb[0].mxu0
      %v1671 = vadd.f32 %v602, %v1670
      %v1672 = vpop.f32.mrb[0].mxu0
      %1673 = vmatprep.mubr.f32.mxu0 %v550
      %1674 = vmatmul.mubr.f32.gmra.mrb[0].mxu0 %v549
      %v1675 = vpop.f32.mrb[0].mxu0
      %v1676 = vadd.f32 %v602, %v1675
      %v1677 = vpop.f32.mrb[0].mxu0
      %1678 = vmatprep.mubr.f32.mxu0 %v553
      %1679 = vmatmul.mubr.f32.gmra.mrb[0].mxu0 %v552
      %v1680 = vpop.f32.mrb[0].mxu0
      %v1681 = vadd.f32 %v602, %v1680
      %v1682 = vpop.f32.mrb[0].mxu0
      %1683 = vmatprep.mubr.f32.mxu0 %v556
      %1684 = vmatmul.mubr.f32.gmra.mrb[0].mxu0 %v555
      %v1685 = vpop.f32.mrb[0].mxu0
      %v1686 = vadd.f32 %v602, %v1685
      %v1687 = vpop.f32.mrb[0].mxu0
      %1688 = vmatprep.mubr.f32.mxu0 %v559
      %1689 = vmatmul.mubr.f32.gmra.mrb[0].mxu0 %v558
      %v1690 = vpop.f32.mrb[0].mxu0
      %v1691 = vadd.f32 %v602, %v1690
      %v1692 = vpop.f32.mrb[0].mxu0
      %1693 = vdwg.mxu0
      %1694 = vmatprep.subr.mxu0 0.0
      %1695 = vmatpush1.msra.mxu0 %v593
      %1696 = vmatprep.subr.mxu0 0.0
      %1697 = vmatpush1.msra.mxu0 %v594
      %1698 = vmatprep.subr.mxu0 0.0
      %1699 = vmatpush1.msra.mxu0 %v595
      %1700 = vmatprep.subr.mxu0 0.0
      %1701 = vmatpush1.msra.mxu0 %v596
      %1702 = vmatprep.subr.mxu0 0.0
      %1703 = vmatpush1.msra.mxu0 0.0
      %1704 = vmatprep.subr.mxu0 0.0
      %1705 = vmatpush1.msra.mxu0 0.0
      %1706 = vmatprep.subr.mxu0 0.0
      %1707 = vmatpush1.msra.mxu0 0.0
      %1708 = vmatprep.subr.mxu0 0.0
      %1709 = vmatpush1.msra.mxu0 0.0
      %1710 = vmatprep.subr.mxu0 0.0
      %1711 = vmatpush1.msra.mxu0 0.0
      %1712 = vmatprep.subr.mxu0 0.0
      %1713 = vmatpush1.msra.mxu0 0.0
      %1714 = vmatprep.subr.mxu0 0.0
      %1715 = vmatpush1.msra.mxu0 0.0
      %1716 = vmatprep.subr.mxu0 0.0
      %1717 = vmatpush1.msra.mxu0 0.0
      %1718 = vmatprep.subr.mxu0 0.0
      %1719 = vmatpush1.msra.mxu0 0.0
      %1720 = vmatprep.subr.mxu0 0.0
      %1721 = vmatpush1.msra.mxu0 0.0
      %1722 = vmatprep.subr.mxu0 0.0
      %1723 = vmatpush1.msra.mxu0 0.0
      %1724 = vmatprep.subr.mxu0 0.0
      %1725 = vmatpush1.msra.mxu0 0.0
      %1726 = vmatprep.subr.mxu0 0.0
      %1727 = vmatpush1.msra.mxu0 0.0
      %1728 = vmatprep.subr.mxu0 0.0
      %1729 = vmatpush1.msra.mxu0 0.0
      %1730 = vmatprep.subr.mxu0 0.0
      %1731 = vmatpush1.msra.mxu0 0.0
      %1732 = vmatprep.subr.mxu0 0.0
      %1733 = vmatpush1.msra.mxu0 0.0
      %1734 = vmatprep.subr.mxu0 0.0
      %1735 = vmatpush1.msra.mxu0 0.0
      %1736 = vmatprep.subr.mxu0 0.0
      %1737 = vmatpush1.msra.mxu0 0.0
      %1738 = vmatprep.subr.mxu0 0.0
      %1739 = vmatpush1.msra.mxu0 0.0
      %1740 = vmatprep.subr.mxu0 0.0
      %1741 = vmatpush1.msra.mxu0 0.0
      %1742 = vmatprep.subr.mxu0 0.0
      %1743 = vmatpush1.msra.mxu0 0.0
      %1744 = vmatprep.subr.mxu0 0.0
      %1745 = vmatpush1.msra.mxu0 0.0
      %1746 = vmatprep.subr.mxu0 0.0
      %1747 = vmatpush1.msra.mxu0 0.0
      %1748 = vmatprep.subr.mxu0 0.0
      %1749 = vmatpush1.msra.mxu0 0.0
      %1750 = vmatprep.subr.mxu0 0.0
      %1751 = vmatpush1.msra.mxu0 0.0
      %1752 = vmatprep.subr.mxu0 0.0
      %1753 = vmatpush1.msra.mxu0 0.0
      %1754 = vmatprep.subr.mxu0 0.0
      %1755 = vmatpush1.msra.mxu0 0.0
      %1756 = vmatprep.subr.mxu0 0.0
      %1757 = vmatpush1.msra.mxu0 0.0
      %1758 = vmatprep.mubr.f32.mxu0 0.0
      %1759 = vmatmul.mubr.f32.gmra.mrb[0].mxu0 %v606
      %v1760 = vpop.f32.mrb[0].mxu0
      %v1761 = vadd.f32 %v1056, %v1760
      %v1762 = vpop.f32.mrb[0].mxu0
      %1763 = vmatprep.mubr.f32.mxu0 0.0
      %1764 = vmatmul.mubr.f32.gmra.mrb[0].mxu0 %v609
      %v1765 = vpop.f32.mrb[0].mxu0
      %v1766 = vadd.f32 %v1061, %v1765
      %v1767 = vpop.f32.mrb[0].mxu0
      %1768 = vmatprep.mubr.f32.mxu0 0.0
      %1769 = vmatmul.mubr.f32.gmra.mrb[0].mxu0 %v612
      %v1770 = vpop.f32.mrb[0].mxu0
      %v1771 = vadd.f32 %v1066, %v1770
      %v1772 = vpop.f32.mrb[0].mxu0
      %1773 = vmatprep.mubr.f32.mxu0 0.0
      %1774 = vmatmul.mubr.f32.gmra.mrb[0].mxu0 %v615
      %v1775 = vpop.f32.mrb[0].mxu0
      %v1776 = vadd.f32 %v1071, %v1775
      %v1777 = vpop.f32.mrb[0].mxu0
      %1778 = vmatprep.mubr.f32.mxu0 0.0
      %1779 = vmatmul.mubr.f32.gmra.mrb[0].mxu0 %v618
      %v1780 = vpop.f32.mrb[0].mxu0
      %v1781 = vadd.f32 %v1076, %v1780
      %v1782 = vpop.f32.mrb[0].mxu0
      %1783 = vmatprep.mubr.f32.mxu0 0.0
      %1784 = vmatmul.mubr.f32.gmra.mrb[0].mxu0 %v621
      %v1785 = vpop.f32.mrb[0].mxu0
      %v1786 = vadd.f32 %v1081, %v1785
      %v1787 = vpop.f32.mrb[0].mxu0
      %1788 = vmatprep.mubr.f32.mxu0 0.0
      %1789 = vmatmul.mubr.f32.gmra.mrb[0].mxu0 %v624
      %v1790 = vpop.f32.mrb[0].mxu0
      %v1791 = vadd.f32 %v1086, %v1790
      %v1792 = vpop.f32.mrb[0].mxu0
      %1793 = vmatprep.mubr.f32.mxu0 0.0
      %1794 = vmatmul.mubr.f32.gmra.mrb[0].mxu0 %v627
      %v1795 = vpop.f32.mrb[0].mxu0
      %v1796 = vadd.f32 %v1091, %v1795
      %v1797 = vpop.f32.mrb[0].mxu0
      %1798 = vmatprep.mubr.f32.mxu0 0.0
      %1799 = vmatmul.mubr.f32.gmra.mrb[0].mxu0 %v630
      %v1800 = vpop.f32.mrb[0].mxu0
      %v1801 = vadd.f32 %v1096, %v1800
      %v1802 = vpop.f32.mrb[0].mxu0
      %1803 = vmatprep.mubr.f32.mxu0 0.0
      %1804 = vmatmul.mubr.f32.gmra.mrb[0].mxu0 %v633
      %v1805 = vpop.f32.mrb[0].mxu0
      %v1806 = vadd.f32 %v1101, %v1805
      %v1807 = vpop.f32.mrb[0].mxu0
      %1808 = vmatprep.mubr.f32.mxu0 0.0
      %1809 = vmatmul.mubr.f32.gmra.mrb[0].mxu0 %v636
      %v1810 = vpop.f32.mrb[0].mxu0
      %v1811 = vadd.f32 %v1106, %v1810
      %v1812 = vpop.f32.mrb[0].mxu0
      %1813 = vmatprep.mubr.f32.mxu0 0.0
      %1814 = vmatmul.mubr.f32.gmra.mrb[0].mxu0 %v639
      %v1815 = vpop.f32.mrb[0].mxu0
      %v1816 = vadd.f32 %v1111, %v1815
      %v1817 = vpop.f32.mrb[0].mxu0
      %1818 = vmatprep.mubr.f32.mxu0 0.0
      %1819 = vmatmul.mubr.f32.gmra.mrb[0].mxu0 %v642
      %v1820 = vpop.f32.mrb[0].mxu0
      %v1821 = vadd.f32 %v1116, %v1820
      %v1822 = vpop.f32.mrb[0].mxu0
      %1823 = vmatprep.mubr.f32.mxu0 0.0
      %1824 = vmatmul.mubr.f32.gmra.mrb[0].mxu0 %v645
      %v1825 = vpop.f32.mrb[0].mxu0
      %v1826 = vadd.f32 %v1121, %v1825
      %v1827 = vpop.f32.mrb[0].mxu0
      %1828 = vmatprep.mubr.f32.mxu0 0.0
      %1829 = vmatmul.mubr.f32.gmra.mrb[0].mxu0 %v648
      %v1830 = vpop.f32.mrb[0].mxu0
      %v1831 = vadd.f32 %v1126, %v1830
      %v1832 = vpop.f32.mrb[0].mxu0
      %1833 = vmatprep.mubr.f32.mxu0 0.0
      %1834 = vmatmul.mubr.f32.gmra.mrb[0].mxu0 %v651
      %v1835 = vpop.f32.mrb[0].mxu0
      %v1836 = vadd.f32 %v1131, %v1835
      %v1837 = vpop.f32.mrb[0].mxu0
      %1838 = vmatprep.mubr.f32.mxu0 0.0
      %1839 = vmatmul.mubr.f32.gmra.mrb[0].mxu0 %v654
      %v1840 = vpop.f32.mrb[0].mxu0
      %v1841 = vadd.f32 %v1136, %v1840
      %v1842 = vpop.f32.mrb[0].mxu0
      %1843 = vmatprep.mubr.f32.mxu0 0.0
      %1844 = vmatmul.mubr.f32.gmra.mrb[0].mxu0 %v657
      %v1845 = vpop.f32.mrb[0].mxu0
      %v1846 = vadd.f32 %v1141, %v1845
      %v1847 = vpop.f32.mrb[0].mxu0
      %1848 = vmatprep.mubr.f32.mxu0 0.0
      %1849 = vmatmul.mubr.f32.gmra.mrb[0].mxu0 %v660
      %v1850 = vpop.f32.mrb[0].mxu0
      %v1851 = vadd.f32 %v1146, %v1850
      %v1852 = vpop.f32.mrb[0].mxu0
      %1853 = vmatprep.mubr.f32.mxu0 0.0
      %1854 = vmatmul.mubr.f32.gmra.mrb[0].mxu0 %v663
      %v1855 = vpop.f32.mrb[0].mxu0
      %v1856 = vadd.f32 %v1151, %v1855
      %v1857 = vpop.f32.mrb[0].mxu0
      %1858 = vmatprep.mubr.f32.mxu0 0.0
      %1859 = vmatmul.mubr.f32.gmra.mrb[0].mxu0 %v666
      %v1860 = vpop.f32.mrb[0].mxu0
      %v1861 = vadd.f32 %v1156, %v1860
      %v1862 = vpop.f32.mrb[0].mxu0
      %1863 = vmatprep.mubr.f32.mxu0 0.0
      %1864 = vmatmul.mubr.f32.gmra.mrb[0].mxu0 %v669
      %v1865 = vpop.f32.mrb[0].mxu0
      %v1866 = vadd.f32 %v1161, %v1865
      %v1867 = vpop.f32.mrb[0].mxu0
      %1868 = vmatprep.mubr.f32.mxu0 0.0
      %1869 = vmatmul.mubr.f32.gmra.mrb[0].mxu0 %v672
      %v1870 = vpop.f32.mrb[0].mxu0
      %v1871 = vadd.f32 %v1166, %v1870
      %v1872 = vpop.f32.mrb[0].mxu0
      %1873 = vmatprep.mubr.f32.mxu0 0.0
      %1874 = vmatmul.mubr.f32.gmra.mrb[0].mxu0 %v675
      %v1875 = vpop.f32.mrb[0].mxu0
      %v1876 = vadd.f32 %v1171, %v1875
      %v1877 = vpop.f32.mrb[0].mxu0
      %1878 = vmatprep.mubr.f32.mxu0 0.0
      %1879 = vmatmul.mubr.f32.gmra.mrb[0].mxu0 %v678
      %v1880 = vpop.f32.mrb[0].mxu0
      %v1881 = vadd.f32 %v1176, %v1880
      %v1882 = vpop.f32.mrb[0].mxu0
      %1883 = vmatprep.mubr.f32.mxu0 0.0
      %1884 = vmatmul.mubr.f32.gmra.mrb[0].mxu0 %v681
      %v1885 = vpop.f32.mrb[0].mxu0
      %v1886 = vadd.f32 %v1181, %v1885
      %v1887 = vpop.f32.mrb[0].mxu0
      %1888 = vmatprep.mubr.f32.mxu0 0.0
      %1889 = vmatmul.mubr.f32.gmra.mrb[0].mxu0 %v684
      %v1890 = vpop.f32.mrb[0].mxu0
      %v1891 = vadd.f32 %v1186, %v1890
      %v1892 = vpop.f32.mrb[0].mxu0
      %1893 = vmatprep.mubr.f32.mxu0 0.0
      %1894 = vmatmul.mubr.f32.gmra.mrb[0].mxu0 %v687
      %v1895 = vpop.f32.mrb[0].mxu0
      %v1896 = vadd.f32 %v1191, %v1895
      %v1897 = vpop.f32.mrb[0].mxu0
      %1898 = vmatprep.mubr.f32.mxu0 0.0
      %1899 = vmatmul.mubr.f32.gmra.mrb[0].mxu0 %v690
      %v1900 = vpop.f32.mrb[0].mxu0
      %v1901 = vadd.f32 %v1196, %v1900
      %v1902 = vpop.f32.mrb[0].mxu0
      %1903 = vmatprep.mubr.f32.mxu0 0.0
      %1904 = vmatmul.mubr.f32.gmra.mrb[0].mxu0 %v693
      %v1905 = vpop.f32.mrb[0].mxu0
      %v1906 = vadd.f32 %v1201, %v1905
      %v1907 = vpop.f32.mrb[0].mxu0
      %1908 = vmatprep.mubr.f32.mxu0 0.0
      %1909 = vmatmul.mubr.f32.gmra.mrb[0].mxu0 %v696
      %v1910 = vpop.f32.mrb[0].mxu0
      %v1911 = vadd.f32 %v1206, %v1910
      %v1912 = vpop.f32.mrb[0].mxu0
      %1913 = vmatprep.mubr.f32.mxu0 0.0
      %1914 = vmatmul.mubr.f32.gmra.mrb[0].mxu0 %v699
      %v1915 = vpop.f32.mrb[0].mxu0
      %v1916 = vadd.f32 %v1211, %v1915
      %v1917 = vpop.f32.mrb[0].mxu0
      %1918 = vmatprep.mubr.f32.mxu0 0.0
      %1919 = vmatmul.mubr.f32.gmra.mrb[0].mxu0 %v702
      %v1920 = vpop.f32.mrb[0].mxu0
      %v1921 = vadd.f32 %v1216, %v1920
      %v1922 = vpop.f32.mrb[0].mxu0
      %1923 = vmatprep.mubr.f32.mxu0 0.0
      %1924 = vmatmul.mubr.f32.gmra.mrb[0].mxu0 %v705
      %v1925 = vpop.f32.mrb[0].mxu0
      %v1926 = vadd.f32 %v1221, %v1925
      %v1927 = vpop.f32.mrb[0].mxu0
      %1928 = vmatprep.mubr.f32.mxu0 0.0
      %1929 = vmatmul.mubr.f32.gmra.mrb[0].mxu0 %v708
      %v1930 = vpop.f32.mrb[0].mxu0
      %v1931 = vadd.f32 %v1226, %v1930
      %v1932 = vpop.f32.mrb[0].mxu0
      %1933 = vmatprep.mubr.f32.mxu0 0.0
      %1934 = vmatmul.mubr.f32.gmra.mrb[0].mxu0 %v711
      %v1935 = vpop.f32.mrb[0].mxu0
      %v1936 = vadd.f32 %v1231, %v1935
      %v1937 = vpop.f32.mrb[0].mxu0
      %1938 = vmatprep.mubr.f32.mxu0 0.0
      %1939 = vmatmul.mubr.f32.gmra.mrb[0].mxu0 %v714
      %v1940 = vpop.f32.mrb[0].mxu0
      %v1941 = vadd.f32 %v1236, %v1940
      %v1942 = vpop.f32.mrb[0].mxu0
      %1943 = vmatprep.mubr.f32.mxu0 0.0
      %1944 = vmatmul.mubr.f32.gmra.mrb[0].mxu0 %v717
      %v1945 = vpop.f32.mrb[0].mxu0
      %v1946 = vadd.f32 %v1241, %v1945
      %v1947 = vpop.f32.mrb[0].mxu0
      %1948 = vmatprep.mubr.f32.mxu0 0.0
      %1949 = vmatmul.mubr.f32.gmra.mrb[0].mxu0 %v720
      %v1950 = vpop.f32.mrb[0].mxu0
      %v1951 = vadd.f32 %v1246, %v1950
      %v1952 = vpop.f32.mrb[0].mxu0
      %1953 = vmatprep.mubr.f32.mxu0 0.0
      %1954 = vmatmul.mubr.f32.gmra.mrb[0].mxu0 %v723
      %v1955 = vpop.f32.mrb[0].mxu0
      %v1956 = vadd.f32 %v1251, %v1955
      %v1957 = vpop.f32.mrb[0].mxu0
      %1958 = vmatprep.mubr.f32.mxu0 0.0
      %1959 = vmatmul.mubr.f32.gmra.mrb[0].mxu0 %v726
      %v1960 = vpop.f32.mrb[0].mxu0
      %v1961 = vadd.f32 %v1256, %v1960
      %v1962 = vpop.f32.mrb[0].mxu0
      %1963 = vmatprep.mubr.f32.mxu0 0.0
      %1964 = vmatmul.mubr.f32.gmra.mrb[0].mxu0 %v729
      %v1965 = vpop.f32.mrb[0].mxu0
      %v1966 = vadd.f32 %v1261, %v1965
      %v1967 = vpop.f32.mrb[0].mxu0
      %1968 = vmatprep.mubr.f32.mxu0 0.0
      %1969 = vmatmul.mubr.f32.gmra.mrb[0].mxu0 %v732
      %v1970 = vpop.f32.mrb[0].mxu0
      %v1971 = vadd.f32 %v1266, %v1970
      %v1972 = vpop.f32.mrb[0].mxu0
      %1973 = vmatprep.mubr.f32.mxu0 0.0
      %1974 = vmatmul.mubr.f32.gmra.mrb[0].mxu0 %v735
      %v1975 = vpop.f32.mrb[0].mxu0
      %v1976 = vadd.f32 %v1271, %v1975
      %v1977 = vpop.f32.mrb[0].mxu0
      %1978 = vmatprep.mubr.f32.mxu0 0.0
      %1979 = vmatmul.mubr.f32.gmra.mrb[0].mxu0 %v738
      %v1980 = vpop.f32.mrb[0].mxu0
      %v1981 = vadd.f32 %v1276, %v1980
      %v1982 = vpop.f32.mrb[0].mxu0
      %1983 = vmatprep.mubr.f32.mxu0 0.0
      %1984 = vmatmul.mubr.f32.gmra.mrb[0].mxu0 %v741
      %v1985 = vpop.f32.mrb[0].mxu0
      %v1986 = vadd.f32 %v1281, %v1985
      %v1987 = vpop.f32.mrb[0].mxu0
      %1988 = vmatprep.mubr.f32.mxu0 0.0
      %1989 = vmatmul.mubr.f32.gmra.mrb[0].mxu0 %v744
      %v1990 = vpop.f32.mrb[0].mxu0
      %v1991 = vadd.f32 %v1286, %v1990
      %v1992 = vpop.f32.mrb[0].mxu0
      %1993 = vmatprep.mubr.f32.mxu0 0.0
      %1994 = vmatmul.mubr.f32.gmra.mrb[0].mxu0 %v747
      %v1995 = vpop.f32.mrb[0].mxu0
      %v1996 = vadd.f32 %v1291, %v1995
      %v1997 = vpop.f32.mrb[0].mxu0
      %1998 = vmatprep.mubr.f32.mxu0 0.0
      %1999 = vmatmul.mubr.f32.gmra.mrb[0].mxu0 %v750
      %v2000 = vpop.f32.mrb[0].mxu0
      %v2001 = vadd.f32 %v1296, %v2000
      %v2002 = vpop.f32.mrb[0].mxu0
      %2003 = vmatprep.mubr.f32.mxu0 0.0
      %2004 = vmatmul.mubr.f32.gmra.mrb[0].mxu0 %v753
      %v2005 = vpop.f32.mrb[0].mxu0
      %v2006 = vadd.f32 %v1301, %v2005
      %v2007 = vpop.f32.mrb[0].mxu0
      %2008 = vmatprep.mubr.f32.mxu0 0.0
      %2009 = vmatmul.mubr.f32.gmra.mrb[0].mxu0 %v756
      %v2010 = vpop.f32.mrb[0].mxu0
      %v2011 = vadd.f32 %v1306, %v2010
      %v2012 = vpop.f32.mrb[0].mxu0
      %2013 = vmatprep.mubr.f32.mxu0 0.0
      %2014 = vmatmul.mubr.f32.gmra.mrb[0].mxu0 %v759
      %v2015 = vpop.f32.mrb[0].mxu0
      %v2016 = vadd.f32 %v1311, %v2015
      %v2017 = vpop.f32.mrb[0].mxu0
      %2018 = vmatprep.mubr.f32.mxu0 0.0
      %2019 = vmatmul.mubr.f32.gmra.mrb[0].mxu0 %v762
      %v2020 = vpop.f32.mrb[0].mxu0
      %v2021 = vadd.f32 %v1316, %v2020
      %v2022 = vpop.f32.mrb[0].mxu0
      %2023 = vmatprep.mubr.f32.mxu0 0.0
      %2024 = vmatmul.mubr.f32.gmra.mrb[0].mxu0 %v765
      %v2025 = vpop.f32.mrb[0].mxu0
      %v2026 = vadd.f32 %v1321, %v2025
      %v2027 = vpop.f32.mrb[0].mxu0
      %2028 = vmatprep.mubr.f32.mxu0 0.0
      %2029 = vmatmul.mubr.f32.gmra.mrb[0].mxu0 %v768
      %v2030 = vpop.f32.mrb[0].mxu0
      %v2031 = vadd.f32 %v1326, %v2030
      %v2032 = vpop.f32.mrb[0].mxu0
      %2033 = vmatprep.mubr.f32.mxu0 0.0
      %2034 = vmatmul.mubr.f32.gmra.mrb[0].mxu0 %v771
      %v2035 = vpop.f32.mrb[0].mxu0
      %v2036 = vadd.f32 %v1331, %v2035
      %v2037 = vpop.f32.mrb[0].mxu0
      %2038 = vmatprep.mubr.f32.mxu0 0.0
      %2039 = vmatmul.mubr.f32.gmra.mrb[0].mxu0 %v774
      %v2040 = vpop.f32.mrb[0].mxu0
      %v2041 = vadd.f32 %v1336, %v2040
      %v2042 = vpop.f32.mrb[0].mxu0
      %2043 = vmatprep.mubr.f32.mxu0 0.0
      %2044 = vmatmul.mubr.f32.gmra.mrb[0].mxu0 %v777
      %v2045 = vpop.f32.mrb[0].mxu0
      %v2046 = vadd.f32 %v1341, %v2045
      %v2047 = vpop.f32.mrb[0].mxu0
      %2048 = vmatprep.mubr.f32.mxu0 0.0
      %2049 = vmatmul.mubr.f32.gmra.mrb[0].mxu0 %v780
      %v2050 = vpop.f32.mrb[0].mxu0
      %v2051 = vadd.f32 %v1346, %v2050
      %v2052 = vpop.f32.mrb[0].mxu0
      %2053 = vmatprep.mubr.f32.mxu0 0.0
      %2054 = vmatmul.mubr.f32.gmra.mrb[0].mxu0 %v783
      %v2055 = vpop.f32.mrb[0].mxu0
      %v2056 = vadd.f32 %v1351, %v2055
      %v2057 = vpop.f32.mrb[0].mxu0
      %2058 = vmatprep.mubr.f32.mxu0 0.0
      %2059 = vmatmul.mubr.f32.gmra.mrb[0].mxu0 %v786
      %v2060 = vpop.f32.mrb[0].mxu0
      %v2061 = vadd.f32 %v1356, %v2060
      %v2062 = vpop.f32.mrb[0].mxu0
      %2063 = vmatprep.mubr.f32.mxu0 0.0
      %2064 = vmatmul.mubr.f32.gmra.mrb[0].mxu0 %v789
      %v2065 = vpop.f32.mrb[0].mxu0
      %v2066 = vadd.f32 %v1361, %v2065
      %v2067 = vpop.f32.mrb[0].mxu0
      %2068 = vmatprep.mubr.f32.mxu0 0.0
      %2069 = vmatmul.mubr.f32.gmra.mrb[0].mxu0 %v792
      %v2070 = vpop.f32.mrb[0].mxu0
      %v2071 = vadd.f32 %v1366, %v2070
      %v2072 = vpop.f32.mrb[0].mxu0
      %2073 = vmatprep.mubr.f32.mxu0 0.0
      %2074 = vmatmul.mubr.f32.gmra.mrb[0].mxu0 %v795
      %v2075 = vpop.f32.mrb[0].mxu0
      %v2076 = vadd.f32 %v1371, %v2075
      %v2077 = vpop.f32.mrb[0].mxu0
      %2078 = vmatprep.mubr.f32.mxu0 0.0
      %2079 = vmatmul.mubr.f32.gmra.mrb[0].mxu0 %v798
      %v2080 = vpop.f32.mrb[0].mxu0
      %v2081 = vadd.f32 %v1376, %v2080
      %v2082 = vpop.f32.mrb[0].mxu0
      %2083 = vmatprep.mubr.f32.mxu0 0.0
      %2084 = vmatmul.mubr.f32.gmra.mrb[0].mxu0 %v801
      %v2085 = vpop.f32.mrb[0].mxu0
      %v2086 = vadd.f32 %v1381, %v2085
      %v2087 = vpop.f32.mrb[0].mxu0
      %2088 = vmatprep.mubr.f32.mxu0 0.0
      %2089 = vmatmul.mubr.f32.gmra.mrb[0].mxu0 %v804
      %v2090 = vpop.f32.mrb[0].mxu0
      %v2091 = vadd.f32 %v1386, %v2090
      %v2092 = vpop.f32.mrb[0].mxu0
      %2093 = vmatprep.mubr.f32.mxu0 0.0
      %2094 = vmatmul.mubr.f32.gmra.mrb[0].mxu0 %v807
      %v2095 = vpop.f32.mrb[0].mxu0
      %v2096 = vadd.f32 %v1391, %v2095
      %v2097 = vpop.f32.mrb[0].mxu0
      %2098 = vmatprep.mubr.f32.mxu0 0.0
      %2099 = vmatmul.mubr.f32.gmra.mrb[0].mxu0 %v810
      %v2100 = vpop.f32.mrb[0].mxu0
      %v2101 = vadd.f32 %v1396, %v2100
      %v2102 = vpop.f32.mrb[0].mxu0
      %2103 = vmatprep.mubr.f32.mxu0 0.0
      %2104 = vmatmul.mubr.f32.gmra.mrb[0].mxu0 %v813
      %v2105 = vpop.f32.mrb[0].mxu0
      %v2106 = vadd.f32 %v1401, %v2105
      %v2107 = vpop.f32.mrb[0].mxu0
      %2108 = vmatprep.mubr.f32.mxu0 0.0
      %2109 = vmatmul.mubr.f32.gmra.mrb[0].mxu0 %v816
      %v2110 = vpop.f32.mrb[0].mxu0
      %v2111 = vadd.f32 %v1406, %v2110
      %v2112 = vpop.f32.mrb[0].mxu0
      %2113 = vmatprep.mubr.f32.mxu0 0.0
      %2114 = vmatmul.mubr.f32.gmra.mrb[0].mxu0 %v819
      %v2115 = vpop.f32.mrb[0].mxu0
      %v2116 = vadd.f32 %v1411, %v2115
      %v2117 = vpop.f32.mrb[0].mxu0
      %2118 = vmatprep.mubr.f32.mxu0 0.0
      %2119 = vmatmul.mubr.f32.gmra.mrb[0].mxu0 %v822
      %v2120 = vpop.f32.mrb[0].mxu0
      %v2121 = vadd.f32 %v1416, %v2120
      %v2122 = vpop.f32.mrb[0].mxu0
      %2123 = vmatprep.mubr.f32.mxu0 0.0
      %2124 = vmatmul.mubr.f32.gmra.mrb[0].mxu0 %v825
      %v2125 = vpop.f32.mrb[0].mxu0
      %v2126 = vadd.f32 %v1421, %v2125
      %v2127 = vpop.f32.mrb[0].mxu0
      %2128 = vmatprep.mubr.f32.mxu0 0.0
      %2129 = vmatmul.mubr.f32.gmra.mrb[0].mxu0 %v828
      %v2130 = vpop.f32.mrb[0].mxu0
      %v2131 = vadd.f32 %v1426, %v2130
      %v2132 = vpop.f32.mrb[0].mxu0
      %2133 = vmatprep.mubr.f32.mxu0 0.0
      %2134 = vmatmul.mubr.f32.gmra.mrb[0].mxu0 %v831
      %v2135 = vpop.f32.mrb[0].mxu0
      %v2136 = vadd.f32 %v1431, %v2135
      %v2137 = vpop.f32.mrb[0].mxu0
      %2138 = vmatprep.mubr.f32.mxu0 0.0
      %2139 = vmatmul.mubr.f32.gmra.mrb[0].mxu0 %v834
      %v2140 = vpop.f32.mrb[0].mxu0
      %v2141 = vadd.f32 %v1436, %v2140
      %v2142 = vpop.f32.mrb[0].mxu0
      %2143 = vmatprep.mubr.f32.mxu0 0.0
      %2144 = vmatmul.mubr.f32.gmra.mrb[0].mxu0 %v837
      %v2145 = vpop.f32.mrb[0].mxu0
      %v2146 = vadd.f32 %v1441, %v2145
      %v2147 = vpop.f32.mrb[0].mxu0
      %2148 = vmatprep.mubr.f32.mxu0 0.0
      %2149 = vmatmul.mubr.f32.gmra.mrb[0].mxu0 %v840
      %v2150 = vpop.f32.mrb[0].mxu0
      %v2151 = vadd.f32 %v1446, %v2150
      %v2152 = vpop.f32.mrb[0].mxu0
      %2153 = vmatprep.mubr.f32.mxu0 0.0
      %2154 = vmatmul.mubr.f32.gmra.mrb[0].mxu0 %v843
      %v2155 = vpop.f32.mrb[0].mxu0
      %v2156 = vadd.f32 %v1451, %v2155
      %v2157 = vpop.f32.mrb[0].mxu0
      %2158 = vmatprep.mubr.f32.mxu0 0.0
      %2159 = vmatmul.mubr.f32.gmra.mrb[0].mxu0 %v846
      %v2160 = vpop.f32.mrb[0].mxu0
      %v2161 = vadd.f32 %v1456, %v2160
      %v2162 = vpop.f32.mrb[0].mxu0
      %2163 = vmatprep.mubr.f32.mxu0 0.0
      %2164 = vmatmul.mubr.f32.gmra.mrb[0].mxu0 %v849
      %v2165 = vpop.f32.mrb[0].mxu0
      %v2166 = vadd.f32 %v1461, %v2165
      %v2167 = vpop.f32.mrb[0].mxu0
      %2168 = vmatprep.mubr.f32.mxu0 0.0
      %2169 = vmatmul.mubr.f32.gmra.mrb[0].mxu0 %v852
      %v2170 = vpop.f32.mrb[0].mxu0
      %v2171 = vadd.f32 %v1466, %v2170
      %v2172 = vpop.f32.mrb[0].mxu0
      %2173 = vmatprep.mubr.f32.mxu0 0.0
      %2174 = vmatmul.mubr.f32.gmra.mrb[0].mxu0 %v855
      %v2175 = vpop.f32.mrb[0].mxu0
      %v2176 = vadd.f32 %v1471, %v2175
      %v2177 = vpop.f32.mrb[0].mxu0
      %2178 = vmatprep.mubr.f32.mxu0 0.0
      %2179 = vmatmul.mubr.f32.gmra.mrb[0].mxu0 %v858
      %v2180 = vpop.f32.mrb[0].mxu0
      %v2181 = vadd.f32 %v1476, %v2180
      %v2182 = vpop.f32.mrb[0].mxu0
      %2183 = vmatprep.mubr.f32.mxu0 0.0
      %2184 = vmatmul.mubr.f32.gmra.mrb[0].mxu0 %v861
      %v2185 = vpop.f32.mrb[0].mxu0
      %v2186 = vadd.f32 %v1481, %v2185
      %v2187 = vpop.f32.mrb[0].mxu0
      %2188 = vmatprep.mubr.f32.mxu0 0.0
      %2189 = vmatmul.mubr.f32.gmra.mrb[0].mxu0 %v864
      %v2190 = vpop.f32.mrb[0].mxu0
      %v2191 = vadd.f32 %v1486, %v2190
      %v2192 = vpop.f32.mrb[0].mxu0
      %2193 = vmatprep.mubr.f32.mxu0 0.0
      %2194 = vmatmul.mubr.f32.gmra.mrb[0].mxu0 %v867
      %v2195 = vpop.f32.mrb[0].mxu0
      %v2196 = vadd.f32 %v1491, %v2195
      %v2197 = vpop.f32.mrb[0].mxu0
      %2198 = vmatprep.mubr.f32.mxu0 0.0
      %2199 = vmatmul.mubr.f32.gmra.mrb[0].mxu0 %v870
      %v2200 = vpop.f32.mrb[0].mxu0
      %v2201 = vadd.f32 %v1496, %v2200
      %v2202 = vpop.f32.mrb[0].mxu0
      %2203 = vmatprep.mubr.f32.mxu0 0.0
      %2204 = vmatmul.mubr.f32.gmra.mrb[0].mxu0 %v873
      %v2205 = vpop.f32.mrb[0].mxu0
      %v2206 = vadd.f32 %v1501, %v2205
      %v2207 = vpop.f32.mrb[0].mxu0
      %2208 = vmatprep.mubr.f32.mxu0 0.0
      %2209 = vmatmul.mubr.f32.gmra.mrb[0].mxu0 %v876
      %v2210 = vpop.f32.mrb[0].mxu0
      %v2211 = vadd.f32 %v1506, %v2210
      %v2212 = vpop.f32.mrb[0].mxu0
      %2213 = vmatprep.mubr.f32.mxu0 0.0
      %2214 = vmatmul.mubr.f32.gmra.mrb[0].mxu0 %v879
      %v2215 = vpop.f32.mrb[0].mxu0
      %v2216 = vadd.f32 %v1511, %v2215
      %v2217 = vpop.f32.mrb[0].mxu0
      %2218 = vmatprep.mubr.f32.mxu0 0.0
      %2219 = vmatmul.mubr.f32.gmra.mrb[0].mxu0 %v882
      %v2220 = vpop.f32.mrb[0].mxu0
      %v2221 = vadd.f32 %v1516, %v2220
      %v2222 = vpop.f32.mrb[0].mxu0
      %2223 = vmatprep.mubr.f32.mxu0 0.0
      %2224 = vmatmul.mubr.f32.gmra.mrb[0].mxu0 %v885
      %v2225 = vpop.f32.mrb[0].mxu0
      %v2226 = vadd.f32 %v1521, %v2225
      %v2227 = vpop.f32.mrb[0].mxu0
      %2228 = vmatprep.mubr.f32.mxu0 0.0
      %2229 = vmatmul.mubr.f32.gmra.mrb[0].mxu0 %v888
      %v2230 = vpop.f32.mrb[0].mxu0
      %v2231 = vadd.f32 %v1526, %v2230
      %v2232 = vpop.f32.mrb[0].mxu0
      %2233 = vmatprep.mubr.f32.mxu0 0.0
      %2234 = vmatmul.mubr.f32.gmra.mrb[0].mxu0 %v891
      %v2235 = vpop.f32.mrb[0].mxu0
      %v2236 = vadd.f32 %v1531, %v2235
      %v2237 = vpop.f32.mrb[0].mxu0
      %2238 = vmatprep.mubr.f32.mxu0 0.0
      %2239 = vmatmul.mubr.f32.gmra.mrb[0].mxu0 %v894
      %v2240 = vpop.f32.mrb[0].mxu0
      %v2241 = vadd.f32 %v1536, %v2240
      %v2242 = vpop.f32.mrb[0].mxu0
      %2243 = vmatprep.mubr.f32.mxu0 0.0
      %2244 = vmatmul.mubr.f32.gmra.mrb[0].mxu0 %v897
      %v2245 = vpop.f32.mrb[0].mxu0
      %v2246 = vadd.f32 %v1541, %v2245
      %v2247 = vpop.f32.mrb[0].mxu0
      %2248 = vmatprep.mubr.f32.mxu0 0.0
      %2249 = vmatmul.mubr.f32.gmra.mrb[0].mxu0 %v900
      %v2250 = vpop.f32.mrb[0].mxu0
      %v2251 = vadd.f32 %v1546, %v2250
      %v2252 = vpop.f32.mrb[0].mxu0
      %2253 = vmatprep.mubr.f32.mxu0 0.0
      %2254 = vmatmul.mubr.f32.gmra.mrb[0].mxu0 %v903
      %v2255 = vpop.f32.mrb[0].mxu0
      %v2256 = vadd.f32 %v1551, %v2255
      %v2257 = vpop.f32.mrb[0].mxu0
      %2258 = vmatprep.mubr.f32.mxu0 0.0
      %2259 = vmatmul.mubr.f32.gmra.mrb[0].mxu0 %v906
      %v2260 = vpop.f32.mrb[0].mxu0
      %v2261 = vadd.f32 %v1556, %v2260
      %v2262 = vpop.f32.mrb[0].mxu0
      %2263 = vmatprep.mubr.f32.mxu0 0.0
      %2264 = vmatmul.mubr.f32.gmra.mrb[0].mxu0 %v909
      %v2265 = vpop.f32.mrb[0].mxu0
      %v2266 = vadd.f32 %v1561, %v2265
      %v2267 = vpop.f32.mrb[0].mxu0
      %2268 = vmatprep.mubr.f32.mxu0 0.0
      %2269 = vmatmul.mubr.f32.gmra.mrb[0].mxu0 %v912
      %v2270 = vpop.f32.mrb[0].mxu0
      %v2271 = vadd.f32 %v1566, %v2270
      %v2272 = vpop.f32.mrb[0].mxu0
      %2273 = vmatprep.mubr.f32.mxu0 0.0
      %2274 = vmatmul.mubr.f32.gmra.mrb[0].mxu0 %v915
      %v2275 = vpop.f32.mrb[0].mxu0
      %v2276 = vadd.f32 %v1571, %v2275
      %v2277 = vpop.f32.mrb[0].mxu0
      %2278 = vmatprep.mubr.f32.mxu0 0.0
      %2279 = vmatmul.mubr.f32.gmra.mrb[0].mxu0 %v918
      %v2280 = vpop.f32.mrb[0].mxu0
      %v2281 = vadd.f32 %v1576, %v2280
      %v2282 = vpop.f32.mrb[0].mxu0
      %2283 = vmatprep.mubr.f32.mxu0 0.0
      %2284 = vmatmul.mubr.f32.gmra.mrb[0].mxu0 %v921
      %v2285 = vpop.f32.mrb[0].mxu0
      %v2286 = vadd.f32 %v1581, %v2285
      %v2287 = vpop.f32.mrb[0].mxu0
      %2288 = vmatprep.mubr.f32.mxu0 0.0
      %2289 = vmatmul.mubr.f32.gmra.mrb[0].mxu0 %v924
      %v2290 = vpop.f32.mrb[0].mxu0
      %v2291 = vadd.f32 %v1586, %v2290
      %v2292 = vpop.f32.mrb[0].mxu0
      %2293 = vmatprep.mubr.f32.mxu0 0.0
      %2294 = vmatmul.mubr.f32.gmra.mrb[0].mxu0 %v927
      %v2295 = vpop.f32.mrb[0].mxu0
      %v2296 = vadd.f32 %v1591, %v2295
      %v2297 = vpop.f32.mrb[0].mxu0
      %2298 = vmatprep.mubr.f32.mxu0 0.0
      %2299 = vmatmul.mubr.f32.gmra.mrb[0].mxu0 %v930
      %v2300 = vpop.f32.mrb[0].mxu0
      %v2301 = vadd.f32 %v1596, %v2300
      %v2302 = vpop.f32.mrb[0].mxu0
      %2303 = vmatprep.mubr.f32.mxu0 0.0
      %2304 = vmatmul.mubr.f32.gmra.mrb[0].mxu0 %v933
      %v2305 = vpop.f32.mrb[0].mxu0
      %v2306 = vadd.f32 %v1601, %v2305
      %v2307 = vpop.f32.mrb[0].mxu0
      %2308 = vmatprep.mubr.f32.mxu0 0.0
      %2309 = vmatmul.mubr.f32.gmra.mrb[0].mxu0 %v936
      %v2310 = vpop.f32.mrb[0].mxu0
      %v2311 = vadd.f32 %v1606, %v2310
      %v2312 = vpop.f32.mrb[0].mxu0
      %2313 = vmatprep.mubr.f32.mxu0 0.0
      %2314 = vmatmul.mubr.f32.gmra.mrb[0].mxu0 %v939
      %v2315 = vpop.f32.mrb[0].mxu0
      %v2316 = vadd.f32 %v1611, %v2315
      %v2317 = vpop.f32.mrb[0].mxu0
      %2318 = vmatprep.mubr.f32.mxu0 0.0
      %2319 = vmatmul.mubr.f32.gmra.mrb[0].mxu0 %v942
      %v2320 = vpop.f32.mrb[0].mxu0
      %v2321 = vadd.f32 %v1616, %v2320
      %v2322 = vpop.f32.mrb[0].mxu0
      %2323 = vmatprep.mubr.f32.mxu0 0.0
      %2324 = vmatmul.mubr.f32.gmra.mrb[0].mxu0 %v945
      %v2325 = vpop.f32.mrb[0].mxu0
      %v2326 = vadd.f32 %v1621, %v2325
      %v2327 = vpop.f32.mrb[0].mxu0
      %2328 = vmatprep.mubr.f32.mxu0 0.0
      %2329 = vmatmul.mubr.f32.gmra.mrb[0].mxu0 %v948
      %v2330 = vpop.f32.mrb[0].mxu0
      %v2331 = vadd.f32 %v1626, %v2330
      %v2332 = vpop.f32.mrb[0].mxu0
      %2333 = vmatprep.mubr.f32.mxu0 0.0
      %2334 = vmatmul.mubr.f32.gmra.mrb[0].mxu0 %v951
      %v2335 = vpop.f32.mrb[0].mxu0
      %v2336 = vadd.f32 %v1631, %v2335
      %v2337 = vpop.f32.mrb[0].mxu0
      %2338 = vmatprep.mubr.f32.mxu0 0.0
      %2339 = vmatmul.mubr.f32.gmra.mrb[0].mxu0 %v954
      %v2340 = vpop.f32.mrb[0].mxu0
      %v2341 = vadd.f32 %v1636, %v2340
      %v2342 = vpop.f32.mrb[0].mxu0
      %2343 = vmatprep.mubr.f32.mxu0 0.0
      %2344 = vmatmul.mubr.f32.gmra.mrb[0].mxu0 %v957
      %v2345 = vpop.f32.mrb[0].mxu0
      %v2346 = vadd.f32 %v1641, %v2345
      %v2347 = vpop.f32.mrb[0].mxu0
      %2348 = vmatprep.mubr.f32.mxu0 0.0
      %2349 = vmatmul.mubr.f32.gmra.mrb[0].mxu0 %v960
      %v2350 = vpop.f32.mrb[0].mxu0
      %v2351 = vadd.f32 %v1646, %v2350
      %v2352 = vpop.f32.mrb[0].mxu0
      %2353 = vmatprep.mubr.f32.mxu0 0.0
      %2354 = vmatmul.mubr.f32.gmra.mrb[0].mxu0 %v963
      %v2355 = vpop.f32.mrb[0].mxu0
      %v2356 = vadd.f32 %v1651, %v2355
      %v2357 = vpop.f32.mrb[0].mxu0
      %2358 = vmatprep.mubr.f32.mxu0 0.0
      %2359 = vmatmul.mubr.f32.gmra.mrb[0].mxu0 %v966
      %v2360 = vpop.f32.mrb[0].mxu0
      %v2361 = vadd.f32 %v1656, %v2360
      %v2362 = vpop.f32.mrb[0].mxu0
      %2363 = vmatprep.mubr.f32.mxu0 0.0
      %2364 = vmatmul.mubr.f32.gmra.mrb[0].mxu0 %v969
      %v2365 = vpop.f32.mrb[0].mxu0
      %v2366 = vadd.f32 %v1661, %v2365
      %v2367 = vpop.f32.mrb[0].mxu0
      %2368 = vmatprep.mubr.f32.mxu0 0.0
      %2369 = vmatmul.mubr.f32.gmra.mrb[0].mxu0 %v972
      %v2370 = vpop.f32.mrb[0].mxu0
      %v2371 = vadd.f32 %v1666, %v2370
      %v2372 = vpop.f32.mrb[0].mxu0
      %2373 = vmatprep.mubr.f32.mxu0 0.0
      %2374 = vmatmul.mubr.f32.gmra.mrb[0].mxu0 %v975
      %v2375 = vpop.f32.mrb[0].mxu0
      %v2376 = vadd.f32 %v1671, %v2375
      %v2377 = vpop.f32.mrb[0].mxu0
      %2378 = vmatprep.mubr.f32.mxu0 0.0
      %2379 = vmatmul.mubr.f32.gmra.mrb[0].mxu0 %v978
      %v2380 = vpop.f32.mrb[0].mxu0
      %v2381 = vadd.f32 %v1676, %v2380
      %v2382 = vpop.f32.mrb[0].mxu0
      %2383 = vmatprep.mubr.f32.mxu0 0.0
      %2384 = vmatmul.mubr.f32.gmra.mrb[0].mxu0 %v981
      %v2385 = vpop.f32.mrb[0].mxu0
      %v2386 = vadd.f32 %v1681, %v2385
      %v2387 = vpop.f32.mrb[0].mxu0
      %2388 = vmatprep.mubr.f32.mxu0 0.0
      %2389 = vmatmul.mubr.f32.gmra.mrb[0].mxu0 %v984
      %v2390 = vpop.f32.mrb[0].mxu0
      %v2391 = vadd.f32 %v1686, %v2390
      %v2392 = vpop.f32.mrb[0].mxu0
      %2393 = vmatprep.mubr.f32.mxu0 0.0
      %2394 = vmatmul.mubr.f32.gmra.mrb[0].mxu0 %v987
      %v2395 = vpop.f32.mrb[0].mxu0
      %v2396 = vadd.f32 %v1691, %v2395
      %v2397 = vpop.f32.mrb[0].mxu0
      %2398 = vdwg.mxu0
      %2399 = vst [vmem:[%s175] sm:$0xff] %v1761
      %2400 = vst [vmem:[%s175 + $0x8] sm:$0xff] %v1766
      %2401 = vst [vmem:[%s175 + $0x10] sm:$0xff] %v1771
      %2402 = vst [vmem:[%s175 + $0x18] sm:$0xff] %v1776
      %2403 = vst [vmem:[%s175 + $0x20] sm:$0xff] %v1781
      %2404 = vst [vmem:[%s175 + $0x28] sm:$0xff] %v1786
      %2405 = vst [vmem:[%s175 + $0x30] sm:$0xff] %v1791
      %2406 = vst [vmem:[%s175 + $0x38] sm:$0xff] %v1796
      %2407 = vst [vmem:[%s175 + $0x40] sm:$0xff] %v1801
      %2408 = vst [vmem:[%s175 + $0x48] sm:$0xff] %v1806
      %2409 = vst [vmem:[%s175 + $0x50] sm:$0xff] %v1811
      %2410 = vst [vmem:[%s175 + $0x58] sm:$0xff] %v1816
      %2411 = vst [vmem:[%s175 + $0x60] sm:$0xff] %v1821
      %2412 = vst [vmem:[%s175 + $0x68] sm:$0xff] %v1826
      %2413 = vst [vmem:[%s175 + $0x70] sm:$0xff] %v1831
      %2414 = vst [vmem:[%s175 + $0x78] sm:$0xff] %v1836
      %2415 = vst [vmem:[%s175 + $0x80] sm:$0xff] %v1841
      %2416 = vst [vmem:[%s175 + $0x88] sm:$0xff] %v1846
      %2417 = vst [vmem:[%s175 + $0x90] sm:$0xff] %v1851
      %2418 = vst [vmem:[%s175 + $0x98] sm:$0xff] %v1856
      %2419 = vst [vmem:[%s175 + $0xa0] sm:$0xff] %v1861
      %2420 = vst [vmem:[%s175 + $0xa8] sm:$0xff] %v1866
      %2421 = vst [vmem:[%s175 + $0xb0] sm:$0xff] %v1871
      %2422 = vst [vmem:[%s175 + $0xb8] sm:$0xff] %v1876
      %2423 = vst [vmem:[%s175 + $0xc0] sm:$0xff] %v1881
      %2424 = vst [vmem:[%s175 + $0xc8] sm:$0xff] %v1886
      %2425 = vst [vmem:[%s175 + $0xd0] sm:$0xff] %v1891
      %2426 = vst [vmem:[%s175 + $0xd8] sm:$0xff] %v1896
      %2427 = vst [vmem:[%s175 + $0xe0] sm:$0xff] %v1901
      %2428 = vst [vmem:[%s175 + $0xe8] sm:$0xff] %v1906
      %2429 = vst [vmem:[%s175 + $0xf0] sm:$0xff] %v1911
      %2430 = vst [vmem:[%s175 + $0xf8] sm:$0xff] %v1916
      %2431 = vst [vmem:[%s175 + $0x100] sm:$0xff] %v1921
      %2432 = vst [vmem:[%s175 + $0x108] sm:$0xff] %v1926
      %2433 = vst [vmem:[%s175 + $0x110] sm:$0xff] %v1931
      %2434 = vst [vmem:[%s175 + $0x118] sm:$0xff] %v1936
      %2435 = vst [vmem:[%s175 + $0x120] sm:$0xff] %v1941
      %2436 = vst [vmem:[%s175 + $0x128] sm:$0xff] %v1946
      %2437 = vst [vmem:[%s175 + $0x130] sm:$0xff] %v1951
      %2438 = vst [vmem:[%s175 + $0x138] sm:$0xff] %v1956
      %2439 = vst [vmem:[%s175 + $0x140] sm:$0xff] %v1961
      %2440 = vst [vmem:[%s175 + $0x148] sm:$0xff] %v1966
      %2441 = vst [vmem:[%s175 + $0x150] sm:$0xff] %v1971
      %2442 = vst [vmem:[%s175 + $0x158] sm:$0xff] %v1976
      %2443 = vst [vmem:[%s175 + $0x160] sm:$0xff] %v1981
      %2444 = vst [vmem:[%s175 + $0x168] sm:$0xff] %v1986
      %2445 = vst [vmem:[%s175 + $0x170] sm:$0xff] %v1991
      %2446 = vst [vmem:[%s175 + $0x178] sm:$0xff] %v1996
      %2447 = vst [vmem:[%s175 + $0x180] sm:$0xff] %v2001
      %2448 = vst [vmem:[%s175 + $0x188] sm:$0xff] %v2006
      %2449 = vst [vmem:[%s175 + $0x190] sm:$0xff] %v2011
      %2450 = vst [vmem:[%s175 + $0x198] sm:$0xff] %v2016
      %2451 = vst [vmem:[%s175 + $0x1a0] sm:$0xff] %v2021
      %2452 = vst [vmem:[%s175 + $0x1a8] sm:$0xff] %v2026
      %2453 = vst [vmem:[%s175 + $0x1b0] sm:$0xff] %v2031
      %2454 = vst [vmem:[%s175 + $0x1b8] sm:$0xff] %v2036
      %2455 = vst [vmem:[%s175 + $0x1c0] sm:$0xff] %v2041
      %2456 = vst [vmem:[%s175 + $0x1c8] sm:$0xff] %v2046
      %2457 = vst [vmem:[%s175 + $0x1d0] sm:$0xff] %v2051
      %2458 = vst [vmem:[%s175 + $0x1d8] sm:$0xff] %v2056
      %2459 = vst [vmem:[%s175 + $0x1e0] sm:$0xff] %v2061
      %2460 = vst [vmem:[%s175 + $0x1e8] sm:$0xff] %v2066
      %2461 = vst [vmem:[%s175 + $0x1f0] sm:$0xff] %v2071
      %2462 = vst [vmem:[%s175 + $0x1f8] sm:$0xff] %v2076
      %2463 = vst [vmem:[%s175 + $0x200] sm:$0xff] %v2081
      %2464 = vst [vmem:[%s175 + $0x208] sm:$0xff] %v2086
      %2465 = vst [vmem:[%s175 + $0x210] sm:$0xff] %v2091
      %2466 = vst [vmem:[%s175 + $0x218] sm:$0xff] %v2096
      %2467 = vst [vmem:[%s175 + $0x220] sm:$0xff] %v2101
      %2468 = vst [vmem:[%s175 + $0x228] sm:$0xff] %v2106
      %2469 = vst [vmem:[%s175 + $0x230] sm:$0xff] %v2111
      %2470 = vst [vmem:[%s175 + $0x238] sm:$0xff] %v2116
      %2471 = vst [vmem:[%s175 + $0x240] sm:$0xff] %v2121
      %2472 = vst [vmem:[%s175 + $0x248] sm:$0xff] %v2126
      %2473 = vst [vmem:[%s175 + $0x250] sm:$0xff] %v2131
      %2474 = vst [vmem:[%s175 + $0x258] sm:$0xff] %v2136
      %2475 = vst [vmem:[%s175 + $0x260] sm:$0xff] %v2141
      %2476 = vst [vmem:[%s175 + $0x268] sm:$0xff] %v2146
      %2477 = vst [vmem:[%s175 + $0x270] sm:$0xff] %v2151
      %2478 = vst [vmem:[%s175 + $0x278] sm:$0xff] %v2156
      %2479 = vst [vmem:[%s175 + $0x280] sm:$0xff] %v2161
      %2480 = vst [vmem:[%s175 + $0x288] sm:$0xff] %v2166
      %2481 = vst [vmem:[%s175 + $0x290] sm:$0xff] %v2171
      %2482 = vst [vmem:[%s175 + $0x298] sm:$0xff] %v2176
      %2483 = vst [vmem:[%s175 + $0x2a0] sm:$0xff] %v2181
      %2484 = vst [vmem:[%s175 + $0x2a8] sm:$0xff] %v2186
      %2485 = vst [vmem:[%s175 + $0x2b0] sm:$0xff] %v2191
      %2486 = vst [vmem:[%s175 + $0x2b8] sm:$0xff] %v2196
      %2487 = vst [vmem:[%s175 + $0x2c0] sm:$0xff] %v2201
      %2488 = vst [vmem:[%s175 + $0x2c8] sm:$0xff] %v2206
      %2489 = vst [vmem:[%s175 + $0x2d0] sm:$0xff] %v2211
      %2490 = vst [vmem:[%s175 + $0x2d8] sm:$0xff] %v2216
      %2491 = vst [vmem:[%s175 + $0x2e0] sm:$0xff] %v2221
      %2492 = vst [vmem:[%s175 + $0x2e8] sm:$0xff] %v2226
      %2493 = vst [vmem:[%s175 + $0x2f0] sm:$0xff] %v2231
      %2494 = vst [vmem:[%s175 + $0x2f8] sm:$0xff] %v2236
      %2495 = vst [vmem:[%s175 + $0x300] sm:$0xff] %v2241
      %2496 = vst [vmem:[%s175 + $0x308] sm:$0xff] %v2246
      %2497 = vst [vmem:[%s175 + $0x310] sm:$0xff] %v2251
      %2498 = vst [vmem:[%s175 + $0x318] sm:$0xff] %v2256
      %2499 = vst [vmem:[%s175 + $0x320] sm:$0xff] %v2261
      %2500 = vst [vmem:[%s175 + $0x328] sm:$0xff] %v2266
      %2501 = vst [vmem:[%s175 + $0x330] sm:$0xff] %v2271
      %2502 = vst [vmem:[%s175 + $0x338] sm:$0xff] %v2276
      %2503 = vst [vmem:[%s175 + $0x340] sm:$0xff] %v2281
      %2504 = vst [vmem:[%s175 + $0x348] sm:$0xff] %v2286
      %2505 = vst [vmem:[%s175 + $0x350] sm:$0xff] %v2291
      %2506 = vst [vmem:[%s175 + $0x358] sm:$0xff] %v2296
      %2507 = vst [vmem:[%s175 + $0x360] sm:$0xff] %v2301
      %2508 = vst [vmem:[%s175 + $0x368] sm:$0xff] %v2306
      %2509 = vst [vmem:[%s175 + $0x370] sm:$0xff] %v2311
      %2510 = vst [vmem:[%s175 + $0x378] sm:$0xff] %v2316
      %2511 = vst [vmem:[%s175 + $0x380] sm:$0xff] %v2321
      %2512 = vst [vmem:[%s175 + $0x388] sm:$0xff] %v2326
      %2513 = vst [vmem:[%s175 + $0x390] sm:$0xff] %v2331
      %2514 = vst [vmem:[%s175 + $0x398] sm:$0xff] %v2336
      %2515 = vst [vmem:[%s175 + $0x3a0] sm:$0xff] %v2341
      %2516 = vst [vmem:[%s175 + $0x3a8] sm:$0xff] %v2346
      %2517 = vst [vmem:[%s175 + $0x3b0] sm:$0xff] %v2351
      %2518 = vst [vmem:[%s175 + $0x3b8] sm:$0xff] %v2356
      %2519 = vst [vmem:[%s175 + $0x3c0] sm:$0xff] %v2361
      %2520 = vst [vmem:[%s175 + $0x3c8] sm:$0xff] %v2366
      %2521 = vst [vmem:[%s175 + $0x3d0] sm:$0xff] %v2371
      %2522 = vst [vmem:[%s175 + $0x3d8] sm:$0xff] %v2376
      %2523 = vst [vmem:[%s175 + $0x3e0] sm:$0xff] %v2381
      %2524 = vst [vmem:[%s175 + $0x3e8] sm:$0xff] %v2386
      %2525 = vst [vmem:[%s175 + $0x3f0] sm:$0xff] %v2391
      %2526 = vst [vmem:[%s175 + $0x3f8] sm:$0xff] %v2396
      %s2527 = smul.u32 128, %s14
      %p2528 = scmp.lt.s32.totalorder %s2527, 511
      %s2529 = scalar_select %p2528, %s2527, 511
      %s2530 = smul.addr %s2529, 8
      %s2531 = scalar_lea.vmem %s3, %s2530
      // Predicated region
      $region33: #{convlstm_forward.6} parent=31 // pred_check
        %p2532 = pneg %p100
      $region34: #{convlstm_forward.6} parent=31 // pred_check_branch
        %2534 = sbr.rel (%p2532) target = $region36
      $region35: #{convlstm_forward.6} parent=31 // pred_region
        %s2535 = smul.u32 128, %s14
      $region36: #{convlstm_forward.6} parent=31 // pred_fallthru
        _
    $region32: #{convlstm_forward.6} parent=5 // pred_fallthru
      _
    %p2536 = scmp.le.s32.totalorder 2, %s9
    // Predicated region
    $region37: #{convlstm_forward.6} parent=5 // pred_check
      %p2537 = pneg %p2536
    $region38: #{convlstm_forward.6} parent=5 // pred_check_branch
      %2539 = sbr.rel (%p2537) target = $region40
    $region39: #{convlstm_forward.6} parent=5 // pred_region
      %s2540 = ssub.s32 %s9, 2
      // Predicated region
      $region41: #{convlstm_forward.6} parent=39 // pred_check
        %p2541 = pneg %p106
      $region42: #{convlstm_forward.6} parent=39 // pred_check_branch
        %2543 = sbr.rel (%p2541) target = $region44
      $region43: #{convlstm_forward.6} parent=39 // pred_region
        %s2544 = smul.u32 128, %s15
        %p2545 = scmp.lt.s32.totalorder %s2544, 511
        %s2546 = scalar_select %p2545, %s2544, 511
        %s2547 = smul.addr %s2546, 8
        %s2548 = scalar_lea.vmem %s3, %s2547
      $region44: #{convlstm_forward.6} parent=39 // pred_fallthru
        _
    $region40: #{convlstm_forward.6} parent=5 // pred_fallthru
      _
  $region6: #{convlstm_forward.6} parent=0 // loop_footer
    %s13 = sadd.s32 1, %s9
  $region7: #{convlstm_forward.6} parent=0 // loop_footer_branch
    %8 = sbr.rel target = $region3
  $region8: #{convlstm_forward.6} parent=0 // loop_exit
    _

// kernel: convlstm_forward.5
$region0: #{convlstm_forward.5}
  #allocation0 [shape = 'u32[]', space=smem, size = 0x4, offset = 0x4, fixed_abs, tag = 'smem constant byte address 0x4 - core index']
  #allocation1 [shape = 'u32[144,128]{1,0:T(1,128)}', space=vmem, size = 0x12000, scoped, tag = 'internal scratch']
  #allocation2 [shape = 'f32[2,18,18,32]{3,2,1,0:T(8,128)}', space=vmem, size = 0x6c000, scoped, tag = 'scratch operand']
  #allocation3 [shape = 'f32[512,32]{1,0:T(8,128)}', space=vmem, size = 0x40000, scoped, tag = 'scratch operand']
  %s0 = inlined_call_operand.vmem [shape: f32[8,512,128], index: 0, kind: input, shape index: {}]
  %s1 = inlined_call_operand.vmem [shape: f32[288,128], index: 1, kind: input, shape index: {}]
  %s2 = inlined_call_operand.vmem [shape: f32[8,512,32], index: 2, kind: output, shape index: {0}]
  %s3 = inlined_call_operand.hbm [shape: f32[512,32], index: 3, kind: output, shape index: {1}]
  %4 = xla_tuple %s2, %s3
  %s5 = sld [smem:[#allocation0]]
  $region57: #{convlstm_forward.5} parent=0
    _
  %s7 = ssub.s32 1, %s5
  %s8 = scalar_select 0, %s7, %s5
  $region1: #{convlstm_forward.5} parent=0
    #allocation4 [shape = 'u8[262144]{0}', space=vmem, size = 0x40000, scoped, tag = 'output window, operand 1, single buffered']
    #allocation5 [shape = 's32[2]{0}', space=sflag, size = 0x8, scoped, tag = 'scoped memory for convlstm_forward.5']
    %9 = vsyncpa [#allocation5], 0
    loop: start=0, step=1, limit=10
    $region2: #{convlstm_forward.5} parent=1 // loop_pre_header
      _
    $region3: #{convlstm_forward.5} parent=1 // loop_header
      %s11 = sphi 0, %s15
      %p12 = scmp.ge.s32.totalorder %s11, 10
      %s21 = sphi 0, %s23
      %s24 = sphi 0, %s21
      %s25 = sphi 0, %s24
      %s41 = sphi 0, %s25
      %s45 = sphi 0, %s45
      %s47 = sphi 0, %s45
      %s48 = sphi 0, %s47
      %s62 = sphi 0, %s48
      %s68 = sphi 0, %s70
      %s71 = sphi 0, %s68
      %s72 = sphi 0, %s71
      %s88 = sphi 0, %s72
      %s92 = sphi 0, %s92
      %s94 = sphi 0, %s92
      %s95 = sphi 0, %s94
      %s109 = sphi 0, %s95
    $region4: #{convlstm_forward.5} parent=1 // loop_header_branch
      %14 = sbr.rel (%p12) target = $region8
    $region5: #{convlstm_forward.5} parent=1 // loop_body
      %s16 = ssub.s32 %s11, 1
      %s17 = ssub.s32 %s11, 2
      %s18 = sadd.s32 %s11, 1
      %s19 = ssub.s32 %s11, %s18
      %p20 = scmp.eq.s32.totalorder %s19, 0
      %s22 = sadd.s32 %s21, 1
      %s23 = scalar_select %p20, %s21, %s22
      %p26 = pneg %p20
      %p27 = scmp.eq.s32.totalorder %s11, 7
      %p28 = por %p26, %p27
      %p29 = scmp.ne.s32.totalorder %s21, %s24
      %p30 = scmp.eq.s32.totalorder %s11, 0
      %p31 = por %p29, %p30
      %p32 = scmp.ne.s32.totalorder %s21, %s24
      %p33 = scmp.eq.s32.totalorder %s16, 7
      %p34 = por %p32, %p33
      %p35 = scmp.ne.s32.totalorder %s24, %s25
      %p36 = scmp.eq.s32.totalorder %s16, 0
      %p37 = por %p35, %p36
      %p38 = scmp.ne.s32.totalorder %s24, %s25
      %p39 = scmp.eq.s32.totalorder %s17, 7
      %p40 = por %p38, %p39
      %p42 = scmp.ne.s32.totalorder %s25, %s41
      %p43 = scmp.eq.s32.totalorder %s17, 0
      %p44 = por %p42, %p43
      %s46 = sadd.s32 %s45, 1
      %p49 = scmp.eq.s32.totalorder %s11, 7
      %p50 = scmp.ne.s32.totalorder %s45, %s47
      %p51 = scmp.eq.s32.totalorder %s11, 0
      %p52 = por %p50, %p51
      %p53 = scmp.ne.s32.totalorder %s45, %s47
      %p54 = scmp.eq.s32.totalorder %s16, 7
      %p55 = por %p53, %p54
      %p56 = scmp.ne.s32.totalorder %s47, %s48
      %p57 = scmp.eq.s32.totalorder %s16, 0
      %p58 = por %p56, %p57
      %p59 = scmp.ne.s32.totalorder %s47, %s48
      %p60 = scmp.eq.s32.totalorder %s17, 7
      %p61 = por %p59, %p60
      %p63 = scmp.ne.s32.totalorder %s48, %s62
      %p64 = scmp.eq.s32.totalorder %s17, 0
      %p65 = por %p63, %p64
      %s66 = ssub.s32 %s11, %s18
      %p67 = scmp.eq.s32.totalorder %s66, 0
      %s69 = sadd.s32 %s68, 1
      %s70 = scalar_select %p67, %s68, %s69
      %p73 = pneg %p67
      %p74 = scmp.eq.s32.totalorder %s11, 7
      %p75 = por %p73, %p74
      %p76 = scmp.ne.s32.totalorder %s68, %s71
      %p77 = scmp.eq.s32.totalorder %s11, 0
      %p78 = por %p76, %p77
      %p79 = scmp.ne.s32.totalorder %s68, %s71
      %p80 = scmp.eq.s32.totalorder %s16, 7
      %p81 = por %p79, %p80
      %p82 = scmp.ne.s32.totalorder %s71, %s72
      %p83 = scmp.eq.s32.totalorder %s16, 0
      %p84 = por %p82, %p83
      %p85 = scmp.ne.s32.totalorder %s71, %s72
      %p86 = scmp.eq.s32.totalorder %s17, 7
      %p87 = por %p85, %p86
      %p89 = scmp.ne.s32.totalorder %s72, %s88
      %p90 = scmp.eq.s32.totalorder %s17, 0
      %p91 = por %p89, %p90
      %s93 = sadd.s32 %s92, 1
      %p96 = scmp.eq.s32.totalorder %s11, 7
      %p97 = scmp.ne.s32.totalorder %s92, %s94
      %p98 = scmp.eq.s32.totalorder %s11, 0
      %p99 = por %p97, %p98
      %p100 = scmp.ne.s32.totalorder %s92, %s94
      %p101 = scmp.eq.s32.totalorder %s16, 7
      %p102 = por %p100, %p101
      %p103 = scmp.ne.s32.totalorder %s94, %s95
      %p104 = scmp.eq.s32.totalorder %s16, 0
      %p105 = por %p103, %p104
      %p106 = scmp.ne.s32.totalorder %s94, %s95
      %p107 = scmp.eq.s32.totalorder %s17, 7
      %p108 = por %p106, %p107
      %p110 = scmp.ne.s32.totalorder %s95, %s109
      %p111 = scmp.eq.s32.totalorder %s17, 0
      %p112 = por %p110, %p111
      %p113 = scmp.le.s32.totalorder 1, %s11
      %p114 = scmp.lt.s32.totalorder %s11, 9
      %p115 = pnand %p113, %p114
      %p116 = pneg %p115
      // Predicated region
      $region9: #{convlstm_forward.5} parent=5 // pred_check
        _
      $region10: #{convlstm_forward.5} parent=5 // pred_check_branch
        %118 = sbr.rel (%p115) target = $region12
      $region11: #{convlstm_forward.5} parent=5 // pred_region
        %s119 = ssub.s32 %s11, 1
        // Predicated region
        $region13: #{convlstm_forward.5} parent=11 // pred_check
          %p120 = pneg %p58
        $region14: #{convlstm_forward.5} parent=11 // pred_check_branch
          %122 = sbr.rel (%p120) target = $region16
        $region15: #{convlstm_forward.5} parent=11 // pred_region
          _
        $region16: #{convlstm_forward.5} parent=11 // pred_fallthru
          _
      $region12: #{convlstm_forward.5} parent=5 // pred_fallthru
        _
      %p123 = scmp.lt.s32.totalorder %s11, 8
      // Predicated region
      $region17: #{convlstm_forward.5} parent=5 // pred_check
        %p124 = pneg %p123
      $region18: #{convlstm_forward.5} parent=5 // pred_check_branch
        %126 = sbr.rel (%p124) target = $region20
      $region19: #{convlstm_forward.5} parent=5 // pred_region
        // Predicated region
        $region21: #{convlstm_forward.5} parent=19 // pred_check
          %p127 = pneg %p31
        $region22: #{convlstm_forward.5} parent=19 // pred_check_branch
          %129 = sbr.rel (%p127) target = $region24
        $region23: #{convlstm_forward.5} parent=19 // pred_region
          %p130 = scmp.lt.s32.totalorder %s11, 7
          %s131 = scalar_select %p130, %s11, 7
          %s132 = smul.addr %s131, 64
          %s133 = smul.addr %s132, 8
          %s134 = scalar_lea.vmem %s0, %s133
        $region24: #{convlstm_forward.5} parent=19 // pred_fallthru
          _
      $region20: #{convlstm_forward.5} parent=5 // pred_fallthru
        _
      %p135 = scmp.le.s32.totalorder 1, %s11
      %p136 = scmp.lt.s32.totalorder %s11, 9
      %p137 = pnand %p135, %p136
      %p138 = pneg %p137
      // Predicated region
      $region25: #{convlstm_forward.5} parent=5 // pred_check
        _
      $region26: #{convlstm_forward.5} parent=5 // pred_check_branch
        %140 = sbr.rel (%p137) target = $region28
      $region27: #{convlstm_forward.5} parent=5 // pred_region
        %s141 = ssub.s32 %s11, 1
        %p142 = scmp.lt.s32.totalorder %s16, 7
        %s143 = scalar_select %p142, %s16, 7
        %s144 = smul.addr %s143, 64
        %s145 = smul.addr %s144, 8
        %s146 = scalar_lea.vmem %s0, %s145
        %p147 = pneg %p37
        %p148 = pneg %p34
        %p149 = pneg %p58
        %p150 = pneg %p55
        %p151 = pneg %p84
        %p152 = pneg %p81
        %p153 = scmp.lt.s32.totalorder %s16, 7
        %s154 = scalar_select %p153, %s16, 7
        %s155 = smul.addr %s154, 64
        %s156 = smul.addr %s155, 8
        %s157 = scalar_lea.vmem %s2, %s156
        %p158 = pneg %p105
        %p159 = pneg %p102
        %p160 = scmp.lt.s32.totalorder %s16, 7
        %s161 = scalar_select %p160, %s16, 7
        %s162 = smul.addr %s161, 64
        %s163 = smul.addr %s162, 8
        %s164 = scalar_lea.vmem %s0, %s163
        %p165 = scmp.lt.s32.totalorder %s16, 7
        %s166 = scalar_select %p165, %s16, 7
        %s167 = smul.addr %s166, 64
        %s168 = smul.addr %s167, 8
        %s169 = scalar_lea.vmem %s2, %s168
        %p170 = scmp.eq.s32.totalorder %s16, 0
        // Predicated region
        $region29: #{convlstm_forward.5} parent=27 // pred_check
          %p171 = pneg %p170
        $region30: #{convlstm_forward.5} parent=27 // pred_check_branch
          %173 = sbr.rel (%p171) target = $region32
        $region31: #{convlstm_forward.5} parent=27 // pred_region
          %vm174 = vcmask 261120
          %175 = vst.msk [vmem:[#allocation2] sm:$0xff] %vm174, 0.0
          %176 = vst.msk [vmem:[#allocation2 + $0x8] sm:$0xff] %vm174, 0.0
          %vm177 = vcmask 254976
          %178 = vst.msk [vmem:[#allocation2 + $0x10] sm:$0x3] %vm177, 0.0
          %179 = vst.msk [vmem:[#allocation2 + $0x18] sm:$0xff] %vm174, 0.0
          %180 = vst.msk [vmem:[#allocation2 + $0x20] sm:$0xff] %vm174, 0.0
          %181 = vst.msk [vmem:[#allocation2 + $0x28] sm:$0x3] %vm177, 0.0
          %182 = vst.msk [vmem:[#allocation2 + $0x30] sm:$0xff] %vm174, 0.0
          %183 = vst.msk [vmem:[#allocation2 + $0x38] sm:$0xff] %vm174, 0.0
          %184 = vst.msk [vmem:[#allocation2 + $0x40] sm:$0x3] %vm177, 0.0
          %185 = vst.msk [vmem:[#allocation2 + $0x48] sm:$0xff] %vm174, 0.0
          %186 = vst.msk [vmem:[#allocation2 + $0x50] sm:$0xff] %vm174, 0.0
          %187 = vst.msk [vmem:[#allocation2 + $0x58] sm:$0x3] %vm177, 0.0
          %188 = vst.msk [vmem:[#allocation2 + $0x60] sm:$0xff] %vm174, 0.0
          %189 = vst.msk [vmem:[#allocation2 + $0x68] sm:$0xff] %vm174, 0.0
          %190 = vst.msk [vmem:[#allocation2 + $0x70] sm:$0x3] %vm177, 0.0
          %191 = vst.msk [vmem:[#allocation2 + $0x78] sm:$0xff] %vm174, 0.0
          %192 = vst.msk [vmem:[#allocation2 + $0x80] sm:$0xff] %vm174, 0.0
          %193 = vst.msk [vmem:[#allocation2 + $0x88] sm:$0x3] %vm177, 0.0
          %194 = vst.msk [vmem:[#allocation2 + $0x90] sm:$0xff] %vm174, 0.0
          %195 = vst.msk [vmem:[#allocation2 + $0x98] sm:$0xff] %vm174, 0.0
          %196 = vst.msk [vmem:[#allocation2 + $0xa0] sm:$0x3] %vm177, 0.0
          %197 = vst.msk [vmem:[#allocation2 + $0xa8] sm:$0xff] %vm174, 0.0
          %198 = vst.msk [vmem:[#allocation2 + $0xb0] sm:$0xff] %vm174, 0.0
          %199 = vst.msk [vmem:[#allocation2 + $0xb8] sm:$0x3] %vm177, 0.0
          %200 = vst.msk [vmem:[#allocation2 + $0xc0] sm:$0xff] %vm174, 0.0
          %201 = vst.msk [vmem:[#allocation2 + $0xc8] sm:$0xff] %vm174, 0.0
          %202 = vst.msk [vmem:[#allocation2 + $0xd0] sm:$0x3] %vm177, 0.0
          %203 = vst.msk [vmem:[#allocation2 + $0xd8] sm:$0xff] %vm174, 0.0
          %204 = vst.msk [vmem:[#allocation2 + $0xe0] sm:$0xff] %vm174, 0.0
          %205 = vst.msk [vmem:[#allocation2 + $0xe8] sm:$0x3] %vm177, 0.0
          %206 = vst.msk [vmem:[#allocation2 + $0xf0] sm:$0xff] %vm174, 0.0
          %207 = vst.msk [vmem:[#allocation2 + $0xf8] sm:$0xff] %vm174, 0.0
          %208 = vst.msk [vmem:[#allocation2 + $0x100] sm:$0x3] %vm177, 0.0
          %209 = vst.msk [vmem:[#allocation2 + $0x108] sm:$0xff] %vm174, 0.0
          %210 = vst.msk [vmem:[#allocation2 + $0x110] sm:$0xff] %vm174, 0.0
          %211 = vst.msk [vmem:[#allocation2 + $0x118] sm:$0x3] %vm177, 0.0
          %212 = vst.msk [vmem:[#allocation2 + $0x120] sm:$0xff] %vm174, 0.0
          %213 = vst.msk [vmem:[#allocation2 + $0x128] sm:$0xff] %vm174, 0.0
          %214 = vst.msk [vmem:[#allocation2 + $0x130] sm:$0x3] %vm177, 0.0
          %215 = vst.msk [vmem:[#allocation2 + $0x138] sm:$0xff] %vm174, 0.0
          %216 = vst.msk [vmem:[#allocation2 + $0x140] sm:$0xff] %vm174, 0.0
          %217 = vst.msk [vmem:[#allocation2 + $0x148] sm:$0x3] %vm177, 0.0
          %218 = vst.msk [vmem:[#allocation2 + $0x150] sm:$0xff] %vm174, 0.0
          %219 = vst.msk [vmem:[#allocation2 + $0x158] sm:$0xff] %vm174, 0.0
          %220 = vst.msk [vmem:[#allocation2 + $0x160] sm:$0x3] %vm177, 0.0
          %221 = vst.msk [vmem:[#allocation2 + $0x168] sm:$0xff] %vm174, 0.0
          %222 = vst.msk [vmem:[#allocation2 + $0x170] sm:$0xff] %vm174, 0.0
          %223 = vst.msk [vmem:[#allocation2 + $0x178] sm:$0x3] %vm177, 0.0
          %224 = vst.msk [vmem:[#allocation2 + $0x180] sm:$0xff] %vm174, 0.0
          %225 = vst.msk [vmem:[#allocation2 + $0x188] sm:$0xff] %vm174, 0.0
          %226 = vst.msk [vmem:[#allocation2 + $0x190] sm:$0x3] %vm177, 0.0
          %227 = vst.msk [vmem:[#allocation2 + $0x198] sm:$0xff] %vm174, 0.0
          %228 = vst.msk [vmem:[#allocation2 + $0x1a0] sm:$0xff] %vm174, 0.0
          %229 = vst.msk [vmem:[#allocation2 + $0x1a8] sm:$0x3] %vm177, 0.0
          %230 = vst.msk [vmem:[#allocation2 + $0x1b0] sm:$0xff] %vm174, 0.0
          %231 = vst.msk [vmem:[#allocation2 + $0x1b8] sm:$0xff] %vm174, 0.0
          %232 = vst.msk [vmem:[#allocation2 + $0x1c0] sm:$0x3] %vm177, 0.0
          %233 = vst.msk [vmem:[#allocation2 + $0x1c8] sm:$0xff] %vm174, 0.0
          %234 = vst.msk [vmem:[#allocation2 + $0x1d0] sm:$0xff] %vm174, 0.0
          %235 = vst.msk [vmem:[#allocation2 + $0x1d8] sm:$0x3] %vm177, 0.0
          %236 = vst.msk [vmem:[#allocation2 + $0x1e0] sm:$0xff] %vm174, 0.0
          %237 = vst.msk [vmem:[#allocation2 + $0x1e8] sm:$0xff] %vm174, 0.0
          %238 = vst.msk [vmem:[#allocation2 + $0x1f0] sm:$0x3] %vm177, 0.0
          %239 = vst.msk [vmem:[#allocation2 + $0x1f8] sm:$0xff] %vm174, 0.0
          %240 = vst.msk [vmem:[#allocation2 + $0x200] sm:$0xff] %vm174, 0.0
          %241 = vst.msk [vmem:[#allocation2 + $0x208] sm:$0x3] %vm177, 0.0
          %242 = vst.msk [vmem:[#allocation2 + $0x210] sm:$0xff] %vm174, 0.0
          %243 = vst.msk [vmem:[#allocation2 + $0x218] sm:$0xff] %vm174, 0.0
          %244 = vst.msk [vmem:[#allocation2 + $0x220] sm:$0x3] %vm177, 0.0
          %245 = vst.msk [vmem:[#allocation2 + $0x228] sm:$0xff] %vm174, 0.0
          %246 = vst.msk [vmem:[#allocation2 + $0x230] sm:$0xff] %vm174, 0.0
          %247 = vst.msk [vmem:[#allocation2 + $0x238] sm:$0x3] %vm177, 0.0
          %248 = vst.msk [vmem:[#allocation2 + $0x240] sm:$0xff] %vm174, 0.0
          %249 = vst.msk [vmem:[#allocation2 + $0x248] sm:$0xff] %vm174, 0.0
          %250 = vst.msk [vmem:[#allocation2 + $0x250] sm:$0x3] %vm177, 0.0
          %251 = vst.msk [vmem:[#allocation2 + $0x258] sm:$0xff] %vm174, 0.0
          %252 = vst.msk [vmem:[#allocation2 + $0x260] sm:$0xff] %vm174, 0.0
          %253 = vst.msk [vmem:[#allocation2 + $0x268] sm:$0x3] %vm177, 0.0
          %254 = vst.msk [vmem:[#allocation2 + $0x270] sm:$0xff] %vm174, 0.0
          %255 = vst.msk [vmem:[#allocation2 + $0x278] sm:$0xff] %vm174, 0.0
          %256 = vst.msk [vmem:[#allocation2 + $0x280] sm:$0x3] %vm177, 0.0
          %257 = vst.msk [vmem:[#allocation2 + $0x288] sm:$0xff] %vm174, 0.0
          %258 = vst.msk [vmem:[#allocation2 + $0x290] sm:$0xff] %vm174, 0.0
          %259 = vst.msk [vmem:[#allocation2 + $0x298] sm:$0x3] %vm177, 0.0
          %260 = vst.msk [vmem:[#allocation2 + $0x2a0] sm:$0xff] %vm174, 0.0
          %261 = vst.msk [vmem:[#allocation2 + $0x2a8] sm:$0xff] %vm174, 0.0
          %262 = vst.msk [vmem:[#allocation2 + $0x2b0] sm:$0x3] %vm177, 0.0
          %263 = vst.msk [vmem:[#allocation2 + $0x2b8] sm:$0xff] %vm174, 0.0
          %264 = vst.msk [vmem:[#allocation2 + $0x2c0] sm:$0xff] %vm174, 0.0
          %265 = vst.msk [vmem:[#allocation2 + $0x2c8] sm:$0x3] %vm177, 0.0
          %266 = vst.msk [vmem:[#allocation2 + $0x2d0] sm:$0xff] %vm174, 0.0
          %267 = vst.msk [vmem:[#allocation2 + $0x2d8] sm:$0xff] %vm174, 0.0
          %268 = vst.msk [vmem:[#allocation2 + $0x2e0] sm:$0x3] %vm177, 0.0
          %269 = vst.msk [vmem:[#allocation2 + $0x2e8] sm:$0xff] %vm174, 0.0
          %270 = vst.msk [vmem:[#allocation2 + $0x2f0] sm:$0xff] %vm174, 0.0
          %271 = vst.msk [vmem:[#allocation2 + $0x2f8] sm:$0x3] %vm177, 0.0
          %272 = vst.msk [vmem:[#allocation2 + $0x300] sm:$0xff] %vm174, 0.0
          %273 = vst.msk [vmem:[#allocation2 + $0x308] sm:$0xff] %vm174, 0.0
          %274 = vst.msk [vmem:[#allocation2 + $0x310] sm:$0x3] %vm177, 0.0
          %275 = vst.msk [vmem:[#allocation2 + $0x318] sm:$0xff] %vm174, 0.0
          %276 = vst.msk [vmem:[#allocation2 + $0x320] sm:$0xff] %vm174, 0.0
          %277 = vst.msk [vmem:[#allocation2 + $0x328] sm:$0x3] %vm177, 0.0
          %278 = vst.msk [vmem:[#allocation2 + $0x330] sm:$0xff] %vm174, 0.0
          %279 = vst.msk [vmem:[#allocation2 + $0x338] sm:$0xff] %vm174, 0.0
          %280 = vst.msk [vmem:[#allocation2 + $0x340] sm:$0x3] %vm177, 0.0
          %281 = vst.msk [vmem:[#allocation2 + $0x348] sm:$0xff] %vm174, 0.0
          %282 = vst.msk [vmem:[#allocation2 + $0x350] sm:$0xff] %vm174, 0.0
          %283 = vst.msk [vmem:[#allocation2 + $0x358] sm:$0x3] %vm177, 0.0
          %284 = vst.msk [vmem:[#allocation3] sm:$0xff] %vm174, 0.0
          %285 = vst.msk [vmem:[#allocation3 + $0x8] sm:$0xff] %vm174, 0.0
          %286 = vst.msk [vmem:[#allocation3 + $0x10] sm:$0xff] %vm174, 0.0
          %287 = vst.msk [vmem:[#allocation3 + $0x18] sm:$0xff] %vm174, 0.0
          %288 = vst.msk [vmem:[#allocation3 + $0x20] sm:$0xff] %vm174, 0.0
          %289 = vst.msk [vmem:[#allocation3 + $0x28] sm:$0xff] %vm174, 0.0
          %290 = vst.msk [vmem:[#allocation3 + $0x30] sm:$0xff] %vm174, 0.0
          %291 = vst.msk [vmem:[#allocation3 + $0x38] sm:$0xff] %vm174, 0.0
          %292 = vst.msk [vmem:[#allocation3 + $0x40] sm:$0xff] %vm174, 0.0
          %293 = vst.msk [vmem:[#allocation3 + $0x48] sm:$0xff] %vm174, 0.0
          %294 = vst.msk [vmem:[#allocation3 + $0x50] sm:$0xff] %vm174, 0.0
          %295 = vst.msk [vmem:[#allocation3 + $0x58] sm:$0xff] %vm174, 0.0
          %296 = vst.msk [vmem:[#allocation3 + $0x60] sm:$0xff] %vm174, 0.0
          %297 = vst.msk [vmem:[#allocation3 + $0x68] sm:$0xff] %vm174, 0.0
          %298 = vst.msk [vmem:[#allocation3 + $0x70] sm:$0xff] %vm174, 0.0
          %299 = vst.msk [vmem:[#allocation3 + $0x78] sm:$0xff] %vm174, 0.0
          %300 = vst.msk [vmem:[#allocation3 + $0x80] sm:$0xff] %vm174, 0.0
          %301 = vst.msk [vmem:[#allocation3 + $0x88] sm:$0xff] %vm174, 0.0
          %302 = vst.msk [vmem:[#allocation3 + $0x90] sm:$0xff] %vm174, 0.0
          %303 = vst.msk [vmem:[#allocation3 + $0x98] sm:$0xff] %vm174, 0.0
          %304 = vst.msk [vmem:[#allocation3 + $0xa0] sm:$0xff] %vm174, 0.0
          %305 = vst.msk [vmem:[#allocation3 + $0xa8] sm:$0xff] %vm174, 0.0
          %306 = vst.msk [vmem:[#allocation3 + $0xb0] sm:$0xff] %vm174, 0.0
          %307 = vst.msk [vmem:[#allocation3 + $0xb8] sm:$0xff] %vm174, 0.0
          %308 = vst.msk [vmem:[#allocation3 + $0xc0] sm:$0xff] %vm174, 0.0
          %309 = vst.msk [vmem:[#allocation3 + $0xc8] sm:$0xff] %vm174, 0.0
          %310 = vst.msk [vmem:[#allocation3 + $0xd0] sm:$0xff] %vm174, 0.0
          %311 = vst.msk [vmem:[#allocation3 + $0xd8] sm:$0xff] %vm174, 0.0
          %312 = vst.msk [vmem:[#allocation3 + $0xe0] sm:$0xff] %vm174, 0.0
          %313 = vst.msk [vmem:[#allocation3 + $0xe8] sm:$0xff] %vm174, 0.0
          %314 = vst.msk [vmem:[#allocation3 + $0xf0] sm:$0xff] %vm174, 0.0
          %315 = vst.msk [vmem:[#allocation3 + $0xf8] sm:$0xff] %vm174, 0.0
          %316 = vst.msk [vmem:[#allocation3 + $0x100] sm:$0xff] %vm174, 0.0
          %317 = vst.msk [vmem:[#allocation3 + $0x108] sm:$0xff] %vm174, 0.0
          %318 = vst.msk [vmem:[#allocation3 + $0x110] sm:$0xff] %vm174, 0.0
          %319 = vst.msk [vmem:[#allocation3 + $0x118] sm:$0xff] %vm174, 0.0
          %320 = vst.msk [vmem:[#allocation3 + $0x120] sm:$0xff] %vm174, 0.0
          %321 = vst.msk [vmem:[#allocation3 + $0x128] sm:$0xff] %vm174, 0.0
          %322 = vst.msk [vmem:[#allocation3 + $0x130] sm:$0xff] %vm174, 0.0
          %323 = vst.msk [vmem:[#allocation3 + $0x138] sm:$0xff] %vm174, 0.0
          %324 = vst.msk [vmem:[#allocation3 + $0x140] sm:$0xff] %vm174, 0.0
          %325 = vst.msk [vmem:[#allocation3 + $0x148] sm:$0xff] %vm174, 0.0
          %326 = vst.msk [vmem:[#allocation3 + $0x150] sm:$0xff] %vm174, 0.0
          %327 = vst.msk [vmem:[#allocation3 + $0x158] sm:$0xff] %vm174, 0.0
          %328 = vst.msk [vmem:[#allocation3 + $0x160] sm:$0xff] %vm174, 0.0
          %329 = vst.msk [vmem:[#allocation3 + $0x168] sm:$0xff] %vm174, 0.0
          %330 = vst.msk [vmem:[#allocation3 + $0x170] sm:$0xff] %vm174, 0.0
          %331 = vst.msk [vmem:[#allocation3 + $0x178] sm:$0xff] %vm174, 0.0
          %332 = vst.msk [vmem:[#allocation3 + $0x180] sm:$0xff] %vm174, 0.0
          %333 = vst.msk [vmem:[#allocation3 + $0x188] sm:$0xff] %vm174, 0.0
          %334 = vst.msk [vmem:[#allocation3 + $0x190] sm:$0xff] %vm174, 0.0
          %335 = vst.msk [vmem:[#allocation3 + $0x198] sm:$0xff] %vm174, 0.0
          %336 = vst.msk [vmem:[#allocation3 + $0x1a0] sm:$0xff] %vm174, 0.0
          %337 = vst.msk [vmem:[#allocation3 + $0x1a8] sm:$0xff] %vm174, 0.0
          %338 = vst.msk [vmem:[#allocation3 + $0x1b0] sm:$0xff] %vm174, 0.0
          %339 = vst.msk [vmem:[#allocation3 + $0x1b8] sm:$0xff] %vm174, 0.0
          %340 = vst.msk [vmem:[#allocation3 + $0x1c0] sm:$0xff] %vm174, 0.0
          %341 = vst.msk [vmem:[#allocation3 + $0x1c8] sm:$0xff] %vm174, 0.0
          %342 = vst.msk [vmem:[#allocation3 + $0x1d0] sm:$0xff] %vm174, 0.0
          %343 = vst.msk [vmem:[#allocation3 + $0x1d8] sm:$0xff] %vm174, 0.0
          %344 = vst.msk [vmem:[#allocation3 + $0x1e0] sm:$0xff] %vm174, 0.0
          %345 = vst.msk [vmem:[#allocation3 + $0x1e8] sm:$0xff] %vm174, 0.0
          %346 = vst.msk [vmem:[#allocation3 + $0x1f0] sm:$0xff] %vm174, 0.0
          %347 = vst.msk [vmem:[#allocation3 + $0x1f8] sm:$0xff] %vm174, 0.0
        $region32: #{convlstm_forward.5} parent=27 // pred_fallthru
          _
        %v348 = vld [vmem:[#allocation2] sm:$0xff]
        %v349 = vld [vmem:[#allocation2 + $0x8] sm:$0xff]
        %v350 = vld [vmem:[#allocation2 + $0x18] sm:$0xff]
        %v351 = vld [vmem:[#allocation2 + $0x20] sm:$0xff]
        %v352 = vld [vmem:[#allocation2 + $0x30] sm:$0xff]
        %v353 = vld [vmem:[#allocation2 + $0x38] sm:$0xff]
        %v354 = vld [vmem:[#allocation2 + $0x48] sm:$0xff]
        %v355 = vld [vmem:[#allocation2 + $0x50] sm:$0xff]
        %v356 = vld [vmem:[#allocation2 + $0x60] sm:$0xff]
        %v357 = vld [vmem:[#allocation2 + $0x68] sm:$0xff]
        %v358 = vld [vmem:[#allocation2 + $0x78] sm:$0xff]
        %v359 = vld [vmem:[#allocation2 + $0x80] sm:$0xff]
        %v360 = vld [vmem:[#allocation2 + $0x90] sm:$0xff]
        %v361 = vld [vmem:[#allocation2 + $0x98] sm:$0xff]
        %v362 = vld [vmem:[#allocation2 + $0xa8] sm:$0xff]
        %v363 = vld [vmem:[#allocation2 + $0xb0] sm:$0xff]
        %v364 = vld [vmem:[#allocation2 + $0xc0] sm:$0xff]
        %v365 = vld [vmem:[#allocation2 + $0xc8] sm:$0xff]
        %v366 = vld [vmem:[#allocation2 + $0xd8] sm:$0xff]
        %v367 = vld [vmem:[#allocation2 + $0xe0] sm:$0xff]
        %v368 = vld [vmem:[#allocation2 + $0xf0] sm:$0xff]
        %v369 = vld [vmem:[#allocation2 + $0xf8] sm:$0xff]
        %v370 = vld [vmem:[#allocation2 + $0x108] sm:$0xff]
        %v371 = vld [vmem:[#allocation2 + $0x110] sm:$0xff]
        %v372 = vld [vmem:[#allocation2 + $0x120] sm:$0xff]
        %v373 = vld [vmem:[#allocation2 + $0x128] sm:$0xff]
        %v374 = vld [vmem:[#allocation2 + $0x138] sm:$0xff]
        %v375 = vld [vmem:[#allocation2 + $0x140] sm:$0xff]
        %v376 = vld [vmem:[#allocation2 + $0x150] sm:$0xff]
        %v377 = vld [vmem:[#allocation2 + $0x158] sm:$0xff]
        %v378 = vld [vmem:[#allocation2 + $0x168] sm:$0xff]
        %v379 = vld [vmem:[#allocation2 + $0x170] sm:$0xff]
        %v380 = vld [vmem:[#allocation2 + $0x1b0] sm:$0xff]
        %v381 = vld [vmem:[#allocation2 + $0x1b8] sm:$0xff]
        %v382 = vld [vmem:[#allocation2 + $0x1c8] sm:$0xff]
        %v383 = vld [vmem:[#allocation2 + $0x1d0] sm:$0xff]
        %v384 = vld [vmem:[#allocation2 + $0x1e0] sm:$0xff]
        %v385 = vld [vmem:[#allocation2 + $0x1e8] sm:$0xff]
        %v386 = vld [vmem:[#allocation2 + $0x1f8] sm:$0xff]
        %v387 = vld [vmem:[#allocation2 + $0x200] sm:$0xff]
        %v388 = vld [vmem:[#allocation2 + $0x210] sm:$0xff]
        %v389 = vld [vmem:[#allocation2 + $0x218] sm:$0xff]
        %v390 = vld [vmem:[#allocation2 + $0x228] sm:$0xff]
        %v391 = vld [vmem:[#allocation2 + $0x230] sm:$0xff]
        %v392 = vld [vmem:[#allocation2 + $0x240] sm:$0xff]
        %v393 = vld [vmem:[#allocation2 + $0x248] sm:$0xff]
        %v394 = vld [vmem:[#allocation2 + $0x258] sm:$0xff]
        %v395 = vld [vmem:[#allocation2 + $0x260] sm:$0xff]
        %v396 = vld [vmem:[#allocation2 + $0x270] sm:$0xff]
        %v397 = vld [vmem:[#allocation2 + $0x278] sm:$0xff]
        %v398 = vld [vmem:[#allocation2 + $0x288] sm:$0xff]
        %v399 = vld [vmem:[#allocation2 + $0x290] sm:$0xff]
        %v400 = vld [vmem:[#allocation2 + $0x2a0] sm:$0xff]
        %v401 = vld [vmem:[#allocation2 + $0x2a8] sm:$0xff]
        %v402 = vld [vmem:[#allocation2 + $0x2b8] sm:$0xff]
        %v403 = vld [vmem:[#allocation2 + $0x2c0] sm:$0xff]
        %v404 = vld [vmem:[#allocation2 + $0x2d0] sm:$0xff]
        %v405 = vld [vmem:[#allocation2 + $0x2d8] sm:$0xff]
        %v406 = vld [vmem:[#allocation2 + $0x2e8] sm:$0xff]
        %v407 = vld [vmem:[#allocation2 + $0x2f0] sm:$0xff]
        %v408 = vld [vmem:[#allocation2 + $0x300] sm:$0xff]
        %v409 = vld [vmem:[#allocation2 + $0x308] sm:$0xff]
        %v410 = vld [vmem:[#allocation2 + $0x318] sm:$0xff]
        %v411 = vld [vmem:[#allocation2 + $0x320] sm:$0xff]
        %v412 = vld [vmem:[#allocation2 + $0x1] sm:$0xff]
        %v413 = vld [vmem:[#allocation2 + $0x9] sm:$0xff]
        %v414 = vld [vmem:[#allocation2 + $0x19] sm:$0xff]
        %v415 = vld [vmem:[#allocation2 + $0x21] sm:$0xff]
        %v416 = vld [vmem:[#allocation2 + $0x31] sm:$0xff]
        %v417 = vld [vmem:[#allocation2 + $0x39] sm:$0xff]
        %v418 = vld [vmem:[#allocation2 + $0x49] sm:$0xff]
        %v419 = vld [vmem:[#allocation2 + $0x51] sm:$0xff]
        %v420 = vld [vmem:[#allocation2 + $0x61] sm:$0xff]
        %v421 = vld [vmem:[#allocation2 + $0x69] sm:$0xff]
        %v422 = vld [vmem:[#allocation2 + $0x79] sm:$0xff]
        %v423 = vld [vmem:[#allocation2 + $0x81] sm:$0xff]
        %v424 = vld [vmem:[#allocation2 + $0x91] sm:$0xff]
        %v425 = vld [vmem:[#allocation2 + $0x99] sm:$0xff]
        %v426 = vld [vmem:[#allocation2 + $0xa9] sm:$0xff]
        %v427 = vld [vmem:[#allocation2 + $0xb1] sm:$0xff]
        %v428 = vld [vmem:[#allocation2 + $0xc1] sm:$0xff]
        %v429 = vld [vmem:[#allocation2 + $0xc9] sm:$0xff]
        %v430 = vld [vmem:[#allocation2 + $0xd9] sm:$0xff]
        %v431 = vld [vmem:[#allocation2 + $0xe1] sm:$0xff]
        %v432 = vld [vmem:[#allocation2 + $0xf1] sm:$0xff]
        %v433 = vld [vmem:[#allocation2 + $0xf9] sm:$0xff]
        %v434 = vld [vmem:[#allocation2 + $0x109] sm:$0xff]
        %v435 = vld [vmem:[#allocation2 + $0x111] sm:$0xff]
        %v436 = vld [vmem:[#allocation2 + $0x121] sm:$0xff]
        %v437 = vld [vmem:[#allocation2 + $0x129] sm:$0xff]
        %v438 = vld [vmem:[#allocation2 + $0x139] sm:$0xff]
        %v439 = vld [vmem:[#allocation2 + $0x141] sm:$0xff]
        %v440 = vld [vmem:[#allocation2 + $0x151] sm:$0xff]
        %v441 = vld [vmem:[#allocation2 + $0x159] sm:$0xff]
        %v442 = vld [vmem:[#allocation2 + $0x169] sm:$0xff]
        %v443 = vld [vmem:[#allocation2 + $0x171] sm:$0xff]
        %v444 = vld [vmem:[#allocation2 + $0x1b1] sm:$0xff]
        %v445 = vld [vmem:[#allocation2 + $0x1b9] sm:$0xff]
        %v446 = vld [vmem:[#allocation2 + $0x1c9] sm:$0xff]
        %v447 = vld [vmem:[#allocation2 + $0x1d1] sm:$0xff]
        %v448 = vld [vmem:[#allocation2 + $0x1e1] sm:$0xff]
        %v449 = vld [vmem:[#allocation2 + $0x1e9] sm:$0xff]
        %v450 = vld [vmem:[#allocation2 + $0x1f9] sm:$0xff]
        %v451 = vld [vmem:[#allocation2 + $0x201] sm:$0xff]
        %v452 = vld [vmem:[#allocation2 + $0x211] sm:$0xff]
        %v453 = vld [vmem:[#allocation2 + $0x219] sm:$0xff]
        %v454 = vld [vmem:[#allocation2 + $0x229] sm:$0xff]
        %v455 = vld [vmem:[#allocation2 + $0x231] sm:$0xff]
        %v456 = vld [vmem:[#allocation2 + $0x241] sm:$0xff]
        %v457 = vld [vmem:[#allocation2 + $0x249] sm:$0xff]
        %v458 = vld [vmem:[#allocation2 + $0x259] sm:$0xff]
        %v459 = vld [vmem:[#allocation2 + $0x261] sm:$0xff]
        %v460 = vld [vmem:[#allocation2 + $0x271] sm:$0xff]
        %v461 = vld [vmem:[#allocation2 + $0x279] sm:$0xff]
        %v462 = vld [vmem:[#allocation2 + $0x289] sm:$0xff]
        %v463 = vld [vmem:[#allocation2 + $0x291] sm:$0xff]
        %v464 = vld [vmem:[#allocation2 + $0x2a1] sm:$0xff]
        %v465 = vld [vmem:[#allocation2 + $0x2a9] sm:$0xff]
        %v466 = vld [vmem:[#allocation2 + $0x2b9] sm:$0xff]
        %v467 = vld [vmem:[#allocation2 + $0x2c1] sm:$0xff]
        %v468 = vld [vmem:[#allocation2 + $0x2d1] sm:$0xff]
        %v469 = vld [vmem:[#allocation2 + $0x2d9] sm:$0xff]
        %v470 = vld [vmem:[#allocation2 + $0x2e9] sm:$0xff]
        %v471 = vld [vmem:[#allocation2 + $0x2f1] sm:$0xff]
        %v472 = vld [vmem:[#allocation2 + $0x301] sm:$0xff]
        %v473 = vld [vmem:[#allocation2 + $0x309] sm:$0xff]
        %v474 = vld [vmem:[#allocation2 + $0x319] sm:$0xff]
        %v475 = vld [vmem:[#allocation2 + $0x321] sm:$0xff]
        %v476 = vld [vmem:[#allocation2 + $0x2] sm:$0xff]
        %v477 = vld [vmem:[#allocation2 + $0xa] sm:$0xff]
        %v478 = vld [vmem:[#allocation2 + $0x1a] sm:$0xff]
        %v479 = vld [vmem:[#allocation2 + $0x22] sm:$0xff]
        %v480 = vld [vmem:[#allocation2 + $0x32] sm:$0xff]
        %v481 = vld [vmem:[#allocation2 + $0x3a] sm:$0xff]
        %v482 = vld [vmem:[#allocation2 + $0x4a] sm:$0xff]
        %v483 = vld [vmem:[#allocation2 + $0x52] sm:$0xff]
        %v484 = vld [vmem:[#allocation2 + $0x62] sm:$0xff]
        %v485 = vld [vmem:[#allocation2 + $0x6a] sm:$0xff]
        %v486 = vld [vmem:[#allocation2 + $0x7a] sm:$0xff]
        %v487 = vld [vmem:[#allocation2 + $0x82] sm:$0xff]
        %v488 = vld [vmem:[#allocation2 + $0x92] sm:$0xff]
        %v489 = vld [vmem:[#allocation2 + $0x9a] sm:$0xff]
        %v490 = vld [vmem:[#allocation2 + $0xaa] sm:$0xff]
        %v491 = vld [vmem:[#allocation2 + $0xb2] sm:$0xff]
        %v492 = vld [vmem:[#allocation2 + $0xc2] sm:$0xff]
        %v493 = vld [vmem:[#allocation2 + $0xca] sm:$0xff]
        %v494 = vld [vmem:[#allocation2 + $0xda] sm:$0xff]
        %v495 = vld [vmem:[#allocation2 + $0xe2] sm:$0xff]
        %v496 = vld [vmem:[#allocation2 + $0xf2] sm:$0xff]
        %v497 = vld [vmem:[#allocation2 + $0xfa] sm:$0xff]
        %v498 = vld [vmem:[#allocation2 + $0x10a] sm:$0xff]
        %v499 = vld [vmem:[#allocation2 + $0x112] sm:$0xff]
        %v500 = vld [vmem:[#allocation2 + $0x122] sm:$0xff]
        %v501 = vld [vmem:[#allocation2 + $0x12a] sm:$0xff]
        %v502 = vld [vmem:[#allocation2 + $0x13a] sm:$0xff]
        %v503 = vld [vmem:[#allocation2 + $0x142] sm:$0xff]
        %v504 = vld [vmem:[#allocation2 + $0x152] sm:$0xff]
        %v505 = vld [vmem:[#allocation2 + $0x15a] sm:$0xff]
        %v506 = vld [vmem:[#allocation2 + $0x16a] sm:$0xff]
        %v507 = vld [vmem:[#allocation2 + $0x172] sm:$0xff]
        %v508 = vld [vmem:[#allocation2 + $0x1b2] sm:$0xff]
        %v509 = vld [vmem:[#allocation2 + $0x1ba] sm:$0xff]
        %v510 = vld [vmem:[#allocation2 + $0x1ca] sm:$0xff]
        %v511 = vld [vmem:[#allocation2 + $0x1d2] sm:$0xff]
        %v512 = vld [vmem:[#allocation2 + $0x1e2] sm:$0xff]
        %v513 = vld [vmem:[#allocation2 + $0x1ea] sm:$0xff]
        %v514 = vld [vmem:[#allocation2 + $0x1fa] sm:$0xff]
        %v515 = vld [vmem:[#allocation2 + $0x202] sm:$0xff]
        %v516 = vld [vmem:[#allocation2 + $0x212] sm:$0xff]
        %v517 = vld [vmem:[#allocation2 + $0x21a] sm:$0xff]
        %v518 = vld [vmem:[#allocation2 + $0x22a] sm:$0xff]
        %v519 = vld [vmem:[#allocation2 + $0x232] sm:$0xff]
        %v520 = vld [vmem:[#allocation2 + $0x242] sm:$0xff]
        %v521 = vld [vmem:[#allocation2 + $0x24a] sm:$0xff]
        %v522 = vld [vmem:[#allocation2 + $0x25a] sm:$0xff]
        %v523 = vld [vmem:[#allocation2 + $0x262] sm:$0xff]
        %v524 = vld [vmem:[#allocation2 + $0x272] sm:$0xff]
        %v525 = vld [vmem:[#allocation2 + $0x27a] sm:$0xff]
        %v526 = vld [vmem:[#allocation2 + $0x28a] sm:$0xff]
        %v527 = vld [vmem:[#allocation2 + $0x292] sm:$0xff]
        %v528 = vld [vmem:[#allocation2 + $0x2a2] sm:$0xff]
        %v529 = vld [vmem:[#allocation2 + $0x2aa] sm:$0xff]
        %v530 = vld [vmem:[#allocation2 + $0x2ba] sm:$0xff]
        %v531 = vld [vmem:[#allocation2 + $0x2c2] sm:$0xff]
        %v532 = vld [vmem:[#allocation2 + $0x2d2] sm:$0xff]
        %v533 = vld [vmem:[#allocation2 + $0x2da] sm:$0xff]
        %v534 = vld [vmem:[#allocation2 + $0x2ea] sm:$0xff]
        %v535 = vld [vmem:[#allocation2 + $0x2f2] sm:$0xff]
        %v536 = vld [vmem:[#allocation2 + $0x302] sm:$0xff]
        %v537 = vld [vmem:[#allocation2 + $0x30a] sm:$0xff]
        %v538 = vld [vmem:[#allocation2 + $0x31a] sm:$0xff]
        %v539 = vld [vmem:[#allocation2 + $0x322] sm:$0xff]
        %s540 = scalar_lea.vmem [#allocation2], 24
        %v541 = vld [vmem:[%s540] sm:$0xff]
        %v542 = vld [vmem:[%s540 + $0x8] sm:$0xff]
        %v543 = vld [vmem:[%s540 + $0x18] sm:$0xff]
        %v544 = vld [vmem:[%s540 + $0x20] sm:$0xff]
        %v545 = vld [vmem:[%s540 + $0x30] sm:$0xff]
        %v546 = vld [vmem:[%s540 + $0x38] sm:$0xff]
        %v547 = vld [vmem:[%s540 + $0x48] sm:$0xff]
        %v548 = vld [vmem:[%s540 + $0x50] sm:$0xff]
        %v549 = vld [vmem:[%s540 + $0x60] sm:$0xff]
        %v550 = vld [vmem:[%s540 + $0x68] sm:$0xff]
        %v551 = vld [vmem:[%s540 + $0x78] sm:$0xff]
        %v552 = vld [vmem:[%s540 + $0x80] sm:$0xff]
        %v553 = vld [vmem:[%s540 + $0x90] sm:$0xff]
        %v554 = vld [vmem:[%s540 + $0x98] sm:$0xff]
        %v555 = vld [vmem:[%s540 + $0xa8] sm:$0xff]
        %v556 = vld [vmem:[%s540 + $0xb0] sm:$0xff]
        %v557 = vld [vmem:[%s540 + $0xc0] sm:$0xff]
        %v558 = vld [vmem:[%s540 + $0xc8] sm:$0xff]
        %v559 = vld [vmem:[%s540 + $0xd8] sm:$0xff]
        %v560 = vld [vmem:[%s540 + $0xe0] sm:$0xff]
        %v561 = vld [vmem:[%s540 + $0xf0] sm:$0xff]
        %v562 = vld [vmem:[%s540 + $0xf8] sm:$0xff]
        %v563 = vld [vmem:[%s540 + $0x108] sm:$0xff]
        %v564 = vld [vmem:[%s540 + $0x110] sm:$0xff]
        %v565 = vld [vmem:[%s540 + $0x120] sm:$0xff]
        %v566 = vld [vmem:[%s540 + $0x128] sm:$0xff]
        %v567 = vld [vmem:[%s540 + $0x138] sm:$0xff]
        %v568 = vld [vmem:[%s540 + $0x140] sm:$0xff]
        %v569 = vld [vmem:[%s540 + $0x150] sm:$0xff]
        %v570 = vld [vmem:[%s540 + $0x158] sm:$0xff]
        %v571 = vld [vmem:[%s540 + $0x168] sm:$0xff]
        %v572 = vld [vmem:[%s540 + $0x170] sm:$0xff]
        %v573 = vld [vmem:[%s540 + $0x1b0] sm:$0xff]
        %v574 = vld [vmem:[%s540 + $0x1b8] sm:$0xff]
        %v575 = vld [vmem:[%s540 + $0x1c8] sm:$0xff]
        %v576 = vld [vmem:[%s540 + $0x1d0] sm:$0xff]
        %v577 = vld [vmem:[%s540 + $0x1e0] sm:$0xff]
        %v578 = vld [vmem:[%s540 + $0x1e8] sm:$0xff]
        %v579 = vld [vmem:[%s540 + $0x1f8] sm:$0xff]
        %v580 = vld [vmem:[%s540 + $0x200] sm:$0xff]
        %v581 = vld [vmem:[%s540 + $0x210] sm:$0xff]
        %v582 = vld [vmem:[%s540 + $0x218] sm:$0xff]
        %v583 = vld [vmem:[%s540 + $0x228] sm:$0xff]
        %v584 = vld [vmem:[%s540 + $0x230] sm:$0xff]
        %v585 = vld [vmem:[%s540 + $0x240] sm:$0xff]
        %v586 = vld [vmem:[%s540 + $0x248] sm:$0xff]
        %v587 = vld [vmem:[%s540 + $0x258] sm:$0xff]
        %v588 = vld [vmem:[%s540 + $0x260] sm:$0xff]
        %v589 = vld [vmem:[%s540 + $0x270] sm:$0xff]
        %v590 = vld [vmem:[%s540 + $0x278] sm:$0xff]
        %v591 = vld [vmem:[%s540 + $0x288] sm:$0xff]
        %v592 = vld [vmem:[%s540 + $0x290] sm:$0xff]
        %v593 = vld [vmem:[%s540 + $0x2a0] sm:$0xff]
        %v594 = vld [vmem:[%s540 + $0x2a8] sm:$0xff]
        %v595 = vld [vmem:[%s540 + $0x2b8] sm:$0xff]
        %v596 = vld [vmem:[%s540 + $0x2c0] sm:$0xff]
        %v597 = vld [vmem:[%s540 + $0x2d0] sm:$0xff]
        %v598 = vld [vmem:[%s540 + $0x2d8] sm:$0xff]
        %v599 = vld [vmem:[%s540 + $0x2e8] sm:$0xff]
        %v600 = vld [vmem:[%s540 + $0x2f0] sm:$0xff]
        %v601 = vld [vmem:[%s540 + $0x300] sm:$0xff]
        %v602 = vld [vmem:[%s540 + $0x308] sm:$0xff]
        %v603 = vld [vmem:[%s540 + $0x318] sm:$0xff]
        %v604 = vld [vmem:[%s540 + $0x320] sm:$0xff]
        %v605 = vld [vmem:[%s540 + $0x1] sm:$0xff]
        %v606 = vld [vmem:[%s540 + $0x9] sm:$0xff]
        %v607 = vld [vmem:[%s540 + $0x19] sm:$0xff]
        %v608 = vld [vmem:[%s540 + $0x21] sm:$0xff]
        %v609 = vld [vmem:[%s540 + $0x31] sm:$0xff]
        %v610 = vld [vmem:[%s540 + $0x39] sm:$0xff]
        %v611 = vld [vmem:[%s540 + $0x49] sm:$0xff]
        %v612 = vld [vmem:[%s540 + $0x51] sm:$0xff]
        %v613 = vld [vmem:[%s540 + $0x61] sm:$0xff]
        %v614 = vld [vmem:[%s540 + $0x69] sm:$0xff]
        %v615 = vld [vmem:[%s540 + $0x79] sm:$0xff]
        %v616 = vld [vmem:[%s540 + $0x81] sm:$0xff]
        %v617 = vld [vmem:[%s540 + $0x91] sm:$0xff]
        %v618 = vld [vmem:[%s540 + $0x99] sm:$0xff]
        %v619 = vld [vmem:[%s540 + $0xa9] sm:$0xff]
        %v620 = vld [vmem:[%s540 + $0xb1] sm:$0xff]
        %v621 = vld [vmem:[%s540 + $0xc1] sm:$0xff]
        %v622 = vld [vmem:[%s540 + $0xc9] sm:$0xff]
        %v623 = vld [vmem:[%s540 + $0xd9] sm:$0xff]
        %v624 = vld [vmem:[%s540 + $0xe1] sm:$0xff]
        %v625 = vld [vmem:[%s540 + $0xf1] sm:$0xff]
        %v626 = vld [vmem:[%s540 + $0xf9] sm:$0xff]
        %v627 = vld [vmem:[%s540 + $0x109] sm:$0xff]
        %v628 = vld [vmem:[%s540 + $0x111] sm:$0xff]
        %v629 = vld [vmem:[%s540 + $0x121] sm:$0xff]
        %v630 = vld [vmem:[%s540 + $0x129] sm:$0xff]
        %v631 = vld [vmem:[%s540 + $0x139] sm:$0xff]
        %v632 = vld [vmem:[%s540 + $0x141] sm:$0xff]
        %v633 = vld [vmem:[%s540 + $0x151] sm:$0xff]
        %v634 = vld [vmem:[%s540 + $0x159] sm:$0xff]
        %v635 = vld [vmem:[%s540 + $0x169] sm:$0xff]
        %v636 = vld [vmem:[%s540 + $0x171] sm:$0xff]
        %v637 = vld [vmem:[%s540 + $0x1b1] sm:$0xff]
        %v638 = vld [vmem:[%s540 + $0x1b9] sm:$0xff]
        %v639 = vld [vmem:[%s540 + $0x1c9] sm:$0xff]
        %v640 = vld [vmem:[%s540 + $0x1d1] sm:$0xff]
        %v641 = vld [vmem:[%s540 + $0x1e1] sm:$0xff]
        %v642 = vld [vmem:[%s540 + $0x1e9] sm:$0xff]
        %v643 = vld [vmem:[%s540 + $0x1f9] sm:$0xff]
        %v644 = vld [vmem:[%s540 + $0x201] sm:$0xff]
        %v645 = vld [vmem:[%s540 + $0x211] sm:$0xff]
        %v646 = vld [vmem:[%s540 + $0x219] sm:$0xff]
        %v647 = vld [vmem:[%s540 + $0x229] sm:$0xff]
        %v648 = vld [vmem:[%s540 + $0x231] sm:$0xff]
        %v649 = vld [vmem:[%s540 + $0x241] sm:$0xff]
        %v650 = vld [vmem:[%s540 + $0x249] sm:$0xff]
        %v651 = vld [vmem:[%s540 + $0x259] sm:$0xff]
        %v652 = vld [vmem:[%s540 + $0x261] sm:$0xff]
        %v653 = vld [vmem:[%s540 + $0x271] sm:$0xff]
        %v654 = vld [vmem:[%s540 + $0x279] sm:$0xff]
        %v655 = vld [vmem:[%s540 + $0x289] sm:$0xff]
        %v656 = vld [vmem:[%s540 + $0x291] sm:$0xff]
        %v657 = vld [vmem:[%s540 + $0x2a1] sm:$0xff]
        %v658 = vld [vmem:[%s540 + $0x2a9] sm:$0xff]
        %v659 = vld [vmem:[%s540 + $0x2b9] sm:$0xff]
        %v660 = vld [vmem:[%s540 + $0x2c1] sm:$0xff]
        %v661 = vld [vmem:[%s540 + $0x2d1] sm:$0xff]
        %v662 = vld [vmem:[%s540 + $0x2d9] sm:$0xff]
        %v663 = vld [vmem:[%s540 + $0x2e9] sm:$0xff]
        %v664 = vld [vmem:[%s540 + $0x2f1] sm:$0xff]
        %v665 = vld [vmem:[%s540 + $0x301] sm:$0xff]
        %v666 = vld [vmem:[%s540 + $0x309] sm:$0xff]
        %v667 = vld [vmem:[%s540 + $0x319] sm:$0xff]
        %v668 = vld [vmem:[%s540 + $0x321] sm:$0xff]
        %v669 = vld [vmem:[%s540 + $0x2] sm:$0xff]
        %v670 = vld [vmem:[%s540 + $0xa] sm:$0xff]
        %v671 = vld [vmem:[%s540 + $0x1a] sm:$0xff]
        %v672 = vld [vmem:[%s540 + $0x22] sm:$0xff]
        %v673 = vld [vmem:[%s540 + $0x32] sm:$0xff]
        %v674 = vld [vmem:[%s540 + $0x3a] sm:$0xff]
        %v675 = vld [vmem:[%s540 + $0x4a] sm:$0xff]
        %v676 = vld [vmem:[%s540 + $0x52] sm:$0xff]
        %v677 = vld [vmem:[%s540 + $0x62] sm:$0xff]
        %v678 = vld [vmem:[%s540 + $0x6a] sm:$0xff]
        %v679 = vld [vmem:[%s540 + $0x7a] sm:$0xff]
        %v680 = vld [vmem:[%s540 + $0x82] sm:$0xff]
        %v681 = vld [vmem:[%s540 + $0x92] sm:$0xff]
        %v682 = vld [vmem:[%s540 + $0x9a] sm:$0xff]
        %v683 = vld [vmem:[%s540 + $0xaa] sm:$0xff]
        %v684 = vld [vmem:[%s540 + $0xb2] sm:$0xff]
        %v685 = vld [vmem:[%s540 + $0xc2] sm:$0xff]
        %v686 = vld [vmem:[%s540 + $0xca] sm:$0xff]
        %v687 = vld [vmem:[%s540 + $0xda] sm:$0xff]
        %v688 = vld [vmem:[%s540 + $0xe2] sm:$0xff]
        %v689 = vld [vmem:[%s540 + $0xf2] sm:$0xff]
        %v690 = vld [vmem:[%s540 + $0xfa] sm:$0xff]
        %v691 = vld [vmem:[%s540 + $0x10a] sm:$0xff]
        %v692 = vld [vmem:[%s540 + $0x112] sm:$0xff]
        %v693 = vld [vmem:[%s540 + $0x122] sm:$0xff]
        %v694 = vld [vmem:[%s540 + $0x12a] sm:$0xff]
        %v695 = vld [vmem:[%s540 + $0x13a] sm:$0xff]
        %v696 = vld [vmem:[%s540 + $0x142] sm:$0xff]
        %v697 = vld [vmem:[%s540 + $0x152] sm:$0xff]
        %v698 = vld [vmem:[%s540 + $0x15a] sm:$0xff]
        %v699 = vld [vmem:[%s540 + $0x16a] sm:$0xff]
        %v700 = vld [vmem:[%s540 + $0x172] sm:$0xff]
        %v701 = vld [vmem:[%s540 + $0x1b2] sm:$0xff]
        %v702 = vld [vmem:[%s540 + $0x1ba] sm:$0xff]
        %v703 = vld [vmem:[%s540 + $0x1ca] sm:$0xff]
        %v704 = vld [vmem:[%s540 + $0x1d2] sm:$0xff]
        %v705 = vld [vmem:[%s540 + $0x1e2] sm:$0xff]
        %v706 = vld [vmem:[%s540 + $0x1ea] sm:$0xff]
        %v707 = vld [vmem:[%s540 + $0x1fa] sm:$0xff]
        %v708 = vld [vmem:[%s540 + $0x202] sm:$0xff]
        %v709 = vld [vmem:[%s540 + $0x212] sm:$0xff]
        %v710 = vld [vmem:[%s540 + $0x21a] sm:$0xff]
        %v711 = vld [vmem:[%s540 + $0x22a] sm:$0xff]
        %v712 = vld [vmem:[%s540 + $0x232] sm:$0xff]
        %v713 = vld [vmem:[%s540 + $0x242] sm:$0xff]
        %v714 = vld [vmem:[%s540 + $0x24a] sm:$0xff]
        %v715 = vld [vmem:[%s540 + $0x25a] sm:$0xff]
        %v716 = vld [vmem:[%s540 + $0x262] sm:$0xff]
        %v717 = vld [vmem:[%s540 + $0x272] sm:$0xff]
        %v718 = vld [vmem:[%s540 + $0x27a] sm:$0xff]
        %v719 = vld [vmem:[%s540 + $0x28a] sm:$0xff]
        %v720 = vld [vmem:[%s540 + $0x292] sm:$0xff]
        %v721 = vld [vmem:[%s540 + $0x2a2] sm:$0xff]
        %v722 = vld [vmem:[%s540 + $0x2aa] sm:$0xff]
        %v723 = vld [vmem:[%s540 + $0x2ba] sm:$0xff]
        %v724 = vld [vmem:[%s540 + $0x2c2] sm:$0xff]
        %v725 = vld [vmem:[%s540 + $0x2d2] sm:$0xff]
        %v726 = vld [vmem:[%s540 + $0x2da] sm:$0xff]
        %v727 = vld [vmem:[%s540 + $0x2ea] sm:$0xff]
        %v728 = vld [vmem:[%s540 + $0x2f2] sm:$0xff]
        %v729 = vld [vmem:[%s540 + $0x302] sm:$0xff]
        %v730 = vld [vmem:[%s540 + $0x30a] sm:$0xff]
        %v731 = vld [vmem:[%s540 + $0x31a] sm:$0xff]
        %v732 = vld [vmem:[%s540 + $0x322] sm:$0xff]
        %s733 = scalar_lea.vmem [#allocation2], 48
        %v734 = vld [vmem:[%s733] sm:$0xff]
        %v735 = vld [vmem:[%s733 + $0x8] sm:$0xff]
        %v736 = vld [vmem:[%s733 + $0x18] sm:$0xff]
        %v737 = vld [vmem:[%s733 + $0x20] sm:$0xff]
        %v738 = vld [vmem:[%s733 + $0x30] sm:$0xff]
        %v739 = vld [vmem:[%s733 + $0x38] sm:$0xff]
        %v740 = vld [vmem:[%s733 + $0x48] sm:$0xff]
        %v741 = vld [vmem:[%s733 + $0x50] sm:$0xff]
        %v742 = vld [vmem:[%s733 + $0x60] sm:$0xff]
        %v743 = vld [vmem:[%s733 + $0x68] sm:$0xff]
        %v744 = vld [vmem:[%s733 + $0x78] sm:$0xff]
        %v745 = vld [vmem:[%s733 + $0x80] sm:$0xff]
        %v746 = vld [vmem:[%s733 + $0x90] sm:$0xff]
        %v747 = vld [vmem:[%s733 + $0x98] sm:$0xff]
        %v748 = vld [vmem:[%s733 + $0xa8] sm:$0xff]
        %v749 = vld [vmem:[%s733 + $0xb0] sm:$0xff]
        %v750 = vld [vmem:[%s733 + $0xc0] sm:$0xff]
        %v751 = vld [vmem:[%s733 + $0xc8] sm:$0xff]
        %v752 = vld [vmem:[%s733 + $0xd8] sm:$0xff]
        %v753 = vld [vmem:[%s733 + $0xe0] sm:$0xff]
        %v754 = vld [vmem:[%s733 + $0xf0] sm:$0xff]
        %v755 = vld [vmem:[%s733 + $0xf8] sm:$0xff]
        %v756 = vld [vmem:[%s733 + $0x108] sm:$0xff]
        %v757 = vld [vmem:[%s733 + $0x110] sm:$0xff]
        %v758 = vld [vmem:[%s733 + $0x120] sm:$0xff]
        %v759 = vld [vmem:[%s733 + $0x128] sm:$0xff]
        %v760 = vld [vmem:[%s733 + $0x138] sm:$0xff]
        %v761 = vld [vmem:[%s733 + $0x140] sm:$0xff]
        %v762 = vld [vmem:[%s733 + $0x150] sm:$0xff]
        %v763 = vld [vmem:[%s733 + $0x158] sm:$0xff]
        %v764 = vld [vmem:[%s733 + $0x168] sm:$0xff]
        %v765 = vld [vmem:[%s733 + $0x170] sm:$0xff]
        %v766 = vld [vmem:[%s733 + $0x1b0] sm:$0xff]
        %v767 = vld [vmem:[%s733 + $0x1b8] sm:$0xff]
        %v768 = vld [vmem:[%s733 + $0x1c8] sm:$0xff]
        %v769 = vld [vmem:[%s733 + $0x1d0] sm:$0xff]
        %v770 = vld [vmem:[%s733 + $0x1e0] sm:$0xff]
        %v771 = vld [vmem:[%s733 + $0x1e8] sm:$0xff]
        %v772 = vld [vmem:[%s733 + $0x1f8] sm:$0xff]
        %v773 = vld [vmem:[%s733 + $0x200] sm:$0xff]
        %v774 = vld [vmem:[%s733 + $0x210] sm:$0xff]
        %v775 = vld [vmem:[%s733 + $0x218] sm:$0xff]
        %v776 = vld [vmem:[%s733 + $0x228] sm:$0xff]
        %v777 = vld [vmem:[%s733 + $0x230] sm:$0xff]
        %v778 = vld [vmem:[%s733 + $0x240] sm:$0xff]
        %v779 = vld [vmem:[%s733 + $0x248] sm:$0xff]
        %v780 = vld [vmem:[%s733 + $0x258] sm:$0xff]
        %v781 = vld [vmem:[%s733 + $0x260] sm:$0xff]
        %v782 = vld [vmem:[%s733 + $0x270] sm:$0xff]
        %v783 = vld [vmem:[%s733 + $0x278] sm:$0xff]
        %v784 = vld [vmem:[%s733 + $0x288] sm:$0xff]
        %v785 = vld [vmem:[%s733 + $0x290] sm:$0xff]
        %v786 = vld [vmem:[%s733 + $0x2a0] sm:$0xff]
        %v787 = vld [vmem:[%s733 + $0x2a8] sm:$0xff]
        %v788 = vld [vmem:[%s733 + $0x2b8] sm:$0xff]
        %v789 = vld [vmem:[%s733 + $0x2c0] sm:$0xff]
        %v790 = vld [vmem:[%s733 + $0x2d0] sm:$0xff]
        %v791 = vld [vmem:[%s733 + $0x2d8] sm:$0xff]
        %v792 = vld [vmem:[%s733 + $0x2e8] sm:$0xff]
        %v793 = vld [vmem:[%s733 + $0x2f0] sm:$0xff]
        %v794 = vld [vmem:[%s733 + $0x300] sm:$0xff]
        %v795 = vld [vmem:[%s733 + $0x308] sm:$0xff]
        %v796 = vld [vmem:[%s733 + $0x318] sm:$0xff]
        %v797 = vld [vmem:[%s733 + $0x320] sm:$0xff]
        %v798 = vld [vmem:[%s733 + $0x1] sm:$0xff]
        %v799 = vld [vmem:[%s733 + $0x9] sm:$0xff]
        %v800 = vld [vmem:[%s733 + $0x19] sm:$0xff]
        %v801 = vld [vmem:[%s733 + $0x21] sm:$0xff]
        %v802 = vld [vmem:[%s733 + $0x31] sm:$0xff]
        %v803 = vld [vmem:[%s733 + $0x39] sm:$0xff]
        %v804 = vld [vmem:[%s733 + $0x49] sm:$0xff]
        %v805 = vld [vmem:[%s733 + $0x51] sm:$0xff]
        %v806 = vld [vmem:[%s733 + $0x61] sm:$0xff]
        %v807 = vld [vmem:[%s733 + $0x69] sm:$0xff]
        %v808 = vld [vmem:[%s733 + $0x79] sm:$0xff]
        %v809 = vld [vmem:[%s733 + $0x81] sm:$0xff]
        %v810 = vld [vmem:[%s733 + $0x91] sm:$0xff]
        %v811 = vld [vmem:[%s733 + $0x99] sm:$0xff]
        %v812 = vld [vmem:[%s733 + $0xa9] sm:$0xff]
        %v813 = vld [vmem:[%s733 + $0xb1] sm:$0xff]
        %v814 = vld [vmem:[%s733 + $0xc1] sm:$0xff]
        %v815 = vld [vmem:[%s733 + $0xc9] sm:$0xff]
        %v816 = vld [vmem:[%s733 + $0xd9] sm:$0xff]
        %v817 = vld [vmem:[%s733 + $0xe1] sm:$0xff]
        %v818 = vld [vmem:[%s733 + $0xf1] sm:$0xff]
        %v819 = vld [vmem:[%s733 + $0xf9] sm:$0xff]
        %v820 = vld [vmem:[%s733 + $0x109] sm:$0xff]
        %v821 = vld [vmem:[%s733 + $0x111] sm:$0xff]
        %v822 = vld [vmem:[%s733 + $0x121] sm:$0xff]
        %v823 = vld [vmem:[%s733 + $0x129] sm:$0xff]
        %v824 = vld [vmem:[%s733 + $0x139] sm:$0xff]
        %v825 = vld [vmem:[%s733 + $0x141] sm:$0xff]
        %v826 = vld [vmem:[%s733 + $0x151] sm:$0xff]
        %v827 = vld [vmem:[%s733 + $0x159] sm:$0xff]
        %v828 = vld [vmem:[%s733 + $0x169] sm:$0xff]
        %v829 = vld [vmem:[%s733 + $0x171] sm:$0xff]
        %v830 = vld [vmem:[%s733 + $0x1b1] sm:$0xff]
        %v831 = vld [vmem:[%s733 + $0x1b9] sm:$0xff]
        %v832 = vld [vmem:[%s733 + $0x1c9] sm:$0xff]
        %v833 = vld [vmem:[%s733 + $0x1d1] sm:$0xff]
        %v834 = vld [vmem:[%s733 + $0x1e1] sm:$0xff]
        %v835 = vld [vmem:[%s733 + $0x1e9] sm:$0xff]
        %v836 = vld [vmem:[%s733 + $0x1f9] sm:$0xff]
        %v837 = vld [vmem:[%s733 + $0x201] sm:$0xff]
        %v838 = vld [vmem:[%s733 + $0x211] sm:$0xff]
        %v839 = vld [vmem:[%s733 + $0x219] sm:$0xff]
        %v840 = vld [vmem:[%s733 + $0x229] sm:$0xff]
        %v841 = vld [vmem:[%s733 + $0x231] sm:$0xff]
        %v842 = vld [vmem:[%s733 + $0x241] sm:$0xff]
        %v843 = vld [vmem:[%s733 + $0x249] sm:$0xff]
        %v844 = vld [vmem:[%s733 + $0x259] sm:$0xff]
        %v845 = vld [vmem:[%s733 + $0x261] sm:$0xff]
        %v846 = vld [vmem:[%s733 + $0x271] sm:$0xff]
        %v847 = vld [vmem:[%s733 + $0x279] sm:$0xff]
        %v848 = vld [vmem:[%s733 + $0x289] sm:$0xff]
        %v849 = vld [vmem:[%s733 + $0x291] sm:$0xff]
        %v850 = vld [vmem:[%s733 + $0x2a1] sm:$0xff]
        %v851 = vld [vmem:[%s733 + $0x2a9] sm:$0xff]
        %v852 = vld [vmem:[%s733 + $0x2b9] sm:$0xff]
        %v853 = vld [vmem:[%s733 + $0x2c1] sm:$0xff]
        %v854 = vld [vmem:[%s733 + $0x2d1] sm:$0xff]
        %v855 = vld [vmem:[%s733 + $0x2d9] sm:$0xff]
        %v856 = vld [vmem:[%s733 + $0x2e9] sm:$0xff]
        %v857 = vld [vmem:[%s733 + $0x2f1] sm:$0xff]
        %v858 = vld [vmem:[%s733 + $0x301] sm:$0xff]
        %v859 = vld [vmem:[%s733 + $0x309] sm:$0xff]
        %v860 = vld [vmem:[%s733 + $0x319] sm:$0xff]
        %v861 = vld [vmem:[%s733 + $0x321] sm:$0xff]
        %v862 = vld [vmem:[%s733 + $0x2] sm:$0xff]
        %v863 = vld [vmem:[%s733 + $0xa] sm:$0xff]
        %v864 = vld [vmem:[%s733 + $0x1a] sm:$0xff]
        %v865 = vld [vmem:[%s733 + $0x22] sm:$0xff]
        %v866 = vld [vmem:[%s733 + $0x32] sm:$0xff]
        %v867 = vld [vmem:[%s733 + $0x3a] sm:$0xff]
        %v868 = vld [vmem:[%s733 + $0x4a] sm:$0xff]
        %v869 = vld [vmem:[%s733 + $0x52] sm:$0xff]
        %v870 = vld [vmem:[%s733 + $0x62] sm:$0xff]
        %v871 = vld [vmem:[%s733 + $0x6a] sm:$0xff]
        %v872 = vld [vmem:[%s733 + $0x7a] sm:$0xff]
        %v873 = vld [vmem:[%s733 + $0x82] sm:$0xff]
        %v874 = vld [vmem:[%s733 + $0x92] sm:$0xff]
        %v875 = vld [vmem:[%s733 + $0x9a] sm:$0xff]
        %v876 = vld [vmem:[%s733 + $0xaa] sm:$0xff]
        %v877 = vld [vmem:[%s733 + $0xb2] sm:$0xff]
        %v878 = vld [vmem:[%s733 + $0xc2] sm:$0xff]
        %v879 = vld [vmem:[%s733 + $0xca] sm:$0xff]
        %v880 = vld [vmem:[%s733 + $0xda] sm:$0xff]
        %v881 = vld [vmem:[%s733 + $0xe2] sm:$0xff]
        %v882 = vld [vmem:[%s733 + $0xf2] sm:$0xff]
        %v883 = vld [vmem:[%s733 + $0xfa] sm:$0xff]
        %v884 = vld [vmem:[%s733 + $0x10a] sm:$0xff]
        %v885 = vld [vmem:[%s733 + $0x112] sm:$0xff]
        %v886 = vld [vmem:[%s733 + $0x122] sm:$0xff]
        %v887 = vld [vmem:[%s733 + $0x12a] sm:$0xff]
        %v888 = vld [vmem:[%s733 + $0x13a] sm:$0xff]
        %v889 = vld [vmem:[%s733 + $0x142] sm:$0xff]
        %v890 = vld [vmem:[%s733 + $0x152] sm:$0xff]
        %v891 = vld [vmem:[%s733 + $0x15a] sm:$0xff]
        %v892 = vld [vmem:[%s733 + $0x16a] sm:$0xff]
        %v893 = vld [vmem:[%s733 + $0x172] sm:$0xff]
        %v894 = vld [vmem:[%s733 + $0x1b2] sm:$0xff]
        %v895 = vld [vmem:[%s733 + $0x1ba] sm:$0xff]
        %v896 = vld [vmem:[%s733 + $0x1ca] sm:$0xff]
        %v897 = vld [vmem:[%s733 + $0x1d2] sm:$0xff]
        %v898 = vld [vmem:[%s733 + $0x1e2] sm:$0xff]
        %v899 = vld [vmem:[%s733 + $0x1ea] sm:$0xff]
        %v900 = vld [vmem:[%s733 + $0x1fa] sm:$0xff]
        %v901 = vld [vmem:[%s733 + $0x202] sm:$0xff]
        %v902 = vld [vmem:[%s733 + $0x212] sm:$0xff]
        %v903 = vld [vmem:[%s733 + $0x21a] sm:$0xff]
        %v904 = vld [vmem:[%s733 + $0x22a] sm:$0xff]
        %v905 = vld [vmem:[%s733 + $0x232] sm:$0xff]
        %v906 = vld [vmem:[%s733 + $0x242] sm:$0xff]
        %v907 = vld [vmem:[%s733 + $0x24a] sm:$0xff]
        %v908 = vld [vmem:[%s733 + $0x25a] sm:$0xff]
        %v909 = vld [vmem:[%s733 + $0x262] sm:$0xff]
        %v910 = vld [vmem:[%s733 + $0x272] sm:$0xff]
        %v911 = vld [vmem:[%s733 + $0x27a] sm:$0xff]
        %v912 = vld [vmem:[%s733 + $0x28a] sm:$0xff]
        %v913 = vld [vmem:[%s733 + $0x292] sm:$0xff]
        %v914 = vld [vmem:[%s733 + $0x2a2] sm:$0xff]
        %v915 = vld [vmem:[%s733 + $0x2aa] sm:$0xff]
        %v916 = vld [vmem:[%s733 + $0x2ba] sm:$0xff]
        %v917 = vld [vmem:[%s733 + $0x2c2] sm:$0xff]
        %v918 = vld [vmem:[%s733 + $0x2d2] sm:$0xff]
        %v919 = vld [vmem:[%s733 + $0x2da] sm:$0xff]
        %v920 = vld [vmem:[%s733 + $0x2ea] sm:$0xff]
        %v921 = vld [vmem:[%s733 + $0x2f2] sm:$0xff]
        %v922 = vld [vmem:[%s733 + $0x302] sm:$0xff]
        %v923 = vld [vmem:[%s733 + $0x30a] sm:$0xff]
        %v924 = vld [vmem:[%s733 + $0x31a] sm:$0xff]
        %v925 = vld [vmem:[%s733 + $0x322] sm:$0xff]
        %990 = vrot.lane.b32.xlu0 %v412, 32
        %v991 = vpop.permute.xlu0 %990
        %992 = vrot.lane.b32.xlu0 %v413, 32
        %v993 = vpop.permute.xlu0 %992
        %994 = vrot.lane.b32.xlu0 %v414, 32
        %v995 = vpop.permute.xlu0 %994
        %996 = vrot.lane.b32.xlu0 %v415, 32
        %v997 = vpop.permute.xlu0 %996
        %998 = vrot.lane.b32.xlu0 %v416, 32
        %v999 = vpop.permute.xlu0 %998
        %1000 = vrot.lane.b32.xlu0 %v417, 32
        %v1001 = vpop.permute.xlu0 %1000
        %1002 = vrot.lane.b32.xlu0 %v418, 32
        %v1003 = vpop.permute.xlu0 %1002
        %1004 = vrot.lane.b32.xlu0 %v419, 32
        %v1005 = vpop.permute.xlu0 %1004
        %1006 = vrot.lane.b32.xlu0 %v420, 32
        %v1007 = vpop.permute.xlu0 %1006
        %1008 = vrot.lane.b32.xlu0 %v421, 32
        %v1009 = vpop.permute.xlu0 %1008
        %1010 = vrot.lane.b32.xlu0 %v422, 32
        %v1011 = vpop.permute.xlu0 %1010
        %1012 = vrot.lane.b32.xlu0 %v423, 32
        %v1013 = vpop.permute.xlu0 %1012
        %1014 = vrot.lane.b32.xlu0 %v424, 32
        %v1015 = vpop.permute.xlu0 %1014
        %1016 = vrot.lane.b32.xlu0 %v425, 32
        %v1017 = vpop.permute.xlu0 %1016
        %1018 = vrot.lane.b32.xlu0 %v426, 32
        %v1019 = vpop.permute.xlu0 %1018
        %1020 = vrot.lane.b32.xlu0 %v427, 32
        %v1021 = vpop.permute.xlu0 %1020
        %1022 = vrot.lane.b32.xlu0 %v428, 32
        %v1023 = vpop.permute.xlu0 %1022
        %1024 = vrot.lane.b32.xlu0 %v429, 32
        %v1025 = vpop.permute.xlu0 %1024
        %1026 = vrot.lane.b32.xlu0 %v430, 32
        %v1027 = vpop.permute.xlu0 %1026
        %1028 = vrot.lane.b32.xlu0 %v431, 32
        %v1029 = vpop.permute.xlu0 %1028
        %1030 = vrot.lane.b32.xlu0 %v432, 32
        %v1031 = vpop.permute.xlu0 %1030
        %1032 = vrot.lane.b32.xlu0 %v433, 32
        %v1033 = vpop.permute.xlu0 %1032
        %1034 = vrot.lane.b32.xlu0 %v434, 32
        %v1035 = vpop.permute.xlu0 %1034
        %1036 = vrot.lane.b32.xlu0 %v435, 32
        %v1037 = vpop.permute.xlu0 %1036
        %1038 = vrot.lane.b32.xlu0 %v436, 32
        %v1039 = vpop.permute.xlu0 %1038
        %1040 = vrot.lane.b32.xlu0 %v437, 32
        %v1041 = vpop.permute.xlu0 %1040
        %1042 = vrot.lane.b32.xlu0 %v438, 32
        %v1043 = vpop.permute.xlu0 %1042
        %1044 = vrot.lane.b32.xlu0 %v439, 32
        %v1045 = vpop.permute.xlu0 %1044
        %1046 = vrot.lane.b32.xlu0 %v440, 32
        %v1047 = vpop.permute.xlu0 %1046
        %1048 = vrot.lane.b32.xlu0 %v441, 32
        %v1049 = vpop.permute.xlu0 %1048
        %1050 = vrot.lane.b32.xlu0 %v442, 32
        %v1051 = vpop.permute.xlu0 %1050
        %1052 = vrot.lane.b32.xlu0 %v443, 32
        %v1053 = vpop.permute.xlu0 %1052
        %1054 = vrot.lane.b32.xlu0 %v444, 32
        %v1055 = vpop.permute.xlu0 %1054
        %1056 = vrot.lane.b32.xlu0 %v445, 32
        %v1057 = vpop.permute.xlu0 %1056
        %1058 = vrot.lane.b32.xlu0 %v446, 32
        %v1059 = vpop.permute.xlu0 %1058
        %1060 = vrot.lane.b32.xlu0 %v447, 32
        %v1061 = vpop.permute.xlu0 %1060
        %1062 = vrot.lane.b32.xlu0 %v448, 32
        %v1063 = vpop.permute.xlu0 %1062
        %1064 = vrot.lane.b32.xlu0 %v449, 32
        %v1065 = vpop.permute.xlu0 %1064
        %1066 = vrot.lane.b32.xlu0 %v450, 32
        %v1067 = vpop.permute.xlu0 %1066
        %1068 = vrot.lane.b32.xlu0 %v451, 32
        %v1069 = vpop.permute.xlu0 %1068
        %1070 = vrot.lane.b32.xlu0 %v452, 32
        %v1071 = vpop.permute.xlu0 %1070
        %1072 = vrot.lane.b32.xlu0 %v453, 32
        %v1073 = vpop.permute.xlu0 %1072
        %1074 = vrot.lane.b32.xlu0 %v454, 32
        %v1075 = vpop.permute.xlu0 %1074
        %1076 = vrot.lane.b32.xlu0 %v455, 32
        %v1077 = vpop.permute.xlu0 %1076
        %1078 = vrot.lane.b32.xlu0 %v456, 32
        %v1079 = vpop.permute.xlu0 %1078
        %1080 = vrot.lane.b32.xlu0 %v457, 32
        %v1081 = vpop.permute.xlu0 %1080
        %1082 = vrot.lane.b32.xlu0 %v458, 32
        %v1083 = vpop.permute.xlu0 %1082
        %1084 = vrot.lane.b32.xlu0 %v459, 32
        %v1085 = vpop.permute.xlu0 %1084
        %1086 = vrot.lane.b32.xlu0 %v460, 32
        %v1087 = vpop.permute.xlu0 %1086
        %1088 = vrot.lane.b32.xlu0 %v461, 32
        %v1089 = vpop.permute.xlu0 %1088
        %1090 = vrot.lane.b32.xlu0 %v462, 32
        %v1091 = vpop.permute.xlu0 %1090
        %1092 = vrot.lane.b32.xlu0 %v463, 32
        %v1093 = vpop.permute.xlu0 %1092
        %1094 = vrot.lane.b32.xlu0 %v464, 32
        %v1095 = vpop.permute.xlu0 %1094
        %1096 = vrot.lane.b32.xlu0 %v465, 32
        %v1097 = vpop.permute.xlu0 %1096
        %1098 = vrot.lane.b32.xlu0 %v466, 32
        %v1099 = vpop.permute.xlu0 %1098
        %1100 = vrot.lane.b32.xlu0 %v467, 32
        %v1101 = vpop.permute.xlu0 %1100
        %1102 = vrot.lane.b32.xlu0 %v468, 32
        %v1103 = vpop.permute.xlu0 %1102
        %1104 = vrot.lane.b32.xlu0 %v469, 32
        %v1105 = vpop.permute.xlu0 %1104
        %1106 = vrot.lane.b32.xlu0 %v470, 32
        %v1107 = vpop.permute.xlu0 %1106
        %1108 = vrot.lane.b32.xlu0 %v471, 32
        %v1109 = vpop.permute.xlu0 %1108
        %1110 = vrot.lane.b32.xlu0 %v472, 32
        %v1111 = vpop.permute.xlu0 %1110
        %1112 = vrot.lane.b32.xlu0 %v473, 32
        %v1113 = vpop.permute.xlu0 %1112
        %1114 = vrot.lane.b32.xlu0 %v474, 32
        %v1115 = vpop.permute.xlu0 %1114
        %1116 = vrot.lane.b32.xlu0 %v475, 32
        %v1117 = vpop.permute.xlu0 %1116
        %1246 = vrot.lane.b32.xlu0 %v476, 64
        %v1247 = vpop.permute.xlu0 %1246
        %1248 = vrot.lane.b32.xlu0 %v477, 64
        %v1249 = vpop.permute.xlu0 %1248
        %1250 = vrot.lane.b32.xlu0 %v478, 64
        %v1251 = vpop.permute.xlu0 %1250
        %1252 = vrot.lane.b32.xlu0 %v479, 64
        %v1253 = vpop.permute.xlu0 %1252
        %1254 = vrot.lane.b32.xlu0 %v480, 64
        %v1255 = vpop.permute.xlu0 %1254
        %1256 = vrot.lane.b32.xlu0 %v481, 64
        %v1257 = vpop.permute.xlu0 %1256
        %1258 = vrot.lane.b32.xlu0 %v482, 64
        %v1259 = vpop.permute.xlu0 %1258
        %1260 = vrot.lane.b32.xlu0 %v483, 64
        %v1261 = vpop.permute.xlu0 %1260
        %1262 = vrot.lane.b32.xlu0 %v484, 64
        %v1263 = vpop.permute.xlu0 %1262
        %1264 = vrot.lane.b32.xlu0 %v485, 64
        %v1265 = vpop.permute.xlu0 %1264
        %1266 = vrot.lane.b32.xlu0 %v486, 64
        %v1267 = vpop.permute.xlu0 %1266
        %1268 = vrot.lane.b32.xlu0 %v487, 64
        %v1269 = vpop.permute.xlu0 %1268
        %1270 = vrot.lane.b32.xlu0 %v488, 64
        %v1271 = vpop.permute.xlu0 %1270
        %1272 = vrot.lane.b32.xlu0 %v489, 64
        %v1273 = vpop.permute.xlu0 %1272
        %1274 = vrot.lane.b32.xlu0 %v490, 64
        %v1275 = vpop.permute.xlu0 %1274
        %1276 = vrot.lane.b32.xlu0 %v491, 64
        %v1277 = vpop.permute.xlu0 %1276
        %1278 = vrot.lane.b32.xlu0 %v492, 64
        %v1279 = vpop.permute.xlu0 %1278
        %1280 = vrot.lane.b32.xlu0 %v493, 64
        %v1281 = vpop.permute.xlu0 %1280
        %1282 = vrot.lane.b32.xlu0 %v494, 64
        %v1283 = vpop.permute.xlu0 %1282
        %1284 = vrot.lane.b32.xlu0 %v495, 64
        %v1285 = vpop.permute.xlu0 %1284
        %1286 = vrot.lane.b32.xlu0 %v496, 64
        %v1287 = vpop.permute.xlu0 %1286
        %1288 = vrot.lane.b32.xlu0 %v497, 64
        %v1289 = vpop.permute.xlu0 %1288
        %1290 = vrot.lane.b32.xlu0 %v498, 64
        %v1291 = vpop.permute.xlu0 %1290
        %1292 = vrot.lane.b32.xlu0 %v499, 64
        %v1293 = vpop.permute.xlu0 %1292
        %1294 = vrot.lane.b32.xlu0 %v500, 64
        %v1295 = vpop.permute.xlu0 %1294
        %1296 = vrot.lane.b32.xlu0 %v501, 64
        %v1297 = vpop.permute.xlu0 %1296
        %1298 = vrot.lane.b32.xlu0 %v502, 64
        %v1299 = vpop.permute.xlu0 %1298
        %1300 = vrot.lane.b32.xlu0 %v503, 64
        %v1301 = vpop.permute.xlu0 %1300
        %1302 = vrot.lane.b32.xlu0 %v504, 64
        %v1303 = vpop.permute.xlu0 %1302
        %1304 = vrot.lane.b32.xlu0 %v505, 64
        %v1305 = vpop.permute.xlu0 %1304
        %1306 = vrot.lane.b32.xlu0 %v506, 64
        %v1307 = vpop.permute.xlu0 %1306
        %1308 = vrot.lane.b32.xlu0 %v507, 64
        %v1309 = vpop.permute.xlu0 %1308
        %1310 = vrot.lane.b32.xlu0 %v508, 64
        %v1311 = vpop.permute.xlu0 %1310
        %1312 = vrot.lane.b32.xlu0 %v509, 64
        %v1313 = vpop.permute.xlu0 %1312
        %1314 = vrot.lane.b32.xlu0 %v510, 64
        %v1315 = vpop.permute.xlu0 %1314
        %1316 = vrot.lane.b32.xlu0 %v511, 64
        %v1317 = vpop.permute.xlu0 %1316
        %1318 = vrot.lane.b32.xlu0 %v512, 64
        %v1319 = vpop.permute.xlu0 %1318
        %1320 = vrot.lane.b32.xlu0 %v513, 64
        %v1321 = vpop.permute.xlu0 %1320
        %1322 = vrot.lane.b32.xlu0 %v514, 64
        %v1323 = vpop.permute.xlu0 %1322
        %1324 = vrot.lane.b32.xlu0 %v515, 64
        %v1325 = vpop.permute.xlu0 %1324
        %1326 = vrot.lane.b32.xlu0 %v516, 64
        %v1327 = vpop.permute.xlu0 %1326
        %1328 = vrot.lane.b32.xlu0 %v517, 64
        %v1329 = vpop.permute.xlu0 %1328
        %1330 = vrot.lane.b32.xlu0 %v518, 64
        %v1331 = vpop.permute.xlu0 %1330
        %1332 = vrot.lane.b32.xlu0 %v519, 64
        %v1333 = vpop.permute.xlu0 %1332
        %1334 = vrot.lane.b32.xlu0 %v520, 64
        %v1335 = vpop.permute.xlu0 %1334
        %1336 = vrot.lane.b32.xlu0 %v521, 64
        %v1337 = vpop.permute.xlu0 %1336
        %1338 = vrot.lane.b32.xlu0 %v522, 64
        %v1339 = vpop.permute.xlu0 %1338
        %1340 = vrot.lane.b32.xlu0 %v523, 64
        %v1341 = vpop.permute.xlu0 %1340
        %1342 = vrot.lane.b32.xlu0 %v524, 64
        %v1343 = vpop.permute.xlu0 %1342
        %1344 = vrot.lane.b32.xlu0 %v525, 64
        %v1345 = vpop.permute.xlu0 %1344
        %1346 = vrot.lane.b32.xlu0 %v526, 64
        %v1347 = vpop.permute.xlu0 %1346
        %1348 = vrot.lane.b32.xlu0 %v527, 64
        %v1349 = vpop.permute.xlu0 %1348
        %1350 = vrot.lane.b32.xlu0 %v528, 64
        %v1351 = vpop.permute.xlu0 %1350
        %1352 = vrot.lane.b32.xlu0 %v529, 64
        %v1353 = vpop.permute.xlu0 %1352
        %1354 = vrot.lane.b32.xlu0 %v530, 64
        %v1355 = vpop.permute.xlu0 %1354
        %1356 = vrot.lane.b32.xlu0 %v531, 64
        %v1357 = vpop.permute.xlu0 %1356
        %1358 = vrot.lane.b32.xlu0 %v532, 64
        %v1359 = vpop.permute.xlu0 %1358
        %1360 = vrot.lane.b32.xlu0 %v533, 64
        %v1361 = vpop.permute.xlu0 %1360
        %1362 = vrot.lane.b32.xlu0 %v534, 64
        %v1363 = vpop.permute.xlu0 %1362
        %1364 = vrot.lane.b32.xlu0 %v535, 64
        %v1365 = vpop.permute.xlu0 %1364
        %1366 = vrot.lane.b32.xlu0 %v536, 64
        %v1367 = vpop.permute.xlu0 %1366
        %1368 = vrot.lane.b32.xlu0 %v537, 64
        %v1369 = vpop.permute.xlu0 %1368
        %1370 = vrot.lane.b32.xlu0 %v538, 64
        %v1371 = vpop.permute.xlu0 %1370
        %1372 = vrot.lane.b32.xlu0 %v539, 64
        %v1373 = vpop.permute.xlu0 %1372
        %1502 = vrot.lane.b32.xlu0 %v541, 96
        %v1503 = vpop.permute.xlu0 %1502
        %1504 = vrot.lane.b32.xlu0 %v542, 96
        %v1505 = vpop.permute.xlu0 %1504
        %1506 = vrot.lane.b32.xlu0 %v543, 96
        %v1507 = vpop.permute.xlu0 %1506
        %1508 = vrot.lane.b32.xlu0 %v544, 96
        %v1509 = vpop.permute.xlu0 %1508
        %1510 = vrot.lane.b32.xlu0 %v545, 96
        %v1511 = vpop.permute.xlu0 %1510
        %1512 = vrot.lane.b32.xlu0 %v546, 96
        %v1513 = vpop.permute.xlu0 %1512
        %1514 = vrot.lane.b32.xlu0 %v547, 96
        %v1515 = vpop.permute.xlu0 %1514
        %1516 = vrot.lane.b32.xlu0 %v548, 96
        %v1517 = vpop.permute.xlu0 %1516
        %1518 = vrot.lane.b32.xlu0 %v549, 96
        %v1519 = vpop.permute.xlu0 %1518
        %1520 = vrot.lane.b32.xlu0 %v550, 96
        %v1521 = vpop.permute.xlu0 %1520
        %1522 = vrot.lane.b32.xlu0 %v551, 96
        %v1523 = vpop.permute.xlu0 %1522
        %1524 = vrot.lane.b32.xlu0 %v552, 96
        %v1525 = vpop.permute.xlu0 %1524
        %1526 = vrot.lane.b32.xlu0 %v553, 96
        %v1527 = vpop.permute.xlu0 %1526
        %1528 = vrot.lane.b32.xlu0 %v554, 96
        %v1529 = vpop.permute.xlu0 %1528
        %1530 = vrot.lane.b32.xlu0 %v555, 96
        %v1531 = vpop.permute.xlu0 %1530
        %1532 = vrot.lane.b32.xlu0 %v556, 96
        %v1533 = vpop.permute.xlu0 %1532
        %1534 = vrot.lane.b32.xlu0 %v557, 96
        %v1535 = vpop.permute.xlu0 %1534
        %1536 = vrot.lane.b32.xlu0 %v558, 96
        %v1537 = vpop.permute.xlu0 %1536
        %1538 = vrot.lane.b32.xlu0 %v559, 96
        %v1539 = vpop.permute.xlu0 %1538
        %1540 = vrot.lane.b32.xlu0 %v560, 96
        %v1541 = vpop.permute.xlu0 %1540
        %1542 = vrot.lane.b32.xlu0 %v561, 96
        %v1543 = vpop.permute.xlu0 %1542
        %1544 = vrot.lane.b32.xlu0 %v562, 96
        %v1545 = vpop.permute.xlu0 %1544
        %1546 = vrot.lane.b32.xlu0 %v563, 96
        %v1547 = vpop.permute.xlu0 %1546
        %1548 = vrot.lane.b32.xlu0 %v564, 96
        %v1549 = vpop.permute.xlu0 %1548
        %1550 = vrot.lane.b32.xlu0 %v565, 96
        %v1551 = vpop.permute.xlu0 %1550
        %1552 = vrot.lane.b32.xlu0 %v566, 96
        %v1553 = vpop.permute.xlu0 %1552
        %1554 = vrot.lane.b32.xlu0 %v567, 96
        %v1555 = vpop.permute.xlu0 %1554
        %1556 = vrot.lane.b32.xlu0 %v568, 96
        %v1557 = vpop.permute.xlu0 %1556
        %1558 = vrot.lane.b32.xlu0 %v569, 96
        %v1559 = vpop.permute.xlu0 %1558
        %1560 = vrot.lane.b32.xlu0 %v570, 96
        %v1561 = vpop.permute.xlu0 %1560
        %1562 = vrot.lane.b32.xlu0 %v571, 96
        %v1563 = vpop.permute.xlu0 %1562
        %1564 = vrot.lane.b32.xlu0 %v572, 96
        %v1565 = vpop.permute.xlu0 %1564
        %1566 = vrot.lane.b32.xlu0 %v573, 96
        %v1567 = vpop.permute.xlu0 %1566
        %1568 = vrot.lane.b32.xlu0 %v574, 96
        %v1569 = vpop.permute.xlu0 %1568
        %1570 = vrot.lane.b32.xlu0 %v575, 96
        %v1571 = vpop.permute.xlu0 %1570
        %1572 = vrot.lane.b32.xlu0 %v576, 96
        %v1573 = vpop.permute.xlu0 %1572
        %1574 = vrot.lane.b32.xlu0 %v577, 96
        %v1575 = vpop.permute.xlu0 %1574
        %1576 = vrot.lane.b32.xlu0 %v578, 96
        %v1577 = vpop.permute.xlu0 %1576
        %1578 = vrot.lane.b32.xlu0 %v579, 96
        %v1579 = vpop.permute.xlu0 %1578
        %1580 = vrot.lane.b32.xlu0 %v580, 96
        %v1581 = vpop.permute.xlu0 %1580
        %1582 = vrot.lane.b32.xlu0 %v581, 96
        %v1583 = vpop.permute.xlu0 %1582
        %1584 = vrot.lane.b32.xlu0 %v582, 96
        %v1585 = vpop.permute.xlu0 %1584
        %1586 = vrot.lane.b32.xlu0 %v583, 96
        %v1587 = vpop.permute.xlu0 %1586
        %1588 = vrot.lane.b32.xlu0 %v584, 96
        %v1589 = vpop.permute.xlu0 %1588
        %1590 = vrot.lane.b32.xlu0 %v585, 96
        %v1591 = vpop.permute.xlu0 %1590
        %1592 = vrot.lane.b32.xlu0 %v586, 96
        %v1593 = vpop.permute.xlu0 %1592
        %1594 = vrot.lane.b32.xlu0 %v587, 96
        %v1595 = vpop.permute.xlu0 %1594
        %1596 = vrot.lane.b32.xlu0 %v588, 96
        %v1597 = vpop.permute.xlu0 %1596
        %1598 = vrot.lane.b32.xlu0 %v589, 96
        %v1599 = vpop.permute.xlu0 %1598
        %1600 = vrot.lane.b32.xlu0 %v590, 96
        %v1601 = vpop.permute.xlu0 %1600
        %1602 = vrot.lane.b32.xlu0 %v591, 96
        %v1603 = vpop.permute.xlu0 %1602
        %1604 = vrot.lane.b32.xlu0 %v592, 96
        %v1605 = vpop.permute.xlu0 %1604
        %1606 = vrot.lane.b32.xlu0 %v593, 96
        %v1607 = vpop.permute.xlu0 %1606
        %1608 = vrot.lane.b32.xlu0 %v594, 96
        %v1609 = vpop.permute.xlu0 %1608
        %1610 = vrot.lane.b32.xlu0 %v595, 96
        %v1611 = vpop.permute.xlu0 %1610
        %1612 = vrot.lane.b32.xlu0 %v596, 96
        %v1613 = vpop.permute.xlu0 %1612
        %1614 = vrot.lane.b32.xlu0 %v597, 96
        %v1615 = vpop.permute.xlu0 %1614
        %1616 = vrot.lane.b32.xlu0 %v598, 96
        %v1617 = vpop.permute.xlu0 %1616
        %1618 = vrot.lane.b32.xlu0 %v599, 96
        %v1619 = vpop.permute.xlu0 %1618
        %1620 = vrot.lane.b32.xlu0 %v600, 96
        %v1621 = vpop.permute.xlu0 %1620
        %1622 = vrot.lane.b32.xlu0 %v601, 96
        %v1623 = vpop.permute.xlu0 %1622
        %1624 = vrot.lane.b32.xlu0 %v602, 96
        %v1625 = vpop.permute.xlu0 %1624
        %1626 = vrot.lane.b32.xlu0 %v603, 96
        %v1627 = vpop.permute.xlu0 %1626
        %1628 = vrot.lane.b32.xlu0 %v604, 96
        %v1629 = vpop.permute.xlu0 %1628
        %1758 = vrot.lane.b32.xlu0 %v669, 32
        %v1759 = vpop.permute.xlu0 %1758
        %1760 = vrot.lane.b32.xlu0 %v670, 32
        %v1761 = vpop.permute.xlu0 %1760
        %1762 = vrot.lane.b32.xlu0 %v671, 32
        %v1763 = vpop.permute.xlu0 %1762
        %1764 = vrot.lane.b32.xlu0 %v672, 32
        %v1765 = vpop.permute.xlu0 %1764
        %1766 = vrot.lane.b32.xlu0 %v673, 32
        %v1767 = vpop.permute.xlu0 %1766
        %1768 = vrot.lane.b32.xlu0 %v674, 32
        %v1769 = vpop.permute.xlu0 %1768
        %1770 = vrot.lane.b32.xlu0 %v675, 32
        %v1771 = vpop.permute.xlu0 %1770
        %1772 = vrot.lane.b32.xlu0 %v676, 32
        %v1773 = vpop.permute.xlu0 %1772
        %1774 = vrot.lane.b32.xlu0 %v677, 32
        %v1775 = vpop.permute.xlu0 %1774
        %1776 = vrot.lane.b32.xlu0 %v678, 32
        %v1777 = vpop.permute.xlu0 %1776
        %1778 = vrot.lane.b32.xlu0 %v679, 32
        %v1779 = vpop.permute.xlu0 %1778
        %1780 = vrot.lane.b32.xlu0 %v680, 32
        %v1781 = vpop.permute.xlu0 %1780
        %1782 = vrot.lane.b32.xlu0 %v681, 32
        %v1783 = vpop.permute.xlu0 %1782
        %1784 = vrot.lane.b32.xlu0 %v682, 32
        %v1785 = vpop.permute.xlu0 %1784
        %1786 = vrot.lane.b32.xlu0 %v683, 32
        %v1787 = vpop.permute.xlu0 %1786
        %1788 = vrot.lane.b32.xlu0 %v684, 32
        %v1789 = vpop.permute.xlu0 %1788
        %1790 = vrot.lane.b32.xlu0 %v685, 32
        %v1791 = vpop.permute.xlu0 %1790
        %1792 = vrot.lane.b32.xlu0 %v686, 32
        %v1793 = vpop.permute.xlu0 %1792
        %1794 = vrot.lane.b32.xlu0 %v687, 32
        %v1795 = vpop.permute.xlu0 %1794
        %1796 = vrot.lane.b32.xlu0 %v688, 32
        %v1797 = vpop.permute.xlu0 %1796
        %1798 = vrot.lane.b32.xlu0 %v689, 32
        %v1799 = vpop.permute.xlu0 %1798
        %1800 = vrot.lane.b32.xlu0 %v690, 32
        %v1801 = vpop.permute.xlu0 %1800
        %1802 = vrot.lane.b32.xlu0 %v691, 32
        %v1803 = vpop.permute.xlu0 %1802
        %1804 = vrot.lane.b32.xlu0 %v692, 32
        %v1805 = vpop.permute.xlu0 %1804
        %1806 = vrot.lane.b32.xlu0 %v693, 32
        %v1807 = vpop.permute.xlu0 %1806
        %1808 = vrot.lane.b32.xlu0 %v694, 32
        %v1809 = vpop.permute.xlu0 %1808
        %1810 = vrot.lane.b32.xlu0 %v695, 32
        %v1811 = vpop.permute.xlu0 %1810
        %1812 = vrot.lane.b32.xlu0 %v696, 32
        %v1813 = vpop.permute.xlu0 %1812
        %1814 = vrot.lane.b32.xlu0 %v697, 32
        %v1815 = vpop.permute.xlu0 %1814
        %1816 = vrot.lane.b32.xlu0 %v698, 32
        %v1817 = vpop.permute.xlu0 %1816
        %1818 = vrot.lane.b32.xlu0 %v699, 32
        %v1819 = vpop.permute.xlu0 %1818
        %1820 = vrot.lane.b32.xlu0 %v700, 32
        %v1821 = vpop.permute.xlu0 %1820
        %1822 = vrot.lane.b32.xlu0 %v701, 32
        %v1823 = vpop.permute.xlu0 %1822
        %1824 = vrot.lane.b32.xlu0 %v702, 32
        %v1825 = vpop.permute.xlu0 %1824
        %1826 = vrot.lane.b32.xlu0 %v703, 32
        %v1827 = vpop.permute.xlu0 %1826
        %1828 = vrot.lane.b32.xlu0 %v704, 32
        %v1829 = vpop.permute.xlu0 %1828
        %1830 = vrot.lane.b32.xlu0 %v705, 32
        %v1831 = vpop.permute.xlu0 %1830
        %1832 = vrot.lane.b32.xlu0 %v706, 32
        %v1833 = vpop.permute.xlu0 %1832
        %1834 = vrot.lane.b32.xlu0 %v707, 32
        %v1835 = vpop.permute.xlu0 %1834
        %1836 = vrot.lane.b32.xlu0 %v708, 32
        %v1837 = vpop.permute.xlu0 %1836
        %1838 = vrot.lane.b32.xlu0 %v709, 32
        %v1839 = vpop.permute.xlu0 %1838
        %1840 = vrot.lane.b32.xlu0 %v710, 32
        %v1841 = vpop.permute.xlu0 %1840
        %1842 = vrot.lane.b32.xlu0 %v711, 32
        %v1843 = vpop.permute.xlu0 %1842
        %1844 = vrot.lane.b32.xlu0 %v712, 32
        %v1845 = vpop.permute.xlu0 %1844
        %1846 = vrot.lane.b32.xlu0 %v713, 32
        %v1847 = vpop.permute.xlu0 %1846
        %1848 = vrot.lane.b32.xlu0 %v714, 32
        %v1849 = vpop.permute.xlu0 %1848
        %1850 = vrot.lane.b32.xlu0 %v715, 32
        %v1851 = vpop.permute.xlu0 %1850
        %1852 = vrot.lane.b32.xlu0 %v716, 32
        %v1853 = vpop.permute.xlu0 %1852
        %1854 = vrot.lane.b32.xlu0 %v717, 32
        %v1855 = vpop.permute.xlu0 %1854
        %1856 = vrot.lane.b32.xlu0 %v718, 32
        %v1857 = vpop.permute.xlu0 %1856
        %1858 = vrot.lane.b32.xlu0 %v719, 32
        %v1859 = vpop.permute.xlu0 %1858
        %1860 = vrot.lane.b32.xlu0 %v720, 32
        %v1861 = vpop.permute.xlu0 %1860
        %1862 = vrot.lane.b32.xlu0 %v721, 32
        %v1863 = vpop.permute.xlu0 %1862
        %1864 = vrot.lane.b32.xlu0 %v722, 32
        %v1865 = vpop.permute.xlu0 %1864
        %1866 = vrot.lane.b32.xlu0 %v723, 32
        %v1867 = vpop.permute.xlu0 %1866
        %1868 = vrot.lane.b32.xlu0 %v724, 32
        %v1869 = vpop.permute.xlu0 %1868
        %1870 = vrot.lane.b32.xlu0 %v725, 32
        %v1871 = vpop.permute.xlu0 %1870
        %1872 = vrot.lane.b32.xlu0 %v726, 32
        %v1873 = vpop.permute.xlu0 %1872
        %1874 = vrot.lane.b32.xlu0 %v727, 32
        %v1875 = vpop.permute.xlu0 %1874
        %1876 = vrot.lane.b32.xlu0 %v728, 32
        %v1877 = vpop.permute.xlu0 %1876
        %1878 = vrot.lane.b32.xlu0 %v729, 32
        %v1879 = vpop.permute.xlu0 %1878
        %1880 = vrot.lane.b32.xlu0 %v730, 32
        %v1881 = vpop.permute.xlu0 %1880
        %1882 = vrot.lane.b32.xlu0 %v731, 32
        %v1883 = vpop.permute.xlu0 %1882
        %1884 = vrot.lane.b32.xlu0 %v732, 32
        %v1885 = vpop.permute.xlu0 %1884
        %2014 = vrot.lane.b32.xlu0 %v734, 64
        %v2015 = vpop.permute.xlu0 %2014
        %2016 = vrot.lane.b32.xlu0 %v735, 64
        %v2017 = vpop.permute.xlu0 %2016
        %2018 = vrot.lane.b32.xlu0 %v736, 64
        %v2019 = vpop.permute.xlu0 %2018
        %2020 = vrot.lane.b32.xlu0 %v737, 64
        %v2021 = vpop.permute.xlu0 %2020
        %2022 = vrot.lane.b32.xlu0 %v738, 64
        %v2023 = vpop.permute.xlu0 %2022
        %2024 = vrot.lane.b32.xlu0 %v739, 64
        %v2025 = vpop.permute.xlu0 %2024
        %2026 = vrot.lane.b32.xlu0 %v740, 64
        %v2027 = vpop.permute.xlu0 %2026
        %2028 = vrot.lane.b32.xlu0 %v741, 64
        %v2029 = vpop.permute.xlu0 %2028
        %2030 = vrot.lane.b32.xlu0 %v742, 64
        %v2031 = vpop.permute.xlu0 %2030
        %2032 = vrot.lane.b32.xlu0 %v743, 64
        %v2033 = vpop.permute.xlu0 %2032
        %2034 = vrot.lane.b32.xlu0 %v744, 64
        %v2035 = vpop.permute.xlu0 %2034
        %2036 = vrot.lane.b32.xlu0 %v745, 64
        %v2037 = vpop.permute.xlu0 %2036
        %2038 = vrot.lane.b32.xlu0 %v746, 64
        %v2039 = vpop.permute.xlu0 %2038
        %2040 = vrot.lane.b32.xlu0 %v747, 64
        %v2041 = vpop.permute.xlu0 %2040
        %2042 = vrot.lane.b32.xlu0 %v748, 64
        %v2043 = vpop.permute.xlu0 %2042
        %2044 = vrot.lane.b32.xlu0 %v749, 64
        %v2045 = vpop.permute.xlu0 %2044
        %2046 = vrot.lane.b32.xlu0 %v750, 64
        %v2047 = vpop.permute.xlu0 %2046
        %2048 = vrot.lane.b32.xlu0 %v751, 64
        %v2049 = vpop.permute.xlu0 %2048
        %2050 = vrot.lane.b32.xlu0 %v752, 64
        %v2051 = vpop.permute.xlu0 %2050
        %2052 = vrot.lane.b32.xlu0 %v753, 64
        %v2053 = vpop.permute.xlu0 %2052
        %2054 = vrot.lane.b32.xlu0 %v754, 64
        %v2055 = vpop.permute.xlu0 %2054
        %2056 = vrot.lane.b32.xlu0 %v755, 64
        %v2057 = vpop.permute.xlu0 %2056
        %2058 = vrot.lane.b32.xlu0 %v756, 64
        %v2059 = vpop.permute.xlu0 %2058
        %2060 = vrot.lane.b32.xlu0 %v757, 64
        %v2061 = vpop.permute.xlu0 %2060
        %2062 = vrot.lane.b32.xlu0 %v758, 64
        %v2063 = vpop.permute.xlu0 %2062
        %2064 = vrot.lane.b32.xlu0 %v759, 64
        %v2065 = vpop.permute.xlu0 %2064
        %2066 = vrot.lane.b32.xlu0 %v760, 64
        %v2067 = vpop.permute.xlu0 %2066
        %2068 = vrot.lane.b32.xlu0 %v761, 64
        %v2069 = vpop.permute.xlu0 %2068
        %2070 = vrot.lane.b32.xlu0 %v762, 64
        %v2071 = vpop.permute.xlu0 %2070
        %2072 = vrot.lane.b32.xlu0 %v763, 64
        %v2073 = vpop.permute.xlu0 %2072
        %2074 = vrot.lane.b32.xlu0 %v764, 64
        %v2075 = vpop.permute.xlu0 %2074
        %2076 = vrot.lane.b32.xlu0 %v765, 64
        %v2077 = vpop.permute.xlu0 %2076
        %2078 = vrot.lane.b32.xlu0 %v766, 64
        %v2079 = vpop.permute.xlu0 %2078
        %2080 = vrot.lane.b32.xlu0 %v767, 64
        %v2081 = vpop.permute.xlu0 %2080
        %2082 = vrot.lane.b32.xlu0 %v768, 64
        %v2083 = vpop.permute.xlu0 %2082
        %2084 = vrot.lane.b32.xlu0 %v769, 64
        %v2085 = vpop.permute.xlu0 %2084
        %2086 = vrot.lane.b32.xlu0 %v770, 64
        %v2087 = vpop.permute.xlu0 %2086
        %2088 = vrot.lane.b32.xlu0 %v771, 64
        %v2089 = vpop.permute.xlu0 %2088
        %2090 = vrot.lane.b32.xlu0 %v772, 64
        %v2091 = vpop.permute.xlu0 %2090
        %2092 = vrot.lane.b32.xlu0 %v773, 64
        %v2093 = vpop.permute.xlu0 %2092
        %2094 = vrot.lane.b32.xlu0 %v774, 64
        %v2095 = vpop.permute.xlu0 %2094
        %2096 = vrot.lane.b32.xlu0 %v775, 64
        %v2097 = vpop.permute.xlu0 %2096
        %2098 = vrot.lane.b32.xlu0 %v776, 64
        %v2099 = vpop.permute.xlu0 %2098
        %2100 = vrot.lane.b32.xlu0 %v777, 64
        %v2101 = vpop.permute.xlu0 %2100
        %2102 = vrot.lane.b32.xlu0 %v778, 64
        %v2103 = vpop.permute.xlu0 %2102
        %2104 = vrot.lane.b32.xlu0 %v779, 64
        %v2105 = vpop.permute.xlu0 %2104
        %2106 = vrot.lane.b32.xlu0 %v780, 64
        %v2107 = vpop.permute.xlu0 %2106
        %2108 = vrot.lane.b32.xlu0 %v781, 64
        %v2109 = vpop.permute.xlu0 %2108
        %2110 = vrot.lane.b32.xlu0 %v782, 64
        %v2111 = vpop.permute.xlu0 %2110
        %2112 = vrot.lane.b32.xlu0 %v783, 64
        %v2113 = vpop.permute.xlu0 %2112
        %2114 = vrot.lane.b32.xlu0 %v784, 64
        %v2115 = vpop.permute.xlu0 %2114
        %2116 = vrot.lane.b32.xlu0 %v785, 64
        %v2117 = vpop.permute.xlu0 %2116
        %2118 = vrot.lane.b32.xlu0 %v786, 64
        %v2119 = vpop.permute.xlu0 %2118
        %2120 = vrot.lane.b32.xlu0 %v787, 64
        %v2121 = vpop.permute.xlu0 %2120
        %2122 = vrot.lane.b32.xlu0 %v788, 64
        %v2123 = vpop.permute.xlu0 %2122
        %2124 = vrot.lane.b32.xlu0 %v789, 64
        %v2125 = vpop.permute.xlu0 %2124
        %2126 = vrot.lane.b32.xlu0 %v790, 64
        %v2127 = vpop.permute.xlu0 %2126
        %2128 = vrot.lane.b32.xlu0 %v791, 64
        %v2129 = vpop.permute.xlu0 %2128
        %2130 = vrot.lane.b32.xlu0 %v792, 64
        %v2131 = vpop.permute.xlu0 %2130
        %2132 = vrot.lane.b32.xlu0 %v793, 64
        %v2133 = vpop.permute.xlu0 %2132
        %2134 = vrot.lane.b32.xlu0 %v794, 64
        %v2135 = vpop.permute.xlu0 %2134
        %2136 = vrot.lane.b32.xlu0 %v795, 64
        %v2137 = vpop.permute.xlu0 %2136
        %2138 = vrot.lane.b32.xlu0 %v796, 64
        %v2139 = vpop.permute.xlu0 %2138
        %2140 = vrot.lane.b32.xlu0 %v797, 64
        %v2141 = vpop.permute.xlu0 %2140
        %2270 = vrot.lane.b32.xlu0 %v798, 96
        %v2271 = vpop.permute.xlu0 %2270
        %2272 = vrot.lane.b32.xlu0 %v799, 96
        %v2273 = vpop.permute.xlu0 %2272
        %2274 = vrot.lane.b32.xlu0 %v800, 96
        %v2275 = vpop.permute.xlu0 %2274
        %2276 = vrot.lane.b32.xlu0 %v801, 96
        %v2277 = vpop.permute.xlu0 %2276
        %2278 = vrot.lane.b32.xlu0 %v802, 96
        %v2279 = vpop.permute.xlu0 %2278
        %2280 = vrot.lane.b32.xlu0 %v803, 96
        %v2281 = vpop.permute.xlu0 %2280
        %2282 = vrot.lane.b32.xlu0 %v804, 96
        %v2283 = vpop.permute.xlu0 %2282
        %2284 = vrot.lane.b32.xlu0 %v805, 96
        %v2285 = vpop.permute.xlu0 %2284
        %2286 = vrot.lane.b32.xlu0 %v806, 96
        %v2287 = vpop.permute.xlu0 %2286
        %2288 = vrot.lane.b32.xlu0 %v807, 96
        %v2289 = vpop.permute.xlu0 %2288
        %2290 = vrot.lane.b32.xlu0 %v808, 96
        %v2291 = vpop.permute.xlu0 %2290
        %2292 = vrot.lane.b32.xlu0 %v809, 96
        %v2293 = vpop.permute.xlu0 %2292
        %2294 = vrot.lane.b32.xlu0 %v810, 96
        %v2295 = vpop.permute.xlu0 %2294
        %2296 = vrot.lane.b32.xlu0 %v811, 96
        %v2297 = vpop.permute.xlu0 %2296
        %2298 = vrot.lane.b32.xlu0 %v812, 96
        %v2299 = vpop.permute.xlu0 %2298
        %2300 = vrot.lane.b32.xlu0 %v813, 96
        %v2301 = vpop.permute.xlu0 %2300
        %2302 = vrot.lane.b32.xlu0 %v814, 96
        %v2303 = vpop.permute.xlu0 %2302
        %2304 = vrot.lane.b32.xlu0 %v815, 96
        %v2305 = vpop.permute.xlu0 %2304
        %2306 = vrot.lane.b32.xlu0 %v816, 96
        %v2307 = vpop.permute.xlu0 %2306
        %2308 = vrot.lane.b32.xlu0 %v817, 96
        %v2309 = vpop.permute.xlu0 %2308
        %2310 = vrot.lane.b32.xlu0 %v818, 96
        %v2311 = vpop.permute.xlu0 %2310
        %2312 = vrot.lane.b32.xlu0 %v819, 96
        %v2313 = vpop.permute.xlu0 %2312
        %2314 = vrot.lane.b32.xlu0 %v820, 96
        %v2315 = vpop.permute.xlu0 %2314
        %2316 = vrot.lane.b32.xlu0 %v821, 96
        %v2317 = vpop.permute.xlu0 %2316
        %2318 = vrot.lane.b32.xlu0 %v822, 96
        %v2319 = vpop.permute.xlu0 %2318
        %2320 = vrot.lane.b32.xlu0 %v823, 96
        %v2321 = vpop.permute.xlu0 %2320
        %2322 = vrot.lane.b32.xlu0 %v824, 96
        %v2323 = vpop.permute.xlu0 %2322
        %2324 = vrot.lane.b32.xlu0 %v825, 96
        %v2325 = vpop.permute.xlu0 %2324
        %2326 = vrot.lane.b32.xlu0 %v826, 96
        %v2327 = vpop.permute.xlu0 %2326
        %2328 = vrot.lane.b32.xlu0 %v827, 96
        %v2329 = vpop.permute.xlu0 %2328
        %2330 = vrot.lane.b32.xlu0 %v828, 96
        %v2331 = vpop.permute.xlu0 %2330
        %2332 = vrot.lane.b32.xlu0 %v829, 96
        %v2333 = vpop.permute.xlu0 %2332
        %2334 = vrot.lane.b32.xlu0 %v830, 96
        %v2335 = vpop.permute.xlu0 %2334
        %2336 = vrot.lane.b32.xlu0 %v831, 96
        %v2337 = vpop.permute.xlu0 %2336
        %2338 = vrot.lane.b32.xlu0 %v832, 96
        %v2339 = vpop.permute.xlu0 %2338
        %2340 = vrot.lane.b32.xlu0 %v833, 96
        %v2341 = vpop.permute.xlu0 %2340
        %2342 = vrot.lane.b32.xlu0 %v834, 96
        %v2343 = vpop.permute.xlu0 %2342
        %2344 = vrot.lane.b32.xlu0 %v835, 96
        %v2345 = vpop.permute.xlu0 %2344
        %2346 = vrot.lane.b32.xlu0 %v836, 96
        %v2347 = vpop.permute.xlu0 %2346
        %2348 = vrot.lane.b32.xlu0 %v837, 96
        %v2349 = vpop.permute.xlu0 %2348
        %2350 = vrot.lane.b32.xlu0 %v838, 96
        %v2351 = vpop.permute.xlu0 %2350
        %2352 = vrot.lane.b32.xlu0 %v839, 96
        %v2353 = vpop.permute.xlu0 %2352
        %2354 = vrot.lane.b32.xlu0 %v840, 96
        %v2355 = vpop.permute.xlu0 %2354
        %2356 = vrot.lane.b32.xlu0 %v841, 96
        %v2357 = vpop.permute.xlu0 %2356
        %2358 = vrot.lane.b32.xlu0 %v842, 96
        %v2359 = vpop.permute.xlu0 %2358
        %2360 = vrot.lane.b32.xlu0 %v843, 96
        %v2361 = vpop.permute.xlu0 %2360
        %2362 = vrot.lane.b32.xlu0 %v844, 96
        %v2363 = vpop.permute.xlu0 %2362
        %2364 = vrot.lane.b32.xlu0 %v845, 96
        %v2365 = vpop.permute.xlu0 %2364
        %2366 = vrot.lane.b32.xlu0 %v846, 96
        %v2367 = vpop.permute.xlu0 %2366
        %2368 = vrot.lane.b32.xlu0 %v847, 96
        %v2369 = vpop.permute.xlu0 %2368
        %2370 = vrot.lane.b32.xlu0 %v848, 96
        %v2371 = vpop.permute.xlu0 %2370
        %2372 = vrot.lane.b32.xlu0 %v849, 96
        %v2373 = vpop.permute.xlu0 %2372
        %2374 = vrot.lane.b32.xlu0 %v850, 96
        %v2375 = vpop.permute.xlu0 %2374
        %2376 = vrot.lane.b32.xlu0 %v851, 96
        %v2377 = vpop.permute.xlu0 %2376
        %2378 = vrot.lane.b32.xlu0 %v852, 96
        %v2379 = vpop.permute.xlu0 %2378
        %2380 = vrot.lane.b32.xlu0 %v853, 96
        %v2381 = vpop.permute.xlu0 %2380
        %2382 = vrot.lane.b32.xlu0 %v854, 96
        %v2383 = vpop.permute.xlu0 %2382
        %2384 = vrot.lane.b32.xlu0 %v855, 96
        %v2385 = vpop.permute.xlu0 %2384
        %2386 = vrot.lane.b32.xlu0 %v856, 96
        %v2387 = vpop.permute.xlu0 %2386
        %2388 = vrot.lane.b32.xlu0 %v857, 96
        %v2389 = vpop.permute.xlu0 %2388
        %2390 = vrot.lane.b32.xlu0 %v858, 96
        %v2391 = vpop.permute.xlu0 %2390
        %2392 = vrot.lane.b32.xlu0 %v859, 96
        %v2393 = vpop.permute.xlu0 %2392
        %2394 = vrot.lane.b32.xlu0 %v860, 96
        %v2395 = vpop.permute.xlu0 %2394
        %2396 = vrot.lane.b32.xlu0 %v861, 96
        %v2397 = vpop.permute.xlu0 %2396
        %vm2462 = vcmask 261120
        %v2463 = vsel %vm2462, %v348, %v991
        %v2464 = vsel %vm2462, %v349, %v993
        %v2465 = vsel %vm2462, %v350, %v995
        %v2466 = vsel %vm2462, %v351, %v997
        %v2467 = vsel %vm2462, %v352, %v999
        %v2468 = vsel %vm2462, %v353, %v1001
        %v2469 = vsel %vm2462, %v354, %v1003
        %v2470 = vsel %vm2462, %v355, %v1005
        %v2471 = vsel %vm2462, %v356, %v1007
        %v2472 = vsel %vm2462, %v357, %v1009
        %v2473 = vsel %vm2462, %v358, %v1011
        %v2474 = vsel %vm2462, %v359, %v1013
        %v2475 = vsel %vm2462, %v360, %v1015
        %v2476 = vsel %vm2462, %v361, %v1017
        %v2477 = vsel %vm2462, %v362, %v1019
        %v2478 = vsel %vm2462, %v363, %v1021
        %v2479 = vsel %vm2462, %v364, %v1023
        %v2480 = vsel %vm2462, %v365, %v1025
        %v2481 = vsel %vm2462, %v366, %v1027
        %v2482 = vsel %vm2462, %v367, %v1029
        %v2483 = vsel %vm2462, %v368, %v1031
        %v2484 = vsel %vm2462, %v369, %v1033
        %v2485 = vsel %vm2462, %v370, %v1035
        %v2486 = vsel %vm2462, %v371, %v1037
        %v2487 = vsel %vm2462, %v372, %v1039
        %v2488 = vsel %vm2462, %v373, %v1041
        %v2489 = vsel %vm2462, %v374, %v1043
        %v2490 = vsel %vm2462, %v375, %v1045
        %v2491 = vsel %vm2462, %v376, %v1047
        %v2492 = vsel %vm2462, %v377, %v1049
        %v2493 = vsel %vm2462, %v378, %v1051
        %v2494 = vsel %vm2462, %v379, %v1053
        %v2495 = vsel %vm2462, %v380, %v1055
        %v2496 = vsel %vm2462, %v381, %v1057
        %v2497 = vsel %vm2462, %v382, %v1059
        %v2498 = vsel %vm2462, %v383, %v1061
        %v2499 = vsel %vm2462, %v384, %v1063
        %v2500 = vsel %vm2462, %v385, %v1065
        %v2501 = vsel %vm2462, %v386, %v1067
        %v2502 = vsel %vm2462, %v387, %v1069
        %v2503 = vsel %vm2462, %v388, %v1071
        %v2504 = vsel %vm2462, %v389, %v1073
        %v2505 = vsel %vm2462, %v390, %v1075
        %v2506 = vsel %vm2462, %v391, %v1077
        %v2507 = vsel %vm2462, %v392, %v1079
        %v2508 = vsel %vm2462, %v393, %v1081
        %v2509 = vsel %vm2462, %v394, %v1083
        %v2510 = vsel %vm2462, %v395, %v1085
        %v2511 = vsel %vm2462, %v396, %v1087
        %v2512 = vsel %vm2462, %v397, %v1089
        %v2513 = vsel %vm2462, %v398, %v1091
        %v2514 = vsel %vm2462, %v399, %v1093
        %v2515 = vsel %vm2462, %v400, %v1095
        %v2516 = vsel %vm2462, %v401, %v1097
        %v2517 = vsel %vm2462, %v402, %v1099
        %v2518 = vsel %vm2462, %v403, %v1101
        %v2519 = vsel %vm2462, %v404, %v1103
        %v2520 = vsel %vm2462, %v405, %v1105
        %v2521 = vsel %vm2462, %v406, %v1107
        %v2522 = vsel %vm2462, %v407, %v1109
        %v2523 = vsel %vm2462, %v408, %v1111
        %v2524 = vsel %vm2462, %v409, %v1113
        %v2525 = vsel %vm2462, %v410, %v1115
        %v2526 = vsel %vm2462, %v411, %v1117
        %vm2527 = vcmask 523264
        %v2528 = vsel %vm2527, %v2463, %v1247
        %v2529 = vsel %vm2527, %v2464, %v1249
        %v2530 = vsel %vm2527, %v2465, %v1251
        %v2531 = vsel %vm2527, %v2466, %v1253
        %v2532 = vsel %vm2527, %v2467, %v1255
        %v2533 = vsel %vm2527, %v2468, %v1257
        %v2534 = vsel %vm2527, %v2469, %v1259
        %v2535 = vsel %vm2527, %v2470, %v1261
        %v2536 = vsel %vm2527, %v2471, %v1263
        %v2537 = vsel %vm2527, %v2472, %v1265
        %v2538 = vsel %vm2527, %v2473, %v1267
        %v2539 = vsel %vm2527, %v2474, %v1269
        %v2540 = vsel %vm2527, %v2475, %v1271
        %v2541 = vsel %vm2527, %v2476, %v1273
        %v2542 = vsel %vm2527, %v2477, %v1275
        %v2543 = vsel %vm2527, %v2478, %v1277
        %v2544 = vsel %vm2527, %v2479, %v1279
        %v2545 = vsel %vm2527, %v2480, %v1281
        %v2546 = vsel %vm2527, %v2481, %v1283
        %v2547 = vsel %vm2527, %v2482, %v1285
        %v2548 = vsel %vm2527, %v2483, %v1287
        %v2549 = vsel %vm2527, %v2484, %v1289
        %v2550 = vsel %vm2527, %v2485, %v1291
        %v2551 = vsel %vm2527, %v2486, %v1293
        %v2552 = vsel %vm2527, %v2487, %v1295
        %v2553 = vsel %vm2527, %v2488, %v1297
        %v2554 = vsel %vm2527, %v2489, %v1299
        %v2555 = vsel %vm2527, %v2490, %v1301
        %v2556 = vsel %vm2527, %v2491, %v1303
        %v2557 = vsel %vm2527, %v2492, %v1305
        %v2558 = vsel %vm2527, %v2493, %v1307
        %v2559 = vsel %vm2527, %v2494, %v1309
        %v2560 = vsel %vm2527, %v2495, %v1311
        %v2561 = vsel %vm2527, %v2496, %v1313
        %v2562 = vsel %vm2527, %v2497, %v1315
        %v2563 = vsel %vm2527, %v2498, %v1317
        %v2564 = vsel %vm2527, %v2499, %v1319
        %v2565 = vsel %vm2527, %v2500, %v1321
        %v2566 = vsel %vm2527, %v2501, %v1323
        %v2567 = vsel %vm2527, %v2502, %v1325
        %v2568 = vsel %vm2527, %v2503, %v1327
        %v2569 = vsel %vm2527, %v2504, %v1329
        %v2570 = vsel %vm2527, %v2505, %v1331
        %v2571 = vsel %vm2527, %v2506, %v1333
        %v2572 = vsel %vm2527, %v2507, %v1335
        %v2573 = vsel %vm2527, %v2508, %v1337
        %v2574 = vsel %vm2527, %v2509, %v1339
        %v2575 = vsel %vm2527, %v2510, %v1341
        %v2576 = vsel %vm2527, %v2511, %v1343
        %v2577 = vsel %vm2527, %v2512, %v1345
        %v2578 = vsel %vm2527, %v2513, %v1347
        %v2579 = vsel %vm2527, %v2514, %v1349
        %v2580 = vsel %vm2527, %v2515, %v1351
        %v2581 = vsel %vm2527, %v2516, %v1353
        %v2582 = vsel %vm2527, %v2517, %v1355
        %v2583 = vsel %vm2527, %v2518, %v1357
        %v2584 = vsel %vm2527, %v2519, %v1359
        %v2585 = vsel %vm2527, %v2520, %v1361
        %v2586 = vsel %vm2527, %v2521, %v1363
        %v2587 = vsel %vm2527, %v2522, %v1365
        %v2588 = vsel %vm2527, %v2523, %v1367
        %v2589 = vsel %vm2527, %v2524, %v1369
        %v2590 = vsel %vm2527, %v2525, %v1371
        %v2591 = vsel %vm2527, %v2526, %v1373
        %vm2592 = vcmask 785408
        %v2593 = vsel %vm2592, %v2528, %v1503
        %v2594 = vsel %vm2592, %v2529, %v1505
        %v2595 = vsel %vm2592, %v2530, %v1507
        %v2596 = vsel %vm2592, %v2531, %v1509
        %v2597 = vsel %vm2592, %v2532, %v1511
        %v2598 = vsel %vm2592, %v2533, %v1513
        %v2599 = vsel %vm2592, %v2534, %v1515
        %v2600 = vsel %vm2592, %v2535, %v1517
        %v2601 = vsel %vm2592, %v2536, %v1519
        %v2602 = vsel %vm2592, %v2537, %v1521
        %v2603 = vsel %vm2592, %v2538, %v1523
        %v2604 = vsel %vm2592, %v2539, %v1525
        %v2605 = vsel %vm2592, %v2540, %v1527
        %v2606 = vsel %vm2592, %v2541, %v1529
        %v2607 = vsel %vm2592, %v2542, %v1531
        %v2608 = vsel %vm2592, %v2543, %v1533
        %v2609 = vsel %vm2592, %v2544, %v1535
        %v2610 = vsel %vm2592, %v2545, %v1537
        %v2611 = vsel %vm2592, %v2546, %v1539
        %v2612 = vsel %vm2592, %v2547, %v1541
        %v2613 = vsel %vm2592, %v2548, %v1543
        %v2614 = vsel %vm2592, %v2549, %v1545
        %v2615 = vsel %vm2592, %v2550, %v1547
        %v2616 = vsel %vm2592, %v2551, %v1549
        %v2617 = vsel %vm2592, %v2552, %v1551
        %v2618 = vsel %vm2592, %v2553, %v1553
        %v2619 = vsel %vm2592, %v2554, %v1555
        %v2620 = vsel %vm2592, %v2555, %v1557
        %v2621 = vsel %vm2592, %v2556, %v1559
        %v2622 = vsel %vm2592, %v2557, %v1561
        %v2623 = vsel %vm2592, %v2558, %v1563
        %v2624 = vsel %vm2592, %v2559, %v1565
        %v2625 = vsel %vm2592, %v2560, %v1567
        %v2626 = vsel %vm2592, %v2561, %v1569
        %v2627 = vsel %vm2592, %v2562, %v1571
        %v2628 = vsel %vm2592, %v2563, %v1573
        %v2629 = vsel %vm2592, %v2564, %v1575
        %v2630 = vsel %vm2592, %v2565, %v1577
        %v2631 = vsel %vm2592, %v2566, %v1579
        %v2632 = vsel %vm2592, %v2567, %v1581
        %v2633 = vsel %vm2592, %v2568, %v1583
        %v2634 = vsel %vm2592, %v2569, %v1585
        %v2635 = vsel %vm2592, %v2570, %v1587
        %v2636 = vsel %vm2592, %v2571, %v1589
        %v2637 = vsel %vm2592, %v2572, %v1591
        %v2638 = vsel %vm2592, %v2573, %v1593
        %v2639 = vsel %vm2592, %v2574, %v1595
        %v2640 = vsel %vm2592, %v2575, %v1597
        %v2641 = vsel %vm2592, %v2576, %v1599
        %v2642 = vsel %vm2592, %v2577, %v1601
        %v2643 = vsel %vm2592, %v2578, %v1603
        %v2644 = vsel %vm2592, %v2579, %v1605
        %v2645 = vsel %vm2592, %v2580, %v1607
        %v2646 = vsel %vm2592, %v2581, %v1609
        %v2647 = vsel %vm2592, %v2582, %v1611
        %v2648 = vsel %vm2592, %v2583, %v1613
        %v2649 = vsel %vm2592, %v2584, %v1615
        %v2650 = vsel %vm2592, %v2585, %v1617
        %v2651 = vsel %vm2592, %v2586, %v1619
        %v2652 = vsel %vm2592, %v2587, %v1621
        %v2653 = vsel %vm2592, %v2588, %v1623
        %v2654 = vsel %vm2592, %v2589, %v1625
        %v2655 = vsel %vm2592, %v2590, %v1627
        %v2656 = vsel %vm2592, %v2591, %v1629
        %v2657 = vsel %vm2462, %v605, %v1759
        %v2658 = vsel %vm2462, %v606, %v1761
        %v2659 = vsel %vm2462, %v607, %v1763
        %v2660 = vsel %vm2462, %v608, %v1765
        %v2661 = vsel %vm2462, %v609, %v1767
        %v2662 = vsel %vm2462, %v610, %v1769
        %v2663 = vsel %vm2462, %v611, %v1771
        %v2664 = vsel %vm2462, %v612, %v1773
        %v2665 = vsel %vm2462, %v613, %v1775
        %v2666 = vsel %vm2462, %v614, %v1777
        %v2667 = vsel %vm2462, %v615, %v1779
        %v2668 = vsel %vm2462, %v616, %v1781
        %v2669 = vsel %vm2462, %v617, %v1783
        %v2670 = vsel %vm2462, %v618, %v1785
        %v2671 = vsel %vm2462, %v619, %v1787
        %v2672 = vsel %vm2462, %v620, %v1789
        %v2673 = vsel %vm2462, %v621, %v1791
        %v2674 = vsel %vm2462, %v622, %v1793
        %v2675 = vsel %vm2462, %v623, %v1795
        %v2676 = vsel %vm2462, %v624, %v1797
        %v2677 = vsel %vm2462, %v625, %v1799
        %v2678 = vsel %vm2462, %v626, %v1801
        %v2679 = vsel %vm2462, %v627, %v1803
        %v2680 = vsel %vm2462, %v628, %v1805
        %v2681 = vsel %vm2462, %v629, %v1807
        %v2682 = vsel %vm2462, %v630, %v1809
        %v2683 = vsel %vm2462, %v631, %v1811
        %v2684 = vsel %vm2462, %v632, %v1813
        %v2685 = vsel %vm2462, %v633, %v1815
        %v2686 = vsel %vm2462, %v634, %v1817
        %v2687 = vsel %vm2462, %v635, %v1819
        %v2688 = vsel %vm2462, %v636, %v1821
        %v2689 = vsel %vm2462, %v637, %v1823
        %v2690 = vsel %vm2462, %v638, %v1825
        %v2691 = vsel %vm2462, %v639, %v1827
        %v2692 = vsel %vm2462, %v640, %v1829
        %v2693 = vsel %vm2462, %v641, %v1831
        %v2694 = vsel %vm2462, %v642, %v1833
        %v2695 = vsel %vm2462, %v643, %v1835
        %v2696 = vsel %vm2462, %v644, %v1837
        %v2697 = vsel %vm2462, %v645, %v1839
        %v2698 = vsel %vm2462, %v646, %v1841
        %v2699 = vsel %vm2462, %v647, %v1843
        %v2700 = vsel %vm2462, %v648, %v1845
        %v2701 = vsel %vm2462, %v649, %v1847
        %v2702 = vsel %vm2462, %v650, %v1849
        %v2703 = vsel %vm2462, %v651, %v1851
        %v2704 = vsel %vm2462, %v652, %v1853
        %v2705 = vsel %vm2462, %v653, %v1855
        %v2706 = vsel %vm2462, %v654, %v1857
        %v2707 = vsel %vm2462, %v655, %v1859
        %v2708 = vsel %vm2462, %v656, %v1861
        %v2709 = vsel %vm2462, %v657, %v1863
        %v2710 = vsel %vm2462, %v658, %v1865
        %v2711 = vsel %vm2462, %v659, %v1867
        %v2712 = vsel %vm2462, %v660, %v1869
        %v2713 = vsel %vm2462, %v661, %v1871
        %v2714 = vsel %vm2462, %v662, %v1873
        %v2715 = vsel %vm2462, %v663, %v1875
        %v2716 = vsel %vm2462, %v664, %v1877
        %v2717 = vsel %vm2462, %v665, %v1879
        %v2718 = vsel %vm2462, %v666, %v1881
        %v2719 = vsel %vm2462, %v667, %v1883
        %v2720 = vsel %vm2462, %v668, %v1885
        %v2721 = vsel %vm2527, %v2657, %v2015
        %v2722 = vsel %vm2527, %v2658, %v2017
        %v2723 = vsel %vm2527, %v2659, %v2019
        %v2724 = vsel %vm2527, %v2660, %v2021
        %v2725 = vsel %vm2527, %v2661, %v2023
        %v2726 = vsel %vm2527, %v2662, %v2025
        %v2727 = vsel %vm2527, %v2663, %v2027
        %v2728 = vsel %vm2527, %v2664, %v2029
        %v2729 = vsel %vm2527, %v2665, %v2031
        %v2730 = vsel %vm2527, %v2666, %v2033
        %v2731 = vsel %vm2527, %v2667, %v2035
        %v2732 = vsel %vm2527, %v2668, %v2037
        %v2733 = vsel %vm2527, %v2669, %v2039
        %v2734 = vsel %vm2527, %v2670, %v2041
        %v2735 = vsel %vm2527, %v2671, %v2043
        %v2736 = vsel %vm2527, %v2672, %v2045
        %v2737 = vsel %vm2527, %v2673, %v2047
        %v2738 = vsel %vm2527, %v2674, %v2049
        %v2739 = vsel %vm2527, %v2675, %v2051
        %v2740 = vsel %vm2527, %v2676, %v2053
        %v2741 = vsel %vm2527, %v2677, %v2055
        %v2742 = vsel %vm2527, %v2678, %v2057
        %v2743 = vsel %vm2527, %v2679, %v2059
        %v2744 = vsel %vm2527, %v2680, %v2061
        %v2745 = vsel %vm2527, %v2681, %v2063
        %v2746 = vsel %vm2527, %v2682, %v2065
        %v2747 = vsel %vm2527, %v2683, %v2067
        %v2748 = vsel %vm2527, %v2684, %v2069
        %v2749 = vsel %vm2527, %v2685, %v2071
        %v2750 = vsel %vm2527, %v2686, %v2073
        %v2751 = vsel %vm2527, %v2687, %v2075
        %v2752 = vsel %vm2527, %v2688, %v2077
        %v2753 = vsel %vm2527, %v2689, %v2079
        %v2754 = vsel %vm2527, %v2690, %v2081
        %v2755 = vsel %vm2527, %v2691, %v2083
        %v2756 = vsel %vm2527, %v2692, %v2085
        %v2757 = vsel %vm2527, %v2693, %v2087
        %v2758 = vsel %vm2527, %v2694, %v2089
        %v2759 = vsel %vm2527, %v2695, %v2091
        %v2760 = vsel %vm2527, %v2696, %v2093
        %v2761 = vsel %vm2527, %v2697, %v2095
        %v2762 = vsel %vm2527, %v2698, %v2097
        %v2763 = vsel %vm2527, %v2699, %v2099
        %v2764 = vsel %vm2527, %v2700, %v2101
        %v2765 = vsel %vm2527, %v2701, %v2103
        %v2766 = vsel %vm2527, %v2702, %v2105
        %v2767 = vsel %vm2527, %v2703, %v2107
        %v2768 = vsel %vm2527, %v2704, %v2109
        %v2769 = vsel %vm2527, %v2705, %v2111
        %v2770 = vsel %vm2527, %v2706, %v2113
        %v2771 = vsel %vm2527, %v2707, %v2115
        %v2772 = vsel %vm2527, %v2708, %v2117
        %v2773 = vsel %vm2527, %v2709, %v2119
        %v2774 = vsel %vm2527, %v2710, %v2121
        %v2775 = vsel %vm2527, %v2711, %v2123
        %v2776 = vsel %vm2527, %v2712, %v2125
        %v2777 = vsel %vm2527, %v2713, %v2127
        %v2778 = vsel %vm2527, %v2714, %v2129
        %v2779 = vsel %vm2527, %v2715, %v2131
        %v2780 = vsel %vm2527, %v2716, %v2133
        %v2781 = vsel %vm2527, %v2717, %v2135
        %v2782 = vsel %vm2527, %v2718, %v2137
        %v2783 = vsel %vm2527, %v2719, %v2139
        %v2784 = vsel %vm2527, %v2720, %v2141
        %v2785 = vsel %vm2592, %v2721, %v2271
        %v2786 = vsel %vm2592, %v2722, %v2273
        %v2787 = vsel %vm2592, %v2723, %v2275
        %v2788 = vsel %vm2592, %v2724, %v2277
        %v2789 = vsel %vm2592, %v2725, %v2279
        %v2790 = vsel %vm2592, %v2726, %v2281
        %v2791 = vsel %vm2592, %v2727, %v2283
        %v2792 = vsel %vm2592, %v2728, %v2285
        %v2793 = vsel %vm2592, %v2729, %v2287
        %v2794 = vsel %vm2592, %v2730, %v2289
        %v2795 = vsel %vm2592, %v2731, %v2291
        %v2796 = vsel %vm2592, %v2732, %v2293
        %v2797 = vsel %vm2592, %v2733, %v2295
        %v2798 = vsel %vm2592, %v2734, %v2297
        %v2799 = vsel %vm2592, %v2735, %v2299
        %v2800 = vsel %vm2592, %v2736, %v2301
        %v2801 = vsel %vm2592, %v2737, %v2303
        %v2802 = vsel %vm2592, %v2738, %v2305
        %v2803 = vsel %vm2592, %v2739, %v2307
        %v2804 = vsel %vm2592, %v2740, %v2309
        %v2805 = vsel %vm2592, %v2741, %v2311
        %v2806 = vsel %vm2592, %v2742, %v2313
        %v2807 = vsel %vm2592, %v2743, %v2315
        %v2808 = vsel %vm2592, %v2744, %v2317
        %v2809 = vsel %vm2592, %v2745, %v2319
        %v2810 = vsel %vm2592, %v2746, %v2321
        %v2811 = vsel %vm2592, %v2747, %v2323
        %v2812 = vsel %vm2592, %v2748, %v2325
        %v2813 = vsel %vm2592, %v2749, %v2327
        %v2814 = vsel %vm2592, %v2750, %v2329
        %v2815 = vsel %vm2592, %v2751, %v2331
        %v2816 = vsel %vm2592, %v2752, %v2333
        %v2817 = vsel %vm2592, %v2753, %v2335
        %v2818 = vsel %vm2592, %v2754, %v2337
        %v2819 = vsel %vm2592, %v2755, %v2339
        %v2820 = vsel %vm2592, %v2756, %v2341
        %v2821 = vsel %vm2592, %v2757, %v2343
        %v2822 = vsel %vm2592, %v2758, %v2345
        %v2823 = vsel %vm2592, %v2759, %v2347
        %v2824 = vsel %vm2592, %v2760, %v2349
        %v2825 = vsel %vm2592, %v2761, %v2351
        %v2826 = vsel %vm2592, %v2762, %v2353
        %v2827 = vsel %vm2592, %v2763, %v2355
        %v2828 = vsel %vm2592, %v2764, %v2357
        %v2829 = vsel %vm2592, %v2765, %v2359
        %v2830 = vsel %vm2592, %v2766, %v2361
        %v2831 = vsel %vm2592, %v2767, %v2363
        %v2832 = vsel %vm2592, %v2768, %v2365
        %v2833 = vsel %vm2592, %v2769, %v2367
        %v2834 = vsel %vm2592, %v2770, %v2369
        %v2835 = vsel %vm2592, %v2771, %v2371
        %v2836 = vsel %vm2592, %v2772, %v2373
        %v2837 = vsel %vm2592, %v2773, %v2375
        %v2838 = vsel %vm2592, %v2774, %v2377
        %v2839 = vsel %vm2592, %v2775, %v2379
        %v2840 = vsel %vm2592, %v2776, %v2381
        %v2841 = vsel %vm2592, %v2777, %v2383
        %v2842 = vsel %vm2592, %v2778, %v2385
        %v2843 = vsel %vm2592, %v2779, %v2387
        %v2844 = vsel %vm2592, %v2780, %v2389
        %v2845 = vsel %vm2592, %v2781, %v2391
        %v2846 = vsel %vm2592, %v2782, %v2393
        %v2847 = vsel %vm2592, %v2783, %v2395
        %v2848 = vsel %vm2592, %v2784, %v2397
        %v2849 = vld [vmem:[%s164] sm:$0xff]
        %v2850 = vld [vmem:[%s164 + $0x8] sm:$0xff]
        %v2851 = vld [vmem:[%s164 + $0x10] sm:$0xff]
        %v2852 = vld [vmem:[%s164 + $0x18] sm:$0xff]
        %v2853 = vld [vmem:[%s164 + $0x20] sm:$0xff]
        %v2854 = vld [vmem:[%s164 + $0x28] sm:$0xff]
        %v2855 = vld [vmem:[%s164 + $0x30] sm:$0xff]
        %v2856 = vld [vmem:[%s164 + $0x38] sm:$0xff]
        %v2857 = vld [vmem:[%s164 + $0x40] sm:$0xff]
        %v2858 = vld [vmem:[%s164 + $0x48] sm:$0xff]
        %v2859 = vld [vmem:[%s164 + $0x50] sm:$0xff]
        %v2860 = vld [vmem:[%s164 + $0x58] sm:$0xff]
        %v2861 = vld [vmem:[%s164 + $0x60] sm:$0xff]
        %v2862 = vld [vmem:[%s164 + $0x68] sm:$0xff]
        %v2863 = vld [vmem:[%s164 + $0x70] sm:$0xff]
        %v2864 = vld [vmem:[%s164 + $0x78] sm:$0xff]
        %v2865 = vld [vmem:[%s164 + $0x80] sm:$0xff]
        %v2866 = vld [vmem:[%s164 + $0x88] sm:$0xff]
        %v2867 = vld [vmem:[%s164 + $0x90] sm:$0xff]
        %v2868 = vld [vmem:[%s164 + $0x98] sm:$0xff]
        %v2869 = vld [vmem:[%s164 + $0xa0] sm:$0xff]
        %v2870 = vld [vmem:[%s164 + $0xa8] sm:$0xff]
        %v2871 = vld [vmem:[%s164 + $0xb0] sm:$0xff]
        %v2872 = vld [vmem:[%s164 + $0xb8] sm:$0xff]
        %v2873 = vld [vmem:[%s164 + $0xc0] sm:$0xff]
        %v2874 = vld [vmem:[%s164 + $0xc8] sm:$0xff]
        %v2875 = vld [vmem:[%s164 + $0xd0] sm:$0xff]
        %v2876 = vld [vmem:[%s164 + $0xd8] sm:$0xff]
        %v2877 = vld [vmem:[%s164 + $0xe0] sm:$0xff]
        %v2878 = vld [vmem:[%s164 + $0xe8] sm:$0xff]
        %v2879 = vld [vmem:[%s164 + $0xf0] sm:$0xff]
        %v2880 = vld [vmem:[%s164 + $0xf8] sm:$0xff]
        %v2881 = vld [vmem:[%s164 + $0x100] sm:$0xff]
        %v2882 = vld [vmem:[%s164 + $0x108] sm:$0xff]
        %v2883 = vld [vmem:[%s164 + $0x110] sm:$0xff]
        %v2884 = vld [vmem:[%s164 + $0x118] sm:$0xff]
        %v2885 = vld [vmem:[%s164 + $0x120] sm:$0xff]
        %v2886 = vld [vmem:[%s164 + $0x128] sm:$0xff]
        %v2887 = vld [vmem:[%s164 + $0x130] sm:$0xff]
        %v2888 = vld [vmem:[%s164 + $0x138] sm:$0xff]
        %v2889 = vld [vmem:[%s164 + $0x140] sm:$0xff]
        %v2890 = vld [vmem:[%s164 + $0x148] sm:$0xff]
        %v2891 = vld [vmem:[%s164 + $0x150] sm:$0xff]
        %v2892 = vld [vmem:[%s164 + $0x158] sm:$0xff]
        %v2893 = vld [vmem:[%s164 + $0x160] sm:$0xff]
        %v2894 = vld [vmem:[%s164 + $0x168] sm:$0xff]
        %v2895 = vld [vmem:[%s164 + $0x170] sm:$0xff]
        %v2896 = vld [vmem:[%s164 + $0x178] sm:$0xff]
        %v2897 = vld [vmem:[%s164 + $0x180] sm:$0xff]
        %v2898 = vld [vmem:[%s164 + $0x188] sm:$0xff]
        %v2899 = vld [vmem:[%s164 + $0x190] sm:$0xff]
        %v2900 = vld [vmem:[%s164 + $0x198] sm:$0xff]
        %v2901 = vld [vmem:[%s164 + $0x1a0] sm:$0xff]
        %v2902 = vld [vmem:[%s164 + $0x1a8] sm:$0xff]
        %v2903 = vld [vmem:[%s164 + $0x1b0] sm:$0xff]
        %v2904 = vld [vmem:[%s164 + $0x1b8] sm:$0xff]
        %v2905 = vld [vmem:[%s164 + $0x1c0] sm:$0xff]
        %v2906 = vld [vmem:[%s164 + $0x1c8] sm:$0xff]
        %v2907 = vld [vmem:[%s164 + $0x1d0] sm:$0xff]
        %v2908 = vld [vmem:[%s164 + $0x1d8] sm:$0xff]
        %v2909 = vld [vmem:[%s164 + $0x1e0] sm:$0xff]
        %v2910 = vld [vmem:[%s164 + $0x1e8] sm:$0xff]
        %v2911 = vld [vmem:[%s164 + $0x1f0] sm:$0xff]
        %v2912 = vld [vmem:[%s164 + $0x1f8] sm:$0xff]
        %v2913 = vld [vmem:[%s1] sm:$0xff]
        %v2914 = vld [vmem:[%s1 + $0x8] sm:$0xff]
        %v2915 = vld [vmem:[%s1 + $0x10] sm:$0xff]
        %v2916 = vld [vmem:[%s1 + $0x18] sm:$0xff]
        %v2917 = vld [vmem:[%s1 + $0x20] sm:$0xff]
        %v2918 = vld [vmem:[%s1 + $0x28] sm:$0xff]
        %v2919 = vld [vmem:[%s1 + $0x30] sm:$0xff]
        %v2920 = vld [vmem:[%s1 + $0x38] sm:$0xff]
        %v2921 = vld [vmem:[%s1 + $0x40] sm:$0xff]
        %v2922 = vld [vmem:[%s1 + $0x48] sm:$0xff]
        %v2923 = vld [vmem:[%s1 + $0x50] sm:$0xff]
        %v2924 = vld [vmem:[%s1 + $0x58] sm:$0xff]
        %v2925 = vld [vmem:[%s1 + $0x60] sm:$0xff]
        %v2926 = vld [vmem:[%s1 + $0x68] sm:$0xff]
        %v2927 = vld [vmem:[%s1 + $0x70] sm:$0xff]
        %v2928 = vld [vmem:[%s1 + $0x78] sm:$0xff]
        %v2929 = vld [vmem:[%s1 + $0x80] sm:$0xff]
        %v2930 = vld [vmem:[%s1 + $0x88] sm:$0xff]
        %v2931 = vld [vmem:[%s1 + $0x90] sm:$0xff]
        %v2932 = vld [vmem:[%s1 + $0x98] sm:$0xff]
        %v2933 = vld [vmem:[%s1 + $0xa0] sm:$0xff]
        %v2934 = vld [vmem:[%s1 + $0xa8] sm:$0xff]
        %v2935 = vld [vmem:[%s1 + $0xb0] sm:$0xff]
        %v2936 = vld [vmem:[%s1 + $0xb8] sm:$0xff]
        %v2937 = vld [vmem:[%s1 + $0xc0] sm:$0xff]
        %v2938 = vld [vmem:[%s1 + $0xc8] sm:$0xff]
        %v2939 = vld [vmem:[%s1 + $0xd0] sm:$0xff]
        %v2940 = vld [vmem:[%s1 + $0xd8] sm:$0xff]
        %v2941 = vld [vmem:[%s1 + $0xe0] sm:$0xff]
        %v2942 = vld [vmem:[%s1 + $0xe8] sm:$0xff]
        %v2943 = vld [vmem:[%s1 + $0xf0] sm:$0xff]
        %v2944 = vld [vmem:[%s1 + $0xf8] sm:$0xff]
        %v2945 = vld [vmem:[%s1 + $0x100] sm:$0xff]
        %v2946 = vld [vmem:[%s1 + $0x108] sm:$0xff]
        %v2947 = vld [vmem:[%s1 + $0x110] sm:$0xff]
        %v2948 = vld [vmem:[%s1 + $0x118] sm:$0xff]
        %v2950 = vsel %vm2462, %v862, 0
        %v2953 = vsel %vm2462, %v863, 0
        %v2956 = vsel %vm2462, %v864, 0
        %v2959 = vsel %vm2462, %v865, 0
        %v2962 = vsel %vm2462, %v866, 0
        %v2965 = vsel %vm2462, %v867, 0
        %v2968 = vsel %vm2462, %v868, 0
        %v2971 = vsel %vm2462, %v869, 0
        %v2974 = vsel %vm2462, %v870, 0
        %v2977 = vsel %vm2462, %v871, 0
        %v2980 = vsel %vm2462, %v872, 0
        %v2983 = vsel %vm2462, %v873, 0
        %v2986 = vsel %vm2462, %v874, 0
        %v2989 = vsel %vm2462, %v875, 0
        %v2992 = vsel %vm2462, %v876, 0
        %v2995 = vsel %vm2462, %v877, 0
        %v2998 = vsel %vm2462, %v878, 0
        %v3001 = vsel %vm2462, %v879, 0
        %v3004 = vsel %vm2462, %v880, 0
        %v3007 = vsel %vm2462, %v881, 0
        %v3010 = vsel %vm2462, %v882, 0
        %v3013 = vsel %vm2462, %v883, 0
        %v3016 = vsel %vm2462, %v884, 0
        %v3019 = vsel %vm2462, %v885, 0
        %v3022 = vsel %vm2462, %v886, 0
        %v3025 = vsel %vm2462, %v887, 0
        %v3028 = vsel %vm2462, %v888, 0
        %v3031 = vsel %vm2462, %v889, 0
        %v3034 = vsel %vm2462, %v890, 0
        %v3037 = vsel %vm2462, %v891, 0
        %v3040 = vsel %vm2462, %v892, 0
        %v3043 = vsel %vm2462, %v893, 0
        %v3046 = vsel %vm2462, %v894, 0
        %v3049 = vsel %vm2462, %v895, 0
        %v3052 = vsel %vm2462, %v896, 0
        %v3055 = vsel %vm2462, %v897, 0
        %v3058 = vsel %vm2462, %v898, 0
        %v3061 = vsel %vm2462, %v899, 0
        %v3064 = vsel %vm2462, %v900, 0
        %v3067 = vsel %vm2462, %v901, 0
        %v3070 = vsel %vm2462, %v902, 0
        %v3073 = vsel %vm2462, %v903, 0
        %v3076 = vsel %vm2462, %v904, 0
        %v3079 = vsel %vm2462, %v905, 0
        %v3082 = vsel %vm2462, %v906, 0
        %v3085 = vsel %vm2462, %v907, 0
        %v3088 = vsel %vm2462, %v908, 0
        %v3091 = vsel %vm2462, %v909, 0
        %v3094 = vsel %vm2462, %v910, 0
        %v3097 = vsel %vm2462, %v911, 0
        %v3100 = vsel %vm2462, %v912, 0
        %v3103 = vsel %vm2462, %v913, 0
        %v3106 = vsel %vm2462, %v914, 0
        %v3109 = vsel %vm2462, %v915, 0
        %v3112 = vsel %vm2462, %v916, 0
        %v3115 = vsel %vm2462, %v917, 0
        %v3118 = vsel %vm2462, %v918, 0
        %v3121 = vsel %vm2462, %v919, 0
        %v3124 = vsel %vm2462, %v920, 0
        %v3127 = vsel %vm2462, %v921, 0
        %v3130 = vsel %vm2462, %v922, 0
        %v3133 = vsel %vm2462, %v923, 0
        %v3136 = vsel %vm2462, %v924, 0
        %v3139 = vsel %vm2462, %v925, 0
        %3141 = vmatprep.subr.mxu0 0.0
        %3142 = vmatpush1.msra.mxu0 %v2913
        %3143 = vmatprep.subr.mxu0 0.0
        %3144 = vmatpush1.msra.mxu0 %v2914
        %3145 = vmatprep.subr.mxu0 0.0
        %3146 = vmatpush1.msra.mxu0 %v2915
        %3147 = vmatprep.subr.mxu0 0.0
        %3148 = vmatpush1.msra.mxu0 %v2916
        %3149 = vmatprep.subr.mxu0 0.0
        %3150 = vmatpush1.msra.mxu0 %v2917
        %3151 = vmatprep.subr.mxu0 0.0
        %3152 = vmatpush1.msra.mxu0 %v2918
        %3153 = vmatprep.subr.mxu0 0.0
        %3154 = vmatpush1.msra.mxu0 %v2919
        %3155 = vmatprep.subr.mxu0 0.0
        %3156 = vmatpush1.msra.mxu0 %v2920
        %3157 = vmatprep.subr.mxu0 0.0
        %3158 = vmatpush1.msra.mxu0 %v2921
        %3159 = vmatprep.subr.mxu0 0.0
        %3160 = vmatpush1.msra.mxu0 %v2922
        %3161 = vmatprep.subr.mxu0 0.0
        %3162 = vmatpush1.msra.mxu0 %v2923
        %3163 = vmatprep.subr.mxu0 0.0
        %3164 = vmatpush1.msra.mxu0 %v2924
        %3165 = vmatprep.subr.mxu0 0.0
        %3166 = vmatpush1.msra.mxu0 %v2925
        %3167 = vmatprep.subr.mxu0 0.0
        %3168 = vmatpush1.msra.mxu0 %v2926
        %3169 = vmatprep.subr.mxu0 0.0
        %3170 = vmatpush1.msra.mxu0 %v2927
        %3171 = vmatprep.subr.mxu0 0.0
        %3172 = vmatpush1.msra.mxu0 %v2928
        %3173 = vmatprep.subr.mxu0 0.0
        %3174 = vmatpush1.msra.mxu0 %v2929
        %3175 = vmatprep.subr.mxu0 0.0
        %3176 = vmatpush1.msra.mxu0 %v2930
        %3177 = vmatprep.subr.mxu0 0.0
        %3178 = vmatpush1.msra.mxu0 %v2931
        %3179 = vmatprep.subr.mxu0 0.0
        %3180 = vmatpush1.msra.mxu0 %v2932
        %3181 = vmatprep.subr.mxu0 0.0
        %3182 = vmatpush1.msra.mxu0 %v2933
        %3183 = vmatprep.subr.mxu0 0.0
        %3184 = vmatpush1.msra.mxu0 %v2934
        %3185 = vmatprep.subr.mxu0 0.0
        %3186 = vmatpush1.msra.mxu0 %v2935
        %3187 = vmatprep.subr.mxu0 0.0
        %3188 = vmatpush1.msra.mxu0 %v2936
        %3189 = vmatprep.subr.mxu0 0.0
        %3190 = vmatpush1.msra.mxu0 %v2937
        %3191 = vmatprep.subr.mxu0 0.0
        %3192 = vmatpush1.msra.mxu0 %v2938
        %3193 = vmatprep.subr.mxu0 0.0
        %3194 = vmatpush1.msra.mxu0 %v2939
        %3195 = vmatprep.subr.mxu0 0.0
        %3196 = vmatpush1.msra.mxu0 %v2940
        %3197 = vmatprep.subr.mxu0 0.0
        %3198 = vmatpush1.msra.mxu0 %v2941
        %3199 = vmatprep.subr.mxu0 0.0
        %3200 = vmatpush1.msra.mxu0 %v2942
        %3201 = vmatprep.subr.mxu0 0.0
        %3202 = vmatpush1.msra.mxu0 %v2943
        %3203 = vmatprep.subr.mxu0 0.0
        %3204 = vmatpush1.msra.mxu0 %v2944
        %3205 = vmatprep.mubr.f32.mxu0 %v2785
        %3206 = vmatmul.mubr.f32.gmra.mrb[0].mxu0 %v2593
        %v3207 = vpop.f32.mrb[0].mxu0
        %v3208 = vadd.f32 0.0, %v3207
        %v3209 = vpop.f32.mrb[0].mxu0
        %3210 = vmatprep.mubr.f32.mxu0 %v2786
        %3211 = vmatmul.mubr.f32.gmra.mrb[0].mxu0 %v2594
        %v3212 = vpop.f32.mrb[0].mxu0
        %v3213 = vadd.f32 0.0, %v3212
        %v3214 = vpop.f32.mrb[0].mxu0
        %3215 = vmatprep.mubr.f32.mxu0 %v2787
        %3216 = vmatmul.mubr.f32.gmra.mrb[0].mxu0 %v2595
        %v3217 = vpop.f32.mrb[0].mxu0
        %v3218 = vadd.f32 0.0, %v3217
        %v3219 = vpop.f32.mrb[0].mxu0
        %3220 = vmatprep.mubr.f32.mxu0 %v2788
        %3221 = vmatmul.mubr.f32.gmra.mrb[0].mxu0 %v2596
        %v3222 = vpop.f32.mrb[0].mxu0
        %v3223 = vadd.f32 0.0, %v3222
        %v3224 = vpop.f32.mrb[0].mxu0
        %3225 = vmatprep.mubr.f32.mxu0 %v2789
        %3226 = vmatmul.mubr.f32.gmra.mrb[0].mxu0 %v2597
        %v3227 = vpop.f32.mrb[0].mxu0
        %v3228 = vadd.f32 0.0, %v3227
        %v3229 = vpop.f32.mrb[0].mxu0
        %3230 = vmatprep.mubr.f32.mxu0 %v2790
        %3231 = vmatmul.mubr.f32.gmra.mrb[0].mxu0 %v2598
        %v3232 = vpop.f32.mrb[0].mxu0
        %v3233 = vadd.f32 0.0, %v3232
        %v3234 = vpop.f32.mrb[0].mxu0
        %3235 = vmatprep.mubr.f32.mxu0 %v2791
        %3236 = vmatmul.mubr.f32.gmra.mrb[0].mxu0 %v2599
        %v3237 = vpop.f32.mrb[0].mxu0
        %v3238 = vadd.f32 0.0, %v3237
        %v3239 = vpop.f32.mrb[0].mxu0
        %3240 = vmatprep.mubr.f32.mxu0 %v2792
        %3241 = vmatmul.mubr.f32.gmra.mrb[0].mxu0 %v2600
        %v3242 = vpop.f32.mrb[0].mxu0
        %v3243 = vadd.f32 0.0, %v3242
        %v3244 = vpop.f32.mrb[0].mxu0
        %3245 = vmatprep.mubr.f32.mxu0 %v2793
        %3246 = vmatmul.mubr.f32.gmra.mrb[0].mxu0 %v2601
        %v3247 = vpop.f32.mrb[0].mxu0
        %v3248 = vadd.f32 0.0, %v3247
        %v3249 = vpop.f32.mrb[0].mxu0
        %3250 = vmatprep.mubr.f32.mxu0 %v2794
        %3251 = vmatmul.mubr.f32.gmra.mrb[0].mxu0 %v2602
        %v3252 = vpop.f32.mrb[0].mxu0
        %v3253 = vadd.f32 0.0, %v3252
        %v3254 = vpop.f32.mrb[0].mxu0
        %3255 = vmatprep.mubr.f32.mxu0 %v2795
        %3256 = vmatmul.mubr.f32.gmra.mrb[0].mxu0 %v2603
        %v3257 = vpop.f32.mrb[0].mxu0
        %v3258 = vadd.f32 0.0, %v3257
        %v3259 = vpop.f32.mrb[0].mxu0
        %3260 = vmatprep.mubr.f32.mxu0 %v2796
        %3261 = vmatmul.mubr.f32.gmra.mrb[0].mxu0 %v2604
        %v3262 = vpop.f32.mrb[0].mxu0
        %v3263 = vadd.f32 0.0, %v3262
        %v3264 = vpop.f32.mrb[0].mxu0
        %3265 = vmatprep.mubr.f32.mxu0 %v2797
        %3266 = vmatmul.mubr.f32.gmra.mrb[0].mxu0 %v2605
        %v3267 = vpop.f32.mrb[0].mxu0
        %v3268 = vadd.f32 0.0, %v3267
        %v3269 = vpop.f32.mrb[0].mxu0
        %3270 = vmatprep.mubr.f32.mxu0 %v2798
        %3271 = vmatmul.mubr.f32.gmra.mrb[0].mxu0 %v2606
        %v3272 = vpop.f32.mrb[0].mxu0
        %v3273 = vadd.f32 0.0, %v3272
        %v3274 = vpop.f32.mrb[0].mxu0
        %3275 = vmatprep.mubr.f32.mxu0 %v2799
        %3276 = vmatmul.mubr.f32.gmra.mrb[0].mxu0 %v2607
        %v3277 = vpop.f32.mrb[0].mxu0
        %v3278 = vadd.f32 0.0, %v3277
        %v3279 = vpop.f32.mrb[0].mxu0
        %3280 = vmatprep.mubr.f32.mxu0 %v2800
        %3281 = vmatmul.mubr.f32.gmra.mrb[0].mxu0 %v2608
        %v3282 = vpop.f32.mrb[0].mxu0
        %v3283 = vadd.f32 0.0, %v3282
        %v3284 = vpop.f32.mrb[0].mxu0
        %3285 = vmatprep.mubr.f32.mxu0 %v2801
        %3286 = vmatmul.mubr.f32.gmra.mrb[0].mxu0 %v2609
        %v3287 = vpop.f32.mrb[0].mxu0
        %v3288 = vadd.f32 0.0, %v3287
        %v3289 = vpop.f32.mrb[0].mxu0
        %3290 = vmatprep.mubr.f32.mxu0 %v2802
        %3291 = vmatmul.mubr.f32.gmra.mrb[0].mxu0 %v2610
        %v3292 = vpop.f32.mrb[0].mxu0
        %v3293 = vadd.f32 0.0, %v3292
        %v3294 = vpop.f32.mrb[0].mxu0
        %3295 = vmatprep.mubr.f32.mxu0 %v2803
        %3296 = vmatmul.mubr.f32.gmra.mrb[0].mxu0 %v2611
        %v3297 = vpop.f32.mrb[0].mxu0
        %v3298 = vadd.f32 0.0, %v3297
        %v3299 = vpop.f32.mrb[0].mxu0
        %3300 = vmatprep.mubr.f32.mxu0 %v2804
        %3301 = vmatmul.mubr.f32.gmra.mrb[0].mxu0 %v2612
        %v3302 = vpop.f32.mrb[0].mxu0
        %v3303 = vadd.f32 0.0, %v3302
        %v3304 = vpop.f32.mrb[0].mxu0
        %3305 = vmatprep.mubr.f32.mxu0 %v2805
        %3306 = vmatmul.mubr.f32.gmra.mrb[0].mxu0 %v2613
        %v3307 = vpop.f32.mrb[0].mxu0
        %v3308 = vadd.f32 0.0, %v3307
        %v3309 = vpop.f32.mrb[0].mxu0
        %3310 = vmatprep.mubr.f32.mxu0 %v2806
        %3311 = vmatmul.mubr.f32.gmra.mrb[0].mxu0 %v2614
        %v3312 = vpop.f32.mrb[0].mxu0
        %v3313 = vadd.f32 0.0, %v3312
        %v3314 = vpop.f32.mrb[0].mxu0
        %3315 = vmatprep.mubr.f32.mxu0 %v2807
        %3316 = vmatmul.mubr.f32.gmra.mrb[0].mxu0 %v2615
        %v3317 = vpop.f32.mrb[0].mxu0
        %v3318 = vadd.f32 0.0, %v3317
        %v3319 = vpop.f32.mrb[0].mxu0
        %3320 = vmatprep.mubr.f32.mxu0 %v2808
        %3321 = vmatmul.mubr.f32.gmra.mrb[0].mxu0 %v2616
        %v3322 = vpop.f32.mrb[0].mxu0
        %v3323 = vadd.f32 0.0, %v3322
        %v3324 = vpop.f32.mrb[0].mxu0
        %3325 = vmatprep.mubr.f32.mxu0 %v2809
        %3326 = vmatmul.mubr.f32.gmra.mrb[0].mxu0 %v2617
        %v3327 = vpop.f32.mrb[0].mxu0
        %v3328 = vadd.f32 0.0, %v3327
        %v3329 = vpop.f32.mrb[0].mxu0
        %3330 = vmatprep.mubr.f32.mxu0 %v2810
        %3331 = vmatmul.mubr.f32.gmra.mrb[0].mxu0 %v2618
        %v3332 = vpop.f32.mrb[0].mxu0
        %v3333 = vadd.f32 0.0, %v3332
        %v3334 = vpop.f32.mrb[0].mxu0
        %3335 = vmatprep.mubr.f32.mxu0 %v2811
        %3336 = vmatmul.mubr.f32.gmra.mrb[0].mxu0 %v2619
        %v3337 = vpop.f32.mrb[0].mxu0
        %v3338 = vadd.f32 0.0, %v3337
        %v3339 = vpop.f32.mrb[0].mxu0
        %3340 = vmatprep.mubr.f32.mxu0 %v2812
        %3341 = vmatmul.mubr.f32.gmra.mrb[0].mxu0 %v2620
        %v3342 = vpop.f32.mrb[0].mxu0
        %v3343 = vadd.f32 0.0, %v3342
        %v3344 = vpop.f32.mrb[0].mxu0
        %3345 = vmatprep.mubr.f32.mxu0 %v2813
        %3346 = vmatmul.mubr.f32.gmra.mrb[0].mxu0 %v2621
        %v3347 = vpop.f32.mrb[0].mxu0
        %v3348 = vadd.f32 0.0, %v3347
        %v3349 = vpop.f32.mrb[0].mxu0
        %3350 = vmatprep.mubr.f32.mxu0 %v2814
        %3351 = vmatmul.mubr.f32.gmra.mrb[0].mxu0 %v2622
        %v3352 = vpop.f32.mrb[0].mxu0
        %v3353 = vadd.f32 0.0, %v3352
        %v3354 = vpop.f32.mrb[0].mxu0
        %3355 = vmatprep.mubr.f32.mxu0 %v2815
        %3356 = vmatmul.mubr.f32.gmra.mrb[0].mxu0 %v2623
        %v3357 = vpop.f32.mrb[0].mxu0
        %v3358 = vadd.f32 0.0, %v3357
        %v3359 = vpop.f32.mrb[0].mxu0
        %3360 = vmatprep.mubr.f32.mxu0 %v2816
        %3361 = vmatmul.mubr.f32.gmra.mrb[0].mxu0 %v2624
        %v3362 = vpop.f32.mrb[0].mxu0
        %v3363 = vadd.f32 0.0, %v3362
        %v3364 = vpop.f32.mrb[0].mxu0
        %3365 = vmatprep.mubr.f32.mxu0 %v2817
        %3366 = vmatmul.mubr.f32.gmra.mrb[0].mxu0 %v2625
        %v3367 = vpop.f32.mrb[0].mxu0
        %v3368 = vadd.f32 0.0, %v3367
        %v3369 = vpop.f32.mrb[0].mxu0
        %3370 = vmatprep.mubr.f32.mxu0 %v2818
        %3371 = vmatmul.mubr.f32.gmra.mrb[0].mxu0 %v2626
        %v3372 = vpop.f32.mrb[0].mxu0
        %v3373 = vadd.f32 0.0, %v3372
        %v3374 = vpop.f32.mrb[0].mxu0
        %3375 = vmatprep.mubr.f32.mxu0 %v2819
        %3376 = vmatmul.mubr.f32.gmra.mrb[0].mxu0 %v2627
        %v3377 = vpop.f32.mrb[0].mxu0
        %v3378 = vadd.f32 0.0, %v3377
        %v3379 = vpop.f32.mrb[0].mxu0
        %3380 = vmatprep.mubr.f32.mxu0 %v2820
        %3381 = vmatmul.mubr.f32.gmra.mrb[0].mxu0 %v2628
        %v3382 = vpop.f32.mrb[0].mxu0
        %v3383 = vadd.f32 0.0, %v3382
        %v3384 = vpop.f32.mrb[0].mxu0
        %3385 = vmatprep.mubr.f32.mxu0 %v2821
        %3386 = vmatmul.mubr.f32.gmra.mrb[0].mxu0 %v2629
        %v3387 = vpop.f32.mrb[0].mxu0
        %v3388 = vadd.f32 0.0, %v3387
        %v3389 = vpop.f32.mrb[0].mxu0
        %3390 = vmatprep.mubr.f32.mxu0 %v2822
        %3391 = vmatmul.mubr.f32.gmra.mrb[0].mxu0 %v2630
        %v3392 = vpop.f32.mrb[0].mxu0
        %v3393 = vadd.f32 0.0, %v3392
        %v3394 = vpop.f32.mrb[0].mxu0
        %3395 = vmatprep.mubr.f32.mxu0 %v2823
        %3396 = vmatmul.mubr.f32.gmra.mrb[0].mxu0 %v2631
        %v3397 = vpop.f32.mrb[0].mxu0
        %v3398 = vadd.f32 0.0, %v3397
        %v3399 = vpop.f32.mrb[0].mxu0
        %3400 = vmatprep.mubr.f32.mxu0 %v2824
        %3401 = vmatmul.mubr.f32.gmra.mrb[0].mxu0 %v2632
        %v3402 = vpop.f32.mrb[0].mxu0
        %v3403 = vadd.f32 0.0, %v3402
        %v3404 = vpop.f32.mrb[0].mxu0
        %3405 = vmatprep.mubr.f32.mxu0 %v2825
        %3406 = vmatmul.mubr.f32.gmra.mrb[0].mxu0 %v2633
        %v3407 = vpop.f32.mrb[0].mxu0
        %v3408 = vadd.f32 0.0, %v3407
        %v3409 = vpop.f32.mrb[0].mxu0
        %3410 = vmatprep.mubr.f32.mxu0 %v2826
        %3411 = vmatmul.mubr.f32.gmra.mrb[0].mxu0 %v2634
        %v3412 = vpop.f32.mrb[0].mxu0
        %v3413 = vadd.f32 0.0, %v3412
        %v3414 = vpop.f32.mrb[0].mxu0
        %3415 = vmatprep.mubr.f32.mxu0 %v2827
        %3416 = vmatmul.mubr.f32.gmra.mrb[0].mxu0 %v2635
        %v3417 = vpop.f32.mrb[0].mxu0
        %v3418 = vadd.f32 0.0, %v3417
        %v3419 = vpop.f32.mrb[0].mxu0
        %3420 = vmatprep.mubr.f32.mxu0 %v2828
        %3421 = vmatmul.mubr.f32.gmra.mrb[0].mxu0 %v2636
        %v3422 = vpop.f32.mrb[0].mxu0
        %v3423 = vadd.f32 0.0, %v3422
        %v3424 = vpop.f32.mrb[0].mxu0
        %3425 = vmatprep.mubr.f32.mxu0 %v2829
        %3426 = vmatmul.mubr.f32.gmra.mrb[0].mxu0 %v2637
        %v3427 = vpop.f32.mrb[0].mxu0
        %v3428 = vadd.f32 0.0, %v3427
        %v3429 = vpop.f32.mrb[0].mxu0
        %3430 = vmatprep.mubr.f32.mxu0 %v2830
        %3431 = vmatmul.mubr.f32.gmra.mrb[0].mxu0 %v2638
        %v3432 = vpop.f32.mrb[0].mxu0
        %v3433 = vadd.f32 0.0, %v3432
        %v3434 = vpop.f32.mrb[0].mxu0
        %3435 = vmatprep.mubr.f32.mxu0 %v2831
        %3436 = vmatmul.mubr.f32.gmra.mrb[0].mxu0 %v2639
        %v3437 = vpop.f32.mrb[0].mxu0
        %v3438 = vadd.f32 0.0, %v3437
        %v3439 = vpop.f32.mrb[0].mxu0
        %3440 = vmatprep.mubr.f32.mxu0 %v2832
        %3441 = vmatmul.mubr.f32.gmra.mrb[0].mxu0 %v2640
        %v3442 = vpop.f32.mrb[0].mxu0
        %v3443 = vadd.f32 0.0, %v3442
        %v3444 = vpop.f32.mrb[0].mxu0
        %3445 = vmatprep.mubr.f32.mxu0 %v2833
        %3446 = vmatmul.mubr.f32.gmra.mrb[0].mxu0 %v2641
        %v3447 = vpop.f32.mrb[0].mxu0
        %v3448 = vadd.f32 0.0, %v3447
        %v3449 = vpop.f32.mrb[0].mxu0
        %3450 = vmatprep.mubr.f32.mxu0 %v2834
        %3451 = vmatmul.mubr.f32.gmra.mrb[0].mxu0 %v2642
        %v3452 = vpop.f32.mrb[0].mxu0
        %v3453 = vadd.f32 0.0, %v3452
        %v3454 = vpop.f32.mrb[0].mxu0
        %3455 = vmatprep.mubr.f32.mxu0 %v2835
        %3456 = vmatmul.mubr.f32.gmra.mrb[0].mxu0 %v2643
        %v3457 = vpop.f32.mrb[0].mxu0
        %v3458 = vadd.f32 0.0, %v3457
        %v3459 = vpop.f32.mrb[0].mxu0
        %3460 = vmatprep.mubr.f32.mxu0 %v2836
        %3461 = vmatmul.mubr.f32.gmra.mrb[0].mxu0 %v2644
        %v3462 = vpop.f32.mrb[0].mxu0
        %v3463 = vadd.f32 0.0, %v3462
        %v3464 = vpop.f32.mrb[0].mxu0
        %3465 = vmatprep.mubr.f32.mxu0 %v2837
        %3466 = vmatmul.mubr.f32.gmra.mrb[0].mxu0 %v2645
        %v3467 = vpop.f32.mrb[0].mxu0
        %v3468 = vadd.f32 0.0, %v3467
        %v3469 = vpop.f32.mrb[0].mxu0
        %3470 = vmatprep.mubr.f32.mxu0 %v2838
        %3471 = vmatmul.mubr.f32.gmra.mrb[0].mxu0 %v2646
        %v3472 = vpop.f32.mrb[0].mxu0
        %v3473 = vadd.f32 0.0, %v3472
        %v3474 = vpop.f32.mrb[0].mxu0
        %3475 = vmatprep.mubr.f32.mxu0 %v2839
        %3476 = vmatmul.mubr.f32.gmra.mrb[0].mxu0 %v2647
        %v3477 = vpop.f32.mrb[0].mxu0
        %v3478 = vadd.f32 0.0, %v3477
        %v3479 = vpop.f32.mrb[0].mxu0
        %3480 = vmatprep.mubr.f32.mxu0 %v2840
        %3481 = vmatmul.mubr.f32.gmra.mrb[0].mxu0 %v2648
        %v3482 = vpop.f32.mrb[0].mxu0
        %v3483 = vadd.f32 0.0, %v3482
        %v3484 = vpop.f32.mrb[0].mxu0
        %3485 = vmatprep.mubr.f32.mxu0 %v2841
        %3486 = vmatmul.mubr.f32.gmra.mrb[0].mxu0 %v2649
        %v3487 = vpop.f32.mrb[0].mxu0
        %v3488 = vadd.f32 0.0, %v3487
        %v3489 = vpop.f32.mrb[0].mxu0
        %3490 = vmatprep.mubr.f32.mxu0 %v2842
        %3491 = vmatmul.mubr.f32.gmra.mrb[0].mxu0 %v2650
        %v3492 = vpop.f32.mrb[0].mxu0
        %v3493 = vadd.f32 0.0, %v3492
        %v3494 = vpop.f32.mrb[0].mxu0
        %3495 = vmatprep.mubr.f32.mxu0 %v2843
        %3496 = vmatmul.mubr.f32.gmra.mrb[0].mxu0 %v2651
        %v3497 = vpop.f32.mrb[0].mxu0
        %v3498 = vadd.f32 0.0, %v3497
        %v3499 = vpop.f32.mrb[0].mxu0
        %3500 = vmatprep.mubr.f32.mxu0 %v2844
        %3501 = vmatmul.mubr.f32.gmra.mrb[0].mxu0 %v2652
        %v3502 = vpop.f32.mrb[0].mxu0
        %v3503 = vadd.f32 0.0, %v3502
        %v3504 = vpop.f32.mrb[0].mxu0
        %3505 = vmatprep.mubr.f32.mxu0 %v2845
        %3506 = vmatmul.mubr.f32.gmra.mrb[0].mxu0 %v2653
        %v3507 = vpop.f32.mrb[0].mxu0
        %v3508 = vadd.f32 0.0, %v3507
        %v3509 = vpop.f32.mrb[0].mxu0
        %3510 = vmatprep.mubr.f32.mxu0 %v2846
        %3511 = vmatmul.mubr.f32.gmra.mrb[0].mxu0 %v2654
        %v3512 = vpop.f32.mrb[0].mxu0
        %v3513 = vadd.f32 0.0, %v3512
        %v3514 = vpop.f32.mrb[0].mxu0
        %3515 = vmatprep.mubr.f32.mxu0 %v2847
        %3516 = vmatmul.mubr.f32.gmra.mrb[0].mxu0 %v2655
        %v3517 = vpop.f32.mrb[0].mxu0
        %v3518 = vadd.f32 0.0, %v3517
        %v3519 = vpop.f32.mrb[0].mxu0
        %3520 = vmatprep.mubr.f32.mxu0 %v2848
        %3521 = vmatmul.mubr.f32.gmra.mrb[0].mxu0 %v2656
        %v3522 = vpop.f32.mrb[0].mxu0
        %v3523 = vadd.f32 0.0, %v3522
        %v3524 = vpop.f32.mrb[0].mxu0
        %3525 = vdwg.mxu0
        %3526 = vmatprep.subr.mxu0 0.0
        %3527 = vmatpush1.msra.mxu0 %v2945
        %3528 = vmatprep.subr.mxu0 0.0
        %3529 = vmatpush1.msra.mxu0 %v2946
        %3530 = vmatprep.subr.mxu0 0.0
        %3531 = vmatpush1.msra.mxu0 %v2947
        %3532 = vmatprep.subr.mxu0 0.0
        %3533 = vmatpush1.msra.mxu0 %v2948
        %3534 = vmatprep.subr.mxu0 0.0
        %3535 = vmatpush1.msra.mxu0 0.0
        %3536 = vmatprep.subr.mxu0 0.0
        %3537 = vmatpush1.msra.mxu0 0.0
        %3538 = vmatprep.subr.mxu0 0.0
        %3539 = vmatpush1.msra.mxu0 0.0
        %3540 = vmatprep.subr.mxu0 0.0
        %3541 = vmatpush1.msra.mxu0 0.0
        %3542 = vmatprep.subr.mxu0 0.0
        %3543 = vmatpush1.msra.mxu0 0.0
        %3544 = vmatprep.subr.mxu0 0.0
        %3545 = vmatpush1.msra.mxu0 0.0
        %3546 = vmatprep.subr.mxu0 0.0
        %3547 = vmatpush1.msra.mxu0 0.0
        %3548 = vmatprep.subr.mxu0 0.0
        %3549 = vmatpush1.msra.mxu0 0.0
        %3550 = vmatprep.subr.mxu0 0.0
        %3551 = vmatpush1.msra.mxu0 0.0
        %3552 = vmatprep.subr.mxu0 0.0
        %3553 = vmatpush1.msra.mxu0 0.0
        %3554 = vmatprep.subr.mxu0 0.0
        %3555 = vmatpush1.msra.mxu0 0.0
        %3556 = vmatprep.subr.mxu0 0.0
        %3557 = vmatpush1.msra.mxu0 0.0
        %3558 = vmatprep.subr.mxu0 0.0
        %3559 = vmatpush1.msra.mxu0 0.0
        %3560 = vmatprep.subr.mxu0 0.0
        %3561 = vmatpush1.msra.mxu0 0.0
        %3562 = vmatprep.subr.mxu0 0.0
        %3563 = vmatpush1.msra.mxu0 0.0
        %3564 = vmatprep.subr.mxu0 0.0
        %3565 = vmatpush1.msra.mxu0 0.0
        %3566 = vmatprep.subr.mxu0 0.0
        %3567 = vmatpush1.msra.mxu0 0.0
        %3568 = vmatprep.subr.mxu0 0.0
        %3569 = vmatpush1.msra.mxu0 0.0
        %3570 = vmatprep.subr.mxu0 0.0
        %3571 = vmatpush1.msra.mxu0 0.0
        %3572 = vmatprep.subr.mxu0 0.0
        %3573 = vmatpush1.msra.mxu0 0.0
        %3574 = vmatprep.subr.mxu0 0.0
        %3575 = vmatpush1.msra.mxu0 0.0
        %3576 = vmatprep.subr.mxu0 0.0
        %3577 = vmatpush1.msra.mxu0 0.0
        %3578 = vmatprep.subr.mxu0 0.0
        %3579 = vmatpush1.msra.mxu0 0.0
        %3580 = vmatprep.subr.mxu0 0.0
        %3581 = vmatpush1.msra.mxu0 0.0
        %3582 = vmatprep.subr.mxu0 0.0
        %3583 = vmatpush1.msra.mxu0 0.0
        %3584 = vmatprep.subr.mxu0 0.0
        %3585 = vmatpush1.msra.mxu0 0.0
        %3586 = vmatprep.subr.mxu0 0.0
        %3587 = vmatpush1.msra.mxu0 0.0
        %3588 = vmatprep.subr.mxu0 0.0
        %3589 = vmatpush1.msra.mxu0 0.0
        %3590 = vmatprep.mubr.f32.mxu0 0.0
        %3591 = vmatmul.mubr.f32.gmra.mrb[0].mxu0 %v2950
        %v3592 = vpop.f32.mrb[0].mxu0
        %v3593 = vadd.f32 %v3208, %v3592
        %v3594 = vpop.f32.mrb[0].mxu0
        %3595 = vmatprep.mubr.f32.mxu0 0.0
        %3596 = vmatmul.mubr.f32.gmra.mrb[0].mxu0 %v2953
        %v3597 = vpop.f32.mrb[0].mxu0
        %v3598 = vadd.f32 %v3213, %v3597
        %v3599 = vpop.f32.mrb[0].mxu0
        %3600 = vmatprep.mubr.f32.mxu0 0.0
        %3601 = vmatmul.mubr.f32.gmra.mrb[0].mxu0 %v2956
        %v3602 = vpop.f32.mrb[0].mxu0
        %v3603 = vadd.f32 %v3218, %v3602
        %v3604 = vpop.f32.mrb[0].mxu0
        %3605 = vmatprep.mubr.f32.mxu0 0.0
        %3606 = vmatmul.mubr.f32.gmra.mrb[0].mxu0 %v2959
        %v3607 = vpop.f32.mrb[0].mxu0
        %v3608 = vadd.f32 %v3223, %v3607
        %v3609 = vpop.f32.mrb[0].mxu0
        %3610 = vmatprep.mubr.f32.mxu0 0.0
        %3611 = vmatmul.mubr.f32.gmra.mrb[0].mxu0 %v2962
        %v3612 = vpop.f32.mrb[0].mxu0
        %v3613 = vadd.f32 %v3228, %v3612
        %v3614 = vpop.f32.mrb[0].mxu0
        %3615 = vmatprep.mubr.f32.mxu0 0.0
        %3616 = vmatmul.mubr.f32.gmra.mrb[0].mxu0 %v2965
        %v3617 = vpop.f32.mrb[0].mxu0
        %v3618 = vadd.f32 %v3233, %v3617
        %v3619 = vpop.f32.mrb[0].mxu0
        %3620 = vmatprep.mubr.f32.mxu0 0.0
        %3621 = vmatmul.mubr.f32.gmra.mrb[0].mxu0 %v2968
        %v3622 = vpop.f32.mrb[0].mxu0
        %v3623 = vadd.f32 %v3238, %v3622
        %v3624 = vpop.f32.mrb[0].mxu0
        %3625 = vmatprep.mubr.f32.mxu0 0.0
        %3626 = vmatmul.mubr.f32.gmra.mrb[0].mxu0 %v2971
        %v3627 = vpop.f32.mrb[0].mxu0
        %v3628 = vadd.f32 %v3243, %v3627
        %v3629 = vpop.f32.mrb[0].mxu0
        %3630 = vmatprep.mubr.f32.mxu0 0.0
        %3631 = vmatmul.mubr.f32.gmra.mrb[0].mxu0 %v2974
        %v3632 = vpop.f32.mrb[0].mxu0
        %v3633 = vadd.f32 %v3248, %v3632
        %v3634 = vpop.f32.mrb[0].mxu0
        %3635 = vmatprep.mubr.f32.mxu0 0.0
        %3636 = vmatmul.mubr.f32.gmra.mrb[0].mxu0 %v2977
        %v3637 = vpop.f32.mrb[0].mxu0
        %v3638 = vadd.f32 %v3253, %v3637
        %v3639 = vpop.f32.mrb[0].mxu0
        %3640 = vmatprep.mubr.f32.mxu0 0.0
        %3641 = vmatmul.mubr.f32.gmra.mrb[0].mxu0 %v2980
        %v3642 = vpop.f32.mrb[0].mxu0
        %v3643 = vadd.f32 %v3258, %v3642
        %v3644 = vpop.f32.mrb[0].mxu0
        %3645 = vmatprep.mubr.f32.mxu0 0.0
        %3646 = vmatmul.mubr.f32.gmra.mrb[0].mxu0 %v2983
        %v3647 = vpop.f32.mrb[0].mxu0
        %v3648 = vadd.f32 %v3263, %v3647
        %v3649 = vpop.f32.mrb[0].mxu0
        %3650 = vmatprep.mubr.f32.mxu0 0.0
        %3651 = vmatmul.mubr.f32.gmra.mrb[0].mxu0 %v2986
        %v3652 = vpop.f32.mrb[0].mxu0
        %v3653 = vadd.f32 %v3268, %v3652
        %v3654 = vpop.f32.mrb[0].mxu0
        %3655 = vmatprep.mubr.f32.mxu0 0.0
        %3656 = vmatmul.mubr.f32.gmra.mrb[0].mxu0 %v2989
        %v3657 = vpop.f32.mrb[0].mxu0
        %v3658 = vadd.f32 %v3273, %v3657
        %v3659 = vpop.f32.mrb[0].mxu0
        %3660 = vmatprep.mubr.f32.mxu0 0.0
        %3661 = vmatmul.mubr.f32.gmra.mrb[0].mxu0 %v2992
        %v3662 = vpop.f32.mrb[0].mxu0
        %v3663 = vadd.f32 %v3278, %v3662
        %v3664 = vpop.f32.mrb[0].mxu0
        %3665 = vmatprep.mubr.f32.mxu0 0.0
        %3666 = vmatmul.mubr.f32.gmra.mrb[0].mxu0 %v2995
        %v3667 = vpop.f32.mrb[0].mxu0
        %v3668 = vadd.f32 %v3283, %v3667
        %v3669 = vpop.f32.mrb[0].mxu0
        %3670 = vmatprep.mubr.f32.mxu0 0.0
        %3671 = vmatmul.mubr.f32.gmra.mrb[0].mxu0 %v2998
        %v3672 = vpop.f32.mrb[0].mxu0
        %v3673 = vadd.f32 %v3288, %v3672
        %v3674 = vpop.f32.mrb[0].mxu0
        %3675 = vmatprep.mubr.f32.mxu0 0.0
        %3676 = vmatmul.mubr.f32.gmra.mrb[0].mxu0 %v3001
        %v3677 = vpop.f32.mrb[0].mxu0
        %v3678 = vadd.f32 %v3293, %v3677
        %v3679 = vpop.f32.mrb[0].mxu0
        %3680 = vmatprep.mubr.f32.mxu0 0.0
        %3681 = vmatmul.mubr.f32.gmra.mrb[0].mxu0 %v3004
        %v3682 = vpop.f32.mrb[0].mxu0
        %v3683 = vadd.f32 %v3298, %v3682
        %v3684 = vpop.f32.mrb[0].mxu0
        %3685 = vmatprep.mubr.f32.mxu0 0.0
        %3686 = vmatmul.mubr.f32.gmra.mrb[0].mxu0 %v3007
        %v3687 = vpop.f32.mrb[0].mxu0
        %v3688 = vadd.f32 %v3303, %v3687
        %v3689 = vpop.f32.mrb[0].mxu0
        %3690 = vmatprep.mubr.f32.mxu0 0.0
        %3691 = vmatmul.mubr.f32.gmra.mrb[0].mxu0 %v3010
        %v3692 = vpop.f32.mrb[0].mxu0
        %v3693 = vadd.f32 %v3308, %v3692
        %v3694 = vpop.f32.mrb[0].mxu0
        %3695 = vmatprep.mubr.f32.mxu0 0.0
        %3696 = vmatmul.mubr.f32.gmra.mrb[0].mxu0 %v3013
        %v3697 = vpop.f32.mrb[0].mxu0
        %v3698 = vadd.f32 %v3313, %v3697
        %v3699 = vpop.f32.mrb[0].mxu0
        %3700 = vmatprep.mubr.f32.mxu0 0.0
        %3701 = vmatmul.mubr.f32.gmra.mrb[0].mxu0 %v3016
        %v3702 = vpop.f32.mrb[0].mxu0
        %v3703 = vadd.f32 %v3318, %v3702
        %v3704 = vpop.f32.mrb[0].mxu0
        %3705 = vmatprep.mubr.f32.mxu0 0.0
        %3706 = vmatmul.mubr.f32.gmra.mrb[0].mxu0 %v3019
        %v3707 = vpop.f32.mrb[0].mxu0
        %v3708 = vadd.f32 %v3323, %v3707
        %v3709 = vpop.f32.mrb[0].mxu0
        %3710 = vmatprep.mubr.f32.mxu0 0.0
        %3711 = vmatmul.mubr.f32.gmra.mrb[0].mxu0 %v3022
        %v3712 = vpop.f32.mrb[0].mxu0
        %v3713 = vadd.f32 %v3328, %v3712
        %v3714 = vpop.f32.mrb[0].mxu0
        %3715 = vmatprep.mubr.f32.mxu0 0.0
        %3716 = vmatmul.mubr.f32.gmra.mrb[0].mxu0 %v3025
        %v3717 = vpop.f32.mrb[0].mxu0
        %v3718 = vadd.f32 %v3333, %v3717
        %v3719 = vpop.f32.mrb[0].mxu0
        %3720 = vmatprep.mubr.f32.mxu0 0.0
        %3721 = vmatmul.mubr.f32.gmra.mrb[0].mxu0 %v3028
        %v3722 = vpop.f32.mrb[0].mxu0
        %v3723 = vadd.f32 %v3338, %v3722
        %v3724 = vpop.f32.mrb[0].mxu0
        %3725 = vmatprep.mubr.f32.mxu0 0.0
        %3726 = vmatmul.mubr.f32.gmra.mrb[0].mxu0 %v3031
        %v3727 = vpop.f32.mrb[0].mxu0
        %v3728 = vadd.f32 %v3343, %v3727
        %v3729 = vpop.f32.mrb[0].mxu0
        %3730 = vmatprep.mubr.f32.mxu0 0.0
        %3731 = vmatmul.mubr.f32.gmra.mrb[0].mxu0 %v3034
        %v3732 = vpop.f32.mrb[0].mxu0
        %v3733 = vadd.f32 %v3348, %v3732
        %v3734 = vpop.f32.mrb[0].mxu0
        %3735 = vmatprep.mubr.f32.mxu0 0.0
        %3736 = vmatmul.mubr.f32.gmra.mrb[0].mxu0 %v3037
        %v3737 = vpop.f32.mrb[0].mxu0
        %v3738 = vadd.f32 %v3353, %v3737
        %v3739 = vpop.f32.mrb[0].mxu0
        %3740 = vmatprep.mubr.f32.mxu0 0.0
        %3741 = vmatmul.mubr.f32.gmra.mrb[0].mxu0 %v3040
        %v3742 = vpop.f32.mrb[0].mxu0
        %v3743 = vadd.f32 %v3358, %v3742
        %v3744 = vpop.f32.mrb[0].mxu0
        %3745 = vmatprep.mubr.f32.mxu0 0.0
        %3746 = vmatmul.mubr.f32.gmra.mrb[0].mxu0 %v3043
        %v3747 = vpop.f32.mrb[0].mxu0
        %v3748 = vadd.f32 %v3363, %v3747
        %v3749 = vpop.f32.mrb[0].mxu0
        %3750 = vmatprep.mubr.f32.mxu0 0.0
        %3751 = vmatmul.mubr.f32.gmra.mrb[0].mxu0 %v3046
        %v3752 = vpop.f32.mrb[0].mxu0
        %v3753 = vadd.f32 %v3368, %v3752
        %v3754 = vpop.f32.mrb[0].mxu0
        %3755 = vmatprep.mubr.f32.mxu0 0.0
        %3756 = vmatmul.mubr.f32.gmra.mrb[0].mxu0 %v3049
        %v3757 = vpop.f32.mrb[0].mxu0
        %v3758 = vadd.f32 %v3373, %v3757
        %v3759 = vpop.f32.mrb[0].mxu0
        %3760 = vmatprep.mubr.f32.mxu0 0.0
        %3761 = vmatmul.mubr.f32.gmra.mrb[0].mxu0 %v3052
        %v3762 = vpop.f32.mrb[0].mxu0
        %v3763 = vadd.f32 %v3378, %v3762
        %v3764 = vpop.f32.mrb[0].mxu0
        %3765 = vmatprep.mubr.f32.mxu0 0.0
        %3766 = vmatmul.mubr.f32.gmra.mrb[0].mxu0 %v3055
        %v3767 = vpop.f32.mrb[0].mxu0
        %v3768 = vadd.f32 %v3383, %v3767
        %v3769 = vpop.f32.mrb[0].mxu0
        %3770 = vmatprep.mubr.f32.mxu0 0.0
        %3771 = vmatmul.mubr.f32.gmra.mrb[0].mxu0 %v3058
        %v3772 = vpop.f32.mrb[0].mxu0
        %v3773 = vadd.f32 %v3388, %v3772
        %v3774 = vpop.f32.mrb[0].mxu0
        %3775 = vmatprep.mubr.f32.mxu0 0.0
        %3776 = vmatmul.mubr.f32.gmra.mrb[0].mxu0 %v3061
        %v3777 = vpop.f32.mrb[0].mxu0
        %v3778 = vadd.f32 %v3393, %v3777
        %v3779 = vpop.f32.mrb[0].mxu0
        %3780 = vmatprep.mubr.f32.mxu0 0.0
        %3781 = vmatmul.mubr.f32.gmra.mrb[0].mxu0 %v3064
        %v3782 = vpop.f32.mrb[0].mxu0
        %v3783 = vadd.f32 %v3398, %v3782
        %v3784 = vpop.f32.mrb[0].mxu0
        %3785 = vmatprep.mubr.f32.mxu0 0.0
        %3786 = vmatmul.mubr.f32.gmra.mrb[0].mxu0 %v3067
        %v3787 = vpop.f32.mrb[0].mxu0
        %v3788 = vadd.f32 %v3403, %v3787
        %v3789 = vpop.f32.mrb[0].mxu0
        %3790 = vmatprep.mubr.f32.mxu0 0.0
        %3791 = vmatmul.mubr.f32.gmra.mrb[0].mxu0 %v3070
        %v3792 = vpop.f32.mrb[0].mxu0
        %v3793 = vadd.f32 %v3408, %v3792
        %v3794 = vpop.f32.mrb[0].mxu0
        %3795 = vmatprep.mubr.f32.mxu0 0.0
        %3796 = vmatmul.mubr.f32.gmra.mrb[0].mxu0 %v3073
        %v3797 = vpop.f32.mrb[0].mxu0
        %v3798 = vadd.f32 %v3413, %v3797
        %v3799 = vpop.f32.mrb[0].mxu0
        %3800 = vmatprep.mubr.f32.mxu0 0.0
        %3801 = vmatmul.mubr.f32.gmra.mrb[0].mxu0 %v3076
        %v3802 = vpop.f32.mrb[0].mxu0
        %v3803 = vadd.f32 %v3418, %v3802
        %v3804 = vpop.f32.mrb[0].mxu0
        %3805 = vmatprep.mubr.f32.mxu0 0.0
        %3806 = vmatmul.mubr.f32.gmra.mrb[0].mxu0 %v3079
        %v3807 = vpop.f32.mrb[0].mxu0
        %v3808 = vadd.f32 %v3423, %v3807
        %v3809 = vpop.f32.mrb[0].mxu0
        %3810 = vmatprep.mubr.f32.mxu0 0.0
        %3811 = vmatmul.mubr.f32.gmra.mrb[0].mxu0 %v3082
        %v3812 = vpop.f32.mrb[0].mxu0
        %v3813 = vadd.f32 %v3428, %v3812
        %v3814 = vpop.f32.mrb[0].mxu0
        %3815 = vmatprep.mubr.f32.mxu0 0.0
        %3816 = vmatmul.mubr.f32.gmra.mrb[0].mxu0 %v3085
        %v3817 = vpop.f32.mrb[0].mxu0
        %v3818 = vadd.f32 %v3433, %v3817
        %v3819 = vpop.f32.mrb[0].mxu0
        %3820 = vmatprep.mubr.f32.mxu0 0.0
        %3821 = vmatmul.mubr.f32.gmra.mrb[0].mxu0 %v3088
        %v3822 = vpop.f32.mrb[0].mxu0
        %v3823 = vadd.f32 %v3438, %v3822
        %v3824 = vpop.f32.mrb[0].mxu0
        %3825 = vmatprep.mubr.f32.mxu0 0.0
        %3826 = vmatmul.mubr.f32.gmra.mrb[0].mxu0 %v3091
        %v3827 = vpop.f32.mrb[0].mxu0
        %v3828 = vadd.f32 %v3443, %v3827
        %v3829 = vpop.f32.mrb[0].mxu0
        %3830 = vmatprep.mubr.f32.mxu0 0.0
        %3831 = vmatmul.mubr.f32.gmra.mrb[0].mxu0 %v3094
        %v3832 = vpop.f32.mrb[0].mxu0
        %v3833 = vadd.f32 %v3448, %v3832
        %v3834 = vpop.f32.mrb[0].mxu0
        %3835 = vmatprep.mubr.f32.mxu0 0.0
        %3836 = vmatmul.mubr.f32.gmra.mrb[0].mxu0 %v3097
        %v3837 = vpop.f32.mrb[0].mxu0
        %v3838 = vadd.f32 %v3453, %v3837
        %v3839 = vpop.f32.mrb[0].mxu0
        %3840 = vmatprep.mubr.f32.mxu0 0.0
        %3841 = vmatmul.mubr.f32.gmra.mrb[0].mxu0 %v3100
        %v3842 = vpop.f32.mrb[0].mxu0
        %v3843 = vadd.f32 %v3458, %v3842
        %v3844 = vpop.f32.mrb[0].mxu0
        %3845 = vmatprep.mubr.f32.mxu0 0.0
        %3846 = vmatmul.mubr.f32.gmra.mrb[0].mxu0 %v3103
        %v3847 = vpop.f32.mrb[0].mxu0
        %v3848 = vadd.f32 %v3463, %v3847
        %v3849 = vpop.f32.mrb[0].mxu0
        %3850 = vmatprep.mubr.f32.mxu0 0.0
        %3851 = vmatmul.mubr.f32.gmra.mrb[0].mxu0 %v3106
        %v3852 = vpop.f32.mrb[0].mxu0
        %v3853 = vadd.f32 %v3468, %v3852
        %v3854 = vpop.f32.mrb[0].mxu0
        %3855 = vmatprep.mubr.f32.mxu0 0.0
        %3856 = vmatmul.mubr.f32.gmra.mrb[0].mxu0 %v3109
        %v3857 = vpop.f32.mrb[0].mxu0
        %v3858 = vadd.f32 %v3473, %v3857
        %v3859 = vpop.f32.mrb[0].mxu0
        %3860 = vmatprep.mubr.f32.mxu0 0.0
        %3861 = vmatmul.mubr.f32.gmra.mrb[0].mxu0 %v3112
        %v3862 = vpop.f32.mrb[0].mxu0
        %v3863 = vadd.f32 %v3478, %v3862
        %v3864 = vpop.f32.mrb[0].mxu0
        %3865 = vmatprep.mubr.f32.mxu0 0.0
        %3866 = vmatmul.mubr.f32.gmra.mrb[0].mxu0 %v3115
        %v3867 = vpop.f32.mrb[0].mxu0
        %v3868 = vadd.f32 %v3483, %v3867
        %v3869 = vpop.f32.mrb[0].mxu0
        %3870 = vmatprep.mubr.f32.mxu0 0.0
        %3871 = vmatmul.mubr.f32.gmra.mrb[0].mxu0 %v3118
        %v3872 = vpop.f32.mrb[0].mxu0
        %v3873 = vadd.f32 %v3488, %v3872
        %v3874 = vpop.f32.mrb[0].mxu0
        %3875 = vmatprep.mubr.f32.mxu0 0.0
        %3876 = vmatmul.mubr.f32.gmra.mrb[0].mxu0 %v3121
        %v3877 = vpop.f32.mrb[0].mxu0
        %v3878 = vadd.f32 %v3493, %v3877
        %v3879 = vpop.f32.mrb[0].mxu0
        %3880 = vmatprep.mubr.f32.mxu0 0.0
        %3881 = vmatmul.mubr.f32.gmra.mrb[0].mxu0 %v3124
        %v3882 = vpop.f32.mrb[0].mxu0
        %v3883 = vadd.f32 %v3498, %v3882
        %v3884 = vpop.f32.mrb[0].mxu0
        %3885 = vmatprep.mubr.f32.mxu0 0.0
        %3886 = vmatmul.mubr.f32.gmra.mrb[0].mxu0 %v3127
        %v3887 = vpop.f32.mrb[0].mxu0
        %v3888 = vadd.f32 %v3503, %v3887
        %v3889 = vpop.f32.mrb[0].mxu0
        %3890 = vmatprep.mubr.f32.mxu0 0.0
        %3891 = vmatmul.mubr.f32.gmra.mrb[0].mxu0 %v3130
        %v3892 = vpop.f32.mrb[0].mxu0
        %v3893 = vadd.f32 %v3508, %v3892
        %v3894 = vpop.f32.mrb[0].mxu0
        %3895 = vmatprep.mubr.f32.mxu0 0.0
        %3896 = vmatmul.mubr.f32.gmra.mrb[0].mxu0 %v3133
        %v3897 = vpop.f32.mrb[0].mxu0
        %v3898 = vadd.f32 %v3513, %v3897
        %v3899 = vpop.f32.mrb[0].mxu0
        %3900 = vmatprep.mubr.f32.mxu0 0.0
        %3901 = vmatmul.mubr.f32.gmra.mrb[0].mxu0 %v3136
        %v3902 = vpop.f32.mrb[0].mxu0
        %v3903 = vadd.f32 %v3518, %v3902
        %v3904 = vpop.f32.mrb[0].mxu0
        %3905 = vmatprep.mubr.f32.mxu0 0.0
        %3906 = vmatmul.mubr.f32.gmra.mrb[0].mxu0 %v3139
        %v3907 = vpop.f32.mrb[0].mxu0
        %v3908 = vadd.f32 %v3523, %v3907
        %v3909 = vpop.f32.mrb[0].mxu0
        %3910 = vdwg.mxu0
        %v3911 = vadd.f32 %v2849, %v3593
        %v3912 = vadd.f32 %v2850, %v3598
        %v3913 = vadd.f32 %v2851, %v3603
        %v3914 = vadd.f32 %v2852, %v3608
        %v3915 = vadd.f32 %v2853, %v3613
        %v3916 = vadd.f32 %v2854, %v3618
        %v3917 = vadd.f32 %v2855, %v3623
        %v3918 = vadd.f32 %v2856, %v3628
        %v3919 = vadd.f32 %v2857, %v3633
        %v3920 = vadd.f32 %v2858, %v3638
        %v3921 = vadd.f32 %v2859, %v3643
        %v3922 = vadd.f32 %v2860, %v3648
        %v3923 = vadd.f32 %v2861, %v3653
        %v3924 = vadd.f32 %v2862, %v3658
        %v3925 = vadd.f32 %v2863, %v3663
        %v3926 = vadd.f32 %v2864, %v3668
        %v3927 = vadd.f32 %v2865, %v3673
        %v3928 = vadd.f32 %v2866, %v3678
        %v3929 = vadd.f32 %v2867, %v3683
        %v3930 = vadd.f32 %v2868, %v3688
        %v3931 = vadd.f32 %v2869, %v3693
        %v3932 = vadd.f32 %v2870, %v3698
        %v3933 = vadd.f32 %v2871, %v3703
        %v3934 = vadd.f32 %v2872, %v3708
        %v3935 = vadd.f32 %v2873, %v3713
        %v3936 = vadd.f32 %v2874, %v3718
        %v3937 = vadd.f32 %v2875, %v3723
        %v3938 = vadd.f32 %v2876, %v3728
        %v3939 = vadd.f32 %v2877, %v3733
        %v3940 = vadd.f32 %v2878, %v3738
        %v3941 = vadd.f32 %v2879, %v3743
        %v3942 = vadd.f32 %v2880, %v3748
        %v3943 = vadd.f32 %v2881, %v3753
        %v3944 = vadd.f32 %v2882, %v3758
        %v3945 = vadd.f32 %v2883, %v3763
        %v3946 = vadd.f32 %v2884, %v3768
        %v3947 = vadd.f32 %v2885, %v3773
        %v3948 = vadd.f32 %v2886, %v3778
        %v3949 = vadd.f32 %v2887, %v3783
        %v3950 = vadd.f32 %v2888, %v3788
        %v3951 = vadd.f32 %v2889, %v3793
        %v3952 = vadd.f32 %v2890, %v3798
        %v3953 = vadd.f32 %v2891, %v3803
        %v3954 = vadd.f32 %v2892, %v3808
        %v3955 = vadd.f32 %v2893, %v3813
        %v3956 = vadd.f32 %v2894, %v3818
        %v3957 = vadd.f32 %v2895, %v3823
        %v3958 = vadd.f32 %v2896, %v3828
        %v3959 = vadd.f32 %v2897, %v3833
        %v3960 = vadd.f32 %v2898, %v3838
        %v3961 = vadd.f32 %v2899, %v3843
        %v3962 = vadd.f32 %v2900, %v3848
        %v3963 = vadd.f32 %v2901, %v3853
        %v3964 = vadd.f32 %v2902, %v3858
        %v3965 = vadd.f32 %v2903, %v3863
        %v3966 = vadd.f32 %v2904, %v3868
        %v3967 = vadd.f32 %v2905, %v3873
        %v3968 = vadd.f32 %v2906, %v3878
        %v3969 = vadd.f32 %v2907, %v3883
        %v3970 = vadd.f32 %v2908, %v3888
        %v3971 = vadd.f32 %v2909, %v3893
        %v3972 = vadd.f32 %v2910, %v3898
        %v3973 = vadd.f32 %v2911, %v3903
        %v3974 = vadd.f32 %v2912, %v3908
        %v3975 = vxor.u32 %v3911, 2147483648
        %v3976 = vxor.u32 %v3912, 2147483648
        %v3977 = vxor.u32 %v3913, 2147483648
        %v3978 = vxor.u32 %v3914, 2147483648
        %v3979 = vxor.u32 %v3915, 2147483648
        %v3980 = vxor.u32 %v3916, 2147483648
        %v3981 = vxor.u32 %v3917, 2147483648
        %v3982 = vxor.u32 %v3918, 2147483648
        %v3983 = vxor.u32 %v3919, 2147483648
        %v3984 = vxor.u32 %v3920, 2147483648
        %v3985 = vxor.u32 %v3921, 2147483648
        %v3986 = vxor.u32 %v3922, 2147483648
        %v3987 = vxor.u32 %v3923, 2147483648
        %v3988 = vxor.u32 %v3924, 2147483648
        %v3989 = vxor.u32 %v3925, 2147483648
        %v3990 = vxor.u32 %v3926, 2147483648
        %v3991 = vxor.u32 %v3927, 2147483648
        %v3992 = vxor.u32 %v3928, 2147483648
        %v3993 = vxor.u32 %v3929, 2147483648
        %v3994 = vxor.u32 %v3930, 2147483648
        %v3995 = vxor.u32 %v3931, 2147483648
        %v3996 = vxor.u32 %v3932, 2147483648
        %v3997 = vxor.u32 %v3933, 2147483648
        %v3998 = vxor.u32 %v3934, 2147483648
        %v3999 = vxor.u32 %v3935, 2147483648
        %v4000 = vxor.u32 %v3936, 2147483648
        %v4001 = vxor.u32 %v3937, 2147483648
        %v4002 = vxor.u32 %v3938, 2147483648
        %v4003 = vxor.u32 %v3939, 2147483648
        %v4004 = vxor.u32 %v3940, 2147483648
        %v4005 = vxor.u32 %v3941, 2147483648
        %v4006 = vxor.u32 %v3942, 2147483648
        %v4007 = vxor.u32 %v3943, 2147483648
        %v4008 = vxor.u32 %v3944, 2147483648
        %v4009 = vxor.u32 %v3945, 2147483648
        %v4010 = vxor.u32 %v3946, 2147483648
        %v4011 = vxor.u32 %v3947, 2147483648
        %v4012 = vxor.u32 %v3948, 2147483648
        %v4013 = vxor.u32 %v3949, 2147483648
        %v4014 = vxor.u32 %v3950, 2147483648
        %v4015 = vxor.u32 %v3951, 2147483648
        %v4016 = vxor.u32 %v3952, 2147483648
        %v4017 = vxor.u32 %v3953, 2147483648
        %v4018 = vxor.u32 %v3954, 2147483648
        %v4019 = vxor.u32 %v3955, 2147483648
        %v4020 = vxor.u32 %v3956, 2147483648
        %v4021 = vxor.u32 %v3957, 2147483648
        %v4022 = vxor.u32 %v3958, 2147483648
        %v4023 = vxor.u32 %v3959, 2147483648
        %v4024 = vxor.u32 %v3960, 2147483648
        %v4025 = vxor.u32 %v3961, 2147483648
        %v4026 = vxor.u32 %v3962, 2147483648
        %v4027 = vxor.u32 %v3963, 2147483648
        %v4028 = vxor.u32 %v3964, 2147483648
        %v4029 = vxor.u32 %v3965, 2147483648
        %v4030 = vxor.u32 %v3966, 2147483648
        %v4031 = vxor.u32 %v3967, 2147483648
        %v4032 = vxor.u32 %v3968, 2147483648
        %v4033 = vxor.u32 %v3969, 2147483648
        %v4034 = vxor.u32 %v3970, 2147483648
        %v4035 = vxor.u32 %v3971, 2147483648
        %v4036 = vxor.u32 %v3972, 2147483648
        %v4037 = vxor.u32 %v3973, 2147483648
        %v4038 = vxor.u32 %v3974, 2147483648
        %v4039 = vmul.f32 %v3975, 1.442695
        %v4040 = vpow.pop %v4039
        %v4041 = vmul.f32 %v3976, 1.442695
        %v4042 = vpow.pop %v4041
        %v4043 = vmul.f32 %v3977, 1.442695
        %v4044 = vpow.pop %v4043
        %v4045 = vmul.f32 %v3978, 1.442695
        %v4046 = vpow.pop %v4045
        %v4047 = vmul.f32 %v3979, 1.442695
        %v4048 = vpow.pop %v4047
        %v4049 = vmul.f32 %v3980, 1.442695
        %v4050 = vpow.pop %v4049
        %v4051 = vmul.f32 %v3981, 1.442695
        %v4052 = vpow.pop %v4051
        %v4053 = vmul.f32 %v3982, 1.442695
        %v4054 = vpow.pop %v4053
        %v4055 = vmul.f32 %v3983, 1.442695
        %v4056 = vpow.pop %v4055
        %v4057 = vmul.f32 %v3984, 1.442695
        %v4058 = vpow.pop %v4057
        %v4059 = vmul.f32 %v3985, 1.442695
        %v4060 = vpow.pop %v4059
        %v4061 = vmul.f32 %v3986, 1.442695
        %v4062 = vpow.pop %v4061
        %v4063 = vmul.f32 %v3987, 1.442695
        %v4064 = vpow.pop %v4063
        %v4065 = vmul.f32 %v3988, 1.442695
        %v4066 = vpow.pop %v4065
        %v4067 = vmul.f32 %v3989, 1.442695
        %v4068 = vpow.pop %v4067
        %v4069 = vmul.f32 %v3990, 1.442695
        %v4070 = vpow.pop %v4069
        %v4071 = vmul.f32 %v3991, 1.442695
        %v4072 = vpow.pop %v4071
        %v4073 = vmul.f32 %v3992, 1.442695
        %v4074 = vpow.pop %v4073
        %v4075 = vmul.f32 %v3993, 1.442695
        %v4076 = vpow.pop %v4075
        %v4077 = vmul.f32 %v3994, 1.442695
        %v4078 = vpow.pop %v4077
        %v4079 = vmul.f32 %v3995, 1.442695
        %v4080 = vpow.pop %v4079
        %v4081 = vmul.f32 %v3996, 1.442695
        %v4082 = vpow.pop %v4081
        %v4083 = vmul.f32 %v3997, 1.442695
        %v4084 = vpow.pop %v4083
        %v4085 = vmul.f32 %v3998, 1.442695
        %v4086 = vpow.pop %v4085
        %v4087 = vmul.f32 %v3999, 1.442695
        %v4088 = vpow.pop %v4087
        %v4089 = vmul.f32 %v4000, 1.442695
        %v4090 = vpow.pop %v4089
        %v4091 = vmul.f32 %v4001, 1.442695
        %v4092 = vpow.pop %v4091
        %v4093 = vmul.f32 %v4002, 1.442695
        %v4094 = vpow.pop %v4093
        %v4095 = vmul.f32 %v4003, 1.442695
        %v4096 = vpow.pop %v4095
        %v4097 = vmul.f32 %v4004, 1.442695
        %v4098 = vpow.pop %v4097
        %v4099 = vmul.f32 %v4005, 1.442695
        %v4100 = vpow.pop %v4099
        %v4101 = vmul.f32 %v4006, 1.442695
        %v4102 = vpow.pop %v4101
        %v4103 = vmul.f32 %v4007, 1.442695
        %v4104 = vpow.pop %v4103
        %v4105 = vmul.f32 %v4008, 1.442695
        %v4106 = vpow.pop %v4105
        %v4107 = vmul.f32 %v4009, 1.442695
        %v4108 = vpow.pop %v4107
        %v4109 = vmul.f32 %v4010, 1.442695
        %v4110 = vpow.pop %v4109
        %v4111 = vmul.f32 %v4011, 1.442695
        %v4112 = vpow.pop %v4111
        %v4113 = vmul.f32 %v4012, 1.442695
        %v4114 = vpow.pop %v4113
        %v4115 = vmul.f32 %v4013, 1.442695
        %v4116 = vpow.pop %v4115
        %v4117 = vmul.f32 %v4014, 1.442695
        %v4118 = vpow.pop %v4117
        %v4119 = vmul.f32 %v4015, 1.442695
        %v4120 = vpow.pop %v4119
        %v4121 = vmul.f32 %v4016, 1.442695
        %v4122 = vpow.pop %v4121
        %v4123 = vmul.f32 %v4017, 1.442695
        %v4124 = vpow.pop %v4123
        %v4125 = vmul.f32 %v4018, 1.442695
        %v4126 = vpow.pop %v4125
        %v4127 = vmul.f32 %v4019, 1.442695
        %v4128 = vpow.pop %v4127
        %v4129 = vmul.f32 %v4020, 1.442695
        %v4130 = vpow.pop %v4129
        %v4131 = vmul.f32 %v4021, 1.442695
        %v4132 = vpow.pop %v4131
        %v4133 = vmul.f32 %v4022, 1.442695
        %v4134 = vpow.pop %v4133
        %v4135 = vmul.f32 %v4023, 1.442695
        %v4136 = vpow.pop %v4135
        %v4137 = vmul.f32 %v4024, 1.442695
        %v4138 = vpow.pop %v4137
        %v4139 = vmul.f32 %v4025, 1.442695
        %v4140 = vpow.pop %v4139
        %v4141 = vmul.f32 %v4026, 1.442695
        %v4142 = vpow.pop %v4141
        %v4143 = vmul.f32 %v4027, 1.442695
        %v4144 = vpow.pop %v4143
        %v4145 = vmul.f32 %v4028, 1.442695
        %v4146 = vpow.pop %v4145
        %v4147 = vmul.f32 %v4029, 1.442695
        %v4148 = vpow.pop %v4147
        %v4149 = vmul.f32 %v4030, 1.442695
        %v4150 = vpow.pop %v4149
        %v4151 = vmul.f32 %v4031, 1.442695
        %v4152 = vpow.pop %v4151
        %v4153 = vmul.f32 %v4032, 1.442695
        %v4154 = vpow.pop %v4153
        %v4155 = vmul.f32 %v4033, 1.442695
        %v4156 = vpow.pop %v4155
        %v4157 = vmul.f32 %v4034, 1.442695
        %v4158 = vpow.pop %v4157
        %v4159 = vmul.f32 %v4035, 1.442695
        %v4160 = vpow.pop %v4159
        %v4161 = vmul.f32 %v4036, 1.442695
        %v4162 = vpow.pop %v4161
        %v4163 = vmul.f32 %v4037, 1.442695
        %v4164 = vpow.pop %v4163
        %v4165 = vmul.f32 %v4038, 1.442695
        %v4166 = vpow.pop %v4165
        %v4167 = vadd.f32 %v4040, 1.0
        %v4168 = vadd.f32 %v4042, 1.0
        %v4169 = vadd.f32 %v4044, 1.0
        %v4170 = vadd.f32 %v4046, 1.0
        %v4171 = vadd.f32 %v4048, 1.0
        %v4172 = vadd.f32 %v4050, 1.0
        %v4173 = vadd.f32 %v4052, 1.0
        %v4174 = vadd.f32 %v4054, 1.0
        %v4175 = vadd.f32 %v4056, 1.0
        %v4176 = vadd.f32 %v4058, 1.0
        %v4177 = vadd.f32 %v4060, 1.0
        %v4178 = vadd.f32 %v4062, 1.0
        %v4179 = vadd.f32 %v4064, 1.0
        %v4180 = vadd.f32 %v4066, 1.0
        %v4181 = vadd.f32 %v4068, 1.0
        %v4182 = vadd.f32 %v4070, 1.0
        %v4183 = vadd.f32 %v4072, 1.0
        %v4184 = vadd.f32 %v4074, 1.0
        %v4185 = vadd.f32 %v4076, 1.0
        %v4186 = vadd.f32 %v4078, 1.0
        %v4187 = vadd.f32 %v4080, 1.0
        %v4188 = vadd.f32 %v4082, 1.0
        %v4189 = vadd.f32 %v4084, 1.0
        %v4190 = vadd.f32 %v4086, 1.0
        %v4191 = vadd.f32 %v4088, 1.0
        %v4192 = vadd.f32 %v4090, 1.0
        %v4193 = vadd.f32 %v4092, 1.0
        %v4194 = vadd.f32 %v4094, 1.0
        %v4195 = vadd.f32 %v4096, 1.0
        %v4196 = vadd.f32 %v4098, 1.0
        %v4197 = vadd.f32 %v4100, 1.0
        %v4198 = vadd.f32 %v4102, 1.0
        %v4199 = vadd.f32 %v4104, 1.0
        %v4200 = vadd.f32 %v4106, 1.0
        %v4201 = vadd.f32 %v4108, 1.0
        %v4202 = vadd.f32 %v4110, 1.0
        %v4203 = vadd.f32 %v4112, 1.0
        %v4204 = vadd.f32 %v4114, 1.0
        %v4205 = vadd.f32 %v4116, 1.0
        %v4206 = vadd.f32 %v4118, 1.0
        %v4207 = vadd.f32 %v4120, 1.0
        %v4208 = vadd.f32 %v4122, 1.0
        %v4209 = vadd.f32 %v4124, 1.0
        %v4210 = vadd.f32 %v4126, 1.0
        %v4211 = vadd.f32 %v4128, 1.0
        %v4212 = vadd.f32 %v4130, 1.0
        %v4213 = vadd.f32 %v4132, 1.0
        %v4214 = vadd.f32 %v4134, 1.0
        %v4215 = vadd.f32 %v4136, 1.0
        %v4216 = vadd.f32 %v4138, 1.0
        %v4217 = vadd.f32 %v4140, 1.0
        %v4218 = vadd.f32 %v4142, 1.0
        %v4219 = vadd.f32 %v4144, 1.0
        %v4220 = vadd.f32 %v4146, 1.0
        %v4221 = vadd.f32 %v4148, 1.0
        %v4222 = vadd.f32 %v4150, 1.0
        %v4223 = vadd.f32 %v4152, 1.0
        %v4224 = vadd.f32 %v4154, 1.0
        %v4225 = vadd.f32 %v4156, 1.0
        %v4226 = vadd.f32 %v4158, 1.0
        %v4227 = vadd.f32 %v4160, 1.0
        %v4228 = vadd.f32 %v4162, 1.0
        %v4229 = vadd.f32 %v4164, 1.0
        %v4230 = vadd.f32 %v4166, 1.0
        %v4231 = vrcp.pop %v4167
        %v4232 = vmul.f32 1.0, %v4231
        %v4233 = vrcp.pop %v4168
        %v4234 = vmul.f32 1.0, %v4233
        %v4235 = vrcp.pop %v4169
        %v4236 = vmul.f32 1.0, %v4235
        %v4237 = vrcp.pop %v4170
        %v4238 = vmul.f32 1.0, %v4237
        %v4239 = vrcp.pop %v4171
        %v4240 = vmul.f32 1.0, %v4239
        %v4241 = vrcp.pop %v4172
        %v4242 = vmul.f32 1.0, %v4241
        %v4243 = vrcp.pop %v4173
        %v4244 = vmul.f32 1.0, %v4243
        %v4245 = vrcp.pop %v4174
        %v4246 = vmul.f32 1.0, %v4245
        %v4247 = vrcp.pop %v4175
        %v4248 = vmul.f32 1.0, %v4247
        %v4249 = vrcp.pop %v4176
        %v4250 = vmul.f32 1.0, %v4249
        %v4251 = vrcp.pop %v4177
        %v4252 = vmul.f32 1.0, %v4251
        %v4253 = vrcp.pop %v4178
        %v4254 = vmul.f32 1.0, %v4253
        %v4255 = vrcp.pop %v4179
        %v4256 = vmul.f32 1.0, %v4255
        %v4257 = vrcp.pop %v4180
        %v4258 = vmul.f32 1.0, %v4257
        %v4259 = vrcp.pop %v4181
        %v4260 = vmul.f32 1.0, %v4259
        %v4261 = vrcp.pop %v4182
        %v4262 = vmul.f32 1.0, %v4261
        %v4263 = vrcp.pop %v4183
        %v4264 = vmul.f32 1.0, %v4263
        %v4265 = vrcp.pop %v4184
        %v4266 = vmul.f32 1.0, %v4265
        %v4267 = vrcp.pop %v4185
        %v4268 = vmul.f32 1.0, %v4267
        %v4269 = vrcp.pop %v4186
        %v4270 = vmul.f32 1.0, %v4269
        %v4271 = vrcp.pop %v4187
        %v4272 = vmul.f32 1.0, %v4271
        %v4273 = vrcp.pop %v4188
        %v4274 = vmul.f32 1.0, %v4273
        %v4275 = vrcp.pop %v4189
        %v4276 = vmul.f32 1.0, %v4275
        %v4277 = vrcp.pop %v4190
        %v4278 = vmul.f32 1.0, %v4277
        %v4279 = vrcp.pop %v4191
        %v4280 = vmul.f32 1.0, %v4279
        %v4281 = vrcp.pop %v4192
        %v4282 = vmul.f32 1.0, %v4281
        %v4283 = vrcp.pop %v4193
        %v4284 = vmul.f32 1.0, %v4283
        %v4285 = vrcp.pop %v4194
        %v4286 = vmul.f32 1.0, %v4285
        %v4287 = vrcp.pop %v4195
        %v4288 = vmul.f32 1.0, %v4287
        %v4289 = vrcp.pop %v4196
        %v4290 = vmul.f32 1.0, %v4289
        %v4291 = vrcp.pop %v4197
        %v4292 = vmul.f32 1.0, %v4291
        %v4293 = vrcp.pop %v4198
        %v4294 = vmul.f32 1.0, %v4293
        %v4295 = vrcp.pop %v4199
        %v4296 = vmul.f32 1.0, %v4295
        %v4297 = vrcp.pop %v4200
        %v4298 = vmul.f32 1.0, %v4297
        %v4299 = vrcp.pop %v4201
        %v4300 = vmul.f32 1.0, %v4299
        %v4301 = vrcp.pop %v4202
        %v4302 = vmul.f32 1.0, %v4301
        %v4303 = vrcp.pop %v4203
        %v4304 = vmul.f32 1.0, %v4303
        %v4305 = vrcp.pop %v4204
        %v4306 = vmul.f32 1.0, %v4305
        %v4307 = vrcp.pop %v4205
        %v4308 = vmul.f32 1.0, %v4307
        %v4309 = vrcp.pop %v4206
        %v4310 = vmul.f32 1.0, %v4309
        %v4311 = vrcp.pop %v4207
        %v4312 = vmul.f32 1.0, %v4311
        %v4313 = vrcp.pop %v4208
        %v4314 = vmul.f32 1.0, %v4313
        %v4315 = vrcp.pop %v4209
        %v4316 = vmul.f32 1.0, %v4315
        %v4317 = vrcp.pop %v4210
        %v4318 = vmul.f32 1.0, %v4317
        %v4319 = vrcp.pop %v4211
        %v4320 = vmul.f32 1.0, %v4319
        %v4321 = vrcp.pop %v4212
        %v4322 = vmul.f32 1.0, %v4321
        %v4323 = vrcp.pop %v4213
        %v4324 = vmul.f32 1.0, %v4323
        %v4325 = vrcp.pop %v4214
        %v4326 = vmul.f32 1.0, %v4325
        %v4327 = vrcp.pop %v4215
        %v4328 = vmul.f32 1.0, %v4327
        %v4329 = vrcp.pop %v4216
        %v4330 = vmul.f32 1.0, %v4329
        %v4331 = vrcp.pop %v4217
        %v4332 = vmul.f32 1.0, %v4331
        %v4333 = vrcp.pop %v4218
        %v4334 = vmul.f32 1.0, %v4333
        %v4335 = vrcp.pop %v4219
        %v4336 = vmul.f32 1.0, %v4335
        %v4337 = vrcp.pop %v4220
        %v4338 = vmul.f32 1.0, %v4337
        %v4339 = vrcp.pop %v4221
        %v4340 = vmul.f32 1.0, %v4339
        %v4341 = vrcp.pop %v4222
        %v4342 = vmul.f32 1.0, %v4341
        %v4343 = vrcp.pop %v4223
        %v4344 = vmul.f32 1.0, %v4343
        %v4345 = vrcp.pop %v4224
        %v4346 = vmul.f32 1.0, %v4345
        %v4347 = vrcp.pop %v4225
        %v4348 = vmul.f32 1.0, %v4347
        %v4349 = vrcp.pop %v4226
        %v4350 = vmul.f32 1.0, %v4349
        %v4351 = vrcp.pop %v4227
        %v4352 = vmul.f32 1.0, %v4351
        %v4353 = vrcp.pop %v4228
        %v4354 = vmul.f32 1.0, %v4353
        %v4355 = vrcp.pop %v4229
        %v4356 = vmul.f32 1.0, %v4355
        %v4357 = vrcp.pop %v4230
        %v4358 = vmul.f32 1.0, %v4357
        %v4359 = vtanh.pop %v3911
        %v4360 = vtanh.pop %v3912
        %v4361 = vtanh.pop %v3913
        %v4362 = vtanh.pop %v3914
        %v4363 = vtanh.pop %v3915
        %v4364 = vtanh.pop %v3916
        %v4365 = vtanh.pop %v3917
        %v4366 = vtanh.pop %v3918
        %v4367 = vtanh.pop %v3919
        %v4368 = vtanh.pop %v3920
        %v4369 = vtanh.pop %v3921
        %v4370 = vtanh.pop %v3922
        %v4371 = vtanh.pop %v3923
        %v4372 = vtanh.pop %v3924
        %v4373 = vtanh.pop %v3925
        %v4374 = vtanh.pop %v3926
        %v4375 = vtanh.pop %v3927
        %v4376 = vtanh.pop %v3928
        %v4377 = vtanh.pop %v3929
        %v4378 = vtanh.pop %v3930
        %v4379 = vtanh.pop %v3931
        %v4380 = vtanh.pop %v3932
        %v4381 = vtanh.pop %v3933
        %v4382 = vtanh.pop %v3934
        %v4383 = vtanh.pop %v3935
        %v4384 = vtanh.pop %v3936
        %v4385 = vtanh.pop %v3937
        %v4386 = vtanh.pop %v3938
        %v4387 = vtanh.pop %v3939
        %v4388 = vtanh.pop %v3940
        %v4389 = vtanh.pop %v3941
        %v4390 = vtanh.pop %v3942
        %v4391 = vtanh.pop %v3943
        %v4392 = vtanh.pop %v3944
        %v4393 = vtanh.pop %v3945
        %v4394 = vtanh.pop %v3946
        %v4395 = vtanh.pop %v3947
        %v4396 = vtanh.pop %v3948
        %v4397 = vtanh.pop %v3949
        %v4398 = vtanh.pop %v3950
        %v4399 = vtanh.pop %v3951
        %v4400 = vtanh.pop %v3952
        %v4401 = vtanh.pop %v3953
        %v4402 = vtanh.pop %v3954
        %v4403 = vtanh.pop %v3955
        %v4404 = vtanh.pop %v3956
        %v4405 = vtanh.pop %v3957
        %v4406 = vtanh.pop %v3958
        %v4407 = vtanh.pop %v3959
        %v4408 = vtanh.pop %v3960
        %v4409 = vtanh.pop %v3961
        %v4410 = vtanh.pop %v3962
        %v4411 = vtanh.pop %v3963
        %v4412 = vtanh.pop %v3964
        %v4413 = vtanh.pop %v3965
        %v4414 = vtanh.pop %v3966
        %v4415 = vtanh.pop %v3967
        %v4416 = vtanh.pop %v3968
        %v4417 = vtanh.pop %v3969
        %v4418 = vtanh.pop %v3970
        %v4419 = vtanh.pop %v3971
        %v4420 = vtanh.pop %v3972
        %v4421 = vtanh.pop %v3973
        %v4422 = vtanh.pop %v3974
        %v4423 = vld [vmem:[#allocation3] sm:$0xff]
        %v4424 = vld [vmem:[#allocation3 + $0x8] sm:$0xff]
        %v4425 = vld [vmem:[#allocation3 + $0x10] sm:$0xff]
        %v4426 = vld [vmem:[#allocation3 + $0x18] sm:$0xff]
        %v4427 = vld [vmem:[#allocation3 + $0x20] sm:$0xff]
        %v4428 = vld [vmem:[#allocation3 + $0x28] sm:$0xff]
        %v4429 = vld [vmem:[#allocation3 + $0x30] sm:$0xff]
        %v4430 = vld [vmem:[#allocation3 + $0x38] sm:$0xff]
        %v4431 = vld [vmem:[#allocation3 + $0x40] sm:$0xff]
        %v4432 = vld [vmem:[#allocation3 + $0x48] sm:$0xff]
        %v4433 = vld [vmem:[#allocation3 + $0x50] sm:$0xff]
        %v4434 = vld [vmem:[#allocation3 + $0x58] sm:$0xff]
        %v4435 = vld [vmem:[#allocation3 + $0x60] sm:$0xff]
        %v4436 = vld [vmem:[#allocation3 + $0x68] sm:$0xff]
        %v4437 = vld [vmem:[#allocation3 + $0x70] sm:$0xff]
        %v4438 = vld [vmem:[#allocation3 + $0x78] sm:$0xff]
        %v4439 = vld [vmem:[#allocation3 + $0x80] sm:$0xff]
        %v4440 = vld [vmem:[#allocation3 + $0x88] sm:$0xff]
        %v4441 = vld [vmem:[#allocation3 + $0x90] sm:$0xff]
        %v4442 = vld [vmem:[#allocation3 + $0x98] sm:$0xff]
        %v4443 = vld [vmem:[#allocation3 + $0xa0] sm:$0xff]
        %v4444 = vld [vmem:[#allocation3 + $0xa8] sm:$0xff]
        %v4445 = vld [vmem:[#allocation3 + $0xb0] sm:$0xff]
        %v4446 = vld [vmem:[#allocation3 + $0xb8] sm:$0xff]
        %v4447 = vld [vmem:[#allocation3 + $0xc0] sm:$0xff]
        %v4448 = vld [vmem:[#allocation3 + $0xc8] sm:$0xff]
        %v4449 = vld [vmem:[#allocation3 + $0xd0] sm:$0xff]
        %v4450 = vld [vmem:[#allocation3 + $0xd8] sm:$0xff]
        %v4451 = vld [vmem:[#allocation3 + $0xe0] sm:$0xff]
        %v4452 = vld [vmem:[#allocation3 + $0xe8] sm:$0xff]
        %v4453 = vld [vmem:[#allocation3 + $0xf0] sm:$0xff]
        %v4454 = vld [vmem:[#allocation3 + $0xf8] sm:$0xff]
        %v4455 = vld [vmem:[#allocation3 + $0x100] sm:$0xff]
        %v4456 = vld [vmem:[#allocation3 + $0x108] sm:$0xff]
        %v4457 = vld [vmem:[#allocation3 + $0x110] sm:$0xff]
        %v4458 = vld [vmem:[#allocation3 + $0x118] sm:$0xff]
        %v4459 = vld [vmem:[#allocation3 + $0x120] sm:$0xff]
        %v4460 = vld [vmem:[#allocation3 + $0x128] sm:$0xff]
        %v4461 = vld [vmem:[#allocation3 + $0x130] sm:$0xff]
        %v4462 = vld [vmem:[#allocation3 + $0x138] sm:$0xff]
        %v4463 = vld [vmem:[#allocation3 + $0x140] sm:$0xff]
        %v4464 = vld [vmem:[#allocation3 + $0x148] sm:$0xff]
        %v4465 = vld [vmem:[#allocation3 + $0x150] sm:$0xff]
        %v4466 = vld [vmem:[#allocation3 + $0x158] sm:$0xff]
        %v4467 = vld [vmem:[#allocation3 + $0x160] sm:$0xff]
        %v4468 = vld [vmem:[#allocation3 + $0x168] sm:$0xff]
        %v4469 = vld [vmem:[#allocation3 + $0x170] sm:$0xff]
        %v4470 = vld [vmem:[#allocation3 + $0x178] sm:$0xff]
        %v4471 = vld [vmem:[#allocation3 + $0x180] sm:$0xff]
        %v4472 = vld [vmem:[#allocation3 + $0x188] sm:$0xff]
        %v4473 = vld [vmem:[#allocation3 + $0x190] sm:$0xff]
        %v4474 = vld [vmem:[#allocation3 + $0x198] sm:$0xff]
        %v4475 = vld [vmem:[#allocation3 + $0x1a0] sm:$0xff]
        %v4476 = vld [vmem:[#allocation3 + $0x1a8] sm:$0xff]
        %v4477 = vld [vmem:[#allocation3 + $0x1b0] sm:$0xff]
        %v4478 = vld [vmem:[#allocation3 + $0x1b8] sm:$0xff]
        %v4479 = vld [vmem:[#allocation3 + $0x1c0] sm:$0xff]
        %v4480 = vld [vmem:[#allocation3 + $0x1c8] sm:$0xff]
        %v4481 = vld [vmem:[#allocation3 + $0x1d0] sm:$0xff]
        %v4482 = vld [vmem:[#allocation3 + $0x1d8] sm:$0xff]
        %v4483 = vld [vmem:[#allocation3 + $0x1e0] sm:$0xff]
        %v4484 = vld [vmem:[#allocation3 + $0x1e8] sm:$0xff]
        %v4485 = vld [vmem:[#allocation3 + $0x1f0] sm:$0xff]
        %v4486 = vld [vmem:[#allocation3 + $0x1f8] sm:$0xff]
        %4551 = vrot.lane.b32.xlu0 %v4423, 32
        %v4552 = vpop.permute.xlu0 %4551
        %4553 = vrot.lane.b32.xlu0 %v4424, 32
        %v4554 = vpop.permute.xlu0 %4553
        %4555 = vrot.lane.b32.xlu0 %v4425, 32
        %v4556 = vpop.permute.xlu0 %4555
        %4557 = vrot.lane.b32.xlu0 %v4426, 32
        %v4558 = vpop.permute.xlu0 %4557
        %4559 = vrot.lane.b32.xlu0 %v4427, 32
        %v4560 = vpop.permute.xlu0 %4559
        %4561 = vrot.lane.b32.xlu0 %v4428, 32
        %v4562 = vpop.permute.xlu0 %4561
        %4563 = vrot.lane.b32.xlu0 %v4429, 32
        %v4564 = vpop.permute.xlu0 %4563
        %4565 = vrot.lane.b32.xlu0 %v4430, 32
        %v4566 = vpop.permute.xlu0 %4565
        %4567 = vrot.lane.b32.xlu0 %v4431, 32
        %v4568 = vpop.permute.xlu0 %4567
        %4569 = vrot.lane.b32.xlu0 %v4432, 32
        %v4570 = vpop.permute.xlu0 %4569
        %4571 = vrot.lane.b32.xlu0 %v4433, 32
        %v4572 = vpop.permute.xlu0 %4571
        %4573 = vrot.lane.b32.xlu0 %v4434, 32
        %v4574 = vpop.permute.xlu0 %4573
        %4575 = vrot.lane.b32.xlu0 %v4435, 32
        %v4576 = vpop.permute.xlu0 %4575
        %4577 = vrot.lane.b32.xlu0 %v4436, 32
        %v4578 = vpop.permute.xlu0 %4577
        %4579 = vrot.lane.b32.xlu0 %v4437, 32
        %v4580 = vpop.permute.xlu0 %4579
        %4581 = vrot.lane.b32.xlu0 %v4438, 32
        %v4582 = vpop.permute.xlu0 %4581
        %4583 = vrot.lane.b32.xlu0 %v4439, 32
        %v4584 = vpop.permute.xlu0 %4583
        %4585 = vrot.lane.b32.xlu0 %v4440, 32
        %v4586 = vpop.permute.xlu0 %4585
        %4587 = vrot.lane.b32.xlu0 %v4441, 32
        %v4588 = vpop.permute.xlu0 %4587
        %4589 = vrot.lane.b32.xlu0 %v4442, 32
        %v4590 = vpop.permute.xlu0 %4589
        %4591 = vrot.lane.b32.xlu0 %v4443, 32
        %v4592 = vpop.permute.xlu0 %4591
        %4593 = vrot.lane.b32.xlu0 %v4444, 32
        %v4594 = vpop.permute.xlu0 %4593
        %4595 = vrot.lane.b32.xlu0 %v4445, 32
        %v4596 = vpop.permute.xlu0 %4595
        %4597 = vrot.lane.b32.xlu0 %v4446, 32
        %v4598 = vpop.permute.xlu0 %4597
        %4599 = vrot.lane.b32.xlu0 %v4447, 32
        %v4600 = vpop.permute.xlu0 %4599
        %4601 = vrot.lane.b32.xlu0 %v4448, 32
        %v4602 = vpop.permute.xlu0 %4601
        %4603 = vrot.lane.b32.xlu0 %v4449, 32
        %v4604 = vpop.permute.xlu0 %4603
        %4605 = vrot.lane.b32.xlu0 %v4450, 32
        %v4606 = vpop.permute.xlu0 %4605
        %4607 = vrot.lane.b32.xlu0 %v4451, 32
        %v4608 = vpop.permute.xlu0 %4607
        %4609 = vrot.lane.b32.xlu0 %v4452, 32
        %v4610 = vpop.permute.xlu0 %4609
        %4611 = vrot.lane.b32.xlu0 %v4453, 32
        %v4612 = vpop.permute.xlu0 %4611
        %4613 = vrot.lane.b32.xlu0 %v4454, 32
        %v4614 = vpop.permute.xlu0 %4613
        %4615 = vrot.lane.b32.xlu0 %v4455, 32
        %v4616 = vpop.permute.xlu0 %4615
        %4617 = vrot.lane.b32.xlu0 %v4456, 32
        %v4618 = vpop.permute.xlu0 %4617
        %4619 = vrot.lane.b32.xlu0 %v4457, 32
        %v4620 = vpop.permute.xlu0 %4619
        %4621 = vrot.lane.b32.xlu0 %v4458, 32
        %v4622 = vpop.permute.xlu0 %4621
        %4623 = vrot.lane.b32.xlu0 %v4459, 32
        %v4624 = vpop.permute.xlu0 %4623
        %4625 = vrot.lane.b32.xlu0 %v4460, 32
        %v4626 = vpop.permute.xlu0 %4625
        %4627 = vrot.lane.b32.xlu0 %v4461, 32
        %v4628 = vpop.permute.xlu0 %4627
        %4629 = vrot.lane.b32.xlu0 %v4462, 32
        %v4630 = vpop.permute.xlu0 %4629
        %4631 = vrot.lane.b32.xlu0 %v4463, 32
        %v4632 = vpop.permute.xlu0 %4631
        %4633 = vrot.lane.b32.xlu0 %v4464, 32
        %v4634 = vpop.permute.xlu0 %4633
        %4635 = vrot.lane.b32.xlu0 %v4465, 32
        %v4636 = vpop.permute.xlu0 %4635
        %4637 = vrot.lane.b32.xlu0 %v4466, 32
        %v4638 = vpop.permute.xlu0 %4637
        %4639 = vrot.lane.b32.xlu0 %v4467, 32
        %v4640 = vpop.permute.xlu0 %4639
        %4641 = vrot.lane.b32.xlu0 %v4468, 32
        %v4642 = vpop.permute.xlu0 %4641
        %4643 = vrot.lane.b32.xlu0 %v4469, 32
        %v4644 = vpop.permute.xlu0 %4643
        %4645 = vrot.lane.b32.xlu0 %v4470, 32
        %v4646 = vpop.permute.xlu0 %4645
        %4647 = vrot.lane.b32.xlu0 %v4471, 32
        %v4648 = vpop.permute.xlu0 %4647
        %4649 = vrot.lane.b32.xlu0 %v4472, 32
        %v4650 = vpop.permute.xlu0 %4649
        %4651 = vrot.lane.b32.xlu0 %v4473, 32
        %v4652 = vpop.permute.xlu0 %4651
        %4653 = vrot.lane.b32.xlu0 %v4474, 32
        %v4654 = vpop.permute.xlu0 %4653
        %4655 = vrot.lane.b32.xlu0 %v4475, 32
        %v4656 = vpop.permute.xlu0 %4655
        %4657 = vrot.lane.b32.xlu0 %v4476, 32
        %v4658 = vpop.permute.xlu0 %4657
        %4659 = vrot.lane.b32.xlu0 %v4477, 32
        %v4660 = vpop.permute.xlu0 %4659
        %4661 = vrot.lane.b32.xlu0 %v4478, 32
        %v4662 = vpop.permute.xlu0 %4661
        %4663 = vrot.lane.b32.xlu0 %v4479, 32
        %v4664 = vpop.permute.xlu0 %4663
        %4665 = vrot.lane.b32.xlu0 %v4480, 32
        %v4666 = vpop.permute.xlu0 %4665
        %4667 = vrot.lane.b32.xlu0 %v4481, 32
        %v4668 = vpop.permute.xlu0 %4667
        %4669 = vrot.lane.b32.xlu0 %v4482, 32
        %v4670 = vpop.permute.xlu0 %4669
        %4671 = vrot.lane.b32.xlu0 %v4483, 32
        %v4672 = vpop.permute.xlu0 %4671
        %4673 = vrot.lane.b32.xlu0 %v4484, 32
        %v4674 = vpop.permute.xlu0 %4673
        %4675 = vrot.lane.b32.xlu0 %v4485, 32
        %v4676 = vpop.permute.xlu0 %4675
        %4677 = vrot.lane.b32.xlu0 %v4486, 32
        %v4678 = vpop.permute.xlu0 %4677
        %v4743 = vmul.f32 %v4232, %v4552
        %v4744 = vmul.f32 %v4234, %v4554
        %v4745 = vmul.f32 %v4236, %v4556
        %v4746 = vmul.f32 %v4238, %v4558
        %v4747 = vmul.f32 %v4240, %v4560
        %v4748 = vmul.f32 %v4242, %v4562
        %v4749 = vmul.f32 %v4244, %v4564
        %v4750 = vmul.f32 %v4246, %v4566
        %v4751 = vmul.f32 %v4248, %v4568
        %v4752 = vmul.f32 %v4250, %v4570
        %v4753 = vmul.f32 %v4252, %v4572
        %v4754 = vmul.f32 %v4254, %v4574
        %v4755 = vmul.f32 %v4256, %v4576
        %v4756 = vmul.f32 %v4258, %v4578
        %v4757 = vmul.f32 %v4260, %v4580
        %v4758 = vmul.f32 %v4262, %v4582
        %v4759 = vmul.f32 %v4264, %v4584
        %v4760 = vmul.f32 %v4266, %v4586
        %v4761 = vmul.f32 %v4268, %v4588
        %v4762 = vmul.f32 %v4270, %v4590
        %v4763 = vmul.f32 %v4272, %v4592
        %v4764 = vmul.f32 %v4274, %v4594
        %v4765 = vmul.f32 %v4276, %v4596
        %v4766 = vmul.f32 %v4278, %v4598
        %v4767 = vmul.f32 %v4280, %v4600
        %v4768 = vmul.f32 %v4282, %v4602
        %v4769 = vmul.f32 %v4284, %v4604
        %v4770 = vmul.f32 %v4286, %v4606
        %v4771 = vmul.f32 %v4288, %v4608
        %v4772 = vmul.f32 %v4290, %v4610
        %v4773 = vmul.f32 %v4292, %v4612
        %v4774 = vmul.f32 %v4294, %v4614
        %v4775 = vmul.f32 %v4296, %v4616
        %v4776 = vmul.f32 %v4298, %v4618
        %v4777 = vmul.f32 %v4300, %v4620
        %v4778 = vmul.f32 %v4302, %v4622
        %v4779 = vmul.f32 %v4304, %v4624
        %v4780 = vmul.f32 %v4306, %v4626
        %v4781 = vmul.f32 %v4308, %v4628
        %v4782 = vmul.f32 %v4310, %v4630
        %v4783 = vmul.f32 %v4312, %v4632
        %v4784 = vmul.f32 %v4314, %v4634
        %v4785 = vmul.f32 %v4316, %v4636
        %v4786 = vmul.f32 %v4318, %v4638
        %v4787 = vmul.f32 %v4320, %v4640
        %v4788 = vmul.f32 %v4322, %v4642
        %v4789 = vmul.f32 %v4324, %v4644
        %v4790 = vmul.f32 %v4326, %v4646
        %v4791 = vmul.f32 %v4328, %v4648
        %v4792 = vmul.f32 %v4330, %v4650
        %v4793 = vmul.f32 %v4332, %v4652
        %v4794 = vmul.f32 %v4334, %v4654
        %v4795 = vmul.f32 %v4336, %v4656
        %v4796 = vmul.f32 %v4338, %v4658
        %v4797 = vmul.f32 %v4340, %v4660
        %v4798 = vmul.f32 %v4342, %v4662
        %v4799 = vmul.f32 %v4344, %v4664
        %v4800 = vmul.f32 %v4346, %v4666
        %v4801 = vmul.f32 %v4348, %v4668
        %v4802 = vmul.f32 %v4350, %v4670
        %v4803 = vmul.f32 %v4352, %v4672
        %v4804 = vmul.f32 %v4354, %v4674
        %v4805 = vmul.f32 %v4356, %v4676
        %v4806 = vmul.f32 %v4358, %v4678
        %4871 = vrot.lane.b32.xlu0 %v4359, 32
        %v4872 = vpop.permute.xlu0 %4871
        %4873 = vrot.lane.b32.xlu0 %v4360, 32
        %v4874 = vpop.permute.xlu0 %4873
        %4875 = vrot.lane.b32.xlu0 %v4361, 32
        %v4876 = vpop.permute.xlu0 %4875
        %4877 = vrot.lane.b32.xlu0 %v4362, 32
        %v4878 = vpop.permute.xlu0 %4877
        %4879 = vrot.lane.b32.xlu0 %v4363, 32
        %v4880 = vpop.permute.xlu0 %4879
        %4881 = vrot.lane.b32.xlu0 %v4364, 32
        %v4882 = vpop.permute.xlu0 %4881
        %4883 = vrot.lane.b32.xlu0 %v4365, 32
        %v4884 = vpop.permute.xlu0 %4883
        %4885 = vrot.lane.b32.xlu0 %v4366, 32
        %v4886 = vpop.permute.xlu0 %4885
        %4887 = vrot.lane.b32.xlu0 %v4367, 32
        %v4888 = vpop.permute.xlu0 %4887
        %4889 = vrot.lane.b32.xlu0 %v4368, 32
        %v4890 = vpop.permute.xlu0 %4889
        %4891 = vrot.lane.b32.xlu0 %v4369, 32
        %v4892 = vpop.permute.xlu0 %4891
        %4893 = vrot.lane.b32.xlu0 %v4370, 32
        %v4894 = vpop.permute.xlu0 %4893
        %4895 = vrot.lane.b32.xlu0 %v4371, 32
        %v4896 = vpop.permute.xlu0 %4895
        %4897 = vrot.lane.b32.xlu0 %v4372, 32
        %v4898 = vpop.permute.xlu0 %4897
        %4899 = vrot.lane.b32.xlu0 %v4373, 32
        %v4900 = vpop.permute.xlu0 %4899
        %4901 = vrot.lane.b32.xlu0 %v4374, 32
        %v4902 = vpop.permute.xlu0 %4901
        %4903 = vrot.lane.b32.xlu0 %v4375, 32
        %v4904 = vpop.permute.xlu0 %4903
        %4905 = vrot.lane.b32.xlu0 %v4376, 32
        %v4906 = vpop.permute.xlu0 %4905
        %4907 = vrot.lane.b32.xlu0 %v4377, 32
        %v4908 = vpop.permute.xlu0 %4907
        %4909 = vrot.lane.b32.xlu0 %v4378, 32
        %v4910 = vpop.permute.xlu0 %4909
        %4911 = vrot.lane.b32.xlu0 %v4379, 32
        %v4912 = vpop.permute.xlu0 %4911
        %4913 = vrot.lane.b32.xlu0 %v4380, 32
        %v4914 = vpop.permute.xlu0 %4913
        %4915 = vrot.lane.b32.xlu0 %v4381, 32
        %v4916 = vpop.permute.xlu0 %4915
        %4917 = vrot.lane.b32.xlu0 %v4382, 32
        %v4918 = vpop.permute.xlu0 %4917
        %4919 = vrot.lane.b32.xlu0 %v4383, 32
        %v4920 = vpop.permute.xlu0 %4919
        %4921 = vrot.lane.b32.xlu0 %v4384, 32
        %v4922 = vpop.permute.xlu0 %4921
        %4923 = vrot.lane.b32.xlu0 %v4385, 32
        %v4924 = vpop.permute.xlu0 %4923
        %4925 = vrot.lane.b32.xlu0 %v4386, 32
        %v4926 = vpop.permute.xlu0 %4925
        %4927 = vrot.lane.b32.xlu0 %v4387, 32
        %v4928 = vpop.permute.xlu0 %4927
        %4929 = vrot.lane.b32.xlu0 %v4388, 32
        %v4930 = vpop.permute.xlu0 %4929
        %4931 = vrot.lane.b32.xlu0 %v4389, 32
        %v4932 = vpop.permute.xlu0 %4931
        %4933 = vrot.lane.b32.xlu0 %v4390, 32
        %v4934 = vpop.permute.xlu0 %4933
        %4935 = vrot.lane.b32.xlu0 %v4391, 32
        %v4936 = vpop.permute.xlu0 %4935
        %4937 = vrot.lane.b32.xlu0 %v4392, 32
        %v4938 = vpop.permute.xlu0 %4937
        %4939 = vrot.lane.b32.xlu0 %v4393, 32
        %v4940 = vpop.permute.xlu0 %4939
        %4941 = vrot.lane.b32.xlu0 %v4394, 32
        %v4942 = vpop.permute.xlu0 %4941
        %4943 = vrot.lane.b32.xlu0 %v4395, 32
        %v4944 = vpop.permute.xlu0 %4943
        %4945 = vrot.lane.b32.xlu0 %v4396, 32
        %v4946 = vpop.permute.xlu0 %4945
        %4947 = vrot.lane.b32.xlu0 %v4397, 32
        %v4948 = vpop.permute.xlu0 %4947
        %4949 = vrot.lane.b32.xlu0 %v4398, 32
        %v4950 = vpop.permute.xlu0 %4949
        %4951 = vrot.lane.b32.xlu0 %v4399, 32
        %v4952 = vpop.permute.xlu0 %4951
        %4953 = vrot.lane.b32.xlu0 %v4400, 32
        %v4954 = vpop.permute.xlu0 %4953
        %4955 = vrot.lane.b32.xlu0 %v4401, 32
        %v4956 = vpop.permute.xlu0 %4955
        %4957 = vrot.lane.b32.xlu0 %v4402, 32
        %v4958 = vpop.permute.xlu0 %4957
        %4959 = vrot.lane.b32.xlu0 %v4403, 32
        %v4960 = vpop.permute.xlu0 %4959
        %4961 = vrot.lane.b32.xlu0 %v4404, 32
        %v4962 = vpop.permute.xlu0 %4961
        %4963 = vrot.lane.b32.xlu0 %v4405, 32
        %v4964 = vpop.permute.xlu0 %4963
        %4965 = vrot.lane.b32.xlu0 %v4406, 32
        %v4966 = vpop.permute.xlu0 %4965
        %4967 = vrot.lane.b32.xlu0 %v4407, 32
        %v4968 = vpop.permute.xlu0 %4967
        %4969 = vrot.lane.b32.xlu0 %v4408, 32
        %v4970 = vpop.permute.xlu0 %4969
        %4971 = vrot.lane.b32.xlu0 %v4409, 32
        %v4972 = vpop.permute.xlu0 %4971
        %4973 = vrot.lane.b32.xlu0 %v4410, 32
        %v4974 = vpop.permute.xlu0 %4973
        %4975 = vrot.lane.b32.xlu0 %v4411, 32
        %v4976 = vpop.permute.xlu0 %4975
        %4977 = vrot.lane.b32.xlu0 %v4412, 32
        %v4978 = vpop.permute.xlu0 %4977
        %4979 = vrot.lane.b32.xlu0 %v4413, 32
        %v4980 = vpop.permute.xlu0 %4979
        %4981 = vrot.lane.b32.xlu0 %v4414, 32
        %v4982 = vpop.permute.xlu0 %4981
        %4983 = vrot.lane.b32.xlu0 %v4415, 32
        %v4984 = vpop.permute.xlu0 %4983
        %4985 = vrot.lane.b32.xlu0 %v4416, 32
        %v4986 = vpop.permute.xlu0 %4985
        %4987 = vrot.lane.b32.xlu0 %v4417, 32
        %v4988 = vpop.permute.xlu0 %4987
        %4989 = vrot.lane.b32.xlu0 %v4418, 32
        %v4990 = vpop.permute.xlu0 %4989
        %4991 = vrot.lane.b32.xlu0 %v4419, 32
        %v4992 = vpop.permute.xlu0 %4991
        %4993 = vrot.lane.b32.xlu0 %v4420, 32
        %v4994 = vpop.permute.xlu0 %4993
        %4995 = vrot.lane.b32.xlu0 %v4421, 32
        %v4996 = vpop.permute.xlu0 %4995
        %4997 = vrot.lane.b32.xlu0 %v4422, 32
        %v4998 = vpop.permute.xlu0 %4997
        %v5063 = vmul.f32 %v4232, %v4872
        %v5064 = vmul.f32 %v4234, %v4874
        %v5065 = vmul.f32 %v4236, %v4876
        %v5066 = vmul.f32 %v4238, %v4878
        %v5067 = vmul.f32 %v4240, %v4880
        %v5068 = vmul.f32 %v4242, %v4882
        %v5069 = vmul.f32 %v4244, %v4884
        %v5070 = vmul.f32 %v4246, %v4886
        %v5071 = vmul.f32 %v4248, %v4888
        %v5072 = vmul.f32 %v4250, %v4890
        %v5073 = vmul.f32 %v4252, %v4892
        %v5074 = vmul.f32 %v4254, %v4894
        %v5075 = vmul.f32 %v4256, %v4896
        %v5076 = vmul.f32 %v4258, %v4898
        %v5077 = vmul.f32 %v4260, %v4900
        %v5078 = vmul.f32 %v4262, %v4902
        %v5079 = vmul.f32 %v4264, %v4904
        %v5080 = vmul.f32 %v4266, %v4906
        %v5081 = vmul.f32 %v4268, %v4908
        %v5082 = vmul.f32 %v4270, %v4910
        %v5083 = vmul.f32 %v4272, %v4912
        %v5084 = vmul.f32 %v4274, %v4914
        %v5085 = vmul.f32 %v4276, %v4916
        %v5086 = vmul.f32 %v4278, %v4918
        %v5087 = vmul.f32 %v4280, %v4920
        %v5088 = vmul.f32 %v4282, %v4922
        %v5089 = vmul.f32 %v4284, %v4924
        %v5090 = vmul.f32 %v4286, %v4926
        %v5091 = vmul.f32 %v4288, %v4928
        %v5092 = vmul.f32 %v4290, %v4930
        %v5093 = vmul.f32 %v4292, %v4932
        %v5094 = vmul.f32 %v4294, %v4934
        %v5095 = vmul.f32 %v4296, %v4936
        %v5096 = vmul.f32 %v4298, %v4938
        %v5097 = vmul.f32 %v4300, %v4940
        %v5098 = vmul.f32 %v4302, %v4942
        %v5099 = vmul.f32 %v4304, %v4944
        %v5100 = vmul.f32 %v4306, %v4946
        %v5101 = vmul.f32 %v4308, %v4948
        %v5102 = vmul.f32 %v4310, %v4950
        %v5103 = vmul.f32 %v4312, %v4952
        %v5104 = vmul.f32 %v4314, %v4954
        %v5105 = vmul.f32 %v4316, %v4956
        %v5106 = vmul.f32 %v4318, %v4958
        %v5107 = vmul.f32 %v4320, %v4960
        %v5108 = vmul.f32 %v4322, %v4962
        %v5109 = vmul.f32 %v4324, %v4964
        %v5110 = vmul.f32 %v4326, %v4966
        %v5111 = vmul.f32 %v4328, %v4968
        %v5112 = vmul.f32 %v4330, %v4970
        %v5113 = vmul.f32 %v4332, %v4972
        %v5114 = vmul.f32 %v4334, %v4974
        %v5115 = vmul.f32 %v4336, %v4976
        %v5116 = vmul.f32 %v4338, %v4978
        %v5117 = vmul.f32 %v4340, %v4980
        %v5118 = vmul.f32 %v4342, %v4982
        %v5119 = vmul.f32 %v4344, %v4984
        %v5120 = vmul.f32 %v4346, %v4986
        %v5121 = vmul.f32 %v4348, %v4988
        %v5122 = vmul.f32 %v4350, %v4990
        %v5123 = vmul.f32 %v4352, %v4992
        %v5124 = vmul.f32 %v4354, %v4994
        %v5125 = vmul.f32 %v4356, %v4996
        %v5126 = vmul.f32 %v4358, %v4998
        %5191 = vrot.lane.b32.xlu0 %v5063, 32
        %v5192 = vpop.permute.xlu0 %5191
        %5193 = vrot.lane.b32.xlu0 %v5064, 32
        %v5194 = vpop.permute.xlu0 %5193
        %5195 = vrot.lane.b32.xlu0 %v5065, 32
        %v5196 = vpop.permute.xlu0 %5195
        %5197 = vrot.lane.b32.xlu0 %v5066, 32
        %v5198 = vpop.permute.xlu0 %5197
        %5199 = vrot.lane.b32.xlu0 %v5067, 32
        %v5200 = vpop.permute.xlu0 %5199
        %5201 = vrot.lane.b32.xlu0 %v5068, 32
        %v5202 = vpop.permute.xlu0 %5201
        %5203 = vrot.lane.b32.xlu0 %v5069, 32
        %v5204 = vpop.permute.xlu0 %5203
        %5205 = vrot.lane.b32.xlu0 %v5070, 32
        %v5206 = vpop.permute.xlu0 %5205
        %5207 = vrot.lane.b32.xlu0 %v5071, 32
        %v5208 = vpop.permute.xlu0 %5207
        %5209 = vrot.lane.b32.xlu0 %v5072, 32
        %v5210 = vpop.permute.xlu0 %5209
        %5211 = vrot.lane.b32.xlu0 %v5073, 32
        %v5212 = vpop.permute.xlu0 %5211
        %5213 = vrot.lane.b32.xlu0 %v5074, 32
        %v5214 = vpop.permute.xlu0 %5213
        %5215 = vrot.lane.b32.xlu0 %v5075, 32
        %v5216 = vpop.permute.xlu0 %5215
        %5217 = vrot.lane.b32.xlu0 %v5076, 32
        %v5218 = vpop.permute.xlu0 %5217
        %5219 = vrot.lane.b32.xlu0 %v5077, 32
        %v5220 = vpop.permute.xlu0 %5219
        %5221 = vrot.lane.b32.xlu0 %v5078, 32
        %v5222 = vpop.permute.xlu0 %5221
        %5223 = vrot.lane.b32.xlu0 %v5079, 32
        %v5224 = vpop.permute.xlu0 %5223
        %5225 = vrot.lane.b32.xlu0 %v5080, 32
        %v5226 = vpop.permute.xlu0 %5225
        %5227 = vrot.lane.b32.xlu0 %v5081, 32
        %v5228 = vpop.permute.xlu0 %5227
        %5229 = vrot.lane.b32.xlu0 %v5082, 32
        %v5230 = vpop.permute.xlu0 %5229
        %5231 = vrot.lane.b32.xlu0 %v5083, 32
        %v5232 = vpop.permute.xlu0 %5231
        %5233 = vrot.lane.b32.xlu0 %v5084, 32
        %v5234 = vpop.permute.xlu0 %5233
        %5235 = vrot.lane.b32.xlu0 %v5085, 32
        %v5236 = vpop.permute.xlu0 %5235
        %5237 = vrot.lane.b32.xlu0 %v5086, 32
        %v5238 = vpop.permute.xlu0 %5237
        %5239 = vrot.lane.b32.xlu0 %v5087, 32
        %v5240 = vpop.permute.xlu0 %5239
        %5241 = vrot.lane.b32.xlu0 %v5088, 32
        %v5242 = vpop.permute.xlu0 %5241
        %5243 = vrot.lane.b32.xlu0 %v5089, 32
        %v5244 = vpop.permute.xlu0 %5243
        %5245 = vrot.lane.b32.xlu0 %v5090, 32
        %v5246 = vpop.permute.xlu0 %5245
        %5247 = vrot.lane.b32.xlu0 %v5091, 32
        %v5248 = vpop.permute.xlu0 %5247
        %5249 = vrot.lane.b32.xlu0 %v5092, 32
        %v5250 = vpop.permute.xlu0 %5249
        %5251 = vrot.lane.b32.xlu0 %v5093, 32
        %v5252 = vpop.permute.xlu0 %5251
        %5253 = vrot.lane.b32.xlu0 %v5094, 32
        %v5254 = vpop.permute.xlu0 %5253
        %5255 = vrot.lane.b32.xlu0 %v5095, 32
        %v5256 = vpop.permute.xlu0 %5255
        %5257 = vrot.lane.b32.xlu0 %v5096, 32
        %v5258 = vpop.permute.xlu0 %5257
        %5259 = vrot.lane.b32.xlu0 %v5097, 32
        %v5260 = vpop.permute.xlu0 %5259
        %5261 = vrot.lane.b32.xlu0 %v5098, 32
        %v5262 = vpop.permute.xlu0 %5261
        %5263 = vrot.lane.b32.xlu0 %v5099, 32
        %v5264 = vpop.permute.xlu0 %5263
        %5265 = vrot.lane.b32.xlu0 %v5100, 32
        %v5266 = vpop.permute.xlu0 %5265
        %5267 = vrot.lane.b32.xlu0 %v5101, 32
        %v5268 = vpop.permute.xlu0 %5267
        %5269 = vrot.lane.b32.xlu0 %v5102, 32
        %v5270 = vpop.permute.xlu0 %5269
        %5271 = vrot.lane.b32.xlu0 %v5103, 32
        %v5272 = vpop.permute.xlu0 %5271
        %5273 = vrot.lane.b32.xlu0 %v5104, 32
        %v5274 = vpop.permute.xlu0 %5273
        %5275 = vrot.lane.b32.xlu0 %v5105, 32
        %v5276 = vpop.permute.xlu0 %5275
        %5277 = vrot.lane.b32.xlu0 %v5106, 32
        %v5278 = vpop.permute.xlu0 %5277
        %5279 = vrot.lane.b32.xlu0 %v5107, 32
        %v5280 = vpop.permute.xlu0 %5279
        %5281 = vrot.lane.b32.xlu0 %v5108, 32
        %v5282 = vpop.permute.xlu0 %5281
        %5283 = vrot.lane.b32.xlu0 %v5109, 32
        %v5284 = vpop.permute.xlu0 %5283
        %5285 = vrot.lane.b32.xlu0 %v5110, 32
        %v5286 = vpop.permute.xlu0 %5285
        %5287 = vrot.lane.b32.xlu0 %v5111, 32
        %v5288 = vpop.permute.xlu0 %5287
        %5289 = vrot.lane.b32.xlu0 %v5112, 32
        %v5290 = vpop.permute.xlu0 %5289
        %5291 = vrot.lane.b32.xlu0 %v5113, 32
        %v5292 = vpop.permute.xlu0 %5291
        %5293 = vrot.lane.b32.xlu0 %v5114, 32
        %v5294 = vpop.permute.xlu0 %5293
        %5295 = vrot.lane.b32.xlu0 %v5115, 32
        %v5296 = vpop.permute.xlu0 %5295
        %5297 = vrot.lane.b32.xlu0 %v5116, 32
        %v5298 = vpop.permute.xlu0 %5297
        %5299 = vrot.lane.b32.xlu0 %v5117, 32
        %v5300 = vpop.permute.xlu0 %5299
        %5301 = vrot.lane.b32.xlu0 %v5118, 32
        %v5302 = vpop.permute.xlu0 %5301
        %5303 = vrot.lane.b32.xlu0 %v5119, 32
        %v5304 = vpop.permute.xlu0 %5303
        %5305 = vrot.lane.b32.xlu0 %v5120, 32
        %v5306 = vpop.permute.xlu0 %5305
        %5307 = vrot.lane.b32.xlu0 %v5121, 32
        %v5308 = vpop.permute.xlu0 %5307
        %5309 = vrot.lane.b32.xlu0 %v5122, 32
        %v5310 = vpop.permute.xlu0 %5309
        %5311 = vrot.lane.b32.xlu0 %v5123, 32
        %v5312 = vpop.permute.xlu0 %5311
        %5313 = vrot.lane.b32.xlu0 %v5124, 32
        %v5314 = vpop.permute.xlu0 %5313
        %5315 = vrot.lane.b32.xlu0 %v5125, 32
        %v5316 = vpop.permute.xlu0 %5315
        %5317 = vrot.lane.b32.xlu0 %v5126, 32
        %v5318 = vpop.permute.xlu0 %5317
        %v5383 = vadd.f32 %v4743, %v5192
        %v5384 = vadd.f32 %v4744, %v5194
        %v5385 = vadd.f32 %v4745, %v5196
        %v5386 = vadd.f32 %v4746, %v5198
        %v5387 = vadd.f32 %v4747, %v5200
        %v5388 = vadd.f32 %v4748, %v5202
        %v5389 = vadd.f32 %v4749, %v5204
        %v5390 = vadd.f32 %v4750, %v5206
        %v5391 = vadd.f32 %v4751, %v5208
        %v5392 = vadd.f32 %v4752, %v5210
        %v5393 = vadd.f32 %v4753, %v5212
        %v5394 = vadd.f32 %v4754, %v5214
        %v5395 = vadd.f32 %v4755, %v5216
        %v5396 = vadd.f32 %v4756, %v5218
        %v5397 = vadd.f32 %v4757, %v5220
        %v5398 = vadd.f32 %v4758, %v5222
        %v5399 = vadd.f32 %v4759, %v5224
        %v5400 = vadd.f32 %v4760, %v5226
        %v5401 = vadd.f32 %v4761, %v5228
        %v5402 = vadd.f32 %v4762, %v5230
        %v5403 = vadd.f32 %v4763, %v5232
        %v5404 = vadd.f32 %v4764, %v5234
        %v5405 = vadd.f32 %v4765, %v5236
        %v5406 = vadd.f32 %v4766, %v5238
        %v5407 = vadd.f32 %v4767, %v5240
        %v5408 = vadd.f32 %v4768, %v5242
        %v5409 = vadd.f32 %v4769, %v5244
        %v5410 = vadd.f32 %v4770, %v5246
        %v5411 = vadd.f32 %v4771, %v5248
        %v5412 = vadd.f32 %v4772, %v5250
        %v5413 = vadd.f32 %v4773, %v5252
        %v5414 = vadd.f32 %v4774, %v5254
        %v5415 = vadd.f32 %v4775, %v5256
        %v5416 = vadd.f32 %v4776, %v5258
        %v5417 = vadd.f32 %v4777, %v5260
        %v5418 = vadd.f32 %v4778, %v5262
        %v5419 = vadd.f32 %v4779, %v5264
        %v5420 = vadd.f32 %v4780, %v5266
        %v5421 = vadd.f32 %v4781, %v5268
        %v5422 = vadd.f32 %v4782, %v5270
        %v5423 = vadd.f32 %v4783, %v5272
        %v5424 = vadd.f32 %v4784, %v5274
        %v5425 = vadd.f32 %v4785, %v5276
        %v5426 = vadd.f32 %v4786, %v5278
        %v5427 = vadd.f32 %v4787, %v5280
        %v5428 = vadd.f32 %v4788, %v5282
        %v5429 = vadd.f32 %v4789, %v5284
        %v5430 = vadd.f32 %v4790, %v5286
        %v5431 = vadd.f32 %v4791, %v5288
        %v5432 = vadd.f32 %v4792, %v5290
        %v5433 = vadd.f32 %v4793, %v5292
        %v5434 = vadd.f32 %v4794, %v5294
        %v5435 = vadd.f32 %v4795, %v5296
        %v5436 = vadd.f32 %v4796, %v5298
        %v5437 = vadd.f32 %v4797, %v5300
        %v5438 = vadd.f32 %v4798, %v5302
        %v5439 = vadd.f32 %v4799, %v5304
        %v5440 = vadd.f32 %v4800, %v5306
        %v5441 = vadd.f32 %v4801, %v5308
        %v5442 = vadd.f32 %v4802, %v5310
        %v5443 = vadd.f32 %v4803, %v5312
        %v5444 = vadd.f32 %v4804, %v5314
        %v5445 = vadd.f32 %v4805, %v5316
        %v5446 = vadd.f32 %v4806, %v5318
        %v5447 = vtanh.pop %v5383
        %v5448 = vtanh.pop %v5384
        %v5449 = vtanh.pop %v5385
        %v5450 = vtanh.pop %v5386
        %v5451 = vtanh.pop %v5387
        %v5452 = vtanh.pop %v5388
        %v5453 = vtanh.pop %v5389
        %v5454 = vtanh.pop %v5390
        %v5455 = vtanh.pop %v5391
        %v5456 = vtanh.pop %v5392
        %v5457 = vtanh.pop %v5393
        %v5458 = vtanh.pop %v5394
        %v5459 = vtanh.pop %v5395
        %v5460 = vtanh.pop %v5396
        %v5461 = vtanh.pop %v5397
        %v5462 = vtanh.pop %v5398
        %v5463 = vtanh.pop %v5399
        %v5464 = vtanh.pop %v5400
        %v5465 = vtanh.pop %v5401
        %v5466 = vtanh.pop %v5402
        %v5467 = vtanh.pop %v5403
        %v5468 = vtanh.pop %v5404
        %v5469 = vtanh.pop %v5405
        %v5470 = vtanh.pop %v5406
        %v5471 = vtanh.pop %v5407
        %v5472 = vtanh.pop %v5408
        %v5473 = vtanh.pop %v5409
        %v5474 = vtanh.pop %v5410
        %v5475 = vtanh.pop %v5411
        %v5476 = vtanh.pop %v5412
        %v5477 = vtanh.pop %v5413
        %v5478 = vtanh.pop %v5414
        %v5479 = vtanh.pop %v5415
        %v5480 = vtanh.pop %v5416
        %v5481 = vtanh.pop %v5417
        %v5482 = vtanh.pop %v5418
        %v5483 = vtanh.pop %v5419
        %v5484 = vtanh.pop %v5420
        %v5485 = vtanh.pop %v5421
        %v5486 = vtanh.pop %v5422
        %v5487 = vtanh.pop %v5423
        %v5488 = vtanh.pop %v5424
        %v5489 = vtanh.pop %v5425
        %v5490 = vtanh.pop %v5426
        %v5491 = vtanh.pop %v5427
        %v5492 = vtanh.pop %v5428
        %v5493 = vtanh.pop %v5429
        %v5494 = vtanh.pop %v5430
        %v5495 = vtanh.pop %v5431
        %v5496 = vtanh.pop %v5432
        %v5497 = vtanh.pop %v5433
        %v5498 = vtanh.pop %v5434
        %v5499 = vtanh.pop %v5435
        %v5500 = vtanh.pop %v5436
        %v5501 = vtanh.pop %v5437
        %v5502 = vtanh.pop %v5438
        %v5503 = vtanh.pop %v5439
        %v5504 = vtanh.pop %v5440
        %v5505 = vtanh.pop %v5441
        %v5506 = vtanh.pop %v5442
        %v5507 = vtanh.pop %v5443
        %v5508 = vtanh.pop %v5444
        %v5509 = vtanh.pop %v5445
        %v5510 = vtanh.pop %v5446
        %5575 = vrot.lane.b32.xlu0 %v5447, 32
        %v5576 = vpop.permute.xlu0 %5575
        %5577 = vrot.lane.b32.xlu0 %v5448, 32
        %v5578 = vpop.permute.xlu0 %5577
        %5579 = vrot.lane.b32.xlu0 %v5449, 32
        %v5580 = vpop.permute.xlu0 %5579
        %5581 = vrot.lane.b32.xlu0 %v5450, 32
        %v5582 = vpop.permute.xlu0 %5581
        %5583 = vrot.lane.b32.xlu0 %v5451, 32
        %v5584 = vpop.permute.xlu0 %5583
        %5585 = vrot.lane.b32.xlu0 %v5452, 32
        %v5586 = vpop.permute.xlu0 %5585
        %5587 = vrot.lane.b32.xlu0 %v5453, 32
        %v5588 = vpop.permute.xlu0 %5587
        %5589 = vrot.lane.b32.xlu0 %v5454, 32
        %v5590 = vpop.permute.xlu0 %5589
        %5591 = vrot.lane.b32.xlu0 %v5455, 32
        %v5592 = vpop.permute.xlu0 %5591
        %5593 = vrot.lane.b32.xlu0 %v5456, 32
        %v5594 = vpop.permute.xlu0 %5593
        %5595 = vrot.lane.b32.xlu0 %v5457, 32
        %v5596 = vpop.permute.xlu0 %5595
        %5597 = vrot.lane.b32.xlu0 %v5458, 32
        %v5598 = vpop.permute.xlu0 %5597
        %5599 = vrot.lane.b32.xlu0 %v5459, 32
        %v5600 = vpop.permute.xlu0 %5599
        %5601 = vrot.lane.b32.xlu0 %v5460, 32
        %v5602 = vpop.permute.xlu0 %5601
        %5603 = vrot.lane.b32.xlu0 %v5461, 32
        %v5604 = vpop.permute.xlu0 %5603
        %5605 = vrot.lane.b32.xlu0 %v5462, 32
        %v5606 = vpop.permute.xlu0 %5605
        %5607 = vrot.lane.b32.xlu0 %v5463, 32
        %v5608 = vpop.permute.xlu0 %5607
        %5609 = vrot.lane.b32.xlu0 %v5464, 32
        %v5610 = vpop.permute.xlu0 %5609
        %5611 = vrot.lane.b32.xlu0 %v5465, 32
        %v5612 = vpop.permute.xlu0 %5611
        %5613 = vrot.lane.b32.xlu0 %v5466, 32
        %v5614 = vpop.permute.xlu0 %5613
        %5615 = vrot.lane.b32.xlu0 %v5467, 32
        %v5616 = vpop.permute.xlu0 %5615
        %5617 = vrot.lane.b32.xlu0 %v5468, 32
        %v5618 = vpop.permute.xlu0 %5617
        %5619 = vrot.lane.b32.xlu0 %v5469, 32
        %v5620 = vpop.permute.xlu0 %5619
        %5621 = vrot.lane.b32.xlu0 %v5470, 32
        %v5622 = vpop.permute.xlu0 %5621
        %5623 = vrot.lane.b32.xlu0 %v5471, 32
        %v5624 = vpop.permute.xlu0 %5623
        %5625 = vrot.lane.b32.xlu0 %v5472, 32
        %v5626 = vpop.permute.xlu0 %5625
        %5627 = vrot.lane.b32.xlu0 %v5473, 32
        %v5628 = vpop.permute.xlu0 %5627
        %5629 = vrot.lane.b32.xlu0 %v5474, 32
        %v5630 = vpop.permute.xlu0 %5629
        %5631 = vrot.lane.b32.xlu0 %v5475, 32
        %v5632 = vpop.permute.xlu0 %5631
        %5633 = vrot.lane.b32.xlu0 %v5476, 32
        %v5634 = vpop.permute.xlu0 %5633
        %5635 = vrot.lane.b32.xlu0 %v5477, 32
        %v5636 = vpop.permute.xlu0 %5635
        %5637 = vrot.lane.b32.xlu0 %v5478, 32
        %v5638 = vpop.permute.xlu0 %5637
        %5639 = vrot.lane.b32.xlu0 %v5479, 32
        %v5640 = vpop.permute.xlu0 %5639
        %5641 = vrot.lane.b32.xlu0 %v5480, 32
        %v5642 = vpop.permute.xlu0 %5641
        %5643 = vrot.lane.b32.xlu0 %v5481, 32
        %v5644 = vpop.permute.xlu0 %5643
        %5645 = vrot.lane.b32.xlu0 %v5482, 32
        %v5646 = vpop.permute.xlu0 %5645
        %5647 = vrot.lane.b32.xlu0 %v5483, 32
        %v5648 = vpop.permute.xlu0 %5647
        %5649 = vrot.lane.b32.xlu0 %v5484, 32
        %v5650 = vpop.permute.xlu0 %5649
        %5651 = vrot.lane.b32.xlu0 %v5485, 32
        %v5652 = vpop.permute.xlu0 %5651
        %5653 = vrot.lane.b32.xlu0 %v5486, 32
        %v5654 = vpop.permute.xlu0 %5653
        %5655 = vrot.lane.b32.xlu0 %v5487, 32
        %v5656 = vpop.permute.xlu0 %5655
        %5657 = vrot.lane.b32.xlu0 %v5488, 32
        %v5658 = vpop.permute.xlu0 %5657
        %5659 = vrot.lane.b32.xlu0 %v5489, 32
        %v5660 = vpop.permute.xlu0 %5659
        %5661 = vrot.lane.b32.xlu0 %v5490, 32
        %v5662 = vpop.permute.xlu0 %5661
        %5663 = vrot.lane.b32.xlu0 %v5491, 32
        %v5664 = vpop.permute.xlu0 %5663
        %5665 = vrot.lane.b32.xlu0 %v5492, 32
        %v5666 = vpop.permute.xlu0 %5665
        %5667 = vrot.lane.b32.xlu0 %v5493, 32
        %v5668 = vpop.permute.xlu0 %5667
        %5669 = vrot.lane.b32.xlu0 %v5494, 32
        %v5670 = vpop.permute.xlu0 %5669
        %5671 = vrot.lane.b32.xlu0 %v5495, 32
        %v5672 = vpop.permute.xlu0 %5671
        %5673 = vrot.lane.b32.xlu0 %v5496, 32
        %v5674 = vpop.permute.xlu0 %5673
        %5675 = vrot.lane.b32.xlu0 %v5497, 32
        %v5676 = vpop.permute.xlu0 %5675
        %5677 = vrot.lane.b32.xlu0 %v5498, 32
        %v5678 = vpop.permute.xlu0 %5677
        %5679 = vrot.lane.b32.xlu0 %v5499, 32
        %v5680 = vpop.permute.xlu0 %5679
        %5681 = vrot.lane.b32.xlu0 %v5500, 32
        %v5682 = vpop.permute.xlu0 %5681
        %5683 = vrot.lane.b32.xlu0 %v5501, 32
        %v5684 = vpop.permute.xlu0 %5683
        %5685 = vrot.lane.b32.xlu0 %v5502, 32
        %v5686 = vpop.permute.xlu0 %5685
        %5687 = vrot.lane.b32.xlu0 %v5503, 32
        %v5688 = vpop.permute.xlu0 %5687
        %5689 = vrot.lane.b32.xlu0 %v5504, 32
        %v5690 = vpop.permute.xlu0 %5689
        %5691 = vrot.lane.b32.xlu0 %v5505, 32
        %v5692 = vpop.permute.xlu0 %5691
        %5693 = vrot.lane.b32.xlu0 %v5506, 32
        %v5694 = vpop.permute.xlu0 %5693
        %5695 = vrot.lane.b32.xlu0 %v5507, 32
        %v5696 = vpop.permute.xlu0 %5695
        %5697 = vrot.lane.b32.xlu0 %v5508, 32
        %v5698 = vpop.permute.xlu0 %5697
        %5699 = vrot.lane.b32.xlu0 %v5509, 32
        %v5700 = vpop.permute.xlu0 %5699
        %5701 = vrot.lane.b32.xlu0 %v5510, 32
        %v5702 = vpop.permute.xlu0 %5701
        %v5767 = vmul.f32 %v4232, %v5576
        %v5768 = vmul.f32 %v4234, %v5578
        %v5769 = vmul.f32 %v4236, %v5580
        %v5770 = vmul.f32 %v4238, %v5582
        %v5771 = vmul.f32 %v4240, %v5584
        %v5772 = vmul.f32 %v4242, %v5586
        %v5773 = vmul.f32 %v4244, %v5588
        %v5774 = vmul.f32 %v4246, %v5590
        %v5775 = vmul.f32 %v4248, %v5592
        %v5776 = vmul.f32 %v4250, %v5594
        %v5777 = vmul.f32 %v4252, %v5596
        %v5778 = vmul.f32 %v4254, %v5598
        %v5779 = vmul.f32 %v4256, %v5600
        %v5780 = vmul.f32 %v4258, %v5602
        %v5781 = vmul.f32 %v4260, %v5604
        %v5782 = vmul.f32 %v4262, %v5606
        %v5783 = vmul.f32 %v4264, %v5608
        %v5784 = vmul.f32 %v4266, %v5610
        %v5785 = vmul.f32 %v4268, %v5612
        %v5786 = vmul.f32 %v4270, %v5614
        %v5787 = vmul.f32 %v4272, %v5616
        %v5788 = vmul.f32 %v4274, %v5618
        %v5789 = vmul.f32 %v4276, %v5620
        %v5790 = vmul.f32 %v4278, %v5622
        %v5791 = vmul.f32 %v4280, %v5624
        %v5792 = vmul.f32 %v4282, %v5626
        %v5793 = vmul.f32 %v4284, %v5628
        %v5794 = vmul.f32 %v4286, %v5630
        %v5795 = vmul.f32 %v4288, %v5632
        %v5796 = vmul.f32 %v4290, %v5634
        %v5797 = vmul.f32 %v4292, %v5636
        %v5798 = vmul.f32 %v4294, %v5638
        %v5799 = vmul.f32 %v4296, %v5640
        %v5800 = vmul.f32 %v4298, %v5642
        %v5801 = vmul.f32 %v4300, %v5644
        %v5802 = vmul.f32 %v4302, %v5646
        %v5803 = vmul.f32 %v4304, %v5648
        %v5804 = vmul.f32 %v4306, %v5650
        %v5805 = vmul.f32 %v4308, %v5652
        %v5806 = vmul.f32 %v4310, %v5654
        %v5807 = vmul.f32 %v4312, %v5656
        %v5808 = vmul.f32 %v4314, %v5658
        %v5809 = vmul.f32 %v4316, %v5660
        %v5810 = vmul.f32 %v4318, %v5662
        %v5811 = vmul.f32 %v4320, %v5664
        %v5812 = vmul.f32 %v4322, %v5666
        %v5813 = vmul.f32 %v4324, %v5668
        %v5814 = vmul.f32 %v4326, %v5670
        %v5815 = vmul.f32 %v4328, %v5672
        %v5816 = vmul.f32 %v4330, %v5674
        %v5817 = vmul.f32 %v4332, %v5676
        %v5818 = vmul.f32 %v4334, %v5678
        %v5819 = vmul.f32 %v4336, %v5680
        %v5820 = vmul.f32 %v4338, %v5682
        %v5821 = vmul.f32 %v4340, %v5684
        %v5822 = vmul.f32 %v4342, %v5686
        %v5823 = vmul.f32 %v4344, %v5688
        %v5824 = vmul.f32 %v4346, %v5690
        %v5825 = vmul.f32 %v4348, %v5692
        %v5826 = vmul.f32 %v4350, %v5694
        %v5827 = vmul.f32 %v4352, %v5696
        %v5828 = vmul.f32 %v4354, %v5698
        %v5829 = vmul.f32 %v4356, %v5700
        %v5830 = vmul.f32 %v4358, %v5702
        %5895 = vrot.lane.b32.xlu0 %v5383, 96
        %v5896 = vpop.permute.xlu0 %5895
        %5897 = vrot.lane.b32.xlu0 %v5384, 96
        %v5898 = vpop.permute.xlu0 %5897
        %5899 = vrot.lane.b32.xlu0 %v5385, 96
        %v5900 = vpop.permute.xlu0 %5899
        %5901 = vrot.lane.b32.xlu0 %v5386, 96
        %v5902 = vpop.permute.xlu0 %5901
        %5903 = vrot.lane.b32.xlu0 %v5387, 96
        %v5904 = vpop.permute.xlu0 %5903
        %5905 = vrot.lane.b32.xlu0 %v5388, 96
        %v5906 = vpop.permute.xlu0 %5905
        %5907 = vrot.lane.b32.xlu0 %v5389, 96
        %v5908 = vpop.permute.xlu0 %5907
        %5909 = vrot.lane.b32.xlu0 %v5390, 96
        %v5910 = vpop.permute.xlu0 %5909
        %5911 = vrot.lane.b32.xlu0 %v5391, 96
        %v5912 = vpop.permute.xlu0 %5911
        %5913 = vrot.lane.b32.xlu0 %v5392, 96
        %v5914 = vpop.permute.xlu0 %5913
        %5915 = vrot.lane.b32.xlu0 %v5393, 96
        %v5916 = vpop.permute.xlu0 %5915
        %5917 = vrot.lane.b32.xlu0 %v5394, 96
        %v5918 = vpop.permute.xlu0 %5917
        %5919 = vrot.lane.b32.xlu0 %v5395, 96
        %v5920 = vpop.permute.xlu0 %5919
        %5921 = vrot.lane.b32.xlu0 %v5396, 96
        %v5922 = vpop.permute.xlu0 %5921
        %5923 = vrot.lane.b32.xlu0 %v5397, 96
        %v5924 = vpop.permute.xlu0 %5923
        %5925 = vrot.lane.b32.xlu0 %v5398, 96
        %v5926 = vpop.permute.xlu0 %5925
        %5927 = vrot.lane.b32.xlu0 %v5399, 96
        %v5928 = vpop.permute.xlu0 %5927
        %5929 = vrot.lane.b32.xlu0 %v5400, 96
        %v5930 = vpop.permute.xlu0 %5929
        %5931 = vrot.lane.b32.xlu0 %v5401, 96
        %v5932 = vpop.permute.xlu0 %5931
        %5933 = vrot.lane.b32.xlu0 %v5402, 96
        %v5934 = vpop.permute.xlu0 %5933
        %5935 = vrot.lane.b32.xlu0 %v5403, 96
        %v5936 = vpop.permute.xlu0 %5935
        %5937 = vrot.lane.b32.xlu0 %v5404, 96
        %v5938 = vpop.permute.xlu0 %5937
        %5939 = vrot.lane.b32.xlu0 %v5405, 96
        %v5940 = vpop.permute.xlu0 %5939
        %5941 = vrot.lane.b32.xlu0 %v5406, 96
        %v5942 = vpop.permute.xlu0 %5941
        %5943 = vrot.lane.b32.xlu0 %v5407, 96
        %v5944 = vpop.permute.xlu0 %5943
        %5945 = vrot.lane.b32.xlu0 %v5408, 96
        %v5946 = vpop.permute.xlu0 %5945
        %5947 = vrot.lane.b32.xlu0 %v5409, 96
        %v5948 = vpop.permute.xlu0 %5947
        %5949 = vrot.lane.b32.xlu0 %v5410, 96
        %v5950 = vpop.permute.xlu0 %5949
        %5951 = vrot.lane.b32.xlu0 %v5411, 96
        %v5952 = vpop.permute.xlu0 %5951
        %5953 = vrot.lane.b32.xlu0 %v5412, 96
        %v5954 = vpop.permute.xlu0 %5953
        %5955 = vrot.lane.b32.xlu0 %v5413, 96
        %v5956 = vpop.permute.xlu0 %5955
        %5957 = vrot.lane.b32.xlu0 %v5414, 96
        %v5958 = vpop.permute.xlu0 %5957
        %5959 = vrot.lane.b32.xlu0 %v5415, 96
        %v5960 = vpop.permute.xlu0 %5959
        %5961 = vrot.lane.b32.xlu0 %v5416, 96
        %v5962 = vpop.permute.xlu0 %5961
        %5963 = vrot.lane.b32.xlu0 %v5417, 96
        %v5964 = vpop.permute.xlu0 %5963
        %5965 = vrot.lane.b32.xlu0 %v5418, 96
        %v5966 = vpop.permute.xlu0 %5965
        %5967 = vrot.lane.b32.xlu0 %v5419, 96
        %v5968 = vpop.permute.xlu0 %5967
        %5969 = vrot.lane.b32.xlu0 %v5420, 96
        %v5970 = vpop.permute.xlu0 %5969
        %5971 = vrot.lane.b32.xlu0 %v5421, 96
        %v5972 = vpop.permute.xlu0 %5971
        %5973 = vrot.lane.b32.xlu0 %v5422, 96
        %v5974 = vpop.permute.xlu0 %5973
        %5975 = vrot.lane.b32.xlu0 %v5423, 96
        %v5976 = vpop.permute.xlu0 %5975
        %5977 = vrot.lane.b32.xlu0 %v5424, 96
        %v5978 = vpop.permute.xlu0 %5977
        %5979 = vrot.lane.b32.xlu0 %v5425, 96
        %v5980 = vpop.permute.xlu0 %5979
        %5981 = vrot.lane.b32.xlu0 %v5426, 96
        %v5982 = vpop.permute.xlu0 %5981
        %5983 = vrot.lane.b32.xlu0 %v5427, 96
        %v5984 = vpop.permute.xlu0 %5983
        %5985 = vrot.lane.b32.xlu0 %v5428, 96
        %v5986 = vpop.permute.xlu0 %5985
        %5987 = vrot.lane.b32.xlu0 %v5429, 96
        %v5988 = vpop.permute.xlu0 %5987
        %5989 = vrot.lane.b32.xlu0 %v5430, 96
        %v5990 = vpop.permute.xlu0 %5989
        %5991 = vrot.lane.b32.xlu0 %v5431, 96
        %v5992 = vpop.permute.xlu0 %5991
        %5993 = vrot.lane.b32.xlu0 %v5432, 96
        %v5994 = vpop.permute.xlu0 %5993
        %5995 = vrot.lane.b32.xlu0 %v5433, 96
        %v5996 = vpop.permute.xlu0 %5995
        %5997 = vrot.lane.b32.xlu0 %v5434, 96
        %v5998 = vpop.permute.xlu0 %5997
        %5999 = vrot.lane.b32.xlu0 %v5435, 96
        %v6000 = vpop.permute.xlu0 %5999
        %6001 = vrot.lane.b32.xlu0 %v5436, 96
        %v6002 = vpop.permute.xlu0 %6001
        %6003 = vrot.lane.b32.xlu0 %v5437, 96
        %v6004 = vpop.permute.xlu0 %6003
        %6005 = vrot.lane.b32.xlu0 %v5438, 96
        %v6006 = vpop.permute.xlu0 %6005
        %6007 = vrot.lane.b32.xlu0 %v5439, 96
        %v6008 = vpop.permute.xlu0 %6007
        %6009 = vrot.lane.b32.xlu0 %v5440, 96
        %v6010 = vpop.permute.xlu0 %6009
        %6011 = vrot.lane.b32.xlu0 %v5441, 96
        %v6012 = vpop.permute.xlu0 %6011
        %6013 = vrot.lane.b32.xlu0 %v5442, 96
        %v6014 = vpop.permute.xlu0 %6013
        %6015 = vrot.lane.b32.xlu0 %v5443, 96
        %v6016 = vpop.permute.xlu0 %6015
        %6017 = vrot.lane.b32.xlu0 %v5444, 96
        %v6018 = vpop.permute.xlu0 %6017
        %6019 = vrot.lane.b32.xlu0 %v5445, 96
        %v6020 = vpop.permute.xlu0 %6019
        %6021 = vrot.lane.b32.xlu0 %v5446, 96
        %v6022 = vpop.permute.xlu0 %6021
        %6087 = vst.msk [vmem:[#allocation3] sm:$0xff] %vm2462, %v5896
        %6088 = vst.msk [vmem:[#allocation3 + $0x8] sm:$0xff] %vm2462, %v5898
        %6089 = vst.msk [vmem:[#allocation3 + $0x10] sm:$0xff] %vm2462, %v5900
        %6090 = vst.msk [vmem:[#allocation3 + $0x18] sm:$0xff] %vm2462, %v5902
        %6091 = vst.msk [vmem:[#allocation3 + $0x20] sm:$0xff] %vm2462, %v5904
        %6092 = vst.msk [vmem:[#allocation3 + $0x28] sm:$0xff] %vm2462, %v5906
        %6093 = vst.msk [vmem:[#allocation3 + $0x30] sm:$0xff] %vm2462, %v5908
        %6094 = vst.msk [vmem:[#allocation3 + $0x38] sm:$0xff] %vm2462, %v5910
        %6095 = vst.msk [vmem:[#allocation3 + $0x40] sm:$0xff] %vm2462, %v5912
        %6096 = vst.msk [vmem:[#allocation3 + $0x48] sm:$0xff] %vm2462, %v5914
        %6097 = vst.msk [vmem:[#allocation3 + $0x50] sm:$0xff] %vm2462, %v5916
        %6098 = vst.msk [vmem:[#allocation3 + $0x58] sm:$0xff] %vm2462, %v5918
        %6099 = vst.msk [vmem:[#allocation3 + $0x60] sm:$0xff] %vm2462, %v5920
        %6100 = vst.msk [vmem:[#allocation3 + $0x68] sm:$0xff] %vm2462, %v5922
        %6101 = vst.msk [vmem:[#allocation3 + $0x70] sm:$0xff] %vm2462, %v5924
        %6102 = vst.msk [vmem:[#allocation3 + $0x78] sm:$0xff] %vm2462, %v5926
        %6103 = vst.msk [vmem:[#allocation3 + $0x80] sm:$0xff] %vm2462, %v5928
        %6104 = vst.msk [vmem:[#allocation3 + $0x88] sm:$0xff] %vm2462, %v5930
        %6105 = vst.msk [vmem:[#allocation3 + $0x90] sm:$0xff] %vm2462, %v5932
        %6106 = vst.msk [vmem:[#allocation3 + $0x98] sm:$0xff] %vm2462, %v5934
        %6107 = vst.msk [vmem:[#allocation3 + $0xa0] sm:$0xff] %vm2462, %v5936
        %6108 = vst.msk [vmem:[#allocation3 + $0xa8] sm:$0xff] %vm2462, %v5938
        %6109 = vst.msk [vmem:[#allocation3 + $0xb0] sm:$0xff] %vm2462, %v5940
        %6110 = vst.msk [vmem:[#allocation3 + $0xb8] sm:$0xff] %vm2462, %v5942
        %6111 = vst.msk [vmem:[#allocation3 + $0xc0] sm:$0xff] %vm2462, %v5944
        %6112 = vst.msk [vmem:[#allocation3 + $0xc8] sm:$0xff] %vm2462, %v5946
        %6113 = vst.msk [vmem:[#allocation3 + $0xd0] sm:$0xff] %vm2462, %v5948
        %6114 = vst.msk [vmem:[#allocation3 + $0xd8] sm:$0xff] %vm2462, %v5950
        %6115 = vst.msk [vmem:[#allocation3 + $0xe0] sm:$0xff] %vm2462, %v5952
        %6116 = vst.msk [vmem:[#allocation3 + $0xe8] sm:$0xff] %vm2462, %v5954
        %6117 = vst.msk [vmem:[#allocation3 + $0xf0] sm:$0xff] %vm2462, %v5956
        %6118 = vst.msk [vmem:[#allocation3 + $0xf8] sm:$0xff] %vm2462, %v5958
        %6119 = vst.msk [vmem:[#allocation3 + $0x100] sm:$0xff] %vm2462, %v5960
        %6120 = vst.msk [vmem:[#allocation3 + $0x108] sm:$0xff] %vm2462, %v5962
        %6121 = vst.msk [vmem:[#allocation3 + $0x110] sm:$0xff] %vm2462, %v5964
        %6122 = vst.msk [vmem:[#allocation3 + $0x118] sm:$0xff] %vm2462, %v5966
        %6123 = vst.msk [vmem:[#allocation3 + $0x120] sm:$0xff] %vm2462, %v5968
        %6124 = vst.msk [vmem:[#allocation3 + $0x128] sm:$0xff] %vm2462, %v5970
        %6125 = vst.msk [vmem:[#allocation3 + $0x130] sm:$0xff] %vm2462, %v5972
        %6126 = vst.msk [vmem:[#allocation3 + $0x138] sm:$0xff] %vm2462, %v5974
        %6127 = vst.msk [vmem:[#allocation3 + $0x140] sm:$0xff] %vm2462, %v5976
        %6128 = vst.msk [vmem:[#allocation3 + $0x148] sm:$0xff] %vm2462, %v5978
        %6129 = vst.msk [vmem:[#allocation3 + $0x150] sm:$0xff] %vm2462, %v5980
        %6130 = vst.msk [vmem:[#allocation3 + $0x158] sm:$0xff] %vm2462, %v5982
        %6131 = vst.msk [vmem:[#allocation3 + $0x160] sm:$0xff] %vm2462, %v5984
        %6132 = vst.msk [vmem:[#allocation3 + $0x168] sm:$0xff] %vm2462, %v5986
        %6133 = vst.msk [vmem:[#allocation3 + $0x170] sm:$0xff] %vm2462, %v5988
        %6134 = vst.msk [vmem:[#allocation3 + $0x178] sm:$0xff] %vm2462, %v5990
        %6135 = vst.msk [vmem:[#allocation3 + $0x180] sm:$0xff] %vm2462, %v5992
        %6136 = vst.msk [vmem:[#allocation3 + $0x188] sm:$0xff] %vm2462, %v5994
        %6137 = vst.msk [vmem:[#allocation3 + $0x190] sm:$0xff] %vm2462, %v5996
        %6138 = vst.msk [vmem:[#allocation3 + $0x198] sm:$0xff] %vm2462, %v5998
        %6139 = vst.msk [vmem:[#allocation3 + $0x1a0] sm:$0xff] %vm2462, %v6000
        %6140 = vst.msk [vmem:[#allocation3 + $0x1a8] sm:$0xff] %vm2462, %v6002
        %6141 = vst.msk [vmem:[#allocation3 + $0x1b0] sm:$0xff] %vm2462, %v6004
        %6142 = vst.msk [vmem:[#allocation3 + $0x1b8] sm:$0xff] %vm2462, %v6006
        %6143 = vst.msk [vmem:[#allocation3 + $0x1c0] sm:$0xff] %vm2462, %v6008
        %6144 = vst.msk [vmem:[#allocation3 + $0x1c8] sm:$0xff] %vm2462, %v6010
        %6145 = vst.msk [vmem:[#allocation3 + $0x1d0] sm:$0xff] %vm2462, %v6012
        %6146 = vst.msk [vmem:[#allocation3 + $0x1d8] sm:$0xff] %vm2462, %v6014
        %6147 = vst.msk [vmem:[#allocation3 + $0x1e0] sm:$0xff] %vm2462, %v6016
        %6148 = vst.msk [vmem:[#allocation3 + $0x1e8] sm:$0xff] %vm2462, %v6018
        %6149 = vst.msk [vmem:[#allocation3 + $0x1f0] sm:$0xff] %vm2462, %v6020
        %6150 = vst.msk [vmem:[#allocation3 + $0x1f8] sm:$0xff] %vm2462, %v6022
        %6215 = vrot.lane.b32.xlu0 %v5767, 64
        %v6216 = vpop.permute.xlu0 %6215
        %6217 = vrot.lane.b32.xlu0 %v5768, 64
        %v6218 = vpop.permute.xlu0 %6217
        %6219 = vrot.lane.b32.xlu0 %v5769, 64
        %v6220 = vpop.permute.xlu0 %6219
        %6221 = vrot.lane.b32.xlu0 %v5770, 64
        %v6222 = vpop.permute.xlu0 %6221
        %6223 = vrot.lane.b32.xlu0 %v5771, 64
        %v6224 = vpop.permute.xlu0 %6223
        %6225 = vrot.lane.b32.xlu0 %v5772, 64
        %v6226 = vpop.permute.xlu0 %6225
        %6227 = vrot.lane.b32.xlu0 %v5773, 64
        %v6228 = vpop.permute.xlu0 %6227
        %6229 = vrot.lane.b32.xlu0 %v5774, 64
        %v6230 = vpop.permute.xlu0 %6229
        %6231 = vrot.lane.b32.xlu0 %v5775, 64
        %v6232 = vpop.permute.xlu0 %6231
        %6233 = vrot.lane.b32.xlu0 %v5776, 64
        %v6234 = vpop.permute.xlu0 %6233
        %6235 = vrot.lane.b32.xlu0 %v5777, 64
        %v6236 = vpop.permute.xlu0 %6235
        %6237 = vrot.lane.b32.xlu0 %v5778, 64
        %v6238 = vpop.permute.xlu0 %6237
        %6239 = vrot.lane.b32.xlu0 %v5779, 64
        %v6240 = vpop.permute.xlu0 %6239
        %6241 = vrot.lane.b32.xlu0 %v5780, 64
        %v6242 = vpop.permute.xlu0 %6241
        %6243 = vrot.lane.b32.xlu0 %v5781, 64
        %v6244 = vpop.permute.xlu0 %6243
        %6245 = vrot.lane.b32.xlu0 %v5782, 64
        %v6246 = vpop.permute.xlu0 %6245
        %6247 = vrot.lane.b32.xlu0 %v5783, 64
        %v6248 = vpop.permute.xlu0 %6247
        %6249 = vrot.lane.b32.xlu0 %v5784, 64
        %v6250 = vpop.permute.xlu0 %6249
        %6251 = vrot.lane.b32.xlu0 %v5785, 64
        %v6252 = vpop.permute.xlu0 %6251
        %6253 = vrot.lane.b32.xlu0 %v5786, 64
        %v6254 = vpop.permute.xlu0 %6253
        %6255 = vrot.lane.b32.xlu0 %v5787, 64
        %v6256 = vpop.permute.xlu0 %6255
        %6257 = vrot.lane.b32.xlu0 %v5788, 64
        %v6258 = vpop.permute.xlu0 %6257
        %6259 = vrot.lane.b32.xlu0 %v5789, 64
        %v6260 = vpop.permute.xlu0 %6259
        %6261 = vrot.lane.b32.xlu0 %v5790, 64
        %v6262 = vpop.permute.xlu0 %6261
        %6263 = vrot.lane.b32.xlu0 %v5791, 64
        %v6264 = vpop.permute.xlu0 %6263
        %6265 = vrot.lane.b32.xlu0 %v5792, 64
        %v6266 = vpop.permute.xlu0 %6265
        %6267 = vrot.lane.b32.xlu0 %v5793, 64
        %v6268 = vpop.permute.xlu0 %6267
        %6269 = vrot.lane.b32.xlu0 %v5794, 64
        %v6270 = vpop.permute.xlu0 %6269
        %6271 = vrot.lane.b32.xlu0 %v5795, 64
        %v6272 = vpop.permute.xlu0 %6271
        %6273 = vrot.lane.b32.xlu0 %v5796, 64
        %v6274 = vpop.permute.xlu0 %6273
        %6275 = vrot.lane.b32.xlu0 %v5797, 64
        %v6276 = vpop.permute.xlu0 %6275
        %6277 = vrot.lane.b32.xlu0 %v5798, 64
        %v6278 = vpop.permute.xlu0 %6277
        %6279 = vrot.lane.b32.xlu0 %v5799, 64
        %v6280 = vpop.permute.xlu0 %6279
        %6281 = vrot.lane.b32.xlu0 %v5800, 64
        %v6282 = vpop.permute.xlu0 %6281
        %6283 = vrot.lane.b32.xlu0 %v5801, 64
        %v6284 = vpop.permute.xlu0 %6283
        %6285 = vrot.lane.b32.xlu0 %v5802, 64
        %v6286 = vpop.permute.xlu0 %6285
        %6287 = vrot.lane.b32.xlu0 %v5803, 64
        %v6288 = vpop.permute.xlu0 %6287
        %6289 = vrot.lane.b32.xlu0 %v5804, 64
        %v6290 = vpop.permute.xlu0 %6289
        %6291 = vrot.lane.b32.xlu0 %v5805, 64
        %v6292 = vpop.permute.xlu0 %6291
        %6293 = vrot.lane.b32.xlu0 %v5806, 64
        %v6294 = vpop.permute.xlu0 %6293
        %6295 = vrot.lane.b32.xlu0 %v5807, 64
        %v6296 = vpop.permute.xlu0 %6295
        %6297 = vrot.lane.b32.xlu0 %v5808, 64
        %v6298 = vpop.permute.xlu0 %6297
        %6299 = vrot.lane.b32.xlu0 %v5809, 64
        %v6300 = vpop.permute.xlu0 %6299
        %6301 = vrot.lane.b32.xlu0 %v5810, 64
        %v6302 = vpop.permute.xlu0 %6301
        %6303 = vrot.lane.b32.xlu0 %v5811, 64
        %v6304 = vpop.permute.xlu0 %6303
        %6305 = vrot.lane.b32.xlu0 %v5812, 64
        %v6306 = vpop.permute.xlu0 %6305
        %6307 = vrot.lane.b32.xlu0 %v5813, 64
        %v6308 = vpop.permute.xlu0 %6307
        %6309 = vrot.lane.b32.xlu0 %v5814, 64
        %v6310 = vpop.permute.xlu0 %6309
        %6311 = vrot.lane.b32.xlu0 %v5815, 64
        %v6312 = vpop.permute.xlu0 %6311
        %6313 = vrot.lane.b32.xlu0 %v5816, 64
        %v6314 = vpop.permute.xlu0 %6313
        %6315 = vrot.lane.b32.xlu0 %v5817, 64
        %v6316 = vpop.permute.xlu0 %6315
        %6317 = vrot.lane.b32.xlu0 %v5818, 64
        %v6318 = vpop.permute.xlu0 %6317
        %6319 = vrot.lane.b32.xlu0 %v5819, 64
        %v6320 = vpop.permute.xlu0 %6319
        %6321 = vrot.lane.b32.xlu0 %v5820, 64
        %v6322 = vpop.permute.xlu0 %6321
        %6323 = vrot.lane.b32.xlu0 %v5821, 64
        %v6324 = vpop.permute.xlu0 %6323
        %6325 = vrot.lane.b32.xlu0 %v5822, 64
        %v6326 = vpop.permute.xlu0 %6325
        %6327 = vrot.lane.b32.xlu0 %v5823, 64
        %v6328 = vpop.permute.xlu0 %6327
        %6329 = vrot.lane.b32.xlu0 %v5824, 64
        %v6330 = vpop.permute.xlu0 %6329
        %6331 = vrot.lane.b32.xlu0 %v5825, 64
        %v6332 = vpop.permute.xlu0 %6331
        %6333 = vrot.lane.b32.xlu0 %v5826, 64
        %v6334 = vpop.permute.xlu0 %6333
        %6335 = vrot.lane.b32.xlu0 %v5827, 64
        %v6336 = vpop.permute.xlu0 %6335
        %6337 = vrot.lane.b32.xlu0 %v5828, 64
        %v6338 = vpop.permute.xlu0 %6337
        %6339 = vrot.lane.b32.xlu0 %v5829, 64
        %v6340 = vpop.permute.xlu0 %6339
        %6341 = vrot.lane.b32.xlu0 %v5830, 64
        %v6342 = vpop.permute.xlu0 %6341
        %6407 = vst.msk [vmem:[%s540 + $0x1] sm:$0xff] %vm2462, %v6216
        %6408 = vst.msk [vmem:[%s540 + $0x9] sm:$0xff] %vm2462, %v6218
        %6409 = vst.msk [vmem:[%s540 + $0x19] sm:$0xff] %vm2462, %v6220
        %6410 = vst.msk [vmem:[%s540 + $0x21] sm:$0xff] %vm2462, %v6222
        %6411 = vst.msk [vmem:[%s540 + $0x31] sm:$0xff] %vm2462, %v6224
        %6412 = vst.msk [vmem:[%s540 + $0x39] sm:$0xff] %vm2462, %v6226
        %6413 = vst.msk [vmem:[%s540 + $0x49] sm:$0xff] %vm2462, %v6228
        %6414 = vst.msk [vmem:[%s540 + $0x51] sm:$0xff] %vm2462, %v6230
        %6415 = vst.msk [vmem:[%s540 + $0x61] sm:$0xff] %vm2462, %v6232
        %6416 = vst.msk [vmem:[%s540 + $0x69] sm:$0xff] %vm2462, %v6234
        %6417 = vst.msk [vmem:[%s540 + $0x79] sm:$0xff] %vm2462, %v6236
        %6418 = vst.msk [vmem:[%s540 + $0x81] sm:$0xff] %vm2462, %v6238
        %6419 = vst.msk [vmem:[%s540 + $0x91] sm:$0xff] %vm2462, %v6240
        %6420 = vst.msk [vmem:[%s540 + $0x99] sm:$0xff] %vm2462, %v6242
        %6421 = vst.msk [vmem:[%s540 + $0xa9] sm:$0xff] %vm2462, %v6244
        %6422 = vst.msk [vmem:[%s540 + $0xb1] sm:$0xff] %vm2462, %v6246
        %6423 = vst.msk [vmem:[%s540 + $0xc1] sm:$0xff] %vm2462, %v6248
        %6424 = vst.msk [vmem:[%s540 + $0xc9] sm:$0xff] %vm2462, %v6250
        %6425 = vst.msk [vmem:[%s540 + $0xd9] sm:$0xff] %vm2462, %v6252
        %6426 = vst.msk [vmem:[%s540 + $0xe1] sm:$0xff] %vm2462, %v6254
        %6427 = vst.msk [vmem:[%s540 + $0xf1] sm:$0xff] %vm2462, %v6256
        %6428 = vst.msk [vmem:[%s540 + $0xf9] sm:$0xff] %vm2462, %v6258
        %6429 = vst.msk [vmem:[%s540 + $0x109] sm:$0xff] %vm2462, %v6260
        %6430 = vst.msk [vmem:[%s540 + $0x111] sm:$0xff] %vm2462, %v6262
        %6431 = vst.msk [vmem:[%s540 + $0x121] sm:$0xff] %vm2462, %v6264
        %6432 = vst.msk [vmem:[%s540 + $0x129] sm:$0xff] %vm2462, %v6266
        %6433 = vst.msk [vmem:[%s540 + $0x139] sm:$0xff] %vm2462, %v6268
        %6434 = vst.msk [vmem:[%s540 + $0x141] sm:$0xff] %vm2462, %v6270
        %6435 = vst.msk [vmem:[%s540 + $0x151] sm:$0xff] %vm2462, %v6272
        %6436 = vst.msk [vmem:[%s540 + $0x159] sm:$0xff] %vm2462, %v6274
        %6437 = vst.msk [vmem:[%s540 + $0x169] sm:$0xff] %vm2462, %v6276
        %6438 = vst.msk [vmem:[%s540 + $0x171] sm:$0xff] %vm2462, %v6278
        %6439 = vst.msk [vmem:[%s540 + $0x1b1] sm:$0xff] %vm2462, %v6280
        %6440 = vst.msk [vmem:[%s540 + $0x1b9] sm:$0xff] %vm2462, %v6282
        %6441 = vst.msk [vmem:[%s540 + $0x1c9] sm:$0xff] %vm2462, %v6284
        %6442 = vst.msk [vmem:[%s540 + $0x1d1] sm:$0xff] %vm2462, %v6286
        %6443 = vst.msk [vmem:[%s540 + $0x1e1] sm:$0xff] %vm2462, %v6288
        %6444 = vst.msk [vmem:[%s540 + $0x1e9] sm:$0xff] %vm2462, %v6290
        %6445 = vst.msk [vmem:[%s540 + $0x1f9] sm:$0xff] %vm2462, %v6292
        %6446 = vst.msk [vmem:[%s540 + $0x201] sm:$0xff] %vm2462, %v6294
        %6447 = vst.msk [vmem:[%s540 + $0x211] sm:$0xff] %vm2462, %v6296
        %6448 = vst.msk [vmem:[%s540 + $0x219] sm:$0xff] %vm2462, %v6298
        %6449 = vst.msk [vmem:[%s540 + $0x229] sm:$0xff] %vm2462, %v6300
        %6450 = vst.msk [vmem:[%s540 + $0x231] sm:$0xff] %vm2462, %v6302
        %6451 = vst.msk [vmem:[%s540 + $0x241] sm:$0xff] %vm2462, %v6304
        %6452 = vst.msk [vmem:[%s540 + $0x249] sm:$0xff] %vm2462, %v6306
        %6453 = vst.msk [vmem:[%s540 + $0x259] sm:$0xff] %vm2462, %v6308
        %6454 = vst.msk [vmem:[%s540 + $0x261] sm:$0xff] %vm2462, %v6310
        %6455 = vst.msk [vmem:[%s540 + $0x271] sm:$0xff] %vm2462, %v6312
        %6456 = vst.msk [vmem:[%s540 + $0x279] sm:$0xff] %vm2462, %v6314
        %6457 = vst.msk [vmem:[%s540 + $0x289] sm:$0xff] %vm2462, %v6316
        %6458 = vst.msk [vmem:[%s540 + $0x291] sm:$0xff] %vm2462, %v6318
        %6459 = vst.msk [vmem:[%s540 + $0x2a1] sm:$0xff] %vm2462, %v6320
        %6460 = vst.msk [vmem:[%s540 + $0x2a9] sm:$0xff] %vm2462, %v6322
        %6461 = vst.msk [vmem:[%s540 + $0x2b9] sm:$0xff] %vm2462, %v6324
        %6462 = vst.msk [vmem:[%s540 + $0x2c1] sm:$0xff] %vm2462, %v6326
        %6463 = vst.msk [vmem:[%s540 + $0x2d1] sm:$0xff] %vm2462, %v6328
        %6464 = vst.msk [vmem:[%s540 + $0x2d9] sm:$0xff] %vm2462, %v6330
        %6465 = vst.msk [vmem:[%s540 + $0x2e9] sm:$0xff] %vm2462, %v6332
        %6466 = vst.msk [vmem:[%s540 + $0x2f1] sm:$0xff] %vm2462, %v6334
        %6467 = vst.msk [vmem:[%s540 + $0x301] sm:$0xff] %vm2462, %v6336
        %6468 = vst.msk [vmem:[%s540 + $0x309] sm:$0xff] %vm2462, %v6338
        %6469 = vst.msk [vmem:[%s540 + $0x319] sm:$0xff] %vm2462, %v6340
        %6470 = vst.msk [vmem:[%s540 + $0x321] sm:$0xff] %vm2462, %v6342
        %6471 = vst.msk [vmem:[%s169] sm:$0xff] %vm2462, %v6216
        %6472 = vst.msk [vmem:[%s169 + $0x8] sm:$0xff] %vm2462, %v6218
        %6473 = vst.msk [vmem:[%s169 + $0x10] sm:$0xff] %vm2462, %v6220
        %6474 = vst.msk [vmem:[%s169 + $0x18] sm:$0xff] %vm2462, %v6222
        %6475 = vst.msk [vmem:[%s169 + $0x20] sm:$0xff] %vm2462, %v6224
        %6476 = vst.msk [vmem:[%s169 + $0x28] sm:$0xff] %vm2462, %v6226
        %6477 = vst.msk [vmem:[%s169 + $0x30] sm:$0xff] %vm2462, %v6228
        %6478 = vst.msk [vmem:[%s169 + $0x38] sm:$0xff] %vm2462, %v6230
        %6479 = vst.msk [vmem:[%s169 + $0x40] sm:$0xff] %vm2462, %v6232
        %6480 = vst.msk [vmem:[%s169 + $0x48] sm:$0xff] %vm2462, %v6234
        %6481 = vst.msk [vmem:[%s169 + $0x50] sm:$0xff] %vm2462, %v6236
        %6482 = vst.msk [vmem:[%s169 + $0x58] sm:$0xff] %vm2462, %v6238
        %6483 = vst.msk [vmem:[%s169 + $0x60] sm:$0xff] %vm2462, %v6240
        %6484 = vst.msk [vmem:[%s169 + $0x68] sm:$0xff] %vm2462, %v6242
        %6485 = vst.msk [vmem:[%s169 + $0x70] sm:$0xff] %vm2462, %v6244
        %6486 = vst.msk [vmem:[%s169 + $0x78] sm:$0xff] %vm2462, %v6246
        %6487 = vst.msk [vmem:[%s169 + $0x80] sm:$0xff] %vm2462, %v6248
        %6488 = vst.msk [vmem:[%s169 + $0x88] sm:$0xff] %vm2462, %v6250
        %6489 = vst.msk [vmem:[%s169 + $0x90] sm:$0xff] %vm2462, %v6252
        %6490 = vst.msk [vmem:[%s169 + $0x98] sm:$0xff] %vm2462, %v6254
        %6491 = vst.msk [vmem:[%s169 + $0xa0] sm:$0xff] %vm2462, %v6256
        %6492 = vst.msk [vmem:[%s169 + $0xa8] sm:$0xff] %vm2462, %v6258
        %6493 = vst.msk [vmem:[%s169 + $0xb0] sm:$0xff] %vm2462, %v6260
        %6494 = vst.msk [vmem:[%s169 + $0xb8] sm:$0xff] %vm2462, %v6262
        %6495 = vst.msk [vmem:[%s169 + $0xc0] sm:$0xff] %vm2462, %v6264
        %6496 = vst.msk [vmem:[%s169 + $0xc8] sm:$0xff] %vm2462, %v6266
        %6497 = vst.msk [vmem:[%s169 + $0xd0] sm:$0xff] %vm2462, %v6268
        %6498 = vst.msk [vmem:[%s169 + $0xd8] sm:$0xff] %vm2462, %v6270
        %6499 = vst.msk [vmem:[%s169 + $0xe0] sm:$0xff] %vm2462, %v6272
        %6500 = vst.msk [vmem:[%s169 + $0xe8] sm:$0xff] %vm2462, %v6274
        %6501 = vst.msk [vmem:[%s169 + $0xf0] sm:$0xff] %vm2462, %v6276
        %6502 = vst.msk [vmem:[%s169 + $0xf8] sm:$0xff] %vm2462, %v6278
        %6503 = vst.msk [vmem:[%s169 + $0x100] sm:$0xff] %vm2462, %v6280
        %6504 = vst.msk [vmem:[%s169 + $0x108] sm:$0xff] %vm2462, %v6282
        %6505 = vst.msk [vmem:[%s169 + $0x110] sm:$0xff] %vm2462, %v6284
        %6506 = vst.msk [vmem:[%s169 + $0x118] sm:$0xff] %vm2462, %v6286
        %6507 = vst.msk [vmem:[%s169 + $0x120] sm:$0xff] %vm2462, %v6288
        %6508 = vst.msk [vmem:[%s169 + $0x128] sm:$0xff] %vm2462, %v6290
        %6509 = vst.msk [vmem:[%s169 + $0x130] sm:$0xff] %vm2462, %v6292
        %6510 = vst.msk [vmem:[%s169 + $0x138] sm:$0xff] %vm2462, %v6294
        %6511 = vst.msk [vmem:[%s169 + $0x140] sm:$0xff] %vm2462, %v6296
        %6512 = vst.msk [vmem:[%s169 + $0x148] sm:$0xff] %vm2462, %v6298
        %6513 = vst.msk [vmem:[%s169 + $0x150] sm:$0xff] %vm2462, %v6300
        %6514 = vst.msk [vmem:[%s169 + $0x158] sm:$0xff] %vm2462, %v6302
        %6515 = vst.msk [vmem:[%s169 + $0x160] sm:$0xff] %vm2462, %v6304
        %6516 = vst.msk [vmem:[%s169 + $0x168] sm:$0xff] %vm2462, %v6306
        %6517 = vst.msk [vmem:[%s169 + $0x170] sm:$0xff] %vm2462, %v6308
        %6518 = vst.msk [vmem:[%s169 + $0x178] sm:$0xff] %vm2462, %v6310
        %6519 = vst.msk [vmem:[%s169 + $0x180] sm:$0xff] %vm2462, %v6312
        %6520 = vst.msk [vmem:[%s169 + $0x188] sm:$0xff] %vm2462, %v6314
        %6521 = vst.msk [vmem:[%s169 + $0x190] sm:$0xff] %vm2462, %v6316
        %6522 = vst.msk [vmem:[%s169 + $0x198] sm:$0xff] %vm2462, %v6318
        %6523 = vst.msk [vmem:[%s169 + $0x1a0] sm:$0xff] %vm2462, %v6320
        %6524 = vst.msk [vmem:[%s169 + $0x1a8] sm:$0xff] %vm2462, %v6322
        %6525 = vst.msk [vmem:[%s169 + $0x1b0] sm:$0xff] %vm2462, %v6324
        %6526 = vst.msk [vmem:[%s169 + $0x1b8] sm:$0xff] %vm2462, %v6326
        %6527 = vst.msk [vmem:[%s169 + $0x1c0] sm:$0xff] %vm2462, %v6328
        %6528 = vst.msk [vmem:[%s169 + $0x1c8] sm:$0xff] %vm2462, %v6330
        %6529 = vst.msk [vmem:[%s169 + $0x1d0] sm:$0xff] %vm2462, %v6332
        %6530 = vst.msk [vmem:[%s169 + $0x1d8] sm:$0xff] %vm2462, %v6334
        %6531 = vst.msk [vmem:[%s169 + $0x1e0] sm:$0xff] %vm2462, %v6336
        %6532 = vst.msk [vmem:[%s169 + $0x1e8] sm:$0xff] %vm2462, %v6338
        %6533 = vst.msk [vmem:[%s169 + $0x1f0] sm:$0xff] %vm2462, %v6340
        %6534 = vst.msk [vmem:[%s169 + $0x1f8] sm:$0xff] %vm2462, %v6342
        %p6535 = scmp.eq.s32.totalorder %s16, 7
        // Predicated region
        $region33: #{convlstm_forward.5} parent=27 // pred_check
          %p6536 = pneg %p6535
        $region34: #{convlstm_forward.5} parent=27 // pred_check_branch
          %6538 = sbr.rel (%p6536) target = $region36
        $region35: #{convlstm_forward.5} parent=27 // pred_region
          %6539 = vst.msk [vmem:[#allocation4] sm:$0xff] %vm2462, %v5896
          %6540 = vst.msk [vmem:[#allocation4 + $0x8] sm:$0xff] %vm2462, %v5898
          %6541 = vst.msk [vmem:[#allocation4 + $0x10] sm:$0xff] %vm2462, %v5900
          %6542 = vst.msk [vmem:[#allocation4 + $0x18] sm:$0xff] %vm2462, %v5902
          %6543 = vst.msk [vmem:[#allocation4 + $0x20] sm:$0xff] %vm2462, %v5904
          %6544 = vst.msk [vmem:[#allocation4 + $0x28] sm:$0xff] %vm2462, %v5906
          %6545 = vst.msk [vmem:[#allocation4 + $0x30] sm:$0xff] %vm2462, %v5908
          %6546 = vst.msk [vmem:[#allocation4 + $0x38] sm:$0xff] %vm2462, %v5910
          %6547 = vst.msk [vmem:[#allocation4 + $0x40] sm:$0xff] %vm2462, %v5912
          %6548 = vst.msk [vmem:[#allocation4 + $0x48] sm:$0xff] %vm2462, %v5914
          %6549 = vst.msk [vmem:[#allocation4 + $0x50] sm:$0xff] %vm2462, %v5916
          %6550 = vst.msk [vmem:[#allocation4 + $0x58] sm:$0xff] %vm2462, %v5918
          %6551 = vst.msk [vmem:[#allocation4 + $0x60] sm:$0xff] %vm2462, %v5920
          %6552 = vst.msk [vmem:[#allocation4 + $0x68] sm:$0xff] %vm2462, %v5922
          %6553 = vst.msk [vmem:[#allocation4 + $0x70] sm:$0xff] %vm2462, %v5924
          %6554 = vst.msk [vmem:[#allocation4 + $0x78] sm:$0xff] %vm2462, %v5926
          %6555 = vst.msk [vmem:[#allocation4 + $0x80] sm:$0xff] %vm2462, %v5928
          %6556 = vst.msk [vmem:[#allocation4 + $0x88] sm:$0xff] %vm2462, %v5930
          %6557 = vst.msk [vmem:[#allocation4 + $0x90] sm:$0xff] %vm2462, %v5932
          %6558 = vst.msk [vmem:[#allocation4 + $0x98] sm:$0xff] %vm2462, %v5934
          %6559 = vst.msk [vmem:[#allocation4 + $0xa0] sm:$0xff] %vm2462, %v5936
          %6560 = vst.msk [vmem:[#allocation4 + $0xa8] sm:$0xff] %vm2462, %v5938
          %6561 = vst.msk [vmem:[#allocation4 + $0xb0] sm:$0xff] %vm2462, %v5940
          %6562 = vst.msk [vmem:[#allocation4 + $0xb8] sm:$0xff] %vm2462, %v5942
          %6563 = vst.msk [vmem:[#allocation4 + $0xc0] sm:$0xff] %vm2462, %v5944
          %6564 = vst.msk [vmem:[#allocation4 + $0xc8] sm:$0xff] %vm2462, %v5946
          %6565 = vst.msk [vmem:[#allocation4 + $0xd0] sm:$0xff] %vm2462, %v5948
          %6566 = vst.msk [vmem:[#allocation4 + $0xd8] sm:$0xff] %vm2462, %v5950
          %6567 = vst.msk [vmem:[#allocation4 + $0xe0] sm:$0xff] %vm2462, %v5952
          %6568 = vst.msk [vmem:[#allocation4 + $0xe8] sm:$0xff] %vm2462, %v5954
          %6569 = vst.msk [vmem:[#allocation4 + $0xf0] sm:$0xff] %vm2462, %v5956
          %6570 = vst.msk [vmem:[#allocation4 + $0xf8] sm:$0xff] %vm2462, %v5958
          %6571 = vst.msk [vmem:[#allocation4 + $0x100] sm:$0xff] %vm2462, %v5960
          %6572 = vst.msk [vmem:[#allocation4 + $0x108] sm:$0xff] %vm2462, %v5962
          %6573 = vst.msk [vmem:[#allocation4 + $0x110] sm:$0xff] %vm2462, %v5964
          %6574 = vst.msk [vmem:[#allocation4 + $0x118] sm:$0xff] %vm2462, %v5966
          %6575 = vst.msk [vmem:[#allocation4 + $0x120] sm:$0xff] %vm2462, %v5968
          %6576 = vst.msk [vmem:[#allocation4 + $0x128] sm:$0xff] %vm2462, %v5970
          %6577 = vst.msk [vmem:[#allocation4 + $0x130] sm:$0xff] %vm2462, %v5972
          %6578 = vst.msk [vmem:[#allocation4 + $0x138] sm:$0xff] %vm2462, %v5974
          %6579 = vst.msk [vmem:[#allocation4 + $0x140] sm:$0xff] %vm2462, %v5976
          %6580 = vst.msk [vmem:[#allocation4 + $0x148] sm:$0xff] %vm2462, %v5978
          %6581 = vst.msk [vmem:[#allocation4 + $0x150] sm:$0xff] %vm2462, %v5980
          %6582 = vst.msk [vmem:[#allocation4 + $0x158] sm:$0xff] %vm2462, %v5982
          %6583 = vst.msk [vmem:[#allocation4 + $0x160] sm:$0xff] %vm2462, %v5984
          %6584 = vst.msk [vmem:[#allocation4 + $0x168] sm:$0xff] %vm2462, %v5986
          %6585 = vst.msk [vmem:[#allocation4 + $0x170] sm:$0xff] %vm2462, %v5988
          %6586 = vst.msk [vmem:[#allocation4 + $0x178] sm:$0xff] %vm2462, %v5990
          %6587 = vst.msk [vmem:[#allocation4 + $0x180] sm:$0xff] %vm2462, %v5992
          %6588 = vst.msk [vmem:[#allocation4 + $0x188] sm:$0xff] %vm2462, %v5994
          %6589 = vst.msk [vmem:[#allocation4 + $0x190] sm:$0xff] %vm2462, %v5996
          %6590 = vst.msk [vmem:[#allocation4 + $0x198] sm:$0xff] %vm2462, %v5998
          %6591 = vst.msk [vmem:[#allocation4 + $0x1a0] sm:$0xff] %vm2462, %v6000
          %6592 = vst.msk [vmem:[#allocation4 + $0x1a8] sm:$0xff] %vm2462, %v6002
          %6593 = vst.msk [vmem:[#allocation4 + $0x1b0] sm:$0xff] %vm2462, %v6004
          %6594 = vst.msk [vmem:[#allocation4 + $0x1b8] sm:$0xff] %vm2462, %v6006
          %6595 = vst.msk [vmem:[#allocation4 + $0x1c0] sm:$0xff] %vm2462, %v6008
          %6596 = vst.msk [vmem:[#allocation4 + $0x1c8] sm:$0xff] %vm2462, %v6010
          %6597 = vst.msk [vmem:[#allocation4 + $0x1d0] sm:$0xff] %vm2462, %v6012
          %6598 = vst.msk [vmem:[#allocation4 + $0x1d8] sm:$0xff] %vm2462, %v6014
          %6599 = vst.msk [vmem:[#allocation4 + $0x1e0] sm:$0xff] %vm2462, %v6016
          %6600 = vst.msk [vmem:[#allocation4 + $0x1e8] sm:$0xff] %vm2462, %v6018
          %6601 = vst.msk [vmem:[#allocation4 + $0x1f0] sm:$0xff] %vm2462, %v6020
          %6602 = vst.msk [vmem:[#allocation4 + $0x1f8] sm:$0xff] %vm2462, %v6022
        $region36: #{convlstm_forward.5} parent=27 // pred_fallthru
          _
        %p6603 = scmp.lt.s32.totalorder %s16, 7
        %s6604 = scalar_select %p6603, %s16, 7
        %s6605 = smul.addr %s6604, 64
        %s6606 = smul.addr %s6605, 8
        %s6607 = scalar_lea.vmem %s2, %s6606
        // Predicated region
        $region37: #{convlstm_forward.5} parent=27 // pred_check
          %p6608 = pneg %p81
        $region38: #{convlstm_forward.5} parent=27 // pred_check_branch
          %6610 = sbr.rel (%p6608) target = $region40
        $region39: #{convlstm_forward.5} parent=27 // pred_region
          _
        $region40: #{convlstm_forward.5} parent=27 // pred_fallthru
          _
        // Predicated region
        $region41: #{convlstm_forward.5} parent=27 // pred_check
          %p6611 = pneg %p102
        $region42: #{convlstm_forward.5} parent=27 // pred_check_branch
          %6613 = sbr.rel (%p6611) target = $region44
        $region43: #{convlstm_forward.5} parent=27 // pred_region
          %s6615 = ssub.s32 8192, 8192
          %6616 = vsyncadd [#allocation5], %s6615
          %s6617 = sshll.u32 [#allocation4], 4
          %s6618 = int_to_ptr.vmem [resolvable:$true] %s6617
          %6623 = dma.vmem_to_hbm [thread:$0]  %s6618, 8192, %s3, [#allocation5], 128, 128, 8
        $region44: #{convlstm_forward.5} parent=27 // pred_fallthru
          _
        // Predicated region
        $region45: #{convlstm_forward.5} parent=27 // pred_check
          %p6624 = pneg %p102
        $region46: #{convlstm_forward.5} parent=27 // pred_check_branch
          %6626 = sbr.rel (%p6624) target = $region48
        $region47: #{convlstm_forward.5} parent=27 // pred_region
          %6627 = dma.done [#allocation5], 8192
        $region48: #{convlstm_forward.5} parent=27 // pred_fallthru
          _
      $region28: #{convlstm_forward.5} parent=5 // pred_fallthru
        _
      %p6628 = scmp.le.s32.totalorder 2, %s11
      // Predicated region
      $region49: #{convlstm_forward.5} parent=5 // pred_check
        %p6629 = pneg %p6628
      $region50: #{convlstm_forward.5} parent=5 // pred_check_branch
        %6631 = sbr.rel (%p6629) target = $region52
      $region51: #{convlstm_forward.5} parent=5 // pred_region
        %s6632 = ssub.s32 %s11, 2
        // Predicated region
        $region53: #{convlstm_forward.5} parent=51 // pred_check
          %p6633 = pneg %p87
        $region54: #{convlstm_forward.5} parent=51 // pred_check_branch
          %6635 = sbr.rel (%p6633) target = $region56
        $region55: #{convlstm_forward.5} parent=51 // pred_region
          %p6636 = scmp.lt.s32.totalorder %s17, 7
          %s6637 = scalar_select %p6636, %s17, 7
          %s6638 = smul.addr %s6637, 64
          %s6639 = smul.addr %s6638, 8
          %s6640 = scalar_lea.vmem %s2, %s6639
        $region56: #{convlstm_forward.5} parent=51 // pred_fallthru
          _
      $region52: #{convlstm_forward.5} parent=5 // pred_fallthru
        _
    $region6: #{convlstm_forward.5} parent=1 // loop_footer
      %s15 = sadd.s32 1, %s11
    $region7: #{convlstm_forward.5} parent=1 // loop_footer_branch
      %10 = sbr.rel target = $region3
    $region8: #{convlstm_forward.5} parent=1 // loop_exit
      _
    %6641 = vsyncpa [#allocation5], 1
    %s6642 = scalar_lea.sflag [#allocation5], 1
    %6643 = vsyncpa %s6642, 1

</llo_original>
